<compile_context>
chip_gen: v7x
topology: tpu7x:2x2x1
jax: 0.10.0
libtpu: 0.0.40
codegen_flags: <defaults>
</compile_context>

<pallas_src>
import functools

import jax
import jax.numpy as jnp
from jax import lax
from jax.experimental import pallas as pl
from jax.experimental.pallas import tpu as pltpu


def _round_up(x, m):
    return (x + m - 1) // m * m


# --------------------------------------------------------------------------
# Fused 3x3 conv (im2col folded in-kernel, weight VMEM-resident)
# --------------------------------------------------------------------------

def _conv3_taps(xp_ref, w_ref, H, W, Cin):
    # 9-tap accumulation on the halo-padded bf16 block; f32 accumulator.
    xp = xp_ref[0]                                   # (H+2, W+2, Cin) bf16
    Cout = w_ref.shape[1]
    acc = jnp.zeros((H * W, Cout), jnp.float32)
    for t in range(9):
        ky, kx = divmod(t, 3)
        patch = xp[ky:ky + H, kx:kx + W, :].reshape(H * W, Cin)
        acc = acc + jnp.dot(patch, w_ref[t * Cin:(t + 1) * Cin, :],
                            preferred_element_type=jnp.float32)
    return acc


def _conv3_kernel(xp_ref, w_ref, y_ref, *, H, W, Cin):
    acc = _conv3_taps(xp_ref, w_ref, H, W, Cin)
    y_ref[0] = acc.reshape(H, W, -1).astype(y_ref.dtype)


def _conv3_stats_kernel(xp_ref, w_ref, y_ref, stats_ref, acc_ref, *, H, W, Cin):
    acc = _conv3_taps(xp_ref, w_ref, H, W, Cin)
    yb = acc.astype(jnp.bfloat16)
    y_ref[0] = yb.reshape(H, W, -1)

    @pl.when(pl.program_id(0) == 0)
    def _():
        acc_ref[...] = jnp.zeros_like(acc_ref)

    # per-column sum / sum-of-squares of the (bf16-rounded) conv output,
    # accumulated across the batch grid axis -> BatchNorm batch statistics.
    y32 = yb.astype(jnp.float32)
    acc_ref[0:1, :] += jnp.sum(y32, axis=0, keepdims=True)
    acc_ref[1:2, :] += jnp.sum(y32 * y32, axis=0, keepdims=True)

    @pl.when(pl.program_id(0) == pl.num_programs(0) - 1)
    def _():
        stats_ref[...] = acc_ref[...]


def pallas_conv3(x_nhwc_bf16, w_mat_bf16, *, with_stats):
    """3x3 'same' conv (no bias).  No im2col tensor is materialized in HBM;
    the (9*Cin, Cout) weight stays resident in VMEM (constant block index)."""
    B, H, W, Cin = x_nhwc_bf16.shape
    Cout = w_mat_bf16.shape[1]
    xp = jnp.pad(x_nhwc_bf16, ((0, 0), (1, 1), (1, 1), (0, 0)))   # halo pad

    in_specs = [pl.BlockSpec((1, H + 2, W + 2, Cin), lambda b: (b, 0, 0, 0)),
                pl.BlockSpec((9 * Cin, Cout), lambda b: (0, 0))]
    y_spec = pl.BlockSpec((1, H, W, Cout), lambda b: (b, 0, 0, 0))

    if with_stats:
        kern = functools.partial(_conv3_stats_kernel, H=H, W=W, Cin=Cin)
        y, stats = pl.pallas_call(
            kern,
            grid=(B,),
            in_specs=in_specs,
            out_specs=(y_spec, pl.BlockSpec((2, Cout), lambda b: (0, 0))),
            out_shape=(jax.ShapeDtypeStruct((B, H, W, Cout), jnp.bfloat16),
                       jax.ShapeDtypeStruct((2, Cout), jnp.float32)),
            scratch_shapes=[pltpu.VMEM((2, Cout), jnp.float32)],
            compiler_params=pltpu.CompilerParams(
                dimension_semantics=("arbitrary",)),
        )(xp, w_mat_bf16)
        return y, stats

    kern = functools.partial(_conv3_kernel, H=H, W=W, Cin=Cin)
    return pl.pallas_call(
        kern,
        grid=(B,),
        in_specs=in_specs,
        out_specs=y_spec,
        out_shape=jax.ShapeDtypeStruct((B, H, W, Cout), jnp.bfloat16),
        compiler_params=pltpu.CompilerParams(
            dimension_semantics=("parallel",)),
    )(xp, w_mat_bf16)


# --------------------------------------------------------------------------
# BatchNorm + recurrent criss-cross attention, fused per batch element
# --------------------------------------------------------------------------

def _cca_kernel(y_ref, stats_ref, g_ref, b_ref, gamma_ref, wqkv_ref, bqkv_ref,
                o_ref, *, inv_m, recurrence, cqp):
    _, H, W, C = y_ref.shape

    # training-mode BatchNorm (biased variance, eps=1e-5) from fused conv stats
    mean = stats_ref[0:1, :] * inv_m                       # (1, C)
    var = stats_ref[1:2, :] * inv_m - mean * mean
    scale = g_ref[...] * lax.rsqrt(var + 1e-5)
    shift = b_ref[...] - mean * scale
    x = (y_ref[0].astype(jnp.float32) * scale.reshape(1, 1, C)
         + shift.reshape(1, 1, C))                         # (H, W, C) f32

    gamma = gamma_ref[...]                                 # (1, 1)
    # 2-D additive diagonal mask (reference: -inf at i == i' in the H branch)
    ri = lax.broadcasted_iota(jnp.int32, (H, H), 0)
    rk = lax.broadcasted_iota(jnp.int32, (H, H), 1)
    diag = jnp.where(ri == rk, -1e30, 0.0).astype(jnp.float32)

    for _ in range(recurrence):      # recurrence folded in: x stays in VMEM
        # fused Q|K|V projection (bf16 MXU operands, f32 accumulation)
        xf = x.reshape(H * W, C).astype(jnp.bfloat16)
        qkv = (jnp.dot(xf, wqkv_ref[...], preferred_element_type=jnp.float32)
               + bqkv_ref[...]).reshape(H, W, -1)
        # q/k segments are zero-padded to 128-lane-aligned boundaries -> free views
        q = qkv[:, :, 0:cqp].astype(jnp.bfloat16)
        k = qkv[:, :, cqp:2 * cqp].astype(jnp.bfloat16)
        v = qkv[:, :, 2 * cqp:2 * cqp + C].astype(jnp.bfloat16)   # (H, W, C)
        q_t = jnp.transpose(q, (1, 0, 2))                  # bf16 transposes only
        k_t = jnp.transpose(k, (1, 0, 2))
        v_t = jnp.transpose(v, (1, 0, 2))

        # W branch (same row): e_w[i,j,j'] = q[i,j,:]·k[i,j',:]          (MXU)
        e_w = jnp.einsum('ijc,ikc->ijk', q, k,
                         preferred_element_type=jnp.float32)        # (H, W, W)
        # H branch (same column), transposed layout:
        # e_h[j,i,i'] = q[i,j,:]·k[i',j,:], diagonal masked out         (MXU)
        e_h = jnp.einsum('jic,jkc->jik', q_t, k_t,
                         preferred_element_type=jnp.float32) + diag  # (W, H, H)

        # joint softmax over the concatenated H + W scores per position (i, j)
        m = jnp.maximum(jnp.max(e_w, axis=-1), jnp.max(e_h, axis=-1).T)  # (H, W)
        p_w = jnp.exp(e_w - m[:, :, None])
        p_h = jnp.exp(e_h - m.T[:, :, None])
        denom = jnp.sum(p_w, axis=-1) + jnp.sum(p_h, axis=-1).T          # (H, W)
        inv = pl.reciprocal(denom, approx=True)                          # (EUP)

        # attention-weighted aggregation of V (MXU)
        o_w = jnp.einsum('ijk,ikd->ijd', p_w.astype(jnp.bfloat16), v,
                         preferred_element_type=jnp.float32)             # (H, W, C)
        o_h = jnp.transpose(
            jnp.einsum('jik,jkd->jid', p_h.astype(jnp.bfloat16), v_t,
                       preferred_element_type=jnp.float32), (1, 0, 2))   # (H, W, C)

        x = gamma * ((o_h + o_w) * inv[:, :, None]) + x

    o_ref[0] = x


def pallas_cca(y1, stats1, bn_g, bn_b, gamma, wqkv, bqkv, *, recurrence, n_rows):
    B, H, W, C = y1.shape
    D = wqkv.shape[1]
    cqp = (D - C) // 2
    kern = functools.partial(_cca_kernel, inv_m=1.0 / float(n_rows),
                             recurrence=recurrence, cqp=cqp)
    return pl.pallas_call(
        kern,
        grid=(B,),
        in_specs=[pl.BlockSpec((1, H, W, C), lambda b: (b, 0, 0, 0)),   # y (bf16)
                  pl.BlockSpec((2, C), lambda b: (0, 0)),               # bn stats
                  pl.BlockSpec((1, C), lambda b: (0, 0)),               # bn gamma
                  pl.BlockSpec((1, C), lambda b: (0, 0)),               # bn beta
                  pl.BlockSpec((1, 1), lambda b: (0, 0)),               # gamma_att
                  pl.BlockSpec((C, D), lambda b: (0, 0)),               # wqkv
                  pl.BlockSpec((1, D), lambda b: (0, 0))],              # bqkv
        out_specs=pl.BlockSpec((1, H, W, C), lambda b: (b, 0, 0, 0)),
        out_shape=jax.ShapeDtypeStruct((B, H, W, C), jnp.float32),
        compiler_params=pltpu.CompilerParams(dimension_semantics=("parallel",)),
    )(y1, stats1, bn_g.reshape(1, C).astype(jnp.float32),
      bn_b.reshape(1, C).astype(jnp.float32),
      gamma.reshape(1, 1).astype(jnp.float32), wqkv, bqkv)


# --------------------------------------------------------------------------
# Fused BatchNorm + 1x1 classification conv (row-tiled)
# --------------------------------------------------------------------------

def _bn_cls_kernel(y_ref, stats_ref, g_ref, b_ref, w_ref, bias_ref, o_ref,
                   *, inv_m):
    mean = stats_ref[0:1, :] * inv_m
    var = stats_ref[1:2, :] * inv_m - mean * mean
    scale = g_ref[...] * lax.rsqrt(var + 1e-5)
    shift = b_ref[...] - mean * scale
    xn = (y_ref[...].astype(jnp.float32) * scale + shift).astype(jnp.bfloat16)
    o_ref[...] = (jnp.dot(xn, w_ref[...], preferred_element_type=jnp.float32)
                  + bias_ref[...])


def pallas_bn_cls(y2, stats2, g, b, w_cls, b_cls, *, n_rows, tm_max=512):
    M, C = y2.shape
    N = w_cls.shape[1]
    tm = M if M <= tm_max else tm_max
    Mp = _round_up(M, tm)
    yp = jnp.pad(y2, ((0, Mp - M), (0, 0))) if Mp != M else y2
    kern = functools.partial(_bn_cls_kernel, inv_m=1.0 / float(n_rows))
    out = pl.pallas_call(
        kern,
        grid=(Mp // tm,),
        in_specs=[pl.BlockSpec((tm, C), lambda i: (i, 0)),
                  pl.BlockSpec((2, C), lambda i: (0, 0)),
                  pl.BlockSpec((1, C), lambda i: (0, 0)),
                  pl.BlockSpec((1, C), lambda i: (0, 0)),
                  pl.BlockSpec((C, N), lambda i: (0, 0)),
                  pl.BlockSpec((1, N), lambda i: (0, 0))],
        out_specs=pl.BlockSpec((tm, N), lambda i: (i, 0)),
        out_shape=jax.ShapeDtypeStruct((Mp, N), jnp.float32),
        compiler_params=pltpu.CompilerParams(dimension_semantics=("parallel",)),
    )(yp, stats2, g.reshape(1, C).astype(jnp.float32),
      b.reshape(1, C).astype(jnp.float32), w_cls,
      b_cls.reshape(1, N).astype(jnp.float32))
    return out[:M] if Mp != M else out


# --------------------------------------------------------------------------
# 16x bilinear upsample (align_corners=True), NCHW emitted directly
# --------------------------------------------------------------------------

def _interp_matrix(n_out, n_in):
    i = jnp.arange(n_out, dtype=jnp.float32)
    src = i * (n_in - 1) / (n_out - 1)
    i0 = jnp.clip(jnp.floor(src).astype(jnp.int32), 0, n_in - 2)
    frac = src - i0.astype(jnp.float32)
    oh0 = jax.nn.one_hot(i0, n_in, dtype=jnp.float32)
    oh1 = jax.nn.one_hot(i0 + 1, n_in, dtype=jnp.float32)
    return oh0 * (1.0 - frac)[:, None] + oh1 * frac[:, None]


def _upsample_kernel(x_ref, uh_ref, uwT_ref, o_ref):
    plane = x_ref[0, 0].astype(jnp.bfloat16)                               # (H, W)
    t = jnp.dot(uh_ref[...], plane,
                preferred_element_type=jnp.float32).astype(jnp.bfloat16)   # (Ho, W)
    o_ref[0, 0] = jnp.dot(t, uwT_ref[...], preferred_element_type=jnp.float32)


def pallas_upsample_nchw(x_nchw, scale):
    """(B, C, H, W) -> (B, C, H*scale, W*scale); fused H- and W-pass per
    (batch, channel) plane, bf16 MXU operands, NCHW written directly."""
    B, C, H, W = x_nchw.shape
    Ho, Wo = H * scale, W * scale
    uh = _interp_matrix(Ho, H).astype(jnp.bfloat16)          # (Ho, H)
    uwT = _interp_matrix(Wo, W).T.astype(jnp.bfloat16)       # (W, Wo)
    return pl.pallas_call(
        _upsample_kernel,
        grid=(B, C),
        in_specs=[pl.BlockSpec((1, 1, H, W), lambda b, c: (b, c, 0, 0)),
                  pl.BlockSpec((Ho, H), lambda b, c: (0, 0)),
                  pl.BlockSpec((W, Wo), lambda b, c: (0, 0))],
        out_specs=pl.BlockSpec((1, 1, Ho, Wo), lambda b, c: (b, c, 0, 0)),
        out_shape=jax.ShapeDtypeStruct((B, C, Ho, Wo), jnp.float32),
        compiler_params=pltpu.CompilerParams(
            dimension_semantics=("parallel", "parallel")),
    )(x_nchw, uh, uwT)


# --------------------------------------------------------------------------
# Module forward
# --------------------------------------------------------------------------

def rcca_forward(x_nchw, p, recurrence=2):
    B, Cin, H, W = x_nchw.shape
    inter = Cin // 4
    n_rows = B * H * W
    x_nhwc = jnp.transpose(x_nchw, (0, 2, 3, 1))
    x_bf16 = x_nhwc.astype(jnp.bfloat16)

    # conv_in: 3x3 conv (no bias) with fused BatchNorm column statistics
    y1, stats1 = pallas_conv3(x_bf16, p['conv_in_w'], with_stats=True)

    # BatchNorm + recurrent criss-cross attention fused in one kernel per batch
    cca = pallas_cca(y1, stats1, p['bn1_g'], p['bn1_b'], p['gamma'],
                     p['wqkv'], p['bqkv'], recurrence=recurrence, n_rows=n_rows)

    # conv_out: 3x3 conv, no bias
    out = pallas_conv3(cca.astype(jnp.bfloat16), p['conv_out_w'], with_stats=False)

    # cls_seg: cat([x, out]) -> 3x3 conv (+ BN stats) -> fused BN + 1x1 cls conv
    # (commuted ahead of the 16x align_corners upsample) -> upsample to NCHW.
    cat = jnp.concatenate([x_bf16, out], axis=-1)
    y2, stats2 = pallas_conv3(cat, p['cls0_w'], with_stats=True)
    logits = pallas_bn_cls(y2.reshape(B * H * W, inter), stats2,
                           p['bn2_g'], p['bn2_b'], p['cls1_w'], p['cls1_b'],
                           n_rows=n_rows)
    nc = p['cls1_w'].shape[1]
    logits_nchw = jnp.transpose(logits.reshape(B, H, W, nc), (0, 3, 1, 2))
    return pallas_upsample_nchw(logits_nchw, 16)      # (B, classes, 16H, 16W)


# --------------------------------------------------------------------------
# Deterministic parameter initialization (shapes follow __init__)
# --------------------------------------------------------------------------

def conv3_weight_to_mat(w):   # torch (Cout, Cin, 3, 3) -> (9*Cin, Cout)
    return jnp.transpose(w, (2, 3, 1, 0)).reshape(-1, w.shape[0])


def conv1_weight_to_mat(w):   # torch (Cout, Cin, 1, 1) -> (Cin, Cout)
    return jnp.transpose(w[:, :, 0, 0], (1, 0))


def init_params(key, in_channels, num_classes):
    inter = in_channels // 4
    cq = inter // 8
    cqp = _round_up(cq, 128)          # 128-lane-aligned q/k segments
    ks = jax.random.split(key, 16)

    def nrm(k, shape, scale):
        return scale * jax.random.normal(k, shape, jnp.float32)

    p = {}
    p['conv_in_w'] = conv3_weight_to_mat(
        nrm(ks[0], (inter, in_channels, 3, 3),
            (2.0 / (9 * in_channels)) ** 0.5)).astype(jnp.bfloat16)
    p['bn1_g'] = 1.0 + 0.1 * jax.random.normal(ks[1], (inter,), jnp.float32)
    p['bn1_b'] = 0.1 * jax.random.normal(ks[2], (inter,), jnp.float32)

    wq = conv1_weight_to_mat(nrm(ks[3], (cq, inter, 1, 1), (1.0 / inter) ** 0.5))
    bq = 0.1 * jax.random.normal(ks[4], (cq,), jnp.float32)
    wk = conv1_weight_to_mat(nrm(ks[5], (cq, inter, 1, 1), (1.0 / inter) ** 0.5))
    bk = 0.1 * jax.random.normal(ks[6], (cq,), jnp.float32)
    wv = conv1_weight_to_mat(nrm(ks[7], (inter, inter, 1, 1), (1.0 / inter) ** 0.5))
    bv = 0.1 * jax.random.normal(ks[8], (inter,), jnp.float32)

    def padq(w):   # (inter, cq) -> (inter, cqp), zero columns
        return jnp.pad(w, ((0, 0), (0, cqp - cq)))

    # fused Q|K|V projection (q/k zero-padded to 128-aligned lane segments)
    p['wqkv'] = jnp.concatenate([padq(wq), padq(wk), wv],
                                axis=1).astype(jnp.bfloat16)
    p['bqkv'] = jnp.concatenate(
        [jnp.pad(bq, (0, cqp - cq)), jnp.pad(bk, (0, cqp - cq)), bv]
    ).reshape(1, -1).astype(jnp.float32)
    # nn.Parameter(torch.zeros(1)) in the reference; nonzero here so the
    # attention path actually contributes to the output.
    p['gamma'] = jnp.array([0.3], jnp.float32)

    p['conv_out_w'] = conv3_weight_to_mat(
        nrm(ks[9], (inter, inter, 3, 3),
            (2.0 / (9 * inter)) ** 0.5)).astype(jnp.bfloat16)
    p['cls0_w'] = conv3_weight_to_mat(
        nrm(ks[10], (inter, in_channels + inter, 3, 3),
            (2.0 / (9 * (in_channels + inter))) ** 0.5)).astype(jnp.bfloat16)
    p['bn2_g'] = 1.0 + 0.1 * jax.random.normal(ks[11], (inter,), jnp.float32)
    p['bn2_b'] = 0.1 * jax.random.normal(ks[12], (inter,), jnp.float32)
    p['cls1_w'] = conv1_weight_to_mat(
        nrm(ks[13], (num_classes, inter, 1, 1),
            (1.0 / inter) ** 0.5)).astype(jnp.bfloat16)
    p['cls1_b'] = 0.1 * jax.random.normal(ks[14], (num_classes,), jnp.float32)
    return p


# --------------------------------------------------------------------------

if __name__ == "__main__":
    key = jax.random.PRNGKey(0)
    kx, kp = jax.random.split(key)

    # Small shapes consistent with the module: in_channels divisible by 4,
    # inter_channels divisible by 8 (for the attention Q/K projection).
    B, Cin, H, W = 2, 64, 8, 8
    num_classes, recurrence = 5, 2

    params = init_params(kp, Cin, num_classes)
    x = jax.random.normal(kx, (B, Cin, H, W), jnp.float32)

    fwd = jax.jit(functools.partial(rcca_forward, recurrence=recurrence))
    out = jax.block_until_ready(fwd(x, params))

    assert out.shape == (B, num_classes, 16 * H, 16 * W), out.shape
    assert bool(jnp.all(jnp.isfinite(out)))
    print("KERNEL_OK")
</pallas_src>

<mosaic_0001>
module attributes {stable_mosaic.version = 11 : i64} {
  func.func @_conv3_kernel(%arg0: i32, %arg1: memref<1x10x10x16xbf16, #tpu.memory_space<vmem>>, %arg2: memref<144x16xbf16, #tpu.memory_space<vmem>>, %arg3: memref<1x8x8x16xbf16, #tpu.memory_space<vmem>>) attributes {dimension_semantics = [#tpu.dimension_semantics<parallel>], iteration_bounds = array<i64: 2>, scalar_prefetch = 0 : i64, scratch_operands = 0 : i64, tpu.core_type = #tpu.core_type<tc>, window_params = [{transform_indices = @transform_0, window_bounds = array<i64: 1, 10, 10, 16>}, {pipeline_mode = #tpu.pipeline_mode<synchronous>, transform_indices = @transform_1, window_bounds = array<i64: 144, 16>}, {transform_indices = @transform_2, window_bounds = array<i64: 1, 8, 8, 16>}]} {
    %c0 = arith.constant 0 : index
    %c0_0 = arith.constant 0 : index
    %c0_1 = arith.constant 0 : index
    %c0_2 = arith.constant 0 : index
    %0 = vector.load %arg1[%c0, %c0_0, %c0_1, %c0_2] : memref<1x10x10x16xbf16, #tpu.memory_space<vmem>>, vector<1x10x10x16xbf16>
    %1 = vector.shape_cast %0 : vector<1x10x10x16xbf16> to vector<10x10x16xbf16>
    %cst = arith.constant 0.000000e+00 : f32
    %2 = vector.broadcast %cst : f32 to vector<64x16xf32>
    %3 = vector.extract_strided_slice %1 {offsets = [0, 0, 0], sizes = [8, 8, 16], strides = [1, 1, 1]} : vector<10x10x16xbf16> to vector<8x8x16xbf16>
    %4 = vector.shape_cast %3 : vector<8x8x16xbf16> to vector<64x16xbf16>
    %c0_3 = arith.constant 0 : index
    %c0_4 = arith.constant 0 : index
    %5 = vector.load %arg2[%c0_3, %c0_4] : memref<144x16xbf16, #tpu.memory_space<vmem>>, vector<16x16xbf16>
    %cst_5 = arith.constant dense<0.000000e+00> : vector<64x16xf32>
    %6 = tpu.matmul %4, %5, %cst_5 {dimension_numbers = #tpu.dot_dimension_numbers<[1], [0], [0], [1], [0, 0, 1, 1], [], []>} : vector<64x16xbf16>, vector<16x16xbf16>, vector<64x16xf32> -> vector<64x16xf32>
    %7 = arith.addf %2, %6 : vector<64x16xf32>
    %8 = vector.extract_strided_slice %1 {offsets = [0, 1, 0], sizes = [8, 8, 16], strides = [1, 1, 1]} : vector<10x10x16xbf16> to vector<8x8x16xbf16>
    %9 = vector.shape_cast %8 : vector<8x8x16xbf16> to vector<64x16xbf16>
    %c16 = arith.constant 16 : index
    %c0_6 = arith.constant 0 : index
    %10 = vector.load %arg2[%c16, %c0_6] : memref<144x16xbf16, #tpu.memory_space<vmem>>, vector<16x16xbf16>
    %cst_7 = arith.constant dense<0.000000e+00> : vector<64x16xf32>
    %11 = tpu.matmul %9, %10, %cst_7 {dimension_numbers = #tpu.dot_dimension_numbers<[1], [0], [0], [1], [0, 0, 1, 1], [], []>} : vector<64x16xbf16>, vector<16x16xbf16>, vector<64x16xf32> -> vector<64x16xf32>
    %12 = arith.addf %7, %11 : vector<64x16xf32>
    %13 = vector.extract_strided_slice %1 {offsets = [0, 2, 0], sizes = [8, 8, 16], strides = [1, 1, 1]} : vector<10x10x16xbf16> to vector<8x8x16xbf16>
    %14 = vector.shape_cast %13 : vector<8x8x16xbf16> to vector<64x16xbf16>
    %c32 = arith.constant 32 : index
    %c0_8 = arith.constant 0 : index
    %15 = vector.load %arg2[%c32, %c0_8] : memref<144x16xbf16, #tpu.memory_space<vmem>>, vector<16x16xbf16>
    %cst_9 = arith.constant dense<0.000000e+00> : vector<64x16xf32>
    %16 = tpu.matmul %14, %15, %cst_9 {dimension_numbers = #tpu.dot_dimension_numbers<[1], [0], [0], [1], [0, 0, 1, 1], [], []>} : vector<64x16xbf16>, vector<16x16xbf16>, vector<64x16xf32> -> vector<64x16xf32>
    %17 = arith.addf %12, %16 : vector<64x16xf32>
    %18 = vector.extract_strided_slice %1 {offsets = [1, 0, 0], sizes = [8, 8, 16], strides = [1, 1, 1]} : vector<10x10x16xbf16> to vector<8x8x16xbf16>
    %19 = vector.shape_cast %18 : vector<8x8x16xbf16> to vector<64x16xbf16>
    %c48 = arith.constant 48 : index
    %c0_10 = arith.constant 0 : index
    %20 = vector.load %arg2[%c48, %c0_10] : memref<144x16xbf16, #tpu.memory_space<vmem>>, vector<16x16xbf16>
    %cst_11 = arith.constant dense<0.000000e+00> : vector<64x16xf32>
    %21 = tpu.matmul %19, %20, %cst_11 {dimension_numbers = #tpu.dot_dimension_numbers<[1], [0], [0], [1], [0, 0, 1, 1], [], []>} : vector<64x16xbf16>, vector<16x16xbf16>, vector<64x16xf32> -> vector<64x16xf32>
    %22 = arith.addf %17, %21 : vector<64x16xf32>
    %23 = vector.extract_strided_slice %1 {offsets = [1, 1, 0], sizes = [8, 8, 16], strides = [1, 1, 1]} : vector<10x10x16xbf16> to vector<8x8x16xbf16>
    %24 = vector.shape_cast %23 : vector<8x8x16xbf16> to vector<64x16xbf16>
    %c64 = arith.constant 64 : index
    %c0_12 = arith.constant 0 : index
    %25 = vector.load %arg2[%c64, %c0_12] : memref<144x16xbf16, #tpu.memory_space<vmem>>, vector<16x16xbf16>
    %cst_13 = arith.constant dense<0.000000e+00> : vector<64x16xf32>
    %26 = tpu.matmul %24, %25, %cst_13 {dimension_numbers = #tpu.dot_dimension_numbers<[1], [0], [0], [1], [0, 0, 1, 1], [], []>} : vector<64x16xbf16>, vector<16x16xbf16>, vector<64x16xf32> -> vector<64x16xf32>
    %27 = arith.addf %22, %26 : vector<64x16xf32>
    %28 = vector.extract_strided_slice %1 {offsets = [1, 2, 0], sizes = [8, 8, 16], strides = [1, 1, 1]} : vector<10x10x16xbf16> to vector<8x8x16xbf16>
    %29 = vector.shape_cast %28 : vector<8x8x16xbf16> to vector<64x16xbf16>
    %c80 = arith.constant 80 : index
    %c0_14 = arith.constant 0 : index
    %30 = vector.load %arg2[%c80, %c0_14] : memref<144x16xbf16, #tpu.memory_space<vmem>>, vector<16x16xbf16>
    %cst_15 = arith.constant dense<0.000000e+00> : vector<64x16xf32>
    %31 = tpu.matmul %29, %30, %cst_15 {dimension_numbers = #tpu.dot_dimension_numbers<[1], [0], [0], [1], [0, 0, 1, 1], [], []>} : vector<64x16xbf16>, vector<16x16xbf16>, vector<64x16xf32> -> vector<64x16xf32>
    %32 = arith.addf %27, %31 : vector<64x16xf32>
    %33 = vector.extract_strided_slice %1 {offsets = [2, 0, 0], sizes = [8, 8, 16], strides = [1, 1, 1]} : vector<10x10x16xbf16> to vector<8x8x16xbf16>
    %34 = vector.shape_cast %33 : vector<8x8x16xbf16> to vector<64x16xbf16>
    %c96 = arith.constant 96 : index
    %c0_16 = arith.constant 0 : index
    %35 = vector.load %arg2[%c96, %c0_16] : memref<144x16xbf16, #tpu.memory_space<vmem>>, vector<16x16xbf16>
    %cst_17 = arith.constant dense<0.000000e+00> : vector<64x16xf32>
    %36 = tpu.matmul %34, %35, %cst_17 {dimension_numbers = #tpu.dot_dimension_numbers<[1], [0], [0], [1], [0, 0, 1, 1], [], []>} : vector<64x16xbf16>, vector<16x16xbf16>, vector<64x16xf32> -> vector<64x16xf32>
    %37 = arith.addf %32, %36 : vector<64x16xf32>
    %38 = vector.extract_strided_slice %1 {offsets = [2, 1, 0], sizes = [8, 8, 16], strides = [1, 1, 1]} : vector<10x10x16xbf16> to vector<8x8x16xbf16>
    %39 = vector.shape_cast %38 : vector<8x8x16xbf16> to vector<64x16xbf16>
    %c112 = arith.constant 112 : index
    %c0_18 = arith.constant 0 : index
    %40 = vector.load %arg2[%c112, %c0_18] : memref<144x16xbf16, #tpu.memory_space<vmem>>, vector<16x16xbf16>
    %cst_19 = arith.constant dense<0.000000e+00> : vector<64x16xf32>
    %41 = tpu.matmul %39, %40, %cst_19 {dimension_numbers = #tpu.dot_dimension_numbers<[1], [0], [0], [1], [0, 0, 1, 1], [], []>} : vector<64x16xbf16>, vector<16x16xbf16>, vector<64x16xf32> -> vector<64x16xf32>
    %42 = arith.addf %37, %41 : vector<64x16xf32>
    %43 = vector.extract_strided_slice %1 {offsets = [2, 2, 0], sizes = [8, 8, 16], strides = [1, 1, 1]} : vector<10x10x16xbf16> to vector<8x8x16xbf16>
    %44 = vector.shape_cast %43 : vector<8x8x16xbf16> to vector<64x16xbf16>
    %c128 = arith.constant 128 : index
    %c0_20 = arith.constant 0 : index
    %45 = vector.load %arg2[%c128, %c0_20] : memref<144x16xbf16, #tpu.memory_space<vmem>>, vector<16x16xbf16>
    %cst_21 = arith.constant dense<0.000000e+00> : vector<64x16xf32>
    %46 = tpu.matmul %44, %45, %cst_21 {dimension_numbers = #tpu.dot_dimension_numbers<[1], [0], [0], [1], [0, 0, 1, 1], [], []>} : vector<64x16xbf16>, vector<16x16xbf16>, vector<64x16xf32> -> vector<64x16xf32>
    %47 = arith.addf %42, %46 : vector<64x16xf32>
    %48 = vector.shape_cast %47 : vector<64x16xf32> to vector<8x8x16xf32>
    %49 = arith.truncf %48 : vector<8x8x16xf32> to vector<8x8x16xbf16>
    %c0_22 = arith.constant 0 : index
    %c0_23 = arith.constant 0 : index
    %c0_24 = arith.constant 0 : index
    %c0_25 = arith.constant 0 : index
    %50 = vector.load %arg3[%c0_22, %c0_23, %c0_24, %c0_25] : memref<1x8x8x16xbf16, #tpu.memory_space<vmem>>, vector<1x8x8x16xbf16>
    %51 = vector.shape_cast %50 : vector<1x8x8x16xbf16> to vector<8x8x16xbf16>
    %52 = vector.shape_cast %49 : vector<8x8x16xbf16> to vector<1x8x8x16xbf16>
    tpu.vector_store %arg3[%c0_22, %c0_23, %c0_24, %c0_25], %52 {strides = array<i32>} : memref<1x8x8x16xbf16, #tpu.memory_space<vmem>>, vector<1x8x8x16xbf16>,
    return
  }
  func.func @transform_0(%arg0: i32) -> (i32, i32, i32, i32) {
    %c0_i32 = arith.constant 0 : i32
    %c0_i32_0 = arith.constant 0 : i32
    %c0_i32_1 = arith.constant 0 : i32
    %c0_i32_2 = arith.constant 0 : i32
    return %arg0, %c0_i32, %c0_i32_0, %c0_i32_1 : i32, i32, i32, i32
  }
  func.func @transform_1(%arg0: i32) -> (i32, i32) {
    %c0_i32 = arith.constant 0 : i32
    %c0_i32_0 = arith.constant 0 : i32
    %c0_i32_1 = arith.constant 0 : i32
    return %c0_i32, %c0_i32_0 : i32, i32
  }
  func.func @transform_2(%arg0: i32) -> (i32, i32, i32, i32) {
    %c0_i32 = arith.constant 0 : i32
    %c0_i32_0 = arith.constant 0 : i32
    %c0_i32_1 = arith.constant 0 : i32
    %c0_i32_2 = arith.constant 0 : i32
    return %arg0, %c0_i32, %c0_i32_0, %c0_i32_1 : i32, i32, i32, i32
  }
}

module attributes {stable_mosaic.version = 11 : i64} {
  func.func @_conv3_stats_kernel(%arg0: i32, %arg1: memref<1x10x10x64xbf16, #tpu.memory_space<vmem>>, %arg2: memref<576x16xbf16, #tpu.memory_space<vmem>>, %arg3: memref<1x8x8x16xbf16, #tpu.memory_space<vmem>>, %arg4: memref<2x16xf32, #tpu.memory_space<vmem>>, %arg5: memref<2x16xf32, #tpu.memory_space<vmem>>) attributes {dimension_semantics = [#tpu.dimension_semantics<arbitrary>], iteration_bounds = array<i64: 2>, scalar_prefetch = 0 : i64, scratch_operands = 1 : i64, tpu.core_type = #tpu.core_type<tc>, window_params = [{transform_indices = @transform_0, window_bounds = array<i64: 1, 10, 10, 64>}, {pipeline_mode = #tpu.pipeline_mode<synchronous>, transform_indices = @transform_1, window_bounds = array<i64: 576, 16>}, {transform_indices = @transform_2, window_bounds = array<i64: 1, 8, 8, 16>}, {pipeline_mode = #tpu.pipeline_mode<synchronous>, transform_indices = @transform_3, window_bounds = array<i64: 2, 16>}]} {
    %c0 = arith.constant 0 : index
    %c0_0 = arith.constant 0 : index
    %c0_1 = arith.constant 0 : index
    %c0_2 = arith.constant 0 : index
    %0 = vector.load %arg1[%c0, %c0_0, %c0_1, %c0_2] : memref<1x10x10x64xbf16, #tpu.memory_space<vmem>>, vector<1x10x10x64xbf16>
    %1 = vector.shape_cast %0 : vector<1x10x10x64xbf16> to vector<10x10x64xbf16>
    %cst = arith.constant 0.000000e+00 : f32
    %2 = vector.broadcast %cst : f32 to vector<64x16xf32>
    %3 = vector.extract_strided_slice %1 {offsets = [0, 0, 0], sizes = [8, 8, 64], strides = [1, 1, 1]} : vector<10x10x64xbf16> to vector<8x8x64xbf16>
    %4 = vector.shape_cast %3 : vector<8x8x64xbf16> to vector<64x64xbf16>
    %c0_3 = arith.constant 0 : index
    %c0_4 = arith.constant 0 : index
    %5 = vector.load %arg2[%c0_3, %c0_4] : memref<576x16xbf16, #tpu.memory_space<vmem>>, vector<64x16xbf16>
    %cst_5 = arith.constant dense<0.000000e+00> : vector<64x16xf32>
    %6 = tpu.matmul %4, %5, %cst_5 {dimension_numbers = #tpu.dot_dimension_numbers<[1], [0], [0], [1], [0, 0, 1, 1], [], []>} : vector<64x64xbf16>, vector<64x16xbf16>, vector<64x16xf32> -> vector<64x16xf32>
    %7 = arith.addf %2, %6 : vector<64x16xf32>
    %8 = vector.extract_strided_slice %1 {offsets = [0, 1, 0], sizes = [8, 8, 64], strides = [1, 1, 1]} : vector<10x10x64xbf16> to vector<8x8x64xbf16>
    %9 = vector.shape_cast %8 : vector<8x8x64xbf16> to vector<64x64xbf16>
    %c64 = arith.constant 64 : index
    %c0_6 = arith.constant 0 : index
    %10 = vector.load %arg2[%c64, %c0_6] : memref<576x16xbf16, #tpu.memory_space<vmem>>, vector<64x16xbf16>
    %cst_7 = arith.constant dense<0.000000e+00> : vector<64x16xf32>
    %11 = tpu.matmul %9, %10, %cst_7 {dimension_numbers = #tpu.dot_dimension_numbers<[1], [0], [0], [1], [0, 0, 1, 1], [], []>} : vector<64x64xbf16>, vector<64x16xbf16>, vector<64x16xf32> -> vector<64x16xf32>
    %12 = arith.addf %7, %11 : vector<64x16xf32>
    %13 = vector.extract_strided_slice %1 {offsets = [0, 2, 0], sizes = [8, 8, 64], strides = [1, 1, 1]} : vector<10x10x64xbf16> to vector<8x8x64xbf16>
    %14 = vector.shape_cast %13 : vector<8x8x64xbf16> to vector<64x64xbf16>
    %c128 = arith.constant 128 : index
    %c0_8 = arith.constant 0 : index
    %15 = vector.load %arg2[%c128, %c0_8] : memref<576x16xbf16, #tpu.memory_space<vmem>>, vector<64x16xbf16>
    %cst_9 = arith.constant dense<0.000000e+00> : vector<64x16xf32>
    %16 = tpu.matmul %14, %15, %cst_9 {dimension_numbers = #tpu.dot_dimension_numbers<[1], [0], [0], [1], [0, 0, 1, 1], [], []>} : vector<64x64xbf16>, vector<64x16xbf16>, vector<64x16xf32> -> vector<64x16xf32>
    %17 = arith.addf %12, %16 : vector<64x16xf32>
    %18 = vector.extract_strided_slice %1 {offsets = [1, 0, 0], sizes = [8, 8, 64], strides = [1, 1, 1]} : vector<10x10x64xbf16> to vector<8x8x64xbf16>
    %19 = vector.shape_cast %18 : vector<8x8x64xbf16> to vector<64x64xbf16>
    %c192 = arith.constant 192 : index
    %c0_10 = arith.constant 0 : index
    %20 = vector.load %arg2[%c192, %c0_10] : memref<576x16xbf16, #tpu.memory_space<vmem>>, vector<64x16xbf16>
    %cst_11 = arith.constant dense<0.000000e+00> : vector<64x16xf32>
    %21 = tpu.matmul %19, %20, %cst_11 {dimension_numbers = #tpu.dot_dimension_numbers<[1], [0], [0], [1], [0, 0, 1, 1], [], []>} : vector<64x64xbf16>, vector<64x16xbf16>, vector<64x16xf32> -> vector<64x16xf32>
    %22 = arith.addf %17, %21 : vector<64x16xf32>
    %23 = vector.extract_strided_slice %1 {offsets = [1, 1, 0], sizes = [8, 8, 64], strides = [1, 1, 1]} : vector<10x10x64xbf16> to vector<8x8x64xbf16>
    %24 = vector.shape_cast %23 : vector<8x8x64xbf16> to vector<64x64xbf16>
    %c256 = arith.constant 256 : index
    %c0_12 = arith.constant 0 : index
    %25 = vector.load %arg2[%c256, %c0_12] : memref<576x16xbf16, #tpu.memory_space<vmem>>, vector<64x16xbf16>
    %cst_13 = arith.constant dense<0.000000e+00> : vector<64x16xf32>
    %26 = tpu.matmul %24, %25, %cst_13 {dimension_numbers = #tpu.dot_dimension_numbers<[1], [0], [0], [1], [0, 0, 1, 1], [], []>} : vector<64x64xbf16>, vector<64x16xbf16>, vector<64x16xf32> -> vector<64x16xf32>
    %27 = arith.addf %22, %26 : vector<64x16xf32>
    %28 = vector.extract_strided_slice %1 {offsets = [1, 2, 0], sizes = [8, 8, 64], strides = [1, 1, 1]} : vector<10x10x64xbf16> to vector<8x8x64xbf16>
    %29 = vector.shape_cast %28 : vector<8x8x64xbf16> to vector<64x64xbf16>
    %c320 = arith.constant 320 : index
    %c0_14 = arith.constant 0 : index
    %30 = vector.load %arg2[%c320, %c0_14] : memref<576x16xbf16, #tpu.memory_space<vmem>>, vector<64x16xbf16>
    %cst_15 = arith.constant dense<0.000000e+00> : vector<64x16xf32>
    %31 = tpu.matmul %29, %30, %cst_15 {dimension_numbers = #tpu.dot_dimension_numbers<[1], [0], [0], [1], [0, 0, 1, 1], [], []>} : vector<64x64xbf16>, vector<64x16xbf16>, vector<64x16xf32> -> vector<64x16xf32>
    %32 = arith.addf %27, %31 : vector<64x16xf32>
    %33 = vector.extract_strided_slice %1 {offsets = [2, 0, 0], sizes = [8, 8, 64], strides = [1, 1, 1]} : vector<10x10x64xbf16> to vector<8x8x64xbf16>
    %34 = vector.shape_cast %33 : vector<8x8x64xbf16> to vector<64x64xbf16>
    %c384 = arith.constant 384 : index
    %c0_16 = arith.constant 0 : index
    %35 = vector.load %arg2[%c384, %c0_16] : memref<576x16xbf16, #tpu.memory_space<vmem>>, vector<64x16xbf16>
    %cst_17 = arith.constant dense<0.000000e+00> : vector<64x16xf32>
    %36 = tpu.matmul %34, %35, %cst_17 {dimension_numbers = #tpu.dot_dimension_numbers<[1], [0], [0], [1], [0, 0, 1, 1], [], []>} : vector<64x64xbf16>, vector<64x16xbf16>, vector<64x16xf32> -> vector<64x16xf32>
    %37 = arith.addf %32, %36 : vector<64x16xf32>
    %38 = vector.extract_strided_slice %1 {offsets = [2, 1, 0], sizes = [8, 8, 64], strides = [1, 1, 1]} : vector<10x10x64xbf16> to vector<8x8x64xbf16>
    %39 = vector.shape_cast %38 : vector<8x8x64xbf16> to vector<64x64xbf16>
    %c448 = arith.constant 448 : index
    %c0_18 = arith.constant 0 : index
    %40 = vector.load %arg2[%c448, %c0_18] : memref<576x16xbf16, #tpu.memory_space<vmem>>, vector<64x16xbf16>
    %cst_19 = arith.constant dense<0.000000e+00> : vector<64x16xf32>
    %41 = tpu.matmul %39, %40, %cst_19 {dimension_numbers = #tpu.dot_dimension_numbers<[1], [0], [0], [1], [0, 0, 1, 1], [], []>} : vector<64x64xbf16>, vector<64x16xbf16>, vector<64x16xf32> -> vector<64x16xf32>
    %42 = arith.addf %37, %41 : vector<64x16xf32>
    %43 = vector.extract_strided_slice %1 {offsets = [2, 2, 0], sizes = [8, 8, 64], strides = [1, 1, 1]} : vector<10x10x64xbf16> to vector<8x8x64xbf16>
    %44 = vector.shape_cast %43 : vector<8x8x64xbf16> to vector<64x64xbf16>
    %c512 = arith.constant 512 : index
    %c0_20 = arith.constant 0 : index
    %45 = vector.load %arg2[%c512, %c0_20] : memref<576x16xbf16, #tpu.memory_space<vmem>>, vector<64x16xbf16>
    %cst_21 = arith.constant dense<0.000000e+00> : vector<64x16xf32>
    %46 = tpu.matmul %44, %45, %cst_21 {dimension_numbers = #tpu.dot_dimension_numbers<[1], [0], [0], [1], [0, 0, 1, 1], [], []>} : vector<64x64xbf16>, vector<64x16xbf16>, vector<64x16xf32> -> vector<64x16xf32>
    %47 = arith.addf %42, %46 : vector<64x16xf32>
    %48 = arith.truncf %47 : vector<64x16xf32> to vector<64x16xbf16>
    %49 = vector.shape_cast %48 : vector<64x16xbf16> to vector<8x8x16xbf16>
    %c0_22 = arith.constant 0 : index
    %c0_23 = arith.constant 0 : index
    %c0_24 = arith.constant 0 : index
    %c0_25 = arith.constant 0 : index
    %50 = vector.load %arg3[%c0_22, %c0_23, %c0_24, %c0_25] : memref<1x8x8x16xbf16, #tpu.memory_space<vmem>>, vector<1x8x8x16xbf16>
    %51 = vector.shape_cast %50 : vector<1x8x8x16xbf16> to vector<8x8x16xbf16>
    %52 = vector.shape_cast %49 : vector<8x8x16xbf16> to vector<1x8x8x16xbf16>
    tpu.vector_store %arg3[%c0_22, %c0_23, %c0_24, %c0_25], %52 {strides = array<i32>} : memref<1x8x8x16xbf16, #tpu.memory_space<vmem>>, vector<1x8x8x16xbf16>,
    %c0_i32 = arith.constant 0 : i32
    %53 = arith.cmpi eq, %arg0, %c0_i32 : i32
    %54 = arith.extui %53 : i1 to i32
    %c0_i32_26 = arith.constant 0 : i32
    %55 = arith.cmpi ne, %54, %c0_i32_26 : i32
    scf.if %55 {
      %cst_37 = arith.constant 0.000000e+00 : f32
      %71 = vector.broadcast %cst_37 : f32 to vector<2x16xf32>
      %c0_38 = arith.constant 0 : index
      %c0_39 = arith.constant 0 : index
      %72 = vector.load %arg5[%c0_38, %c0_39] : memref<2x16xf32, #tpu.memory_space<vmem>>, vector<2x16xf32>
      tpu.vector_store %arg5[%c0_38, %c0_39], %71 {strides = array<i32>} : memref<2x16xf32, #tpu.memory_space<vmem>>, vector<2x16xf32>,
    } else {
    }
    %56 = arith.extf %48 : vector<64x16xbf16> to vector<64x16xf32>
    %c0_27 = arith.constant 0 : index
    %c0_28 = arith.constant 0 : index
    %57 = vector.load %arg5[%c0_27, %c0_28] : memref<2x16xf32, #tpu.memory_space<vmem>>, vector<1x16xf32>
    %cst_29 = arith.constant dense<0.000000e+00> : vector<16xf32>
    %58 = vector.multi_reduction <add>, %56, %cst_29 [0] : vector<64x16xf32> to vector<16xf32>
    %59 = vector.shape_cast %58 : vector<16xf32> to vector<1x16xf32>
    %60 = arith.addf %57, %59 : vector<1x16xf32>
    %c0_30 = arith.constant 0 : index
    %c0_31 = arith.constant 0 : index
    %61 = vector.load %arg5[%c0_30, %c0_31] : memref<2x16xf32, #tpu.memory_space<vmem>>, vector<1x16xf32>
    tpu.vector_store %arg5[%c0_30, %c0_31], %60 {strides = array<i32>} : memref<2x16xf32, #tpu.memory_space<vmem>>, vector<1x16xf32>,
    %c1 = arith.constant 1 : index
    %c0_32 = arith.constant 0 : index
    %62 = vector.load %arg5[%c1, %c0_32] : memref<2x16xf32, #tpu.memory_space<vmem>>, vector<1x16xf32>
    %63 = arith.mulf %56, %56 : vector<64x16xf32>
    %cst_33 = arith.constant dense<0.000000e+00> : vector<16xf32>
    %64 = vector.multi_reduction <add>, %63, %cst_33 [0] : vector<64x16xf32> to vector<16xf32>
    %65 = vector.shape_cast %64 : vector<16xf32> to vector<1x16xf32>
    %66 = arith.addf %62, %65 : vector<1x16xf32>
    %c1_34 = arith.constant 1 : index
    %c0_35 = arith.constant 0 : index
    %67 = vector.load %arg5[%c1_34, %c0_35] : memref<2x16xf32, #tpu.memory_space<vmem>>, vector<1x16xf32>
    tpu.vector_store %arg5[%c1_34, %c0_35], %66 {strides = array<i32>} : memref<2x16xf32, #tpu.memory_space<vmem>>, vector<1x16xf32>,
    %c1_i32 = arith.constant 1 : i32
    %68 = arith.cmpi eq, %arg0, %c1_i32 : i32
    %69 = arith.extui %68 : i1 to i32
    %c0_i32_36 = arith.constant 0 : i32
    %70 = arith.cmpi ne, %69, %c0_i32_36 : i32
    scf.if %70 {
      %c0_37 = arith.constant 0 : index
      %c0_38 = arith.constant 0 : index
      %71 = vector.load %arg5[%c0_37, %c0_38] : memref<2x16xf32, #tpu.memory_space<vmem>>, vector<2x16xf32>
      %c0_39 = arith.constant 0 : index
      %c0_40 = arith.constant 0 : index
      %72 = vector.load %arg4[%c0_39, %c0_40] : memref<2x16xf32, #tpu.memory_space<vmem>>, vector<2x16xf32>
      tpu.vector_store %arg4[%c0_39, %c0_40], %71 {strides = array<i32>} : memref<2x16xf32, #tpu.memory_space<vmem>>, vector<2x16xf32>,
    } else {
    }
    return
  }
  func.func @transform_0(%arg0: i32) -> (i32, i32, i32, i32) {
    %c0_i32 = arith.constant 0 : i32
    %c0_i32_0 = arith.constant 0 : i32
    %c0_i32_1 = arith.constant 0 : i32
    %c0_i32_2 = arith.constant 0 : i32
    return %arg0, %c0_i32, %c0_i32_0, %c0_i32_1 : i32, i32, i32, i32
  }
  func.func @transform_1(%arg0: i32) -> (i32, i32) {
    %c0_i32 = arith.constant 0 : i32
    %c0_i32_0 = arith.constant 0 : i32
    %c0_i32_1 = arith.constant 0 : i32
    return %c0_i32, %c0_i32_0 : i32, i32
  }
  func.func @transform_2(%arg0: i32) -> (i32, i32, i32, i32) {
    %c0_i32 = arith.constant 0 : i32
    %c0_i32_0 = arith.constant 0 : i32
    %c0_i32_1 = arith.constant 0 : i32
    %c0_i32_2 = arith.constant 0 : i32
    return %arg0, %c0_i32, %c0_i32_0, %c0_i32_1 : i32, i32, i32, i32
  }
  func.func @transform_3(%arg0: i32) -> (i32, i32) {
    %c0_i32 = arith.constant 0 : i32
    %c0_i32_0 = arith.constant 0 : i32
    %c0_i32_1 = arith.constant 0 : i32
    return %c0_i32, %c0_i32_0 : i32, i32
  }
}

module attributes {stable_mosaic.version = 11 : i64} {
  func.func @_cca_kernel(%arg0: i32, %arg1: memref<1x8x8x16xbf16, #tpu.memory_space<vmem>>, %arg2: memref<2x16xf32, #tpu.memory_space<vmem>>, %arg3: memref<1x16xf32, #tpu.memory_space<vmem>>, %arg4: memref<1x16xf32, #tpu.memory_space<vmem>>, %arg5: memref<1x1xf32, #tpu.memory_space<vmem>>, %arg6: memref<16x272xbf16, #tpu.memory_space<vmem>>, %arg7: memref<1x272xf32, #tpu.memory_space<vmem>>, %arg8: memref<1x8x8x16xf32, #tpu.memory_space<vmem>>) attributes {dimension_semantics = [#tpu.dimension_semantics<parallel>], iteration_bounds = array<i64: 2>, scalar_prefetch = 0 : i64, scratch_operands = 0 : i64, tpu.core_type = #tpu.core_type<tc>, window_params = [{transform_indices = @transform_0, window_bounds = array<i64: 1, 8, 8, 16>}, {pipeline_mode = #tpu.pipeline_mode<synchronous>, transform_indices = @transform_1, window_bounds = array<i64: 2, 16>}, {pipeline_mode = #tpu.pipeline_mode<synchronous>, transform_indices = @transform_2, window_bounds = array<i64: 1, 16>}, {pipeline_mode = #tpu.pipeline_mode<synchronous>, transform_indices = @transform_3, window_bounds = array<i64: 1, 16>}, {pipeline_mode = #tpu.pipeline_mode<synchronous>, transform_indices = @transform_4, window_bounds = array<i64: 1, 1>}, {pipeline_mode = #tpu.pipeline_mode<synchronous>, transform_indices = @transform_5, window_bounds = array<i64: 16, 272>}, {pipeline_mode = #tpu.pipeline_mode<synchronous>, transform_indices = @transform_6, window_bounds = array<i64: 1, 272>}, {transform_indices = @transform_7, window_bounds = array<i64: 1, 8, 8, 16>}]} {
    %c0 = arith.constant 0 : index
    %c0_0 = arith.constant 0 : index
    %0 = vector.load %arg2[%c0, %c0_0] : memref<2x16xf32, #tpu.memory_space<vmem>>, vector<1x16xf32>
    %cst = arith.constant 7.812500e-03 : f32
    %1 = vector.broadcast %cst : f32 to vector<1x16xf32>
    %2 = arith.mulf %0, %1 : vector<1x16xf32>
    %c1 = arith.constant 1 : index
    %c0_1 = arith.constant 0 : index
    %3 = vector.load %arg2[%c1, %c0_1] : memref<2x16xf32, #tpu.memory_space<vmem>>, vector<1x16xf32>
    %cst_2 = arith.constant 7.812500e-03 : f32
    %4 = vector.broadcast %cst_2 : f32 to vector<1x16xf32>
    %5 = arith.mulf %3, %4 : vector<1x16xf32>
    %6 = arith.mulf %2, %2 : vector<1x16xf32>
    %7 = arith.subf %5, %6 : vector<1x16xf32>
    %c0_3 = arith.constant 0 : index
    %c0_4 = arith.constant 0 : index
    %8 = vector.load %arg3[%c0_3, %c0_4] : memref<1x16xf32, #tpu.memory_space<vmem>>, vector<1x16xf32>
    %cst_5 = arith.constant 9.99999974E-6 : f32
    %9 = vector.broadcast %cst_5 : f32 to vector<1x16xf32>
    %10 = arith.addf %7, %9 : vector<1x16xf32>
    %11 = math.rsqrt %10 : vector<1x16xf32>
    %12 = arith.mulf %8, %11 : vector<1x16xf32>
    %c0_6 = arith.constant 0 : index
    %c0_7 = arith.constant 0 : index
    %13 = vector.load %arg4[%c0_6, %c0_7] : memref<1x16xf32, #tpu.memory_space<vmem>>, vector<1x16xf32>
    %14 = arith.mulf %2, %12 : vector<1x16xf32>
    %15 = arith.subf %13, %14 : vector<1x16xf32>
    %c0_8 = arith.constant 0 : index
    %c0_9 = arith.constant 0 : index
    %c0_10 = arith.constant 0 : index
    %c0_11 = arith.constant 0 : index
    %16 = vector.load %arg1[%c0_8, %c0_9, %c0_10, %c0_11] : memref<1x8x8x16xbf16, #tpu.memory_space<vmem>>, vector<1x8x8x16xbf16>
    %17 = vector.shape_cast %16 : vector<1x8x8x16xbf16> to vector<8x8x16xbf16>
    %18 = arith.extf %17 : vector<8x8x16xbf16> to vector<8x8x16xf32>
    %19 = vector.shape_cast %12 : vector<1x16xf32> to vector<1x1x16xf32>
    %20 = vector.broadcast %19 : vector<1x1x16xf32> to vector<8x8x16xf32>
    %21 = arith.mulf %18, %20 : vector<8x8x16xf32>
    %22 = vector.shape_cast %15 : vector<1x16xf32> to vector<1x1x16xf32>
    %23 = vector.broadcast %22 : vector<1x1x16xf32> to vector<8x8x16xf32>
    %24 = arith.addf %21, %23 : vector<8x8x16xf32>
    %c0_12 = arith.constant 0 : index
    %c0_13 = arith.constant 0 : index
    %25 = vector.load %arg5[%c0_12, %c0_13] : memref<1x1xf32, #tpu.memory_space<vmem>>, vector<1x1xf32>
    %26 = tpu.iota {dimensions = array<i32: 0>} : vector<8x8xi32>
    %27 = tpu.iota {dimensions = array<i32: 1>} : vector<8x8xi32>
    %28 = arith.cmpi eq, %26, %27 : vector<8x8xi32>
    %cst_14 = arith.constant -1.000000e+30 : f32
    %cst_15 = arith.constant 0.000000e+00 : f32
    %29 = vector.broadcast %cst_14 : f32 to vector<8x8xf32>
    %30 = vector.broadcast %cst_15 : f32 to vector<8x8xf32>
    %31 = arith.select %28, %29, %30 : vector<8x8xi1>, vector<8x8xf32>
    %32 = vector.shape_cast %24 : vector<8x8x16xf32> to vector<64x16xf32>
    %33 = arith.truncf %32 : vector<64x16xf32> to vector<64x16xbf16>
    %c0_16 = arith.constant 0 : index
    %c0_17 = arith.constant 0 : index
    %34 = vector.load %arg6[%c0_16, %c0_17] : memref<16x272xbf16, #tpu.memory_space<vmem>>, vector<16x272xbf16>
    %cst_18 = arith.constant dense<0.000000e+00> : vector<64x272xf32>
    %35 = tpu.matmul %33, %34, %cst_18 {dimension_numbers = #tpu.dot_dimension_numbers<[1], [0], [0], [1], [0, 0, 1, 1], [], []>} : vector<64x16xbf16>, vector<16x272xbf16>, vector<64x272xf32> -> vector<64x272xf32>
    %c0_19 = arith.constant 0 : index
    %c0_20 = arith.constant 0 : index
    %36 = vector.load %arg7[%c0_19, %c0_20] : memref<1x272xf32, #tpu.memory_space<vmem>>, vector<1x272xf32>
    %37 = vector.broadcast %36 : vector<1x272xf32> to vector<64x272xf32>
    %38 = arith.addf %35, %37 : vector<64x272xf32>
    %39 = vector.shape_cast %38 : vector<64x272xf32> to vector<8x8x272xf32>
    %40 = vector.extract_strided_slice %39 {offsets = [0, 0, 0], sizes = [8, 8, 128], strides = [1, 1, 1]} : vector<8x8x272xf32> to vector<8x8x128xf32>
    %41 = arith.truncf %40 : vector<8x8x128xf32> to vector<8x8x128xbf16>
    %42 = vector.extract_strided_slice %39 {offsets = [0, 0, 128], sizes = [8, 8, 128], strides = [1, 1, 1]} : vector<8x8x272xf32> to vector<8x8x128xf32>
    %43 = arith.truncf %42 : vector<8x8x128xf32> to vector<8x8x128xbf16>
    %44 = vector.extract_strided_slice %39 {offsets = [0, 0, 256], sizes = [8, 8, 16], strides = [1, 1, 1]} : vector<8x8x272xf32> to vector<8x8x16xf32>
    %45 = arith.truncf %44 : vector<8x8x16xf32> to vector<8x8x16xbf16>
    %46 = tpu.transpose %41, [1, 0, 2] : vector<8x8x128xbf16> -> vector<8x8x128xbf16>
    %47 = tpu.transpose %43, [1, 0, 2] : vector<8x8x128xbf16> -> vector<8x8x128xbf16>
    %48 = tpu.transpose %45, [1, 0, 2] : vector<8x8x16xbf16> -> vector<8x8x16xbf16>
    "tpu.trace_start"() <{level = 10 : i32, message = "ijc,ikc->ijk"}> : () -> ()
    %cst_21 = arith.constant dense<0.000000e+00> : vector<8x8x8xf32>
    %49 = tpu.matmul %41, %43, %cst_21 {dimension_numbers = #tpu.dot_dimension_numbers<[2], [2], [1], [1], [0, 0, 0, 1, 1, 1], [0], [0]>} : vector<8x8x128xbf16>, vector<8x8x128xbf16>, vector<8x8x8xf32> -> vector<8x8x8xf32>
    "tpu.trace_stop"() : () -> ()
    "tpu.trace_start"() <{level = 10 : i32, message = "jic,jkc->jik"}> : () -> ()
    %cst_22 = arith.constant dense<0.000000e+00> : vector<8x8x8xf32>
    %50 = tpu.matmul %46, %47, %cst_22 {dimension_numbers = #tpu.dot_dimension_numbers<[2], [2], [1], [1], [0, 0, 0, 1, 1, 1], [0], [0]>} : vector<8x8x128xbf16>, vector<8x8x128xbf16>, vector<8x8x8xf32> -> vector<8x8x8xf32>
    "tpu.trace_stop"() : () -> ()
    %51 = vector.shape_cast %31 : vector<8x8xf32> to vector<1x8x8xf32>
    %52 = vector.broadcast %51 : vector<1x8x8xf32> to vector<8x8x8xf32>
    %53 = arith.addf %50, %52 : vector<8x8x8xf32>
    %cst_23 = arith.constant dense<0xFF800000> : vector<8x8xf32>
    %54 = vector.multi_reduction <maximumf>, %49, %cst_23 [2] : vector<8x8x8xf32> to vector<8x8xf32>
    %cst_24 = arith.constant dense<0xFF800000> : vector<8x8xf32>
    %55 = vector.multi_reduction <maximumf>, %53, %cst_24 [2] : vector<8x8x8xf32> to vector<8x8xf32>
    %56 = tpu.transpose %55, [1, 0] : vector<8x8xf32> -> vector<8x8xf32>
    %57 = arith.maximumf %54, %56 : vector<8x8xf32>
    %58 = vector.shape_cast %57 : vector<8x8xf32> to vector<8x8x1xf32>
    %59 = vector.broadcast %58 : vector<8x8x1xf32> to vector<8x8x8xf32>
    %60 = arith.subf %49, %59 : vector<8x8x8xf32>
    %61 = math.exp %60 : vector<8x8x8xf32>
    %62 = tpu.transpose %57, [1, 0] : vector<8x8xf32> -> vector<8x8xf32>
    %63 = vector.shape_cast %62 : vector<8x8xf32> to vector<8x8x1xf32>
    %64 = vector.broadcast %63 : vector<8x8x1xf32> to vector<8x8x8xf32>
    %65 = arith.subf %53, %64 : vector<8x8x8xf32>
    %66 = math.exp %65 : vector<8x8x8xf32>
    %cst_25 = arith.constant dense<0.000000e+00> : vector<8x8xf32>
    %67 = vector.multi_reduction <add>, %61, %cst_25 [2] : vector<8x8x8xf32> to vector<8x8xf32>
    %cst_26 = arith.constant dense<0.000000e+00> : vector<8x8xf32>
    %68 = vector.multi_reduction <add>, %66, %cst_26 [2] : vector<8x8x8xf32> to vector<8x8xf32>
    %69 = tpu.transpose %68, [1, 0] : vector<8x8xf32> -> vector<8x8xf32>
    %70 = arith.addf %67, %69 : vector<8x8xf32>
    %71 = tpu.reciprocal %70 {approx = true} : vector<8x8xf32> -> vector<8x8xf32>
    %72 = arith.truncf %61 : vector<8x8x8xf32> to vector<8x8x8xbf16>
    "tpu.trace_start"() <{level = 10 : i32, message = "ijk,ikd->ijd"}> : () -> ()
    %cst_27 = arith.constant dense<0.000000e+00> : vector<8x8x16xf32>
    %73 = tpu.matmul %72, %45, %cst_27 {dimension_numbers = #tpu.dot_dimension_numbers<[2], [1], [1], [2], [0, 0, 0, 1, 1, 2], [0], [0]>} : vector<8x8x8xbf16>, vector<8x8x16xbf16>, vector<8x8x16xf32> -> vector<8x8x16xf32>
    "tpu.trace_stop"() : () -> ()
    %74 = arith.truncf %66 : vector<8x8x8xf32> to vector<8x8x8xbf16>
    "tpu.trace_start"() <{level = 10 : i32, message = "jik,jkd->jid"}> : () -> ()
    %cst_28 = arith.constant dense<0.000000e+00> : vector<8x8x16xf32>
    %75 = tpu.matmul %74, %48, %cst_28 {dimension_numbers = #tpu.dot_dimension_numbers<[2], [1], [1], [2], [0, 0, 0, 1, 1, 2], [0], [0]>} : vector<8x8x8xbf16>, vector<8x8x16xbf16>, vector<8x8x16xf32> -> vector<8x8x16xf32>
    "tpu.trace_stop"() : () -> ()
    %76 = tpu.transpose %75, [1, 0, 2] : vector<8x8x16xf32> -> vector<8x8x16xf32>
    %77 = arith.addf %76, %73 : vector<8x8x16xf32>
    %78 = vector.shape_cast %71 : vector<8x8xf32> to vector<8x8x1xf32>
    %79 = vector.broadcast %78 : vector<8x8x1xf32> to vector<8x8x16xf32>
    %80 = arith.mulf %77, %79 : vector<8x8x16xf32>
    %81 = vector.shape_cast %25 : vector<1x1xf32> to vector<1x1x1xf32>
    %82 = vector.broadcast %81 : vector<1x1x1xf32> to vector<8x8x16xf32>
    %83 = arith.mulf %82, %80 : vector<8x8x16xf32>
    %84 = arith.addf %83, %24 : vector<8x8x16xf32>
    %85 = vector.shape_cast %84 : vector<8x8x16xf32> to vector<64x16xf32>
    %86 = arith.truncf %85 : vector<64x16xf32> to vector<64x16xbf16>
    %c0_29 = arith.constant 0 : index
    %c0_30 = arith.constant 0 : index
    %87 = vector.load %arg6[%c0_29, %c0_30] : memref<16x272xbf16, #tpu.memory_space<vmem>>, vector<16x272xbf16>
    %cst_31 = arith.constant dense<0.000000e+00> : vector<64x272xf32>
    %88 = tpu.matmul %86, %87, %cst_31 {dimension_numbers = #tpu.dot_dimension_numbers<[1], [0], [0], [1], [0, 0, 1, 1], [], []>} : vector<64x16xbf16>, vector<16x272xbf16>, vector<64x272xf32> -> vector<64x272xf32>
    %c0_32 = arith.constant 0 : index
    %c0_33 = arith.constant 0 : index
    %89 = vector.load %arg7[%c0_32, %c0_33] : memref<1x272xf32, #tpu.memory_space<vmem>>, vector<1x272xf32>
    %90 = vector.broadcast %89 : vector<1x272xf32> to vector<64x272xf32>
    %91 = arith.addf %88, %90 : vector<64x272xf32>
    %92 = vector.shape_cast %91 : vector<64x272xf32> to vector<8x8x272xf32>
    %93 = vector.extract_strided_slice %92 {offsets = [0, 0, 0], sizes = [8, 8, 128], strides = [1, 1, 1]} : vector<8x8x272xf32> to vector<8x8x128xf32>
    %94 = arith.truncf %93 : vector<8x8x128xf32> to vector<8x8x128xbf16>
    %95 = vector.extract_strided_slice %92 {offsets = [0, 0, 128], sizes = [8, 8, 128], strides = [1, 1, 1]} : vector<8x8x272xf32> to vector<8x8x128xf32>
    %96 = arith.truncf %95 : vector<8x8x128xf32> to vector<8x8x128xbf16>
    %97 = vector.extract_strided_slice %92 {offsets = [0, 0, 256], sizes = [8, 8, 16], strides = [1, 1, 1]} : vector<8x8x272xf32> to vector<8x8x16xf32>
    %98 = arith.truncf %97 : vector<8x8x16xf32> to vector<8x8x16xbf16>
    %99 = tpu.transpose %94, [1, 0, 2] : vector<8x8x128xbf16> -> vector<8x8x128xbf16>
    %100 = tpu.transpose %96, [1, 0, 2] : vector<8x8x128xbf16> -> vector<8x8x128xbf16>
    %101 = tpu.transpose %98, [1, 0, 2] : vector<8x8x16xbf16> -> vector<8x8x16xbf16>
    "tpu.trace_start"() <{level = 10 : i32, message = "ijc,ikc->ijk"}> : () -> ()
    %cst_34 = arith.constant dense<0.000000e+00> : vector<8x8x8xf32>
    %102 = tpu.matmul %94, %96, %cst_34 {dimension_numbers = #tpu.dot_dimension_numbers<[2], [2], [1], [1], [0, 0, 0, 1, 1, 1], [0], [0]>} : vector<8x8x128xbf16>, vector<8x8x128xbf16>, vector<8x8x8xf32> -> vector<8x8x8xf32>
    "tpu.trace_stop"() : () -> ()
    "tpu.trace_start"() <{level = 10 : i32, message = "jic,jkc->jik"}> : () -> ()
    %cst_35 = arith.constant dense<0.000000e+00> : vector<8x8x8xf32>
    %103 = tpu.matmul %99, %100, %cst_35 {dimension_numbers = #tpu.dot_dimension_numbers<[2], [2], [1], [1], [0, 0, 0, 1, 1, 1], [0], [0]>} : vector<8x8x128xbf16>, vector<8x8x128xbf16>, vector<8x8x8xf32> -> vector<8x8x8xf32>
    "tpu.trace_stop"() : () -> ()
    %104 = vector.shape_cast %31 : vector<8x8xf32> to vector<1x8x8xf32>
    %105 = vector.broadcast %104 : vector<1x8x8xf32> to vector<8x8x8xf32>
    %106 = arith.addf %103, %105 : vector<8x8x8xf32>
    %cst_36 = arith.constant dense<0xFF800000> : vector<8x8xf32>
    %107 = vector.multi_reduction <maximumf>, %102, %cst_36 [2] : vector<8x8x8xf32> to vector<8x8xf32>
    %cst_37 = arith.constant dense<0xFF800000> : vector<8x8xf32>
    %108 = vector.multi_reduction <maximumf>, %106, %cst_37 [2] : vector<8x8x8xf32> to vector<8x8xf32>
    %109 = tpu.transpose %108, [1, 0] : vector<8x8xf32> -> vector<8x8xf32>
    %110 = arith.maximumf %107, %109 : vector<8x8xf32>
    %111 = vector.shape_cast %110 : vector<8x8xf32> to vector<8x8x1xf32>
    %112 = vector.broadcast %111 : vector<8x8x1xf32> to vector<8x8x8xf32>
    %113 = arith.subf %102, %112 : vector<8x8x8xf32>
    %114 = math.exp %113 : vector<8x8x8xf32>
    %115 = tpu.transpose %110, [1, 0] : vector<8x8xf32> -> vector<8x8xf32>
    %116 = vector.shape_cast %115 : vector<8x8xf32> to vector<8x8x1xf32>
    %117 = vector.broadcast %116 : vector<8x8x1xf32> to vector<8x8x8xf32>
    %118 = arith.subf %106, %117 : vector<8x8x8xf32>
    %119 = math.exp %118 : vector<8x8x8xf32>
    %cst_38 = arith.constant dense<0.000000e+00> : vector<8x8xf32>
    %120 = vector.multi_reduction <add>, %114, %cst_38 [2] : vector<8x8x8xf32> to vector<8x8xf32>
    %cst_39 = arith.constant dense<0.000000e+00> : vector<8x8xf32>
    %121 = vector.multi_reduction <add>, %119, %cst_39 [2] : vector<8x8x8xf32> to vector<8x8xf32>
    %122 = tpu.transpose %121, [1, 0] : vector<8x8xf32> -> vector<8x8xf32>
    %123 = arith.addf %120, %122 : vector<8x8xf32>
    %124 = tpu.reciprocal %123 {approx = true} : vector<8x8xf32> -> vector<8x8xf32>
    %125 = arith.truncf %114 : vector<8x8x8xf32> to vector<8x8x8xbf16>
    "tpu.trace_start"() <{level = 10 : i32, message = "ijk,ikd->ijd"}> : () -> ()
    %cst_40 = arith.constant dense<0.000000e+00> : vector<8x8x16xf32>
    %126 = tpu.matmul %125, %98, %cst_40 {dimension_numbers = #tpu.dot_dimension_numbers<[2], [1], [1], [2], [0, 0, 0, 1, 1, 2], [0], [0]>} : vector<8x8x8xbf16>, vector<8x8x16xbf16>, vector<8x8x16xf32> -> vector<8x8x16xf32>
    "tpu.trace_stop"() : () -> ()
    %127 = arith.truncf %119 : vector<8x8x8xf32> to vector<8x8x8xbf16>
    "tpu.trace_start"() <{level = 10 : i32, message = "jik,jkd->jid"}> : () -> ()
    %cst_41 = arith.constant dense<0.000000e+00> : vector<8x8x16xf32>
    %128 = tpu.matmul %127, %101, %cst_41 {dimension_numbers = #tpu.dot_dimension_numbers<[2], [1], [1], [2], [0, 0, 0, 1, 1, 2], [0], [0]>} : vector<8x8x8xbf16>, vector<8x8x16xbf16>, vector<8x8x16xf32> -> vector<8x8x16xf32>
    "tpu.trace_stop"() : () -> ()
    %129 = tpu.transpose %128, [1, 0, 2] : vector<8x8x16xf32> -> vector<8x8x16xf32>
    %130 = arith.addf %129, %126 : vector<8x8x16xf32>
    %131 = vector.shape_cast %124 : vector<8x8xf32> to vector<8x8x1xf32>
    %132 = vector.broadcast %131 : vector<8x8x1xf32> to vector<8x8x16xf32>
    %133 = arith.mulf %130, %132 : vector<8x8x16xf32>
    %134 = vector.shape_cast %25 : vector<1x1xf32> to vector<1x1x1xf32>
    %135 = vector.broadcast %134 : vector<1x1x1xf32> to vector<8x8x16xf32>
    %136 = arith.mulf %135, %133 : vector<8x8x16xf32>
    %137 = arith.addf %136, %84 : vector<8x8x16xf32>
    %c0_42 = arith.constant 0 : index
    %c0_43 = arith.constant 0 : index
    %c0_44 = arith.constant 0 : index
    %c0_45 = arith.constant 0 : index
    %138 = vector.load %arg8[%c0_42, %c0_43, %c0_44, %c0_45] : memref<1x8x8x16xf32, #tpu.memory_space<vmem>>, vector<1x8x8x16xf32>
    %139 = vector.shape_cast %138 : vector<1x8x8x16xf32> to vector<8x8x16xf32>
    %140 = vector.shape_cast %137 : vector<8x8x16xf32> to vector<1x8x8x16xf32>
    tpu.vector_store %arg8[%c0_42, %c0_43, %c0_44, %c0_45], %140 {strides = array<i32>} : memref<1x8x8x16xf32, #tpu.memory_space<vmem>>, vector<1x8x8x16xf32>,
    return
  }
  func.func @transform_0(%arg0: i32) -> (i32, i32, i32, i32) {
    %c0_i32 = arith.constant 0 : i32
    %c0_i32_0 = arith.constant 0 : i32
    %c0_i32_1 = arith.constant 0 : i32
    %c0_i32_2 = arith.constant 0 : i32
    return %arg0, %c0_i32, %c0_i32_0, %c0_i32_1 : i32, i32, i32, i32
  }
  func.func @transform_1(%arg0: i32) -> (i32, i32) {
    %c0_i32 = arith.constant 0 : i32
    %c0_i32_0 = arith.constant 0 : i32
    %c0_i32_1 = arith.constant 0 : i32
    return %c0_i32, %c0_i32_0 : i32, i32
  }
  func.func @transform_2(%arg0: i32) -> (i32, i32) {
    %c0_i32 = arith.constant 0 : i32
    %c0_i32_0 = arith.constant 0 : i32
    %c0_i32_1 = arith.constant 0 : i32
    return %c0_i32, %c0_i32_0 : i32, i32
  }
  func.func @transform_3(%arg0: i32) -> (i32, i32) {
    %c0_i32 = arith.constant 0 : i32
    %c0_i32_0 = arith.constant 0 : i32
    %c0_i32_1 = arith.constant 0 : i32
    return %c0_i32, %c0_i32_0 : i32, i32
  }
  func.func @transform_4(%arg0: i32) -> (i32, i32) {
    %c0_i32 = arith.constant 0 : i32
    %c0_i32_0 = arith.constant 0 : i32
    %c0_i32_1 = arith.constant 0 : i32
    return %c0_i32, %c0_i32_0 : i32, i32
  }
  func.func @transform_5(%arg0: i32) -> (i32, i32) {
    %c0_i32 = arith.constant 0 : i32
    %c0_i32_0 = arith.constant 0 : i32
    %c0_i32_1 = arith.constant 0 : i32
    return %c0_i32, %c0_i32_0 : i32, i32
  }
  func.func @transform_6(%arg0: i32) -> (i32, i32) {
    %c0_i32 = arith.constant 0 : i32
    %c0_i32_0 = arith.constant 0 : i32
    %c0_i32_1 = arith.constant 0 : i32
    return %c0_i32, %c0_i32_0 : i32, i32
  }
  func.func @transform_7(%arg0: i32) -> (i32, i32, i32, i32) {
    %c0_i32 = arith.constant 0 : i32
    %c0_i32_0 = arith.constant 0 : i32
    %c0_i32_1 = arith.constant 0 : i32
    %c0_i32_2 = arith.constant 0 : i32
    return %arg0, %c0_i32, %c0_i32_0, %c0_i32_1 : i32, i32, i32, i32
  }
}

module attributes {stable_mosaic.version = 11 : i64} {
  func.func @_conv3_stats_kernel(%arg0: i32, %arg1: memref<1x10x10x80xbf16, #tpu.memory_space<vmem>>, %arg2: memref<720x16xbf16, #tpu.memory_space<vmem>>, %arg3: memref<1x8x8x16xbf16, #tpu.memory_space<vmem>>, %arg4: memref<2x16xf32, #tpu.memory_space<vmem>>, %arg5: memref<2x16xf32, #tpu.memory_space<vmem>>) attributes {dimension_semantics = [#tpu.dimension_semantics<arbitrary>], iteration_bounds = array<i64: 2>, scalar_prefetch = 0 : i64, scratch_operands = 1 : i64, tpu.core_type = #tpu.core_type<tc>, window_params = [{transform_indices = @transform_0, window_bounds = array<i64: 1, 10, 10, 80>}, {pipeline_mode = #tpu.pipeline_mode<synchronous>, transform_indices = @transform_1, window_bounds = array<i64: 720, 16>}, {transform_indices = @transform_2, window_bounds = array<i64: 1, 8, 8, 16>}, {pipeline_mode = #tpu.pipeline_mode<synchronous>, transform_indices = @transform_3, window_bounds = array<i64: 2, 16>}]} {
    %c0 = arith.constant 0 : index
    %c0_0 = arith.constant 0 : index
    %c0_1 = arith.constant 0 : index
    %c0_2 = arith.constant 0 : index
    %0 = vector.load %arg1[%c0, %c0_0, %c0_1, %c0_2] : memref<1x10x10x80xbf16, #tpu.memory_space<vmem>>, vector<1x10x10x80xbf16>
    %1 = vector.shape_cast %0 : vector<1x10x10x80xbf16> to vector<10x10x80xbf16>
    %cst = arith.constant 0.000000e+00 : f32
    %2 = vector.broadcast %cst : f32 to vector<64x16xf32>
    %3 = vector.extract_strided_slice %1 {offsets = [0, 0, 0], sizes = [8, 8, 80], strides = [1, 1, 1]} : vector<10x10x80xbf16> to vector<8x8x80xbf16>
    %4 = vector.shape_cast %3 : vector<8x8x80xbf16> to vector<64x80xbf16>
    %c0_3 = arith.constant 0 : index
    %c0_4 = arith.constant 0 : index
    %5 = vector.load %arg2[%c0_3, %c0_4] : memref<720x16xbf16, #tpu.memory_space<vmem>>, vector<80x16xbf16>
    %cst_5 = arith.constant dense<0.000000e+00> : vector<64x16xf32>
    %6 = tpu.matmul %4, %5, %cst_5 {dimension_numbers = #tpu.dot_dimension_numbers<[1], [0], [0], [1], [0, 0, 1, 1], [], []>} : vector<64x80xbf16>, vector<80x16xbf16>, vector<64x16xf32> -> vector<64x16xf32>
    %7 = arith.addf %2, %6 : vector<64x16xf32>
    %8 = vector.extract_strided_slice %1 {offsets = [0, 1, 0], sizes = [8, 8, 80], strides = [1, 1, 1]} : vector<10x10x80xbf16> to vector<8x8x80xbf16>
    %9 = vector.shape_cast %8 : vector<8x8x80xbf16> to vector<64x80xbf16>
    %c80 = arith.constant 80 : index
    %c0_6 = arith.constant 0 : index
    %10 = vector.load %arg2[%c80, %c0_6] : memref<720x16xbf16, #tpu.memory_space<vmem>>, vector<80x16xbf16>
    %cst_7 = arith.constant dense<0.000000e+00> : vector<64x16xf32>
    %11 = tpu.matmul %9, %10, %cst_7 {dimension_numbers = #tpu.dot_dimension_numbers<[1], [0], [0], [1], [0, 0, 1, 1], [], []>} : vector<64x80xbf16>, vector<80x16xbf16>, vector<64x16xf32> -> vector<64x16xf32>
    %12 = arith.addf %7, %11 : vector<64x16xf32>
    %13 = vector.extract_strided_slice %1 {offsets = [0, 2, 0], sizes = [8, 8, 80], strides = [1, 1, 1]} : vector<10x10x80xbf16> to vector<8x8x80xbf16>
    %14 = vector.shape_cast %13 : vector<8x8x80xbf16> to vector<64x80xbf16>
    %c160 = arith.constant 160 : index
    %c0_8 = arith.constant 0 : index
    %15 = vector.load %arg2[%c160, %c0_8] : memref<720x16xbf16, #tpu.memory_space<vmem>>, vector<80x16xbf16>
    %cst_9 = arith.constant dense<0.000000e+00> : vector<64x16xf32>
    %16 = tpu.matmul %14, %15, %cst_9 {dimension_numbers = #tpu.dot_dimension_numbers<[1], [0], [0], [1], [0, 0, 1, 1], [], []>} : vector<64x80xbf16>, vector<80x16xbf16>, vector<64x16xf32> -> vector<64x16xf32>
    %17 = arith.addf %12, %16 : vector<64x16xf32>
    %18 = vector.extract_strided_slice %1 {offsets = [1, 0, 0], sizes = [8, 8, 80], strides = [1, 1, 1]} : vector<10x10x80xbf16> to vector<8x8x80xbf16>
    %19 = vector.shape_cast %18 : vector<8x8x80xbf16> to vector<64x80xbf16>
    %c240 = arith.constant 240 : index
    %c0_10 = arith.constant 0 : index
    %20 = vector.load %arg2[%c240, %c0_10] : memref<720x16xbf16, #tpu.memory_space<vmem>>, vector<80x16xbf16>
    %cst_11 = arith.constant dense<0.000000e+00> : vector<64x16xf32>
    %21 = tpu.matmul %19, %20, %cst_11 {dimension_numbers = #tpu.dot_dimension_numbers<[1], [0], [0], [1], [0, 0, 1, 1], [], []>} : vector<64x80xbf16>, vector<80x16xbf16>, vector<64x16xf32> -> vector<64x16xf32>
    %22 = arith.addf %17, %21 : vector<64x16xf32>
    %23 = vector.extract_strided_slice %1 {offsets = [1, 1, 0], sizes = [8, 8, 80], strides = [1, 1, 1]} : vector<10x10x80xbf16> to vector<8x8x80xbf16>
    %24 = vector.shape_cast %23 : vector<8x8x80xbf16> to vector<64x80xbf16>
    %c320 = arith.constant 320 : index
    %c0_12 = arith.constant 0 : index
    %25 = vector.load %arg2[%c320, %c0_12] : memref<720x16xbf16, #tpu.memory_space<vmem>>, vector<80x16xbf16>
    %cst_13 = arith.constant dense<0.000000e+00> : vector<64x16xf32>
    %26 = tpu.matmul %24, %25, %cst_13 {dimension_numbers = #tpu.dot_dimension_numbers<[1], [0], [0], [1], [0, 0, 1, 1], [], []>} : vector<64x80xbf16>, vector<80x16xbf16>, vector<64x16xf32> -> vector<64x16xf32>
    %27 = arith.addf %22, %26 : vector<64x16xf32>
    %28 = vector.extract_strided_slice %1 {offsets = [1, 2, 0], sizes = [8, 8, 80], strides = [1, 1, 1]} : vector<10x10x80xbf16> to vector<8x8x80xbf16>
    %29 = vector.shape_cast %28 : vector<8x8x80xbf16> to vector<64x80xbf16>
    %c400 = arith.constant 400 : index
    %c0_14 = arith.constant 0 : index
    %30 = vector.load %arg2[%c400, %c0_14] : memref<720x16xbf16, #tpu.memory_space<vmem>>, vector<80x16xbf16>
    %cst_15 = arith.constant dense<0.000000e+00> : vector<64x16xf32>
    %31 = tpu.matmul %29, %30, %cst_15 {dimension_numbers = #tpu.dot_dimension_numbers<[1], [0], [0], [1], [0, 0, 1, 1], [], []>} : vector<64x80xbf16>, vector<80x16xbf16>, vector<64x16xf32> -> vector<64x16xf32>
    %32 = arith.addf %27, %31 : vector<64x16xf32>
    %33 = vector.extract_strided_slice %1 {offsets = [2, 0, 0], sizes = [8, 8, 80], strides = [1, 1, 1]} : vector<10x10x80xbf16> to vector<8x8x80xbf16>
    %34 = vector.shape_cast %33 : vector<8x8x80xbf16> to vector<64x80xbf16>
    %c480 = arith.constant 480 : index
    %c0_16 = arith.constant 0 : index
    %35 = vector.load %arg2[%c480, %c0_16] : memref<720x16xbf16, #tpu.memory_space<vmem>>, vector<80x16xbf16>
    %cst_17 = arith.constant dense<0.000000e+00> : vector<64x16xf32>
    %36 = tpu.matmul %34, %35, %cst_17 {dimension_numbers = #tpu.dot_dimension_numbers<[1], [0], [0], [1], [0, 0, 1, 1], [], []>} : vector<64x80xbf16>, vector<80x16xbf16>, vector<64x16xf32> -> vector<64x16xf32>
    %37 = arith.addf %32, %36 : vector<64x16xf32>
    %38 = vector.extract_strided_slice %1 {offsets = [2, 1, 0], sizes = [8, 8, 80], strides = [1, 1, 1]} : vector<10x10x80xbf16> to vector<8x8x80xbf16>
    %39 = vector.shape_cast %38 : vector<8x8x80xbf16> to vector<64x80xbf16>
    %c560 = arith.constant 560 : index
    %c0_18 = arith.constant 0 : index
    %40 = vector.load %arg2[%c560, %c0_18] : memref<720x16xbf16, #tpu.memory_space<vmem>>, vector<80x16xbf16>
    %cst_19 = arith.constant dense<0.000000e+00> : vector<64x16xf32>
    %41 = tpu.matmul %39, %40, %cst_19 {dimension_numbers = #tpu.dot_dimension_numbers<[1], [0], [0], [1], [0, 0, 1, 1], [], []>} : vector<64x80xbf16>, vector<80x16xbf16>, vector<64x16xf32> -> vector<64x16xf32>
    %42 = arith.addf %37, %41 : vector<64x16xf32>
    %43 = vector.extract_strided_slice %1 {offsets = [2, 2, 0], sizes = [8, 8, 80], strides = [1, 1, 1]} : vector<10x10x80xbf16> to vector<8x8x80xbf16>
    %44 = vector.shape_cast %43 : vector<8x8x80xbf16> to vector<64x80xbf16>
    %c640 = arith.constant 640 : index
    %c0_20 = arith.constant 0 : index
    %45 = vector.load %arg2[%c640, %c0_20] : memref<720x16xbf16, #tpu.memory_space<vmem>>, vector<80x16xbf16>
    %cst_21 = arith.constant dense<0.000000e+00> : vector<64x16xf32>
    %46 = tpu.matmul %44, %45, %cst_21 {dimension_numbers = #tpu.dot_dimension_numbers<[1], [0], [0], [1], [0, 0, 1, 1], [], []>} : vector<64x80xbf16>, vector<80x16xbf16>, vector<64x16xf32> -> vector<64x16xf32>
    %47 = arith.addf %42, %46 : vector<64x16xf32>
    %48 = arith.truncf %47 : vector<64x16xf32> to vector<64x16xbf16>
    %49 = vector.shape_cast %48 : vector<64x16xbf16> to vector<8x8x16xbf16>
    %c0_22 = arith.constant 0 : index
    %c0_23 = arith.constant 0 : index
    %c0_24 = arith.constant 0 : index
    %c0_25 = arith.constant 0 : index
    %50 = vector.load %arg3[%c0_22, %c0_23, %c0_24, %c0_25] : memref<1x8x8x16xbf16, #tpu.memory_space<vmem>>, vector<1x8x8x16xbf16>
    %51 = vector.shape_cast %50 : vector<1x8x8x16xbf16> to vector<8x8x16xbf16>
    %52 = vector.shape_cast %49 : vector<8x8x16xbf16> to vector<1x8x8x16xbf16>
    tpu.vector_store %arg3[%c0_22, %c0_23, %c0_24, %c0_25], %52 {strides = array<i32>} : memref<1x8x8x16xbf16, #tpu.memory_space<vmem>>, vector<1x8x8x16xbf16>,
    %c0_i32 = arith.constant 0 : i32
    %53 = arith.cmpi eq, %arg0, %c0_i32 : i32
    %54 = arith.extui %53 : i1 to i32
    %c0_i32_26 = arith.constant 0 : i32
    %55 = arith.cmpi ne, %54, %c0_i32_26 : i32
    scf.if %55 {
      %cst_37 = arith.constant 0.000000e+00 : f32
      %71 = vector.broadcast %cst_37 : f32 to vector<2x16xf32>
      %c0_38 = arith.constant 0 : index
      %c0_39 = arith.constant 0 : index
      %72 = vector.load %arg5[%c0_38, %c0_39] : memref<2x16xf32, #tpu.memory_space<vmem>>, vector<2x16xf32>
      tpu.vector_store %arg5[%c0_38, %c0_39], %71 {strides = array<i32>} : memref<2x16xf32, #tpu.memory_space<vmem>>, vector<2x16xf32>,
    } else {
    }
    %56 = arith.extf %48 : vector<64x16xbf16> to vector<64x16xf32>
    %c0_27 = arith.constant 0 : index
    %c0_28 = arith.constant 0 : index
    %57 = vector.load %arg5[%c0_27, %c0_28] : memref<2x16xf32, #tpu.memory_space<vmem>>, vector<1x16xf32>
    %cst_29 = arith.constant dense<0.000000e+00> : vector<16xf32>
    %58 = vector.multi_reduction <add>, %56, %cst_29 [0] : vector<64x16xf32> to vector<16xf32>
    %59 = vector.shape_cast %58 : vector<16xf32> to vector<1x16xf32>
    %60 = arith.addf %57, %59 : vector<1x16xf32>
    %c0_30 = arith.constant 0 : index
    %c0_31 = arith.constant 0 : index
    %61 = vector.load %arg5[%c0_30, %c0_31] : memref<2x16xf32, #tpu.memory_space<vmem>>, vector<1x16xf32>
    tpu.vector_store %arg5[%c0_30, %c0_31], %60 {strides = array<i32>} : memref<2x16xf32, #tpu.memory_space<vmem>>, vector<1x16xf32>,
    %c1 = arith.constant 1 : index
    %c0_32 = arith.constant 0 : index
    %62 = vector.load %arg5[%c1, %c0_32] : memref<2x16xf32, #tpu.memory_space<vmem>>, vector<1x16xf32>
    %63 = arith.mulf %56, %56 : vector<64x16xf32>
    %cst_33 = arith.constant dense<0.000000e+00> : vector<16xf32>
    %64 = vector.multi_reduction <add>, %63, %cst_33 [0] : vector<64x16xf32> to vector<16xf32>
    %65 = vector.shape_cast %64 : vector<16xf32> to vector<1x16xf32>
    %66 = arith.addf %62, %65 : vector<1x16xf32>
    %c1_34 = arith.constant 1 : index
    %c0_35 = arith.constant 0 : index
    %67 = vector.load %arg5[%c1_34, %c0_35] : memref<2x16xf32, #tpu.memory_space<vmem>>, vector<1x16xf32>
    tpu.vector_store %arg5[%c1_34, %c0_35], %66 {strides = array<i32>} : memref<2x16xf32, #tpu.memory_space<vmem>>, vector<1x16xf32>,
    %c1_i32 = arith.constant 1 : i32
    %68 = arith.cmpi eq, %arg0, %c1_i32 : i32
    %69 = arith.extui %68 : i1 to i32
    %c0_i32_36 = arith.constant 0 : i32
    %70 = arith.cmpi ne, %69, %c0_i32_36 : i32
    scf.if %70 {
      %c0_37 = arith.constant 0 : index
      %c0_38 = arith.constant 0 : index
      %71 = vector.load %arg5[%c0_37, %c0_38] : memref<2x16xf32, #tpu.memory_space<vmem>>, vector<2x16xf32>
      %c0_39 = arith.constant 0 : index
      %c0_40 = arith.constant 0 : index
      %72 = vector.load %arg4[%c0_39, %c0_40] : memref<2x16xf32, #tpu.memory_space<vmem>>, vector<2x16xf32>
      tpu.vector_store %arg4[%c0_39, %c0_40], %71 {strides = array<i32>} : memref<2x16xf32, #tpu.memory_space<vmem>>, vector<2x16xf32>,
    } else {
    }
    return
  }
  func.func @transform_0(%arg0: i32) -> (i32, i32, i32, i32) {
    %c0_i32 = arith.constant 0 : i32
    %c0_i32_0 = arith.constant 0 : i32
    %c0_i32_1 = arith.constant 0 : i32
    %c0_i32_2 = arith.constant 0 : i32
    return %arg0, %c0_i32, %c0_i32_0, %c0_i32_1 : i32, i32, i32, i32
  }
  func.func @transform_1(%arg0: i32) -> (i32, i32) {
    %c0_i32 = arith.constant 0 : i32
    %c0_i32_0 = arith.constant 0 : i32
    %c0_i32_1 = arith.constant 0 : i32
    return %c0_i32, %c0_i32_0 : i32, i32
  }
  func.func @transform_2(%arg0: i32) -> (i32, i32, i32, i32) {
    %c0_i32 = arith.constant 0 : i32
    %c0_i32_0 = arith.constant 0 : i32
    %c0_i32_1 = arith.constant 0 : i32
    %c0_i32_2 = arith.constant 0 : i32
    return %arg0, %c0_i32, %c0_i32_0, %c0_i32_1 : i32, i32, i32, i32
  }
  func.func @transform_3(%arg0: i32) -> (i32, i32) {
    %c0_i32 = arith.constant 0 : i32
    %c0_i32_0 = arith.constant 0 : i32
    %c0_i32_1 = arith.constant 0 : i32
    return %c0_i32, %c0_i32_0 : i32, i32
  }
}

module attributes {stable_mosaic.version = 11 : i64} {
  func.func @_bn_cls_kernel(%arg0: i32, %arg1: memref<128x16xbf16, #tpu.memory_space<vmem>>, %arg2: memref<2x16xf32, #tpu.memory_space<vmem>>, %arg3: memref<1x16xf32, #tpu.memory_space<vmem>>, %arg4: memref<1x16xf32, #tpu.memory_space<vmem>>, %arg5: memref<16x5xbf16, #tpu.memory_space<vmem>>, %arg6: memref<1x5xf32, #tpu.memory_space<vmem>>, %arg7: memref<128x5xf32, #tpu.memory_space<vmem>>) attributes {dimension_semantics = [#tpu.dimension_semantics<parallel>], iteration_bounds = array<i64: 1>, scalar_prefetch = 0 : i64, scratch_operands = 0 : i64, tpu.core_type = #tpu.core_type<tc>, window_params = [{transform_indices = @transform_0, window_bounds = array<i64: 128, 16>}, {pipeline_mode = #tpu.pipeline_mode<synchronous>, transform_indices = @transform_1, window_bounds = array<i64: 2, 16>}, {pipeline_mode = #tpu.pipeline_mode<synchronous>, transform_indices = @transform_2, window_bounds = array<i64: 1, 16>}, {pipeline_mode = #tpu.pipeline_mode<synchronous>, transform_indices = @transform_3, window_bounds = array<i64: 1, 16>}, {pipeline_mode = #tpu.pipeline_mode<synchronous>, transform_indices = @transform_4, window_bounds = array<i64: 16, 5>}, {pipeline_mode = #tpu.pipeline_mode<synchronous>, transform_indices = @transform_5, window_bounds = array<i64: 1, 5>}, {transform_indices = @transform_6, window_bounds = array<i64: 128, 5>}]} {
    %c0 = arith.constant 0 : index
    %c0_0 = arith.constant 0 : index
    %0 = vector.load %arg2[%c0, %c0_0] : memref<2x16xf32, #tpu.memory_space<vmem>>, vector<1x16xf32>
    %cst = arith.constant 7.812500e-03 : f32
    %1 = vector.broadcast %cst : f32 to vector<1x16xf32>
    %2 = arith.mulf %0, %1 : vector<1x16xf32>
    %c1 = arith.constant 1 : index
    %c0_1 = arith.constant 0 : index
    %3 = vector.load %arg2[%c1, %c0_1] : memref<2x16xf32, #tpu.memory_space<vmem>>, vector<1x16xf32>
    %cst_2 = arith.constant 7.812500e-03 : f32
    %4 = vector.broadcast %cst_2 : f32 to vector<1x16xf32>
    %5 = arith.mulf %3, %4 : vector<1x16xf32>
    %6 = arith.mulf %2, %2 : vector<1x16xf32>
    %7 = arith.subf %5, %6 : vector<1x16xf32>
    %c0_3 = arith.constant 0 : index
    %c0_4 = arith.constant 0 : index
    %8 = vector.load %arg3[%c0_3, %c0_4] : memref<1x16xf32, #tpu.memory_space<vmem>>, vector<1x16xf32>
    %cst_5 = arith.constant 9.99999974E-6 : f32
    %9 = vector.broadcast %cst_5 : f32 to vector<1x16xf32>
    %10 = arith.addf %7, %9 : vector<1x16xf32>
    %11 = math.rsqrt %10 : vector<1x16xf32>
    %12 = arith.mulf %8, %11 : vector<1x16xf32>
    %c0_6 = arith.constant 0 : index
    %c0_7 = arith.constant 0 : index
    %13 = vector.load %arg4[%c0_6, %c0_7] : memref<1x16xf32, #tpu.memory_space<vmem>>, vector<1x16xf32>
    %14 = arith.mulf %2, %12 : vector<1x16xf32>
    %15 = arith.subf %13, %14 : vector<1x16xf32>
    %c0_8 = arith.constant 0 : index
    %c0_9 = arith.constant 0 : index
    %16 = vector.load %arg1[%c0_8, %c0_9] : memref<128x16xbf16, #tpu.memory_space<vmem>>, vector<128x16xbf16>
    %17 = arith.extf %16 : vector<128x16xbf16> to vector<128x16xf32>
    %18 = vector.broadcast %12 : vector<1x16xf32> to vector<128x16xf32>
    %19 = arith.mulf %17, %18 : vector<128x16xf32>
    %20 = vector.broadcast %15 : vector<1x16xf32> to vector<128x16xf32>
    %21 = arith.addf %19, %20 : vector<128x16xf32>
    %22 = arith.truncf %21 : vector<128x16xf32> to vector<128x16xbf16>
    %c0_10 = arith.constant 0 : index
    %c0_11 = arith.constant 0 : index
    %23 = vector.load %arg5[%c0_10, %c0_11] : memref<16x5xbf16, #tpu.memory_space<vmem>>, vector<16x5xbf16>
    %cst_12 = arith.constant dense<0.000000e+00> : vector<128x5xf32>
    %24 = tpu.matmul %22, %23, %cst_12 {dimension_numbers = #tpu.dot_dimension_numbers<[1], [0], [0], [1], [0, 0, 1, 1], [], []>} : vector<128x16xbf16>, vector<16x5xbf16>, vector<128x5xf32> -> vector<128x5xf32>
    %c0_13 = arith.constant 0 : index
    %c0_14 = arith.constant 0 : index
    %25 = vector.load %arg6[%c0_13, %c0_14] : memref<1x5xf32, #tpu.memory_space<vmem>>, vector<1x5xf32>
    %26 = vector.broadcast %25 : vector<1x5xf32> to vector<128x5xf32>
    %27 = arith.addf %24, %26 : vector<128x5xf32>
    %c0_15 = arith.constant 0 : index
    %c0_16 = arith.constant 0 : index
    %28 = vector.load %arg7[%c0_15, %c0_16] : memref<128x5xf32, #tpu.memory_space<vmem>>, vector<128x5xf32>
    tpu.vector_store %arg7[%c0_15, %c0_16], %27 {strides = array<i32>} : memref<128x5xf32, #tpu.memory_space<vmem>>, vector<128x5xf32>,
    return
  }
  func.func @transform_0(%arg0: i32) -> (i32, i32) {
    %c0_i32 = arith.constant 0 : i32
    %c0_i32_0 = arith.constant 0 : i32
    return %arg0, %c0_i32 : i32, i32
  }
  func.func @transform_1(%arg0: i32) -> (i32, i32) {
    %c0_i32 = arith.constant 0 : i32
    %c0_i32_0 = arith.constant 0 : i32
    %c0_i32_1 = arith.constant 0 : i32
    return %c0_i32, %c0_i32_0 : i32, i32
  }
  func.func @transform_2(%arg0: i32) -> (i32, i32) {
    %c0_i32 = arith.constant 0 : i32
    %c0_i32_0 = arith.constant 0 : i32
    %c0_i32_1 = arith.constant 0 : i32
    return %c0_i32, %c0_i32_0 : i32, i32
  }
  func.func @transform_3(%arg0: i32) -> (i32, i32) {
    %c0_i32 = arith.constant 0 : i32
    %c0_i32_0 = arith.constant 0 : i32
    %c0_i32_1 = arith.constant 0 : i32
    return %c0_i32, %c0_i32_0 : i32, i32
  }
  func.func @transform_4(%arg0: i32) -> (i32, i32) {
    %c0_i32 = arith.constant 0 : i32
    %c0_i32_0 = arith.constant 0 : i32
    %c0_i32_1 = arith.constant 0 : i32
    return %c0_i32, %c0_i32_0 : i32, i32
  }
  func.func @transform_5(%arg0: i32) -> (i32, i32) {
    %c0_i32 = arith.constant 0 : i32
    %c0_i32_0 = arith.constant 0 : i32
    %c0_i32_1 = arith.constant 0 : i32
    return %c0_i32, %c0_i32_0 : i32, i32
  }
  func.func @transform_6(%arg0: i32) -> (i32, i32) {
    %c0_i32 = arith.constant 0 : i32
    %c0_i32_0 = arith.constant 0 : i32
    return %arg0, %c0_i32 : i32, i32
  }
}

module attributes {stable_mosaic.version = 11 : i64} {
  func.func @_upsample_kernel(%arg0: i32, %arg1: i32, %arg2: memref<1x1x8x8xf32, #tpu.memory_space<vmem>>, %arg3: memref<128x8xbf16, #tpu.memory_space<vmem>>, %arg4: memref<8x128xbf16, #tpu.memory_space<vmem>>, %arg5: memref<1x1x128x128xf32, #tpu.memory_space<vmem>>) attributes {dimension_semantics = [#tpu.dimension_semantics<parallel>, #tpu.dimension_semantics<parallel>], iteration_bounds = array<i64: 2, 5>, scalar_prefetch = 0 : i64, scratch_operands = 0 : i64, tpu.core_type = #tpu.core_type<tc>, window_params = [{transform_indices = @transform_0, window_bounds = array<i64: 1, 1, 8, 8>}, {pipeline_mode = #tpu.pipeline_mode<synchronous>, transform_indices = @transform_1, window_bounds = array<i64: 128, 8>}, {pipeline_mode = #tpu.pipeline_mode<synchronous>, transform_indices = @transform_2, window_bounds = array<i64: 8, 128>}, {transform_indices = @transform_3, window_bounds = array<i64: 1, 1, 128, 128>}]} {
    %c0 = arith.constant 0 : index
    %c0_0 = arith.constant 0 : index
    %c0_1 = arith.constant 0 : index
    %c0_2 = arith.constant 0 : index
    %0 = vector.load %arg2[%c0, %c0_0, %c0_1, %c0_2] : memref<1x1x8x8xf32, #tpu.memory_space<vmem>>, vector<1x1x8x8xf32>
    %1 = vector.shape_cast %0 : vector<1x1x8x8xf32> to vector<8x8xf32>
    %2 = arith.truncf %1 : vector<8x8xf32> to vector<8x8xbf16>
    %c0_3 = arith.constant 0 : index
    %c0_4 = arith.constant 0 : index
    %3 = vector.load %arg3[%c0_3, %c0_4] : memref<128x8xbf16, #tpu.memory_space<vmem>>, vector<128x8xbf16>
    %cst = arith.constant dense<0.000000e+00> : vector<128x8xf32>
    %4 = tpu.matmul %3, %2, %cst {dimension_numbers = #tpu.dot_dimension_numbers<[1], [0], [0], [1], [0, 0, 1, 1], [], []>} : vector<128x8xbf16>, vector<8x8xbf16>, vector<128x8xf32> -> vector<128x8xf32>
    %5 = arith.truncf %4 : vector<128x8xf32> to vector<128x8xbf16>
    %c0_5 = arith.constant 0 : index
    %c0_6 = arith.constant 0 : index
    %6 = vector.load %arg4[%c0_5, %c0_6] : memref<8x128xbf16, #tpu.memory_space<vmem>>, vector<8x128xbf16>
    %cst_7 = arith.constant dense<0.000000e+00> : vector<128x128xf32>
    %7 = tpu.matmul %5, %6, %cst_7 {dimension_numbers = #tpu.dot_dimension_numbers<[1], [0], [0], [1], [0, 0, 1, 1], [], []>} : vector<128x8xbf16>, vector<8x128xbf16>, vector<128x128xf32> -> vector<128x128xf32>
    %c0_8 = arith.constant 0 : index
    %c0_9 = arith.constant 0 : index
    %c0_10 = arith.constant 0 : index
    %c0_11 = arith.constant 0 : index
    %8 = vector.load %arg5[%c0_8, %c0_9, %c0_10, %c0_11] : memref<1x1x128x128xf32, #tpu.memory_space<vmem>>, vector<1x1x128x128xf32>
    %9 = vector.shape_cast %8 : vector<1x1x128x128xf32> to vector<128x128xf32>
    %10 = vector.shape_cast %7 : vector<128x128xf32> to vector<1x1x128x128xf32>
    tpu.vector_store %arg5[%c0_8, %c0_9, %c0_10, %c0_11], %10 {strides = array<i32>} : memref<1x1x128x128xf32, #tpu.memory_space<vmem>>, vector<1x1x128x128xf32>,
    return
  }
  func.func @transform_0(%arg0: i32, %arg1: i32) -> (i32, i32, i32, i32) {
    %c0_i32 = arith.constant 0 : i32
    %c0_i32_0 = arith.constant 0 : i32
    %c0_i32_1 = arith.constant 0 : i32
    return %arg0, %arg1, %c0_i32, %c0_i32_0 : i32, i32, i32, i32
  }
  func.func @transform_1(%arg0: i32, %arg1: i32) -> (i32, i32) {
    %c0_i32 = arith.constant 0 : i32
    %c0_i32_0 = arith.constant 0 : i32
    %c0_i32_1 = arith.constant 0 : i32
    return %c0_i32, %c0_i32_0 : i32, i32
  }
  func.func @transform_2(%arg0: i32, %arg1: i32) -> (i32, i32) {
    %c0_i32 = arith.constant 0 : i32
    %c0_i32_0 = arith.constant 0 : i32
    %c0_i32_1 = arith.constant 0 : i32
    return %c0_i32, %c0_i32_0 : i32, i32
  }
  func.func @transform_3(%arg0: i32, %arg1: i32) -> (i32, i32, i32, i32) {
    %c0_i32 = arith.constant 0 : i32
    %c0_i32_0 = arith.constant 0 : i32
    %c0_i32_1 = arith.constant 0 : i32
    return %arg0, %arg1, %c0_i32, %c0_i32_0 : i32, i32, i32, i32
  }
}

</mosaic_0001>

<llo_original>
// kernel: rcca_forward.8
$region0: #{rcca_forward.8}
  #allocation0 [shape = 'u32[]', space=smem, size = 0x4, offset = 0x4, fixed_abs, tag = 'smem constant byte address 0x4 - core index']
  #allocation1 [shape = 'u32[144,128]{1,0:T(1,128)}', space=vmem, size = 0x12000, scoped, tag = 'internal scratch']
  %s0 = inlined_call_operand.vmem [shape: bf16[2,10,10,16], index: 0, kind: input, shape index: {}]
  %s1 = inlined_call_operand.vmem [shape: bf16[144,16], index: 1, kind: input, shape index: {}]
  %s2 = inlined_call_operand.vmem [shape: bf16[2,8,8,16], index: 2, kind: output, shape index: {}]
  %s3 = sld [smem:[#allocation0]]
  $region41: #{rcca_forward.8} parent=0
    _
  %s5 = ssub.s32 1, %s3
  %s6 = scalar_select 0, %s5, %s3
  loop: start=0, step=1, limit=4
  $region2: #{rcca_forward.8} parent=0 // loop_pre_header
    _
  $region3: #{rcca_forward.8} parent=0 // loop_header
    %s8 = sphi 0, %s12
    %p9 = scmp.ge.s32.totalorder %s8, 4
    %s18 = sphi 0, %s20
    %s21 = sphi 0, %s18
    %s22 = sphi 0, %s21
    %s38 = sphi 0, %s22
    %s42 = sphi 0, %s42
    %s44 = sphi 0, %s42
    %s45 = sphi 0, %s44
    %s59 = sphi 0, %s45
    %s65 = sphi 0, %s67
    %s68 = sphi 0, %s65
    %s69 = sphi 0, %s68
    %s85 = sphi 0, %s69
  $region4: #{rcca_forward.8} parent=0 // loop_header_branch
    %11 = sbr.rel (%p9) target = $region8
  $region5: #{rcca_forward.8} parent=0 // loop_body
    %s13 = ssub.s32 %s8, 1
    %s14 = ssub.s32 %s8, 2
    %s15 = sadd.s32 %s8, 1
    %s16 = ssub.s32 %s8, %s15
    %p17 = scmp.eq.s32.totalorder %s16, 0
    %s19 = sadd.s32 %s18, 1
    %s20 = scalar_select %p17, %s18, %s19
    %p23 = pneg %p17
    %p24 = scmp.eq.s32.totalorder %s8, 1
    %p25 = por %p23, %p24
    %p26 = scmp.ne.s32.totalorder %s18, %s21
    %p27 = scmp.eq.s32.totalorder %s8, 0
    %p28 = por %p26, %p27
    %p29 = scmp.ne.s32.totalorder %s18, %s21
    %p30 = scmp.eq.s32.totalorder %s13, 1
    %p31 = por %p29, %p30
    %p32 = scmp.ne.s32.totalorder %s21, %s22
    %p33 = scmp.eq.s32.totalorder %s13, 0
    %p34 = por %p32, %p33
    %p35 = scmp.ne.s32.totalorder %s21, %s22
    %p36 = scmp.eq.s32.totalorder %s14, 1
    %p37 = por %p35, %p36
    %p39 = scmp.ne.s32.totalorder %s22, %s38
    %p40 = scmp.eq.s32.totalorder %s14, 0
    %p41 = por %p39, %p40
    %s43 = sadd.s32 %s42, 1
    %p46 = scmp.eq.s32.totalorder %s8, 1
    %p47 = scmp.ne.s32.totalorder %s42, %s44
    %p48 = scmp.eq.s32.totalorder %s8, 0
    %p49 = por %p47, %p48
    %p50 = scmp.ne.s32.totalorder %s42, %s44
    %p51 = scmp.eq.s32.totalorder %s13, 1
    %p52 = por %p50, %p51
    %p53 = scmp.ne.s32.totalorder %s44, %s45
    %p54 = scmp.eq.s32.totalorder %s13, 0
    %p55 = por %p53, %p54
    %p56 = scmp.ne.s32.totalorder %s44, %s45
    %p57 = scmp.eq.s32.totalorder %s14, 1
    %p58 = por %p56, %p57
    %p60 = scmp.ne.s32.totalorder %s45, %s59
    %p61 = scmp.eq.s32.totalorder %s14, 0
    %p62 = por %p60, %p61
    %s63 = ssub.s32 %s8, %s15
    %p64 = scmp.eq.s32.totalorder %s63, 0
    %s66 = sadd.s32 %s65, 1
    %s67 = scalar_select %p64, %s65, %s66
    %p70 = pneg %p64
    %p71 = scmp.eq.s32.totalorder %s8, 1
    %p72 = por %p70, %p71
    %p73 = scmp.ne.s32.totalorder %s65, %s68
    %p74 = scmp.eq.s32.totalorder %s8, 0
    %p75 = por %p73, %p74
    %p76 = scmp.ne.s32.totalorder %s65, %s68
    %p77 = scmp.eq.s32.totalorder %s13, 1
    %p78 = por %p76, %p77
    %p79 = scmp.ne.s32.totalorder %s68, %s69
    %p80 = scmp.eq.s32.totalorder %s13, 0
    %p81 = por %p79, %p80
    %p82 = scmp.ne.s32.totalorder %s68, %s69
    %p83 = scmp.eq.s32.totalorder %s14, 1
    %p84 = por %p82, %p83
    %p86 = scmp.ne.s32.totalorder %s69, %s85
    %p87 = scmp.eq.s32.totalorder %s14, 0
    %p88 = por %p86, %p87
    %p89 = scmp.le.s32.totalorder 1, %s8
    %p90 = scmp.lt.s32.totalorder %s8, 3
    %p91 = pnand %p89, %p90
    %p92 = pneg %p91
    // Predicated region
    $region9: #{rcca_forward.8} parent=5 // pred_check
      _
    $region10: #{rcca_forward.8} parent=5 // pred_check_branch
      %94 = sbr.rel (%p91) target = $region12
    $region11: #{rcca_forward.8} parent=5 // pred_region
      %s95 = ssub.s32 %s8, 1
      // Predicated region
      $region13: #{rcca_forward.8} parent=11 // pred_check
        %p96 = pneg %p55
      $region14: #{rcca_forward.8} parent=11 // pred_check_branch
        %98 = sbr.rel (%p96) target = $region16
      $region15: #{rcca_forward.8} parent=11 // pred_region
        _
      $region16: #{rcca_forward.8} parent=11 // pred_fallthru
        _
    $region12: #{rcca_forward.8} parent=5 // pred_fallthru
      _
    %p99 = scmp.lt.s32.totalorder %s8, 2
    // Predicated region
    $region17: #{rcca_forward.8} parent=5 // pred_check
      %p100 = pneg %p99
    $region18: #{rcca_forward.8} parent=5 // pred_check_branch
      %102 = sbr.rel (%p100) target = $region20
    $region19: #{rcca_forward.8} parent=5 // pred_region
      // Predicated region
      $region21: #{rcca_forward.8} parent=19 // pred_check
        %p103 = pneg %p28
      $region22: #{rcca_forward.8} parent=19 // pred_check_branch
        %105 = sbr.rel (%p103) target = $region24
      $region23: #{rcca_forward.8} parent=19 // pred_region
        %p106 = scmp.lt.s32.totalorder %s8, 1
        %s107 = scalar_select %p106, %s8, 1
        %s108 = smul.addr %s107, 20
        %s109 = smul.addr %s108, 4
        %s110 = scalar_lea.vmem %s0, %s109
      $region24: #{rcca_forward.8} parent=19 // pred_fallthru
        _
    $region20: #{rcca_forward.8} parent=5 // pred_fallthru
      _
    %p111 = scmp.le.s32.totalorder 1, %s8
    %p112 = scmp.lt.s32.totalorder %s8, 3
    %p113 = pnand %p111, %p112
    %p114 = pneg %p113
    // Predicated region
    $region25: #{rcca_forward.8} parent=5 // pred_check
      _
    $region26: #{rcca_forward.8} parent=5 // pred_check_branch
      %116 = sbr.rel (%p113) target = $region28
    $region27: #{rcca_forward.8} parent=5 // pred_region
      %s117 = ssub.s32 %s8, 1
      %p118 = scmp.lt.s32.totalorder %s13, 1
      %s119 = scalar_select %p118, %s13, 1
      %s120 = smul.addr %s119, 20
      %s121 = smul.addr %s120, 4
      %s122 = scalar_lea.vmem %s0, %s121
      %p123 = pneg %p34
      %p124 = pneg %p31
      %p125 = pneg %p55
      %p126 = pneg %p52
      %p127 = pneg %p81
      %p128 = pneg %p78
      %p129 = scmp.lt.s32.totalorder %s13, 1
      %s130 = scalar_select %p129, %s13, 1
      %s131 = smul.addr %s130, 8
      %s132 = smul.addr %s131, 4
      %s133 = scalar_lea.vmem %s2, %s132
      %p134 = scmp.lt.s32.totalorder %s13, 1
      %s135 = scalar_select %p134, %s13, 1
      %s136 = smul.addr %s135, 20
      %s137 = smul.addr %s136, 4
      %s138 = scalar_lea.vmem %s0, %s137
      %p139 = scmp.lt.s32.totalorder %s13, 1
      %s140 = scalar_select %p139, %s13, 1
      %s141 = smul.addr %s140, 8
      %s142 = smul.addr %s141, 4
      %s143 = scalar_lea.vmem %s2, %s142
      %v145 = vld [vmem:[%s138] sm:$0xf]
      %v146 = vld [vmem:[%s138 + $0x4] sm:$0x1]
      %v147 = vld [vmem:[%s138 + $0x8] sm:$0xf]
      %v148 = vld [vmem:[%s138 + $0xc] sm:$0x1]
      %v149 = vld [vmem:[%s138 + $0x10] sm:$0xf]
      %v150 = vld [vmem:[%s138 + $0x14] sm:$0x1]
      %v151 = vld [vmem:[%s138 + $0x18] sm:$0xf]
      %v152 = vld [vmem:[%s138 + $0x1c] sm:$0x1]
      %v153 = vld [vmem:[%s138 + $0x20] sm:$0xf]
      %v154 = vld [vmem:[%s138 + $0x24] sm:$0x1]
      %v155 = vld [vmem:[%s138 + $0x28] sm:$0xf]
      %v156 = vld [vmem:[%s138 + $0x2c] sm:$0x1]
      %v157 = vld [vmem:[%s138 + $0x30] sm:$0xf]
      %v158 = vld [vmem:[%s138 + $0x34] sm:$0x1]
      %v159 = vld [vmem:[%s138 + $0x38] sm:$0xf]
      %v160 = vld [vmem:[%s138 + $0x3c] sm:$0x1]
      %v161 = vld [vmem:[%s138 + $0x40] sm:$0xf]
      %v162 = vld [vmem:[%s138 + $0x44] sm:$0x1]
      %v163 = vld [vmem:[%s138 + $0x48] sm:$0xf]
      %v164 = vld [vmem:[%s138 + $0x4c] sm:$0x1]
      %v165 = vld [vmem:[%s1] sm:$0xf]
      %v166 = vld [vmem:[%s1 + $0x4] sm:$0xf]
      %vm167 = vsmask.f32 3328
      %vm168 = vsmask.f32 7440
      %vm169 = vmor %vm167, %vm168
      %v171 = vshrl.u32 %v145, 16
      %v173 = vrot.slane %v171, 4
      %v174 = vshll.u32 %v145, 16
      %v176 = vrot.slane %v174, 5
      %v177 = vor.u32 %v173, %v176
      %v178 = vrot.slane %v177, 4
      %v180 = vshll.u32 %v146, 16
      %v182 = vrot.slane %v180, 5
      %v183 = vsel %vm169, %v178, %v182
      %v185 = vshrl.u32 %v147, 16
      %v187 = vrot.slane %v185, 4
      %v188 = vshll.u32 %v147, 16
      %v190 = vrot.slane %v188, 5
      %v191 = vor.u32 %v187, %v190
      %v192 = vrot.slane %v191, 4
      %v194 = vshll.u32 %v148, 16
      %v196 = vrot.slane %v194, 5
      %v197 = vsel %vm169, %v192, %v196
      %v199 = vshrl.u32 %v149, 16
      %v201 = vrot.slane %v199, 4
      %v202 = vshll.u32 %v149, 16
      %v204 = vrot.slane %v202, 5
      %v205 = vor.u32 %v201, %v204
      %v206 = vrot.slane %v205, 4
      %v208 = vshll.u32 %v150, 16
      %v210 = vrot.slane %v208, 5
      %v211 = vsel %vm169, %v206, %v210
      %v213 = vshrl.u32 %v151, 16
      %v215 = vrot.slane %v213, 4
      %v216 = vshll.u32 %v151, 16
      %v218 = vrot.slane %v216, 5
      %v219 = vor.u32 %v215, %v218
      %v220 = vrot.slane %v219, 4
      %v222 = vshll.u32 %v152, 16
      %v224 = vrot.slane %v222, 5
      %v225 = vsel %vm169, %v220, %v224
      %v227 = vshrl.u32 %v153, 16
      %v229 = vrot.slane %v227, 4
      %v230 = vshll.u32 %v153, 16
      %v232 = vrot.slane %v230, 5
      %v233 = vor.u32 %v229, %v232
      %v234 = vrot.slane %v233, 4
      %v236 = vshll.u32 %v154, 16
      %v238 = vrot.slane %v236, 5
      %v239 = vsel %vm169, %v234, %v238
      %v241 = vshrl.u32 %v155, 16
      %v243 = vrot.slane %v241, 4
      %v244 = vshll.u32 %v155, 16
      %v246 = vrot.slane %v244, 5
      %v247 = vor.u32 %v243, %v246
      %v248 = vrot.slane %v247, 4
      %v250 = vshll.u32 %v156, 16
      %v252 = vrot.slane %v250, 5
      %v253 = vsel %vm169, %v248, %v252
      %v255 = vshrl.u32 %v157, 16
      %v257 = vrot.slane %v255, 4
      %v258 = vshll.u32 %v157, 16
      %v260 = vrot.slane %v258, 5
      %v261 = vor.u32 %v257, %v260
      %v262 = vrot.slane %v261, 4
      %v264 = vshll.u32 %v158, 16
      %v266 = vrot.slane %v264, 5
      %v267 = vsel %vm169, %v262, %v266
      %v269 = vshrl.u32 %v159, 16
      %v271 = vrot.slane %v269, 4
      %v272 = vshll.u32 %v159, 16
      %v274 = vrot.slane %v272, 5
      %v275 = vor.u32 %v271, %v274
      %v276 = vrot.slane %v275, 4
      %v278 = vshll.u32 %v160, 16
      %v280 = vrot.slane %v278, 5
      %v281 = vsel %vm169, %v276, %v280
      %v282 = vld [vmem:[%s1 + $0x8] sm:$0xf]
      %v283 = vld [vmem:[%s1 + $0xc] sm:$0xf]
      %v284 = vunpack.c.l.b16 %v183
      %v285 = vunpack.c.l.b16 %v197
      %v286 = vunpack.c.l.b16 %v211
      %v287 = vunpack.c.l.b16 %v225
      %v288 = vunpack.c.l.b16 %v239
      %v289 = vunpack.c.l.b16 %v253
      %v290 = vunpack.c.l.b16 %v267
      %v291 = vunpack.c.l.b16 %v281
      %v292 = vpack.c.b16 %v285, %v284
      %v293 = vpack.c.b16 %v287, %v286
      %v294 = vpack.c.b16 %v289, %v288
      %v295 = vpack.c.b16 %v291, %v290
      %v298 = vunpack.c.l.b16 %v282
      %v299 = vunpack.c.l.b16 %v283
      %v300 = vpack.c.b16 %v299, %v298
      %vm302 = vcmask 130048
      %v304 = vsel %vm302, %v292, 0
      %v307 = vsel %vm302, %v293, 0
      %v310 = vsel %vm302, %v294, 0
      %v313 = vsel %vm302, %v295, 0
      %315 = vmatprep.subr.bf16.mxu0 0
      %316 = vmatpush1.bf16.msra.mxu0 %v300
      %317 = vmatprep.subr.bf16.mxu0 0
      %318 = vmatpush1.bf16.msra.mxu0 0
      %319 = vmatprep.subr.bf16.mxu0 0
      %320 = vmatpush1.bf16.msra.mxu0 0
      %321 = vmatprep.subr.bf16.mxu0 0
      %322 = vmatpush1.bf16.msra.mxu0 0
      %323 = vmatprep.subr.bf16.mxu0 0
      %324 = vmatpush1.bf16.msra.mxu0 0
      %325 = vmatprep.subr.bf16.mxu0 0
      %326 = vmatpush1.bf16.msra.mxu0 0
      %327 = vmatprep.subr.bf16.mxu0 0
      %328 = vmatpush1.bf16.msra.mxu0 0
      %329 = vmatprep.subr.bf16.mxu0 0
      %330 = vmatpush1.bf16.msra.mxu0 0
      %331 = vmatprep.subr.bf16.mxu0 0
      %332 = vmatpush1.bf16.msra.mxu0 0
      %333 = vmatprep.subr.bf16.mxu0 0
      %334 = vmatpush1.bf16.msra.mxu0 0
      %335 = vmatprep.subr.bf16.mxu0 0
      %336 = vmatpush1.bf16.msra.mxu0 0
      %337 = vmatprep.subr.bf16.mxu0 0
      %338 = vmatpush1.bf16.msra.mxu0 0
      %339 = vmatprep.subr.bf16.mxu0 0
      %340 = vmatpush1.bf16.msra.mxu0 0
      %341 = vmatprep.subr.bf16.mxu0 0
      %342 = vmatpush1.bf16.msra.mxu0 0
      %343 = vmatprep.subr.bf16.mxu0 0
      %344 = vmatpush1.bf16.msra.mxu0 0
      %345 = vmatprep.subr.bf16.mxu0 0
      %346 = vmatpush1.bf16.msra.mxu0 0
      %347 = vmatprep.mubr.bf16.mxu0 0
      %348 = vmatmul.mubr.bf16.gmra.mrb[0].mxu0 %v304
      %v349 = vpop.f32.mrb[0].mxu0
      %v350 = vadd.f32 0.0, %v349
      %v351 = vpop.f32.mrb[0].mxu0
      %v352 = vpop.f32.mrb[0].mxu0
      %v353 = vadd.f32 0.0, %v352
      %v354 = vpop.f32.mrb[0].mxu0
      %355 = vmatprep.mubr.bf16.mxu0 0
      %356 = vmatmul.mubr.bf16.gmra.mrb[0].mxu0 %v307
      %v357 = vpop.f32.mrb[0].mxu0
      %v358 = vadd.f32 0.0, %v357
      %v359 = vpop.f32.mrb[0].mxu0
      %v360 = vpop.f32.mrb[0].mxu0
      %v361 = vadd.f32 0.0, %v360
      %v362 = vpop.f32.mrb[0].mxu0
      %363 = vmatprep.mubr.bf16.mxu0 0
      %364 = vmatmul.mubr.bf16.gmra.mrb[0].mxu0 %v310
      %v365 = vpop.f32.mrb[0].mxu0
      %v366 = vadd.f32 0.0, %v365
      %v367 = vpop.f32.mrb[0].mxu0
      %v368 = vpop.f32.mrb[0].mxu0
      %v369 = vadd.f32 0.0, %v368
      %v370 = vpop.f32.mrb[0].mxu0
      %371 = vmatprep.mubr.bf16.mxu0 0
      %372 = vmatmul.mubr.bf16.gmra.mrb[0].mxu0 %v313
      %v373 = vpop.f32.mrb[0].mxu0
      %v374 = vadd.f32 0.0, %v373
      %v375 = vpop.f32.mrb[0].mxu0
      %v376 = vpop.f32.mrb[0].mxu0
      %v377 = vadd.f32 0.0, %v376
      %v378 = vpop.f32.mrb[0].mxu0
      %379 = vdwg.mxu0
      %v388 = vunpack.c.l.b16 %v145
      %v389 = vunpack.c.l.b16 %v147
      %v390 = vunpack.c.l.b16 %v149
      %v391 = vunpack.c.l.b16 %v151
      %v392 = vunpack.c.l.b16 %v153
      %v393 = vunpack.c.l.b16 %v155
      %v394 = vunpack.c.l.b16 %v157
      %v395 = vunpack.c.l.b16 %v159
      %v396 = vpack.c.b16 %v389, %v388
      %v397 = vpack.c.b16 %v391, %v390
      %v398 = vpack.c.b16 %v393, %v392
      %v399 = vpack.c.b16 %v395, %v394
      %v402 = vunpack.c.l.b16 %v165
      %v403 = vunpack.c.l.b16 %v166
      %v404 = vpack.c.b16 %v403, %v402
      %v407 = vsel %vm302, %v396, 0
      %v410 = vsel %vm302, %v397, 0
      %v413 = vsel %vm302, %v398, 0
      %v416 = vsel %vm302, %v399, 0
      %418 = vmatprep.subr.bf16.mxu0 0
      %419 = vmatpush1.bf16.msra.mxu0 %v404
      %420 = vmatprep.subr.bf16.mxu0 0
      %421 = vmatpush1.bf16.msra.mxu0 0
      %422 = vmatprep.subr.bf16.mxu0 0
      %423 = vmatpush1.bf16.msra.mxu0 0
      %424 = vmatprep.subr.bf16.mxu0 0
      %425 = vmatpush1.bf16.msra.mxu0 0
      %426 = vmatprep.subr.bf16.mxu0 0
      %427 = vmatpush1.bf16.msra.mxu0 0
      %428 = vmatprep.subr.bf16.mxu0 0
      %429 = vmatpush1.bf16.msra.mxu0 0
      %430 = vmatprep.subr.bf16.mxu0 0
      %431 = vmatpush1.bf16.msra.mxu0 0
      %432 = vmatprep.subr.bf16.mxu0 0
      %433 = vmatpush1.bf16.msra.mxu0 0
      %434 = vmatprep.subr.bf16.mxu0 0
      %435 = vmatpush1.bf16.msra.mxu0 0
      %436 = vmatprep.subr.bf16.mxu0 0
      %437 = vmatpush1.bf16.msra.mxu0 0
      %438 = vmatprep.subr.bf16.mxu0 0
      %439 = vmatpush1.bf16.msra.mxu0 0
      %440 = vmatprep.subr.bf16.mxu0 0
      %441 = vmatpush1.bf16.msra.mxu0 0
      %442 = vmatprep.subr.bf16.mxu0 0
      %443 = vmatpush1.bf16.msra.mxu0 0
      %444 = vmatprep.subr.bf16.mxu0 0
      %445 = vmatpush1.bf16.msra.mxu0 0
      %446 = vmatprep.subr.bf16.mxu0 0
      %447 = vmatpush1.bf16.msra.mxu0 0
      %448 = vmatprep.subr.bf16.mxu0 0
      %449 = vmatpush1.bf16.msra.mxu0 0
      %450 = vmatprep.mubr.bf16.mxu0 0
      %451 = vmatmul.mubr.bf16.gmra.mrb[0].mxu0 %v407
      %v452 = vpop.f32.mrb[0].mxu0
      %v453 = vadd.f32 %v350, %v452
      %v454 = vpop.f32.mrb[0].mxu0
      %v455 = vpop.f32.mrb[0].mxu0
      %v456 = vadd.f32 %v353, %v455
      %v457 = vpop.f32.mrb[0].mxu0
      %458 = vmatprep.mubr.bf16.mxu0 0
      %459 = vmatmul.mubr.bf16.gmra.mrb[0].mxu0 %v410
      %v460 = vpop.f32.mrb[0].mxu0
      %v461 = vadd.f32 %v358, %v460
      %v462 = vpop.f32.mrb[0].mxu0
      %v463 = vpop.f32.mrb[0].mxu0
      %v464 = vadd.f32 %v361, %v463
      %v465 = vpop.f32.mrb[0].mxu0
      %466 = vmatprep.mubr.bf16.mxu0 0
      %467 = vmatmul.mubr.bf16.gmra.mrb[0].mxu0 %v413
      %v468 = vpop.f32.mrb[0].mxu0
      %v469 = vadd.f32 %v366, %v468
      %v470 = vpop.f32.mrb[0].mxu0
      %v471 = vpop.f32.mrb[0].mxu0
      %v472 = vadd.f32 %v369, %v471
      %v473 = vpop.f32.mrb[0].mxu0
      %474 = vmatprep.mubr.bf16.mxu0 0
      %475 = vmatmul.mubr.bf16.gmra.mrb[0].mxu0 %v416
      %v476 = vpop.f32.mrb[0].mxu0
      %v477 = vadd.f32 %v374, %v476
      %v478 = vpop.f32.mrb[0].mxu0
      %v479 = vpop.f32.mrb[0].mxu0
      %v480 = vadd.f32 %v377, %v479
      %v481 = vpop.f32.mrb[0].mxu0
      %482 = vdwg.mxu0
      %vm491 = vcmask 1042432
      %vm492 = vcmask 1046532
      %vm493 = vmor %vm491, %vm492
      %v494 = vrot.slane %v145, 5
      %v495 = vrot.slane %v494, 4
      %v496 = vrot.slane %v146, 5
      %v497 = vsel %vm493, %v495, %v496
      %v498 = vrot.slane %v147, 5
      %v499 = vrot.slane %v498, 4
      %v500 = vrot.slane %v148, 5
      %v501 = vsel %vm493, %v499, %v500
      %v502 = vrot.slane %v149, 5
      %v503 = vrot.slane %v502, 4
      %v504 = vrot.slane %v150, 5
      %v505 = vsel %vm493, %v503, %v504
      %v506 = vrot.slane %v151, 5
      %v507 = vrot.slane %v506, 4
      %v508 = vrot.slane %v152, 5
      %v509 = vsel %vm493, %v507, %v508
      %v510 = vrot.slane %v153, 5
      %v511 = vrot.slane %v510, 4
      %v512 = vrot.slane %v154, 5
      %v513 = vsel %vm493, %v511, %v512
      %v514 = vrot.slane %v155, 5
      %v515 = vrot.slane %v514, 4
      %v516 = vrot.slane %v156, 5
      %v517 = vsel %vm493, %v515, %v516
      %v518 = vrot.slane %v157, 5
      %v519 = vrot.slane %v518, 4
      %v520 = vrot.slane %v158, 5
      %v521 = vsel %vm493, %v519, %v520
      %v522 = vrot.slane %v159, 5
      %v523 = vrot.slane %v522, 4
      %v524 = vrot.slane %v160, 5
      %v525 = vsel %vm493, %v523, %v524
      %v526 = vld [vmem:[%s1 + $0x10] sm:$0xf]
      %v527 = vld [vmem:[%s1 + $0x14] sm:$0xf]
      %v528 = vunpack.c.l.b16 %v497
      %v529 = vunpack.c.l.b16 %v501
      %v530 = vunpack.c.l.b16 %v505
      %v531 = vunpack.c.l.b16 %v509
      %v532 = vunpack.c.l.b16 %v513
      %v533 = vunpack.c.l.b16 %v517
      %v534 = vunpack.c.l.b16 %v521
      %v535 = vunpack.c.l.b16 %v525
      %v536 = vpack.c.b16 %v529, %v528
      %v537 = vpack.c.b16 %v531, %v530
      %v538 = vpack.c.b16 %v533, %v532
      %v539 = vpack.c.b16 %v535, %v534
      %v542 = vunpack.c.l.b16 %v526
      %v543 = vunpack.c.l.b16 %v527
      %v544 = vpack.c.b16 %v543, %v542
      %v547 = vsel %vm302, %v536, 0
      %v550 = vsel %vm302, %v537, 0
      %v553 = vsel %vm302, %v538, 0
      %v556 = vsel %vm302, %v539, 0
      %558 = vmatprep.subr.bf16.mxu0 0
      %559 = vmatpush1.bf16.msra.mxu0 %v544
      %560 = vmatprep.subr.bf16.mxu0 0
      %561 = vmatpush1.bf16.msra.mxu0 0
      %562 = vmatprep.subr.bf16.mxu0 0
      %563 = vmatpush1.bf16.msra.mxu0 0
      %564 = vmatprep.subr.bf16.mxu0 0
      %565 = vmatpush1.bf16.msra.mxu0 0
      %566 = vmatprep.subr.bf16.mxu0 0
      %567 = vmatpush1.bf16.msra.mxu0 0
      %568 = vmatprep.subr.bf16.mxu0 0
      %569 = vmatpush1.bf16.msra.mxu0 0
      %570 = vmatprep.subr.bf16.mxu0 0
      %571 = vmatpush1.bf16.msra.mxu0 0
      %572 = vmatprep.subr.bf16.mxu0 0
      %573 = vmatpush1.bf16.msra.mxu0 0
      %574 = vmatprep.subr.bf16.mxu0 0
      %575 = vmatpush1.bf16.msra.mxu0 0
      %576 = vmatprep.subr.bf16.mxu0 0
      %577 = vmatpush1.bf16.msra.mxu0 0
      %578 = vmatprep.subr.bf16.mxu0 0
      %579 = vmatpush1.bf16.msra.mxu0 0
      %580 = vmatprep.subr.bf16.mxu0 0
      %581 = vmatpush1.bf16.msra.mxu0 0
      %582 = vmatprep.subr.bf16.mxu0 0
      %583 = vmatpush1.bf16.msra.mxu0 0
      %584 = vmatprep.subr.bf16.mxu0 0
      %585 = vmatpush1.bf16.msra.mxu0 0
      %586 = vmatprep.subr.bf16.mxu0 0
      %587 = vmatpush1.bf16.msra.mxu0 0
      %588 = vmatprep.subr.bf16.mxu0 0
      %589 = vmatpush1.bf16.msra.mxu0 0
      %590 = vmatprep.mubr.bf16.mxu0 0
      %591 = vmatmul.mubr.bf16.gmra.mrb[0].mxu0 %v547
      %v592 = vpop.f32.mrb[0].mxu0
      %v593 = vadd.f32 0.0, %v592
      %v594 = vpop.f32.mrb[0].mxu0
      %v595 = vpop.f32.mrb[0].mxu0
      %v596 = vadd.f32 0.0, %v595
      %v597 = vpop.f32.mrb[0].mxu0
      %598 = vmatprep.mubr.bf16.mxu0 0
      %599 = vmatmul.mubr.bf16.gmra.mrb[0].mxu0 %v550
      %v600 = vpop.f32.mrb[0].mxu0
      %v601 = vadd.f32 0.0, %v600
      %v602 = vpop.f32.mrb[0].mxu0
      %v603 = vpop.f32.mrb[0].mxu0
      %v604 = vadd.f32 0.0, %v603
      %v605 = vpop.f32.mrb[0].mxu0
      %606 = vmatprep.mubr.bf16.mxu0 0
      %607 = vmatmul.mubr.bf16.gmra.mrb[0].mxu0 %v553
      %v608 = vpop.f32.mrb[0].mxu0
      %v609 = vadd.f32 0.0, %v608
      %v610 = vpop.f32.mrb[0].mxu0
      %v611 = vpop.f32.mrb[0].mxu0
      %v612 = vadd.f32 0.0, %v611
      %v613 = vpop.f32.mrb[0].mxu0
      %614 = vmatprep.mubr.bf16.mxu0 0
      %615 = vmatmul.mubr.bf16.gmra.mrb[0].mxu0 %v556
      %v616 = vpop.f32.mrb[0].mxu0
      %v617 = vadd.f32 0.0, %v616
      %v618 = vpop.f32.mrb[0].mxu0
      %v619 = vpop.f32.mrb[0].mxu0
      %v620 = vadd.f32 0.0, %v619
      %v621 = vpop.f32.mrb[0].mxu0
      %622 = vdwg.mxu0
      %v623 = vadd.f32 %v453, %v593
      %v624 = vadd.f32 %v456, %v596
      %v625 = vadd.f32 %v461, %v601
      %v626 = vadd.f32 %v464, %v604
      %v627 = vadd.f32 %v469, %v609
      %v628 = vadd.f32 %v472, %v612
      %v629 = vadd.f32 %v477, %v617
      %v630 = vadd.f32 %v480, %v620
      %v631 = vld [vmem:[%s1 + $0x18] sm:$0xf]
      %v632 = vld [vmem:[%s1 + $0x1c] sm:$0xf]
      %v634 = vunpack.c.l.b16 %v161
      %v635 = vpack.c.b16 %v390, %v389
      %v636 = vpack.c.b16 %v392, %v391
      %v637 = vpack.c.b16 %v394, %v393
      %v638 = vpack.c.b16 %v634, %v395
      %v641 = vunpack.c.l.b16 %v631
      %v642 = vunpack.c.l.b16 %v632
      %v643 = vpack.c.b16 %v642, %v641
      %v646 = vsel %vm302, %v635, 0
      %v649 = vsel %vm302, %v636, 0
      %v652 = vsel %vm302, %v637, 0
      %v655 = vsel %vm302, %v638, 0
      %657 = vmatprep.subr.bf16.mxu0 0
      %658 = vmatpush1.bf16.msra.mxu0 %v643
      %659 = vmatprep.subr.bf16.mxu0 0
      %660 = vmatpush1.bf16.msra.mxu0 0
      %661 = vmatprep.subr.bf16.mxu0 0
      %662 = vmatpush1.bf16.msra.mxu0 0
      %663 = vmatprep.subr.bf16.mxu0 0
      %664 = vmatpush1.bf16.msra.mxu0 0
      %665 = vmatprep.subr.bf16.mxu0 0
      %666 = vmatpush1.bf16.msra.mxu0 0
      %667 = vmatprep.subr.bf16.mxu0 0
      %668 = vmatpush1.bf16.msra.mxu0 0
      %669 = vmatprep.subr.bf16.mxu0 0
      %670 = vmatpush1.bf16.msra.mxu0 0
      %671 = vmatprep.subr.bf16.mxu0 0
      %672 = vmatpush1.bf16.msra.mxu0 0
      %673 = vmatprep.subr.bf16.mxu0 0
      %674 = vmatpush1.bf16.msra.mxu0 0
      %675 = vmatprep.subr.bf16.mxu0 0
      %676 = vmatpush1.bf16.msra.mxu0 0
      %677 = vmatprep.subr.bf16.mxu0 0
      %678 = vmatpush1.bf16.msra.mxu0 0
      %679 = vmatprep.subr.bf16.mxu0 0
      %680 = vmatpush1.bf16.msra.mxu0 0
      %681 = vmatprep.subr.bf16.mxu0 0
      %682 = vmatpush1.bf16.msra.mxu0 0
      %683 = vmatprep.subr.bf16.mxu0 0
      %684 = vmatpush1.bf16.msra.mxu0 0
      %685 = vmatprep.subr.bf16.mxu0 0
      %686 = vmatpush1.bf16.msra.mxu0 0
      %687 = vmatprep.subr.bf16.mxu0 0
      %688 = vmatpush1.bf16.msra.mxu0 0
      %689 = vmatprep.mubr.bf16.mxu0 0
      %690 = vmatmul.mubr.bf16.gmra.mrb[0].mxu0 %v646
      %v691 = vpop.f32.mrb[0].mxu0
      %v692 = vadd.f32 0.0, %v691
      %v693 = vpop.f32.mrb[0].mxu0
      %v694 = vpop.f32.mrb[0].mxu0
      %v695 = vadd.f32 0.0, %v694
      %v696 = vpop.f32.mrb[0].mxu0
      %697 = vmatprep.mubr.bf16.mxu0 0
      %698 = vmatmul.mubr.bf16.gmra.mrb[0].mxu0 %v649
      %v699 = vpop.f32.mrb[0].mxu0
      %v700 = vadd.f32 0.0, %v699
      %v701 = vpop.f32.mrb[0].mxu0
      %v702 = vpop.f32.mrb[0].mxu0
      %v703 = vadd.f32 0.0, %v702
      %v704 = vpop.f32.mrb[0].mxu0
      %705 = vmatprep.mubr.bf16.mxu0 0
      %706 = vmatmul.mubr.bf16.gmra.mrb[0].mxu0 %v652
      %v707 = vpop.f32.mrb[0].mxu0
      %v708 = vadd.f32 0.0, %v707
      %v709 = vpop.f32.mrb[0].mxu0
      %v710 = vpop.f32.mrb[0].mxu0
      %v711 = vadd.f32 0.0, %v710
      %v712 = vpop.f32.mrb[0].mxu0
      %713 = vmatprep.mubr.bf16.mxu0 0
      %714 = vmatmul.mubr.bf16.gmra.mrb[0].mxu0 %v655
      %v715 = vpop.f32.mrb[0].mxu0
      %v716 = vadd.f32 0.0, %v715
      %v717 = vpop.f32.mrb[0].mxu0
      %v718 = vpop.f32.mrb[0].mxu0
      %v719 = vadd.f32 0.0, %v718
      %v720 = vpop.f32.mrb[0].mxu0
      %721 = vdwg.mxu0
      %v722 = vadd.f32 %v623, %v692
      %v723 = vadd.f32 %v624, %v695
      %v724 = vadd.f32 %v625, %v700
      %v725 = vadd.f32 %v626, %v703
      %v726 = vadd.f32 %v627, %v708
      %v727 = vadd.f32 %v628, %v711
      %v728 = vadd.f32 %v629, %v716
      %v729 = vadd.f32 %v630, %v719
      %v731 = vshrl.u32 %v161, 16
      %v733 = vrot.slane %v731, 4
      %v734 = vshll.u32 %v161, 16
      %v736 = vrot.slane %v734, 5
      %v737 = vor.u32 %v733, %v736
      %v738 = vrot.slane %v737, 4
      %v740 = vshll.u32 %v162, 16
      %v742 = vrot.slane %v740, 5
      %v743 = vsel %vm169, %v738, %v742
      %v744 = vld [vmem:[%s1 + $0x20] sm:$0xf]
      %v745 = vld [vmem:[%s1 + $0x24] sm:$0xf]
      %v746 = vunpack.c.l.b16 %v743
      %v747 = vpack.c.b16 %v286, %v285
      %v748 = vpack.c.b16 %v288, %v287
      %v749 = vpack.c.b16 %v290, %v289
      %v750 = vpack.c.b16 %v746, %v291
      %v753 = vunpack.c.l.b16 %v744
      %v754 = vunpack.c.l.b16 %v745
      %v755 = vpack.c.b16 %v754, %v753
      %v758 = vsel %vm302, %v747, 0
      %v761 = vsel %vm302, %v748, 0
      %v764 = vsel %vm302, %v749, 0
      %v767 = vsel %vm302, %v750, 0
      %769 = vmatprep.subr.bf16.mxu0 0
      %770 = vmatpush1.bf16.msra.mxu0 %v755
      %771 = vmatprep.subr.bf16.mxu0 0
      %772 = vmatpush1.bf16.msra.mxu0 0
      %773 = vmatprep.subr.bf16.mxu0 0
      %774 = vmatpush1.bf16.msra.mxu0 0
      %775 = vmatprep.subr.bf16.mxu0 0
      %776 = vmatpush1.bf16.msra.mxu0 0
      %777 = vmatprep.subr.bf16.mxu0 0
      %778 = vmatpush1.bf16.msra.mxu0 0
      %779 = vmatprep.subr.bf16.mxu0 0
      %780 = vmatpush1.bf16.msra.mxu0 0
      %781 = vmatprep.subr.bf16.mxu0 0
      %782 = vmatpush1.bf16.msra.mxu0 0
      %783 = vmatprep.subr.bf16.mxu0 0
      %784 = vmatpush1.bf16.msra.mxu0 0
      %785 = vmatprep.subr.bf16.mxu0 0
      %786 = vmatpush1.bf16.msra.mxu0 0
      %787 = vmatprep.subr.bf16.mxu0 0
      %788 = vmatpush1.bf16.msra.mxu0 0
      %789 = vmatprep.subr.bf16.mxu0 0
      %790 = vmatpush1.bf16.msra.mxu0 0
      %791 = vmatprep.subr.bf16.mxu0 0
      %792 = vmatpush1.bf16.msra.mxu0 0
      %793 = vmatprep.subr.bf16.mxu0 0
      %794 = vmatpush1.bf16.msra.mxu0 0
      %795 = vmatprep.subr.bf16.mxu0 0
      %796 = vmatpush1.bf16.msra.mxu0 0
      %797 = vmatprep.subr.bf16.mxu0 0
      %798 = vmatpush1.bf16.msra.mxu0 0
      %799 = vmatprep.subr.bf16.mxu0 0
      %800 = vmatpush1.bf16.msra.mxu0 0
      %801 = vmatprep.mubr.bf16.mxu0 0
      %802 = vmatmul.mubr.bf16.gmra.mrb[0].mxu0 %v758
      %v803 = vpop.f32.mrb[0].mxu0
      %v804 = vadd.f32 0.0, %v803
      %v805 = vpop.f32.mrb[0].mxu0
      %v806 = vpop.f32.mrb[0].mxu0
      %v807 = vadd.f32 0.0, %v806
      %v808 = vpop.f32.mrb[0].mxu0
      %809 = vmatprep.mubr.bf16.mxu0 0
      %810 = vmatmul.mubr.bf16.gmra.mrb[0].mxu0 %v761
      %v811 = vpop.f32.mrb[0].mxu0
      %v812 = vadd.f32 0.0, %v811
      %v813 = vpop.f32.mrb[0].mxu0
      %v814 = vpop.f32.mrb[0].mxu0
      %v815 = vadd.f32 0.0, %v814
      %v816 = vpop.f32.mrb[0].mxu0
      %817 = vmatprep.mubr.bf16.mxu0 0
      %818 = vmatmul.mubr.bf16.gmra.mrb[0].mxu0 %v764
      %v819 = vpop.f32.mrb[0].mxu0
      %v820 = vadd.f32 0.0, %v819
      %v821 = vpop.f32.mrb[0].mxu0
      %v822 = vpop.f32.mrb[0].mxu0
      %v823 = vadd.f32 0.0, %v822
      %v824 = vpop.f32.mrb[0].mxu0
      %825 = vmatprep.mubr.bf16.mxu0 0
      %826 = vmatmul.mubr.bf16.gmra.mrb[0].mxu0 %v767
      %v827 = vpop.f32.mrb[0].mxu0
      %v828 = vadd.f32 0.0, %v827
      %v829 = vpop.f32.mrb[0].mxu0
      %v830 = vpop.f32.mrb[0].mxu0
      %v831 = vadd.f32 0.0, %v830
      %v832 = vpop.f32.mrb[0].mxu0
      %833 = vdwg.mxu0
      %v834 = vadd.f32 %v722, %v804
      %v835 = vadd.f32 %v723, %v807
      %v836 = vadd.f32 %v724, %v812
      %v837 = vadd.f32 %v725, %v815
      %v838 = vadd.f32 %v726, %v820
      %v839 = vadd.f32 %v727, %v823
      %v840 = vadd.f32 %v728, %v828
      %v841 = vadd.f32 %v729, %v831
      %v843 = vrot.slane %v161, 5
      %v844 = vrot.slane %v843, 4
      %v845 = vrot.slane %v162, 5
      %v846 = vsel %vm493, %v844, %v845
      %v847 = vld [vmem:[%s1 + $0x28] sm:$0xf]
      %v848 = vld [vmem:[%s1 + $0x2c] sm:$0xf]
      %v849 = vunpack.c.l.b16 %v846
      %v850 = vpack.c.b16 %v530, %v529
      %v851 = vpack.c.b16 %v532, %v531
      %v852 = vpack.c.b16 %v534, %v533
      %v853 = vpack.c.b16 %v849, %v535
      %v856 = vunpack.c.l.b16 %v847
      %v857 = vunpack.c.l.b16 %v848
      %v858 = vpack.c.b16 %v857, %v856
      %v861 = vsel %vm302, %v850, 0
      %v864 = vsel %vm302, %v851, 0
      %v867 = vsel %vm302, %v852, 0
      %v870 = vsel %vm302, %v853, 0
      %872 = vmatprep.subr.bf16.mxu0 0
      %873 = vmatpush1.bf16.msra.mxu0 %v858
      %874 = vmatprep.subr.bf16.mxu0 0
      %875 = vmatpush1.bf16.msra.mxu0 0
      %876 = vmatprep.subr.bf16.mxu0 0
      %877 = vmatpush1.bf16.msra.mxu0 0
      %878 = vmatprep.subr.bf16.mxu0 0
      %879 = vmatpush1.bf16.msra.mxu0 0
      %880 = vmatprep.subr.bf16.mxu0 0
      %881 = vmatpush1.bf16.msra.mxu0 0
      %882 = vmatprep.subr.bf16.mxu0 0
      %883 = vmatpush1.bf16.msra.mxu0 0
      %884 = vmatprep.subr.bf16.mxu0 0
      %885 = vmatpush1.bf16.msra.mxu0 0
      %886 = vmatprep.subr.bf16.mxu0 0
      %887 = vmatpush1.bf16.msra.mxu0 0
      %888 = vmatprep.subr.bf16.mxu0 0
      %889 = vmatpush1.bf16.msra.mxu0 0
      %890 = vmatprep.subr.bf16.mxu0 0
      %891 = vmatpush1.bf16.msra.mxu0 0
      %892 = vmatprep.subr.bf16.mxu0 0
      %893 = vmatpush1.bf16.msra.mxu0 0
      %894 = vmatprep.subr.bf16.mxu0 0
      %895 = vmatpush1.bf16.msra.mxu0 0
      %896 = vmatprep.subr.bf16.mxu0 0
      %897 = vmatpush1.bf16.msra.mxu0 0
      %898 = vmatprep.subr.bf16.mxu0 0
      %899 = vmatpush1.bf16.msra.mxu0 0
      %900 = vmatprep.subr.bf16.mxu0 0
      %901 = vmatpush1.bf16.msra.mxu0 0
      %902 = vmatprep.subr.bf16.mxu0 0
      %903 = vmatpush1.bf16.msra.mxu0 0
      %904 = vmatprep.mubr.bf16.mxu0 0
      %905 = vmatmul.mubr.bf16.gmra.mrb[0].mxu0 %v861
      %v906 = vpop.f32.mrb[0].mxu0
      %v907 = vadd.f32 0.0, %v906
      %v908 = vpop.f32.mrb[0].mxu0
      %v909 = vpop.f32.mrb[0].mxu0
      %v910 = vadd.f32 0.0, %v909
      %v911 = vpop.f32.mrb[0].mxu0
      %912 = vmatprep.mubr.bf16.mxu0 0
      %913 = vmatmul.mubr.bf16.gmra.mrb[0].mxu0 %v864
      %v914 = vpop.f32.mrb[0].mxu0
      %v915 = vadd.f32 0.0, %v914
      %v916 = vpop.f32.mrb[0].mxu0
      %v917 = vpop.f32.mrb[0].mxu0
      %v918 = vadd.f32 0.0, %v917
      %v919 = vpop.f32.mrb[0].mxu0
      %920 = vmatprep.mubr.bf16.mxu0 0
      %921 = vmatmul.mubr.bf16.gmra.mrb[0].mxu0 %v867
      %v922 = vpop.f32.mrb[0].mxu0
      %v923 = vadd.f32 0.0, %v922
      %v924 = vpop.f32.mrb[0].mxu0
      %v925 = vpop.f32.mrb[0].mxu0
      %v926 = vadd.f32 0.0, %v925
      %v927 = vpop.f32.mrb[0].mxu0
      %928 = vmatprep.mubr.bf16.mxu0 0
      %929 = vmatmul.mubr.bf16.gmra.mrb[0].mxu0 %v870
      %v930 = vpop.f32.mrb[0].mxu0
      %v931 = vadd.f32 0.0, %v930
      %v932 = vpop.f32.mrb[0].mxu0
      %v933 = vpop.f32.mrb[0].mxu0
      %v934 = vadd.f32 0.0, %v933
      %v935 = vpop.f32.mrb[0].mxu0
      %936 = vdwg.mxu0
      %v937 = vadd.f32 %v834, %v907
      %v938 = vadd.f32 %v835, %v910
      %v939 = vadd.f32 %v836, %v915
      %v940 = vadd.f32 %v837, %v918
      %v941 = vadd.f32 %v838, %v923
      %v942 = vadd.f32 %v839, %v926
      %v943 = vadd.f32 %v840, %v931
      %v944 = vadd.f32 %v841, %v934
      %v945 = vld [vmem:[%s1 + $0x30] sm:$0xf]
      %v946 = vld [vmem:[%s1 + $0x34] sm:$0xf]
      %v948 = vunpack.c.l.b16 %v163
      %v949 = vpack.c.b16 %v948, %v634
      %v952 = vunpack.c.l.b16 %v945
      %v953 = vunpack.c.l.b16 %v946
      %v954 = vpack.c.b16 %v953, %v952
      %v957 = vsel %vm302, %v949, 0
      %959 = vmatprep.subr.bf16.mxu0 0
      %960 = vmatpush1.bf16.msra.mxu0 %v954
      %961 = vmatprep.subr.bf16.mxu0 0
      %962 = vmatpush1.bf16.msra.mxu0 0
      %963 = vmatprep.subr.bf16.mxu0 0
      %964 = vmatpush1.bf16.msra.mxu0 0
      %965 = vmatprep.subr.bf16.mxu0 0
      %966 = vmatpush1.bf16.msra.mxu0 0
      %967 = vmatprep.subr.bf16.mxu0 0
      %968 = vmatpush1.bf16.msra.mxu0 0
      %969 = vmatprep.subr.bf16.mxu0 0
      %970 = vmatpush1.bf16.msra.mxu0 0
      %971 = vmatprep.subr.bf16.mxu0 0
      %972 = vmatpush1.bf16.msra.mxu0 0
      %973 = vmatprep.subr.bf16.mxu0 0
      %974 = vmatpush1.bf16.msra.mxu0 0
      %975 = vmatprep.subr.bf16.mxu0 0
      %976 = vmatpush1.bf16.msra.mxu0 0
      %977 = vmatprep.subr.bf16.mxu0 0
      %978 = vmatpush1.bf16.msra.mxu0 0
      %979 = vmatprep.subr.bf16.mxu0 0
      %980 = vmatpush1.bf16.msra.mxu0 0
      %981 = vmatprep.subr.bf16.mxu0 0
      %982 = vmatpush1.bf16.msra.mxu0 0
      %983 = vmatprep.subr.bf16.mxu0 0
      %984 = vmatpush1.bf16.msra.mxu0 0
      %985 = vmatprep.subr.bf16.mxu0 0
      %986 = vmatpush1.bf16.msra.mxu0 0
      %987 = vmatprep.subr.bf16.mxu0 0
      %988 = vmatpush1.bf16.msra.mxu0 0
      %989 = vmatprep.subr.bf16.mxu0 0
      %990 = vmatpush1.bf16.msra.mxu0 0
      %991 = vmatprep.mubr.bf16.mxu0 0
      %992 = vmatmul.mubr.bf16.gmra.mrb[0].mxu0 %v410
      %v993 = vpop.f32.mrb[0].mxu0
      %v994 = vadd.f32 0.0, %v993
      %v995 = vpop.f32.mrb[0].mxu0
      %v996 = vpop.f32.mrb[0].mxu0
      %v997 = vadd.f32 0.0, %v996
      %v998 = vpop.f32.mrb[0].mxu0
      %999 = vmatprep.mubr.bf16.mxu0 0
      %1000 = vmatmul.mubr.bf16.gmra.mrb[0].mxu0 %v413
      %v1001 = vpop.f32.mrb[0].mxu0
      %v1002 = vadd.f32 0.0, %v1001
      %v1003 = vpop.f32.mrb[0].mxu0
      %v1004 = vpop.f32.mrb[0].mxu0
      %v1005 = vadd.f32 0.0, %v1004
      %v1006 = vpop.f32.mrb[0].mxu0
      %1007 = vmatprep.mubr.bf16.mxu0 0
      %1008 = vmatmul.mubr.bf16.gmra.mrb[0].mxu0 %v416
      %v1009 = vpop.f32.mrb[0].mxu0
      %v1010 = vadd.f32 0.0, %v1009
      %v1011 = vpop.f32.mrb[0].mxu0
      %v1012 = vpop.f32.mrb[0].mxu0
      %v1013 = vadd.f32 0.0, %v1012
      %v1014 = vpop.f32.mrb[0].mxu0
      %1015 = vmatprep.mubr.bf16.mxu0 0
      %1016 = vmatmul.mubr.bf16.gmra.mrb[0].mxu0 %v957
      %v1017 = vpop.f32.mrb[0].mxu0
      %v1018 = vadd.f32 0.0, %v1017
      %v1019 = vpop.f32.mrb[0].mxu0
      %v1020 = vpop.f32.mrb[0].mxu0
      %v1021 = vadd.f32 0.0, %v1020
      %v1022 = vpop.f32.mrb[0].mxu0
      %1023 = vdwg.mxu0
      %v1024 = vadd.f32 %v937, %v994
      %v1025 = vadd.f32 %v938, %v997
      %v1026 = vadd.f32 %v939, %v1002
      %v1027 = vadd.f32 %v940, %v1005
      %v1028 = vadd.f32 %v941, %v1010
      %v1029 = vadd.f32 %v942, %v1013
      %v1030 = vadd.f32 %v943, %v1018
      %v1031 = vadd.f32 %v944, %v1021
      %v1033 = vshrl.u32 %v163, 16
      %v1035 = vrot.slane %v1033, 4
      %v1036 = vshll.u32 %v163, 16
      %v1038 = vrot.slane %v1036, 5
      %v1039 = vor.u32 %v1035, %v1038
      %v1040 = vrot.slane %v1039, 4
      %v1042 = vshll.u32 %v164, 16
      %v1044 = vrot.slane %v1042, 5
      %v1045 = vsel %vm169, %v1040, %v1044
      %v1046 = vld [vmem:[%s1 + $0x38] sm:$0xf]
      %v1047 = vld [vmem:[%s1 + $0x3c] sm:$0xf]
      %v1048 = vunpack.c.l.b16 %v1045
      %v1049 = vpack.c.b16 %v1048, %v746
      %v1052 = vunpack.c.l.b16 %v1046
      %v1053 = vunpack.c.l.b16 %v1047
      %v1054 = vpack.c.b16 %v1053, %v1052
      %v1057 = vsel %vm302, %v1049, 0
      %1059 = vmatprep.subr.bf16.mxu0 0
      %1060 = vmatpush1.bf16.msra.mxu0 %v1054
      %1061 = vmatprep.subr.bf16.mxu0 0
      %1062 = vmatpush1.bf16.msra.mxu0 0
      %1063 = vmatprep.subr.bf16.mxu0 0
      %1064 = vmatpush1.bf16.msra.mxu0 0
      %1065 = vmatprep.subr.bf16.mxu0 0
      %1066 = vmatpush1.bf16.msra.mxu0 0
      %1067 = vmatprep.subr.bf16.mxu0 0
      %1068 = vmatpush1.bf16.msra.mxu0 0
      %1069 = vmatprep.subr.bf16.mxu0 0
      %1070 = vmatpush1.bf16.msra.mxu0 0
      %1071 = vmatprep.subr.bf16.mxu0 0
      %1072 = vmatpush1.bf16.msra.mxu0 0
      %1073 = vmatprep.subr.bf16.mxu0 0
      %1074 = vmatpush1.bf16.msra.mxu0 0
      %1075 = vmatprep.subr.bf16.mxu0 0
      %1076 = vmatpush1.bf16.msra.mxu0 0
      %1077 = vmatprep.subr.bf16.mxu0 0
      %1078 = vmatpush1.bf16.msra.mxu0 0
      %1079 = vmatprep.subr.bf16.mxu0 0
      %1080 = vmatpush1.bf16.msra.mxu0 0
      %1081 = vmatprep.subr.bf16.mxu0 0
      %1082 = vmatpush1.bf16.msra.mxu0 0
      %1083 = vmatprep.subr.bf16.mxu0 0
      %1084 = vmatpush1.bf16.msra.mxu0 0
      %1085 = vmatprep.subr.bf16.mxu0 0
      %1086 = vmatpush1.bf16.msra.mxu0 0
      %1087 = vmatprep.subr.bf16.mxu0 0
      %1088 = vmatpush1.bf16.msra.mxu0 0
      %1089 = vmatprep.subr.bf16.mxu0 0
      %1090 = vmatpush1.bf16.msra.mxu0 0
      %1091 = vmatprep.mubr.bf16.mxu0 0
      %1092 = vmatmul.mubr.bf16.gmra.mrb[0].mxu0 %v307
      %v1093 = vpop.f32.mrb[0].mxu0
      %v1094 = vadd.f32 0.0, %v1093
      %v1095 = vpop.f32.mrb[0].mxu0
      %v1096 = vpop.f32.mrb[0].mxu0
      %v1097 = vadd.f32 0.0, %v1096
      %v1098 = vpop.f32.mrb[0].mxu0
      %1099 = vmatprep.mubr.bf16.mxu0 0
      %1100 = vmatmul.mubr.bf16.gmra.mrb[0].mxu0 %v310
      %v1101 = vpop.f32.mrb[0].mxu0
      %v1102 = vadd.f32 0.0, %v1101
      %v1103 = vpop.f32.mrb[0].mxu0
      %v1104 = vpop.f32.mrb[0].mxu0
      %v1105 = vadd.f32 0.0, %v1104
      %v1106 = vpop.f32.mrb[0].mxu0
      %1107 = vmatprep.mubr.bf16.mxu0 0
      %1108 = vmatmul.mubr.bf16.gmra.mrb[0].mxu0 %v313
      %v1109 = vpop.f32.mrb[0].mxu0
      %v1110 = vadd.f32 0.0, %v1109
      %v1111 = vpop.f32.mrb[0].mxu0
      %v1112 = vpop.f32.mrb[0].mxu0
      %v1113 = vadd.f32 0.0, %v1112
      %v1114 = vpop.f32.mrb[0].mxu0
      %1115 = vmatprep.mubr.bf16.mxu0 0
      %1116 = vmatmul.mubr.bf16.gmra.mrb[0].mxu0 %v1057
      %v1117 = vpop.f32.mrb[0].mxu0
      %v1118 = vadd.f32 0.0, %v1117
      %v1119 = vpop.f32.mrb[0].mxu0
      %v1120 = vpop.f32.mrb[0].mxu0
      %v1121 = vadd.f32 0.0, %v1120
      %v1122 = vpop.f32.mrb[0].mxu0
      %1123 = vdwg.mxu0
      %v1124 = vadd.f32 %v1024, %v1094
      %v1125 = vadd.f32 %v1025, %v1097
      %v1126 = vadd.f32 %v1026, %v1102
      %v1127 = vadd.f32 %v1027, %v1105
      %v1128 = vadd.f32 %v1028, %v1110
      %v1129 = vadd.f32 %v1029, %v1113
      %v1130 = vadd.f32 %v1030, %v1118
      %v1131 = vadd.f32 %v1031, %v1121
      %v1133 = vrot.slane %v163, 5
      %v1134 = vrot.slane %v1133, 4
      %v1135 = vrot.slane %v164, 5
      %v1136 = vsel %vm493, %v1134, %v1135
      %v1137 = vld [vmem:[%s1 + $0x40] sm:$0xf]
      %v1138 = vld [vmem:[%s1 + $0x44] sm:$0xf]
      %v1139 = vunpack.c.l.b16 %v1136
      %v1140 = vpack.c.b16 %v1139, %v849
      %v1143 = vunpack.c.l.b16 %v1137
      %v1144 = vunpack.c.l.b16 %v1138
      %v1145 = vpack.c.b16 %v1144, %v1143
      %v1148 = vsel %vm302, %v1140, 0
      %1150 = vmatprep.subr.bf16.mxu0 0
      %1151 = vmatpush1.bf16.msra.mxu0 %v1145
      %1152 = vmatprep.subr.bf16.mxu0 0
      %1153 = vmatpush1.bf16.msra.mxu0 0
      %1154 = vmatprep.subr.bf16.mxu0 0
      %1155 = vmatpush1.bf16.msra.mxu0 0
      %1156 = vmatprep.subr.bf16.mxu0 0
      %1157 = vmatpush1.bf16.msra.mxu0 0
      %1158 = vmatprep.subr.bf16.mxu0 0
      %1159 = vmatpush1.bf16.msra.mxu0 0
      %1160 = vmatprep.subr.bf16.mxu0 0
      %1161 = vmatpush1.bf16.msra.mxu0 0
      %1162 = vmatprep.subr.bf16.mxu0 0
      %1163 = vmatpush1.bf16.msra.mxu0 0
      %1164 = vmatprep.subr.bf16.mxu0 0
      %1165 = vmatpush1.bf16.msra.mxu0 0
      %1166 = vmatprep.subr.bf16.mxu0 0
      %1167 = vmatpush1.bf16.msra.mxu0 0
      %1168 = vmatprep.subr.bf16.mxu0 0
      %1169 = vmatpush1.bf16.msra.mxu0 0
      %1170 = vmatprep.subr.bf16.mxu0 0
      %1171 = vmatpush1.bf16.msra.mxu0 0
      %1172 = vmatprep.subr.bf16.mxu0 0
      %1173 = vmatpush1.bf16.msra.mxu0 0
      %1174 = vmatprep.subr.bf16.mxu0 0
      %1175 = vmatpush1.bf16.msra.mxu0 0
      %1176 = vmatprep.subr.bf16.mxu0 0
      %1177 = vmatpush1.bf16.msra.mxu0 0
      %1178 = vmatprep.subr.bf16.mxu0 0
      %1179 = vmatpush1.bf16.msra.mxu0 0
      %1180 = vmatprep.subr.bf16.mxu0 0
      %1181 = vmatpush1.bf16.msra.mxu0 0
      %1182 = vmatprep.mubr.bf16.mxu0 0
      %1183 = vmatmul.mubr.bf16.gmra.mrb[0].mxu0 %v550
      %v1184 = vpop.f32.mrb[0].mxu0
      %v1185 = vadd.f32 0.0, %v1184
      %v1186 = vpop.f32.mrb[0].mxu0
      %v1187 = vpop.f32.mrb[0].mxu0
      %v1188 = vadd.f32 0.0, %v1187
      %v1189 = vpop.f32.mrb[0].mxu0
      %1190 = vmatprep.mubr.bf16.mxu0 0
      %1191 = vmatmul.mubr.bf16.gmra.mrb[0].mxu0 %v553
      %v1192 = vpop.f32.mrb[0].mxu0
      %v1193 = vadd.f32 0.0, %v1192
      %v1194 = vpop.f32.mrb[0].mxu0
      %v1195 = vpop.f32.mrb[0].mxu0
      %v1196 = vadd.f32 0.0, %v1195
      %v1197 = vpop.f32.mrb[0].mxu0
      %1198 = vmatprep.mubr.bf16.mxu0 0
      %1199 = vmatmul.mubr.bf16.gmra.mrb[0].mxu0 %v556
      %v1200 = vpop.f32.mrb[0].mxu0
      %v1201 = vadd.f32 0.0, %v1200
      %v1202 = vpop.f32.mrb[0].mxu0
      %v1203 = vpop.f32.mrb[0].mxu0
      %v1204 = vadd.f32 0.0, %v1203
      %v1205 = vpop.f32.mrb[0].mxu0
      %1206 = vmatprep.mubr.bf16.mxu0 0
      %1207 = vmatmul.mubr.bf16.gmra.mrb[0].mxu0 %v1148
      %v1208 = vpop.f32.mrb[0].mxu0
      %v1209 = vadd.f32 0.0, %v1208
      %v1210 = vpop.f32.mrb[0].mxu0
      %v1211 = vpop.f32.mrb[0].mxu0
      %v1212 = vadd.f32 0.0, %v1211
      %v1213 = vpop.f32.mrb[0].mxu0
      %1214 = vdwg.mxu0
      %v1215 = vadd.f32 %v1124, %v1185
      %v1216 = vadd.f32 %v1125, %v1188
      %v1217 = vadd.f32 %v1126, %v1193
      %v1218 = vadd.f32 %v1127, %v1196
      %v1219 = vadd.f32 %v1128, %v1201
      %v1220 = vadd.f32 %v1129, %v1204
      %v1221 = vadd.f32 %v1130, %v1209
      %v1222 = vadd.f32 %v1131, %v1212
      %v1223 = vpack.c.bf16 %v1215, %v1215
      %v1224 = vpack.c.bf16 %v1216, %v1216
      %v1225 = vpack.c.bf16 %v1217, %v1217
      %v1226 = vpack.c.bf16 %v1218, %v1218
      %v1227 = vpack.c.bf16 %v1219, %v1219
      %v1228 = vpack.c.bf16 %v1220, %v1220
      %v1229 = vpack.c.bf16 %v1221, %v1221
      %v1230 = vpack.c.bf16 %v1222, %v1222
      %vm1231 = vcmask 125952
      %1232 = vst.msk [vmem:[%s143] sm:$0xf] %vm1231, %v1223
      %1233 = vst.msk [vmem:[%s143 + $0x4] sm:$0xf] %vm1231, %v1224
      %1234 = vst.msk [vmem:[%s143 + $0x8] sm:$0xf] %vm1231, %v1225
      %1235 = vst.msk [vmem:[%s143 + $0xc] sm:$0xf] %vm1231, %v1226
      %1236 = vst.msk [vmem:[%s143 + $0x10] sm:$0xf] %vm1231, %v1227
      %1237 = vst.msk [vmem:[%s143 + $0x14] sm:$0xf] %vm1231, %v1228
      %1238 = vst.msk [vmem:[%s143 + $0x18] sm:$0xf] %vm1231, %v1229
      %1239 = vst.msk [vmem:[%s143 + $0x1c] sm:$0xf] %vm1231, %v1230
      %p1240 = scmp.lt.s32.totalorder %s13, 1
      %s1241 = scalar_select %p1240, %s13, 1
      %s1242 = smul.addr %s1241, 8
      %s1243 = smul.addr %s1242, 4
      %s1244 = scalar_lea.vmem %s2, %s1243
      // Predicated region
      $region29: #{rcca_forward.8} parent=27 // pred_check
        %p1245 = pneg %p78
      $region30: #{rcca_forward.8} parent=27 // pred_check_branch
        %1247 = sbr.rel (%p1245) target = $region32
      $region31: #{rcca_forward.8} parent=27 // pred_region
        _
      $region32: #{rcca_forward.8} parent=27 // pred_fallthru
        _
    $region28: #{rcca_forward.8} parent=5 // pred_fallthru
      _
    %p1248 = scmp.le.s32.totalorder 2, %s8
    // Predicated region
    $region33: #{rcca_forward.8} parent=5 // pred_check
      %p1249 = pneg %p1248
    $region34: #{rcca_forward.8} parent=5 // pred_check_branch
      %1251 = sbr.rel (%p1249) target = $region36
    $region35: #{rcca_forward.8} parent=5 // pred_region
      %s1252 = ssub.s32 %s8, 2
      // Predicated region
      $region37: #{rcca_forward.8} parent=35 // pred_check
        %p1253 = pneg %p84
      $region38: #{rcca_forward.8} parent=35 // pred_check_branch
        %1255 = sbr.rel (%p1253) target = $region40
      $region39: #{rcca_forward.8} parent=35 // pred_region
        %p1256 = scmp.lt.s32.totalorder %s14, 1
        %s1257 = scalar_select %p1256, %s14, 1
        %s1258 = smul.addr %s1257, 8
        %s1259 = smul.addr %s1258, 4
        %s1260 = scalar_lea.vmem %s2, %s1259
      $region40: #{rcca_forward.8} parent=35 // pred_fallthru
        _
    $region36: #{rcca_forward.8} parent=5 // pred_fallthru
      _
  $region6: #{rcca_forward.8} parent=0 // loop_footer
    %s12 = sadd.s32 1, %s8
  $region7: #{rcca_forward.8} parent=0 // loop_footer_branch
    %7 = sbr.rel target = $region3
  $region8: #{rcca_forward.8} parent=0 // loop_exit
    _

// kernel: rcca_forward.6
$region0: #{rcca_forward.6}
  #allocation0 [shape = 'u32[]', space=smem, size = 0x4, offset = 0x4, fixed_abs, tag = 'smem constant byte address 0x4 - core index']
  #allocation1 [shape = 'u32[144,128]{1,0:T(1,128)}', space=vmem, size = 0x12000, scoped, tag = 'internal scratch']
  #allocation2 [shape = 'f32[2,16]{1,0:T(2,128)}', space=vmem, size = 0x400, scoped, tag = 'scratch operand']
  %s0 = inlined_call_operand.vmem [shape: bf16[2,10,10,64], index: 0, kind: input, shape index: {}]
  %s1 = inlined_call_operand.vmem [shape: bf16[576,16], index: 1, kind: input, shape index: {}]
  %s2 = inlined_call_operand.vmem [shape: bf16[2,8,8,16], index: 2, kind: output, shape index: {0}]
  %s3 = inlined_call_operand.vmem [shape: f32[2,16], index: 3, kind: output, shape index: {1}]
  %4 = xla_tuple %s2, %s3
  %s5 = sld [smem:[#allocation0]]
  $region57: #{rcca_forward.6} parent=0
    _
  %s7 = ssub.s32 1, %s5
  %s8 = scalar_select 0, %s7, %s5
  loop: start=0, step=1, limit=4
  $region2: #{rcca_forward.6} parent=0 // loop_pre_header
    _
  $region3: #{rcca_forward.6} parent=0 // loop_header
    %s10 = sphi 0, %s14
    %p11 = scmp.ge.s32.totalorder %s10, 4
    %s20 = sphi 0, %s22
    %s23 = sphi 0, %s20
    %s24 = sphi 0, %s23
    %s40 = sphi 0, %s24
    %s44 = sphi 0, %s44
    %s46 = sphi 0, %s44
    %s47 = sphi 0, %s46
    %s61 = sphi 0, %s47
    %s67 = sphi 0, %s69
    %s70 = sphi 0, %s67
    %s71 = sphi 0, %s70
    %s87 = sphi 0, %s71
    %s91 = sphi 0, %s91
    %s93 = sphi 0, %s91
    %s94 = sphi 0, %s93
    %s108 = sphi 0, %s94
  $region4: #{rcca_forward.6} parent=0 // loop_header_branch
    %13 = sbr.rel (%p11) target = $region8
  $region5: #{rcca_forward.6} parent=0 // loop_body
    %s15 = ssub.s32 %s10, 1
    %s16 = ssub.s32 %s10, 2
    %s17 = sadd.s32 %s10, 1
    %s18 = ssub.s32 %s10, %s17
    %p19 = scmp.eq.s32.totalorder %s18, 0
    %s21 = sadd.s32 %s20, 1
    %s22 = scalar_select %p19, %s20, %s21
    %p25 = pneg %p19
    %p26 = scmp.eq.s32.totalorder %s10, 1
    %p27 = por %p25, %p26
    %p28 = scmp.ne.s32.totalorder %s20, %s23
    %p29 = scmp.eq.s32.totalorder %s10, 0
    %p30 = por %p28, %p29
    %p31 = scmp.ne.s32.totalorder %s20, %s23
    %p32 = scmp.eq.s32.totalorder %s15, 1
    %p33 = por %p31, %p32
    %p34 = scmp.ne.s32.totalorder %s23, %s24
    %p35 = scmp.eq.s32.totalorder %s15, 0
    %p36 = por %p34, %p35
    %p37 = scmp.ne.s32.totalorder %s23, %s24
    %p38 = scmp.eq.s32.totalorder %s16, 1
    %p39 = por %p37, %p38
    %p41 = scmp.ne.s32.totalorder %s24, %s40
    %p42 = scmp.eq.s32.totalorder %s16, 0
    %p43 = por %p41, %p42
    %s45 = sadd.s32 %s44, 1
    %p48 = scmp.eq.s32.totalorder %s10, 1
    %p49 = scmp.ne.s32.totalorder %s44, %s46
    %p50 = scmp.eq.s32.totalorder %s10, 0
    %p51 = por %p49, %p50
    %p52 = scmp.ne.s32.totalorder %s44, %s46
    %p53 = scmp.eq.s32.totalorder %s15, 1
    %p54 = por %p52, %p53
    %p55 = scmp.ne.s32.totalorder %s46, %s47
    %p56 = scmp.eq.s32.totalorder %s15, 0
    %p57 = por %p55, %p56
    %p58 = scmp.ne.s32.totalorder %s46, %s47
    %p59 = scmp.eq.s32.totalorder %s16, 1
    %p60 = por %p58, %p59
    %p62 = scmp.ne.s32.totalorder %s47, %s61
    %p63 = scmp.eq.s32.totalorder %s16, 0
    %p64 = por %p62, %p63
    %s65 = ssub.s32 %s10, %s17
    %p66 = scmp.eq.s32.totalorder %s65, 0
    %s68 = sadd.s32 %s67, 1
    %s69 = scalar_select %p66, %s67, %s68
    %p72 = pneg %p66
    %p73 = scmp.eq.s32.totalorder %s10, 1
    %p74 = por %p72, %p73
    %p75 = scmp.ne.s32.totalorder %s67, %s70
    %p76 = scmp.eq.s32.totalorder %s10, 0
    %p77 = por %p75, %p76
    %p78 = scmp.ne.s32.totalorder %s67, %s70
    %p79 = scmp.eq.s32.totalorder %s15, 1
    %p80 = por %p78, %p79
    %p81 = scmp.ne.s32.totalorder %s70, %s71
    %p82 = scmp.eq.s32.totalorder %s15, 0
    %p83 = por %p81, %p82
    %p84 = scmp.ne.s32.totalorder %s70, %s71
    %p85 = scmp.eq.s32.totalorder %s16, 1
    %p86 = por %p84, %p85
    %p88 = scmp.ne.s32.totalorder %s71, %s87
    %p89 = scmp.eq.s32.totalorder %s16, 0
    %p90 = por %p88, %p89
    %s92 = sadd.s32 %s91, 1
    %p95 = scmp.eq.s32.totalorder %s10, 1
    %p96 = scmp.ne.s32.totalorder %s91, %s93
    %p97 = scmp.eq.s32.totalorder %s10, 0
    %p98 = por %p96, %p97
    %p99 = scmp.ne.s32.totalorder %s91, %s93
    %p100 = scmp.eq.s32.totalorder %s15, 1
    %p101 = por %p99, %p100
    %p102 = scmp.ne.s32.totalorder %s93, %s94
    %p103 = scmp.eq.s32.totalorder %s15, 0
    %p104 = por %p102, %p103
    %p105 = scmp.ne.s32.totalorder %s93, %s94
    %p106 = scmp.eq.s32.totalorder %s16, 1
    %p107 = por %p105, %p106
    %p109 = scmp.ne.s32.totalorder %s94, %s108
    %p110 = scmp.eq.s32.totalorder %s16, 0
    %p111 = por %p109, %p110
    %p112 = scmp.le.s32.totalorder 1, %s10
    %p113 = scmp.lt.s32.totalorder %s10, 3
    %p114 = pnand %p112, %p113
    %p115 = pneg %p114
    // Predicated region
    $region9: #{rcca_forward.6} parent=5 // pred_check
      _
    $region10: #{rcca_forward.6} parent=5 // pred_check_branch
      %117 = sbr.rel (%p114) target = $region12
    $region11: #{rcca_forward.6} parent=5 // pred_region
      %s118 = ssub.s32 %s10, 1
      // Predicated region
      $region13: #{rcca_forward.6} parent=11 // pred_check
        %p119 = pneg %p57
      $region14: #{rcca_forward.6} parent=11 // pred_check_branch
        %121 = sbr.rel (%p119) target = $region16
      $region15: #{rcca_forward.6} parent=11 // pred_region
        _
      $region16: #{rcca_forward.6} parent=11 // pred_fallthru
        _
    $region12: #{rcca_forward.6} parent=5 // pred_fallthru
      _
    %p122 = scmp.lt.s32.totalorder %s10, 2
    // Predicated region
    $region17: #{rcca_forward.6} parent=5 // pred_check
      %p123 = pneg %p122
    $region18: #{rcca_forward.6} parent=5 // pred_check_branch
      %125 = sbr.rel (%p123) target = $region20
    $region19: #{rcca_forward.6} parent=5 // pred_region
      // Predicated region
      $region21: #{rcca_forward.6} parent=19 // pred_check
        %p126 = pneg %p30
      $region22: #{rcca_forward.6} parent=19 // pred_check_branch
        %128 = sbr.rel (%p126) target = $region24
      $region23: #{rcca_forward.6} parent=19 // pred_region
        %p129 = scmp.lt.s32.totalorder %s10, 1
        %s130 = scalar_select %p129, %s10, 1
        %s131 = smul.addr %s130, 20
        %s132 = smul.addr %s131, 4
        %s133 = scalar_lea.vmem %s0, %s132
      $region24: #{rcca_forward.6} parent=19 // pred_fallthru
        _
    $region20: #{rcca_forward.6} parent=5 // pred_fallthru
      _
    %p134 = scmp.le.s32.totalorder 1, %s10
    %p135 = scmp.lt.s32.totalorder %s10, 3
    %p136 = pnand %p134, %p135
    %p137 = pneg %p136
    // Predicated region
    $region25: #{rcca_forward.6} parent=5 // pred_check
      _
    $region26: #{rcca_forward.6} parent=5 // pred_check_branch
      %139 = sbr.rel (%p136) target = $region28
    $region27: #{rcca_forward.6} parent=5 // pred_region
      %s140 = ssub.s32 %s10, 1
      %p141 = scmp.lt.s32.totalorder %s15, 1
      %s142 = scalar_select %p141, %s15, 1
      %s143 = smul.addr %s142, 20
      %s144 = smul.addr %s143, 4
      %s145 = scalar_lea.vmem %s0, %s144
      %p146 = pneg %p36
      %p147 = pneg %p33
      %p148 = pneg %p57
      %p149 = pneg %p54
      %p150 = pneg %p83
      %p151 = pneg %p80
      %p152 = scmp.lt.s32.totalorder %s15, 1
      %s153 = scalar_select %p152, %s15, 1
      %s154 = smul.addr %s153, 8
      %s155 = smul.addr %s154, 4
      %s156 = scalar_lea.vmem %s2, %s155
      %p157 = pneg %p104
      %p158 = pneg %p101
      %p159 = scmp.lt.s32.totalorder %s15, 1
      %s160 = scalar_select %p159, %s15, 1
      %s161 = smul.addr %s160, 20
      %s162 = smul.addr %s161, 4
      %s163 = scalar_lea.vmem %s0, %s162
      %p164 = scmp.lt.s32.totalorder %s15, 1
      %s165 = scalar_select %p164, %s15, 1
      %s166 = smul.addr %s165, 8
      %s167 = smul.addr %s166, 4
      %s168 = scalar_lea.vmem %s2, %s167
      %v170 = vld [vmem:[%s163] sm:$0xf]
      %v171 = vld [vmem:[%s163 + $0x4] sm:$0x1]
      %v172 = vld [vmem:[%s163 + $0x8] sm:$0xf]
      %v173 = vld [vmem:[%s163 + $0xc] sm:$0x1]
      %v174 = vld [vmem:[%s163 + $0x10] sm:$0xf]
      %v175 = vld [vmem:[%s163 + $0x14] sm:$0x1]
      %v176 = vld [vmem:[%s163 + $0x18] sm:$0xf]
      %v177 = vld [vmem:[%s163 + $0x1c] sm:$0x1]
      %v178 = vld [vmem:[%s163 + $0x20] sm:$0xf]
      %v179 = vld [vmem:[%s163 + $0x24] sm:$0x1]
      %v180 = vld [vmem:[%s163 + $0x28] sm:$0xf]
      %v181 = vld [vmem:[%s163 + $0x2c] sm:$0x1]
      %v182 = vld [vmem:[%s163 + $0x30] sm:$0xf]
      %v183 = vld [vmem:[%s163 + $0x34] sm:$0x1]
      %v184 = vld [vmem:[%s163 + $0x38] sm:$0xf]
      %v185 = vld [vmem:[%s163 + $0x3c] sm:$0x1]
      %v186 = vld [vmem:[%s163 + $0x40] sm:$0xf]
      %v187 = vld [vmem:[%s163 + $0x44] sm:$0x1]
      %v188 = vld [vmem:[%s163 + $0x48] sm:$0xf]
      %v189 = vld [vmem:[%s163 + $0x4c] sm:$0x1]
      %v190 = vld [vmem:[%s1] sm:$0xf]
      %v191 = vld [vmem:[%s1 + $0x4] sm:$0xf]
      %v192 = vld [vmem:[%s1 + $0x8] sm:$0xf]
      %v193 = vld [vmem:[%s1 + $0xc] sm:$0xf]
      %v194 = vld [vmem:[%s1 + $0x10] sm:$0xf]
      %v195 = vld [vmem:[%s1 + $0x14] sm:$0xf]
      %v196 = vld [vmem:[%s1 + $0x18] sm:$0xf]
      %v197 = vld [vmem:[%s1 + $0x1c] sm:$0xf]
      %vm198 = vsmask.f32 3328
      %vm199 = vsmask.f32 7440
      %vm200 = vmor %vm198, %vm199
      %v202 = vshrl.u32 %v170, 16
      %v204 = vrot.slane %v202, 4
      %v205 = vshll.u32 %v170, 16
      %v207 = vrot.slane %v205, 5
      %v208 = vor.u32 %v204, %v207
      %v209 = vrot.slane %v208, 4
      %v211 = vshll.u32 %v171, 16
      %v213 = vrot.slane %v211, 5
      %v214 = vsel %vm200, %v209, %v213
      %v216 = vshrl.u32 %v172, 16
      %v218 = vrot.slane %v216, 4
      %v219 = vshll.u32 %v172, 16
      %v221 = vrot.slane %v219, 5
      %v222 = vor.u32 %v218, %v221
      %v223 = vrot.slane %v222, 4
      %v225 = vshll.u32 %v173, 16
      %v227 = vrot.slane %v225, 5
      %v228 = vsel %vm200, %v223, %v227
      %v230 = vshrl.u32 %v174, 16
      %v232 = vrot.slane %v230, 4
      %v233 = vshll.u32 %v174, 16
      %v235 = vrot.slane %v233, 5
      %v236 = vor.u32 %v232, %v235
      %v237 = vrot.slane %v236, 4
      %v239 = vshll.u32 %v175, 16
      %v241 = vrot.slane %v239, 5
      %v242 = vsel %vm200, %v237, %v241
      %v244 = vshrl.u32 %v176, 16
      %v246 = vrot.slane %v244, 4
      %v247 = vshll.u32 %v176, 16
      %v249 = vrot.slane %v247, 5
      %v250 = vor.u32 %v246, %v249
      %v251 = vrot.slane %v250, 4
      %v253 = vshll.u32 %v177, 16
      %v255 = vrot.slane %v253, 5
      %v256 = vsel %vm200, %v251, %v255
      %v258 = vshrl.u32 %v178, 16
      %v260 = vrot.slane %v258, 4
      %v261 = vshll.u32 %v178, 16
      %v263 = vrot.slane %v261, 5
      %v264 = vor.u32 %v260, %v263
      %v265 = vrot.slane %v264, 4
      %v267 = vshll.u32 %v179, 16
      %v269 = vrot.slane %v267, 5
      %v270 = vsel %vm200, %v265, %v269
      %v272 = vshrl.u32 %v180, 16
      %v274 = vrot.slane %v272, 4
      %v275 = vshll.u32 %v180, 16
      %v277 = vrot.slane %v275, 5
      %v278 = vor.u32 %v274, %v277
      %v279 = vrot.slane %v278, 4
      %v281 = vshll.u32 %v181, 16
      %v283 = vrot.slane %v281, 5
      %v284 = vsel %vm200, %v279, %v283
      %v286 = vshrl.u32 %v182, 16
      %v288 = vrot.slane %v286, 4
      %v289 = vshll.u32 %v182, 16
      %v291 = vrot.slane %v289, 5
      %v292 = vor.u32 %v288, %v291
      %v293 = vrot.slane %v292, 4
      %v295 = vshll.u32 %v183, 16
      %v297 = vrot.slane %v295, 5
      %v298 = vsel %vm200, %v293, %v297
      %v300 = vshrl.u32 %v184, 16
      %v302 = vrot.slane %v300, 4
      %v303 = vshll.u32 %v184, 16
      %v305 = vrot.slane %v303, 5
      %v306 = vor.u32 %v302, %v305
      %v307 = vrot.slane %v306, 4
      %v309 = vshll.u32 %v185, 16
      %v311 = vrot.slane %v309, 5
      %v312 = vsel %vm200, %v307, %v311
      %v313 = vld [vmem:[%s1 + $0x20] sm:$0xf]
      %v314 = vld [vmem:[%s1 + $0x24] sm:$0xf]
      %v315 = vld [vmem:[%s1 + $0x28] sm:$0xf]
      %v316 = vld [vmem:[%s1 + $0x2c] sm:$0xf]
      %v317 = vld [vmem:[%s1 + $0x30] sm:$0xf]
      %v318 = vld [vmem:[%s1 + $0x34] sm:$0xf]
      %v319 = vld [vmem:[%s1 + $0x38] sm:$0xf]
      %v320 = vld [vmem:[%s1 + $0x3c] sm:$0xf]
      %v321 = vunpack.c.l.b16 %v214
      %v322 = vunpack.c.l.b16 %v228
      %v323 = vunpack.c.l.b16 %v242
      %v324 = vunpack.c.l.b16 %v256
      %v325 = vunpack.c.l.b16 %v270
      %v326 = vunpack.c.l.b16 %v284
      %v327 = vunpack.c.l.b16 %v298
      %v328 = vunpack.c.l.b16 %v312
      %v329 = vpack.c.b16 %v322, %v321
      %v330 = vpack.c.b16 %v324, %v323
      %v331 = vpack.c.b16 %v326, %v325
      %v332 = vpack.c.b16 %v328, %v327
      %v341 = vunpack.c.l.b16 %v313
      %v342 = vunpack.c.l.b16 %v314
      %v343 = vunpack.c.l.b16 %v315
      %v344 = vunpack.c.l.b16 %v316
      %v345 = vunpack.c.l.b16 %v317
      %v346 = vunpack.c.l.b16 %v318
      %v347 = vunpack.c.l.b16 %v319
      %v348 = vunpack.c.l.b16 %v320
      %v349 = vpack.c.b16 %v342, %v341
      %v350 = vpack.c.b16 %v344, %v343
      %v351 = vpack.c.b16 %v346, %v345
      %v352 = vpack.c.b16 %v348, %v347
      %vm357 = vcmask 523264
      %v359 = vsel %vm357, %v329, 0
      %v362 = vsel %vm357, %v330, 0
      %v365 = vsel %vm357, %v331, 0
      %v368 = vsel %vm357, %v332, 0
      %370 = vmatprep.subr.bf16.mxu0 0
      %371 = vmatpush1.bf16.msra.mxu0 %v349
      %372 = vmatprep.subr.bf16.mxu0 0
      %373 = vmatpush1.bf16.msra.mxu0 %v350
      %374 = vmatprep.subr.bf16.mxu0 0
      %375 = vmatpush1.bf16.msra.mxu0 %v351
      %376 = vmatprep.subr.bf16.mxu0 0
      %377 = vmatpush1.bf16.msra.mxu0 %v352
      %378 = vmatprep.subr.bf16.mxu0 0
      %379 = vmatpush1.bf16.msra.mxu0 0
      %380 = vmatprep.subr.bf16.mxu0 0
      %381 = vmatpush1.bf16.msra.mxu0 0
      %382 = vmatprep.subr.bf16.mxu0 0
      %383 = vmatpush1.bf16.msra.mxu0 0
      %384 = vmatprep.subr.bf16.mxu0 0
      %385 = vmatpush1.bf16.msra.mxu0 0
      %386 = vmatprep.subr.bf16.mxu0 0
      %387 = vmatpush1.bf16.msra.mxu0 0
      %388 = vmatprep.subr.bf16.mxu0 0
      %389 = vmatpush1.bf16.msra.mxu0 0
      %390 = vmatprep.subr.bf16.mxu0 0
      %391 = vmatpush1.bf16.msra.mxu0 0
      %392 = vmatprep.subr.bf16.mxu0 0
      %393 = vmatpush1.bf16.msra.mxu0 0
      %394 = vmatprep.subr.bf16.mxu0 0
      %395 = vmatpush1.bf16.msra.mxu0 0
      %396 = vmatprep.subr.bf16.mxu0 0
      %397 = vmatpush1.bf16.msra.mxu0 0
      %398 = vmatprep.subr.bf16.mxu0 0
      %399 = vmatpush1.bf16.msra.mxu0 0
      %400 = vmatprep.subr.bf16.mxu0 0
      %401 = vmatpush1.bf16.msra.mxu0 0
      %402 = vmatprep.mubr.bf16.mxu0 0
      %403 = vmatmul.mubr.bf16.gmra.mrb[0].mxu0 %v359
      %v404 = vpop.f32.mrb[0].mxu0
      %v405 = vadd.f32 0.0, %v404
      %v406 = vpop.f32.mrb[0].mxu0
      %v407 = vpop.f32.mrb[0].mxu0
      %v408 = vadd.f32 0.0, %v407
      %v409 = vpop.f32.mrb[0].mxu0
      %410 = vmatprep.mubr.bf16.mxu0 0
      %411 = vmatmul.mubr.bf16.gmra.mrb[0].mxu0 %v362
      %v412 = vpop.f32.mrb[0].mxu0
      %v413 = vadd.f32 0.0, %v412
      %v414 = vpop.f32.mrb[0].mxu0
      %v415 = vpop.f32.mrb[0].mxu0
      %v416 = vadd.f32 0.0, %v415
      %v417 = vpop.f32.mrb[0].mxu0
      %418 = vmatprep.mubr.bf16.mxu0 0
      %419 = vmatmul.mubr.bf16.gmra.mrb[0].mxu0 %v365
      %v420 = vpop.f32.mrb[0].mxu0
      %v421 = vadd.f32 0.0, %v420
      %v422 = vpop.f32.mrb[0].mxu0
      %v423 = vpop.f32.mrb[0].mxu0
      %v424 = vadd.f32 0.0, %v423
      %v425 = vpop.f32.mrb[0].mxu0
      %426 = vmatprep.mubr.bf16.mxu0 0
      %427 = vmatmul.mubr.bf16.gmra.mrb[0].mxu0 %v368
      %v428 = vpop.f32.mrb[0].mxu0
      %v429 = vadd.f32 0.0, %v428
      %v430 = vpop.f32.mrb[0].mxu0
      %v431 = vpop.f32.mrb[0].mxu0
      %v432 = vadd.f32 0.0, %v431
      %v433 = vpop.f32.mrb[0].mxu0
      %434 = vdwg.mxu0
      %v443 = vunpack.c.l.b16 %v170
      %v444 = vunpack.c.l.b16 %v172
      %v445 = vunpack.c.l.b16 %v174
      %v446 = vunpack.c.l.b16 %v176
      %v447 = vunpack.c.l.b16 %v178
      %v448 = vunpack.c.l.b16 %v180
      %v449 = vunpack.c.l.b16 %v182
      %v450 = vunpack.c.l.b16 %v184
      %v451 = vpack.c.b16 %v444, %v443
      %v452 = vpack.c.b16 %v446, %v445
      %v453 = vpack.c.b16 %v448, %v447
      %v454 = vpack.c.b16 %v450, %v449
      %v463 = vunpack.c.l.b16 %v190
      %v464 = vunpack.c.l.b16 %v191
      %v465 = vunpack.c.l.b16 %v192
      %v466 = vunpack.c.l.b16 %v193
      %v467 = vunpack.c.l.b16 %v194
      %v468 = vunpack.c.l.b16 %v195
      %v469 = vunpack.c.l.b16 %v196
      %v470 = vunpack.c.l.b16 %v197
      %v471 = vpack.c.b16 %v464, %v463
      %v472 = vpack.c.b16 %v466, %v465
      %v473 = vpack.c.b16 %v468, %v467
      %v474 = vpack.c.b16 %v470, %v469
      %v480 = vsel %vm357, %v451, 0
      %v483 = vsel %vm357, %v452, 0
      %v486 = vsel %vm357, %v453, 0
      %v489 = vsel %vm357, %v454, 0
      %491 = vmatprep.subr.bf16.mxu0 0
      %492 = vmatpush1.bf16.msra.mxu0 %v471
      %493 = vmatprep.subr.bf16.mxu0 0
      %494 = vmatpush1.bf16.msra.mxu0 %v472
      %495 = vmatprep.subr.bf16.mxu0 0
      %496 = vmatpush1.bf16.msra.mxu0 %v473
      %497 = vmatprep.subr.bf16.mxu0 0
      %498 = vmatpush1.bf16.msra.mxu0 %v474
      %499 = vmatprep.subr.bf16.mxu0 0
      %500 = vmatpush1.bf16.msra.mxu0 0
      %501 = vmatprep.subr.bf16.mxu0 0
      %502 = vmatpush1.bf16.msra.mxu0 0
      %503 = vmatprep.subr.bf16.mxu0 0
      %504 = vmatpush1.bf16.msra.mxu0 0
      %505 = vmatprep.subr.bf16.mxu0 0
      %506 = vmatpush1.bf16.msra.mxu0 0
      %507 = vmatprep.subr.bf16.mxu0 0
      %508 = vmatpush1.bf16.msra.mxu0 0
      %509 = vmatprep.subr.bf16.mxu0 0
      %510 = vmatpush1.bf16.msra.mxu0 0
      %511 = vmatprep.subr.bf16.mxu0 0
      %512 = vmatpush1.bf16.msra.mxu0 0
      %513 = vmatprep.subr.bf16.mxu0 0
      %514 = vmatpush1.bf16.msra.mxu0 0
      %515 = vmatprep.subr.bf16.mxu0 0
      %516 = vmatpush1.bf16.msra.mxu0 0
      %517 = vmatprep.subr.bf16.mxu0 0
      %518 = vmatpush1.bf16.msra.mxu0 0
      %519 = vmatprep.subr.bf16.mxu0 0
      %520 = vmatpush1.bf16.msra.mxu0 0
      %521 = vmatprep.subr.bf16.mxu0 0
      %522 = vmatpush1.bf16.msra.mxu0 0
      %523 = vmatprep.mubr.bf16.mxu0 0
      %524 = vmatmul.mubr.bf16.gmra.mrb[0].mxu0 %v480
      %v525 = vpop.f32.mrb[0].mxu0
      %v526 = vadd.f32 %v405, %v525
      %v527 = vpop.f32.mrb[0].mxu0
      %v528 = vpop.f32.mrb[0].mxu0
      %v529 = vadd.f32 %v408, %v528
      %v530 = vpop.f32.mrb[0].mxu0
      %531 = vmatprep.mubr.bf16.mxu0 0
      %532 = vmatmul.mubr.bf16.gmra.mrb[0].mxu0 %v483
      %v533 = vpop.f32.mrb[0].mxu0
      %v534 = vadd.f32 %v413, %v533
      %v535 = vpop.f32.mrb[0].mxu0
      %v536 = vpop.f32.mrb[0].mxu0
      %v537 = vadd.f32 %v416, %v536
      %v538 = vpop.f32.mrb[0].mxu0
      %539 = vmatprep.mubr.bf16.mxu0 0
      %540 = vmatmul.mubr.bf16.gmra.mrb[0].mxu0 %v486
      %v541 = vpop.f32.mrb[0].mxu0
      %v542 = vadd.f32 %v421, %v541
      %v543 = vpop.f32.mrb[0].mxu0
      %v544 = vpop.f32.mrb[0].mxu0
      %v545 = vadd.f32 %v424, %v544
      %v546 = vpop.f32.mrb[0].mxu0
      %547 = vmatprep.mubr.bf16.mxu0 0
      %548 = vmatmul.mubr.bf16.gmra.mrb[0].mxu0 %v489
      %v549 = vpop.f32.mrb[0].mxu0
      %v550 = vadd.f32 %v429, %v549
      %v551 = vpop.f32.mrb[0].mxu0
      %v552 = vpop.f32.mrb[0].mxu0
      %v553 = vadd.f32 %v432, %v552
      %v554 = vpop.f32.mrb[0].mxu0
      %555 = vdwg.mxu0
      %vm564 = vcmask 1042432
      %vm565 = vcmask 1046532
      %vm566 = vmor %vm564, %vm565
      %v567 = vrot.slane %v170, 5
      %v568 = vrot.slane %v567, 4
      %v569 = vrot.slane %v171, 5
      %v570 = vsel %vm566, %v568, %v569
      %v571 = vrot.slane %v172, 5
      %v572 = vrot.slane %v571, 4
      %v573 = vrot.slane %v173, 5
      %v574 = vsel %vm566, %v572, %v573
      %v575 = vrot.slane %v174, 5
      %v576 = vrot.slane %v575, 4
      %v577 = vrot.slane %v175, 5
      %v578 = vsel %vm566, %v576, %v577
      %v579 = vrot.slane %v176, 5
      %v580 = vrot.slane %v579, 4
      %v581 = vrot.slane %v177, 5
      %v582 = vsel %vm566, %v580, %v581
      %v583 = vrot.slane %v178, 5
      %v584 = vrot.slane %v583, 4
      %v585 = vrot.slane %v179, 5
      %v586 = vsel %vm566, %v584, %v585
      %v587 = vrot.slane %v180, 5
      %v588 = vrot.slane %v587, 4
      %v589 = vrot.slane %v181, 5
      %v590 = vsel %vm566, %v588, %v589
      %v591 = vrot.slane %v182, 5
      %v592 = vrot.slane %v591, 4
      %v593 = vrot.slane %v183, 5
      %v594 = vsel %vm566, %v592, %v593
      %v595 = vrot.slane %v184, 5
      %v596 = vrot.slane %v595, 4
      %v597 = vrot.slane %v185, 5
      %v598 = vsel %vm566, %v596, %v597
      %v599 = vld [vmem:[%s1 + $0x40] sm:$0xf]
      %v600 = vld [vmem:[%s1 + $0x44] sm:$0xf]
      %v601 = vld [vmem:[%s1 + $0x48] sm:$0xf]
      %v602 = vld [vmem:[%s1 + $0x4c] sm:$0xf]
      %v603 = vld [vmem:[%s1 + $0x50] sm:$0xf]
      %v604 = vld [vmem:[%s1 + $0x54] sm:$0xf]
      %v605 = vld [vmem:[%s1 + $0x58] sm:$0xf]
      %v606 = vld [vmem:[%s1 + $0x5c] sm:$0xf]
      %v607 = vunpack.c.l.b16 %v570
      %v608 = vunpack.c.l.b16 %v574
      %v609 = vunpack.c.l.b16 %v578
      %v610 = vunpack.c.l.b16 %v582
      %v611 = vunpack.c.l.b16 %v586
      %v612 = vunpack.c.l.b16 %v590
      %v613 = vunpack.c.l.b16 %v594
      %v614 = vunpack.c.l.b16 %v598
      %v615 = vpack.c.b16 %v608, %v607
      %v616 = vpack.c.b16 %v610, %v609
      %v617 = vpack.c.b16 %v612, %v611
      %v618 = vpack.c.b16 %v614, %v613
      %v627 = vunpack.c.l.b16 %v599
      %v628 = vunpack.c.l.b16 %v600
      %v629 = vunpack.c.l.b16 %v601
      %v630 = vunpack.c.l.b16 %v602
      %v631 = vunpack.c.l.b16 %v603
      %v632 = vunpack.c.l.b16 %v604
      %v633 = vunpack.c.l.b16 %v605
      %v634 = vunpack.c.l.b16 %v606
      %v635 = vpack.c.b16 %v628, %v627
      %v636 = vpack.c.b16 %v630, %v629
      %v637 = vpack.c.b16 %v632, %v631
      %v638 = vpack.c.b16 %v634, %v633
      %v644 = vsel %vm357, %v615, 0
      %v647 = vsel %vm357, %v616, 0
      %v650 = vsel %vm357, %v617, 0
      %v653 = vsel %vm357, %v618, 0
      %655 = vmatprep.subr.bf16.mxu0 0
      %656 = vmatpush1.bf16.msra.mxu0 %v635
      %657 = vmatprep.subr.bf16.mxu0 0
      %658 = vmatpush1.bf16.msra.mxu0 %v636
      %659 = vmatprep.subr.bf16.mxu0 0
      %660 = vmatpush1.bf16.msra.mxu0 %v637
      %661 = vmatprep.subr.bf16.mxu0 0
      %662 = vmatpush1.bf16.msra.mxu0 %v638
      %663 = vmatprep.subr.bf16.mxu0 0
      %664 = vmatpush1.bf16.msra.mxu0 0
      %665 = vmatprep.subr.bf16.mxu0 0
      %666 = vmatpush1.bf16.msra.mxu0 0
      %667 = vmatprep.subr.bf16.mxu0 0
      %668 = vmatpush1.bf16.msra.mxu0 0
      %669 = vmatprep.subr.bf16.mxu0 0
      %670 = vmatpush1.bf16.msra.mxu0 0
      %671 = vmatprep.subr.bf16.mxu0 0
      %672 = vmatpush1.bf16.msra.mxu0 0
      %673 = vmatprep.subr.bf16.mxu0 0
      %674 = vmatpush1.bf16.msra.mxu0 0
      %675 = vmatprep.subr.bf16.mxu0 0
      %676 = vmatpush1.bf16.msra.mxu0 0
      %677 = vmatprep.subr.bf16.mxu0 0
      %678 = vmatpush1.bf16.msra.mxu0 0
      %679 = vmatprep.subr.bf16.mxu0 0
      %680 = vmatpush1.bf16.msra.mxu0 0
      %681 = vmatprep.subr.bf16.mxu0 0
      %682 = vmatpush1.bf16.msra.mxu0 0
      %683 = vmatprep.subr.bf16.mxu0 0
      %684 = vmatpush1.bf16.msra.mxu0 0
      %685 = vmatprep.subr.bf16.mxu0 0
      %686 = vmatpush1.bf16.msra.mxu0 0
      %687 = vmatprep.mubr.bf16.mxu0 0
      %688 = vmatmul.mubr.bf16.gmra.mrb[0].mxu0 %v644
      %v689 = vpop.f32.mrb[0].mxu0
      %v690 = vadd.f32 0.0, %v689
      %v691 = vpop.f32.mrb[0].mxu0
      %v692 = vpop.f32.mrb[0].mxu0
      %v693 = vadd.f32 0.0, %v692
      %v694 = vpop.f32.mrb[0].mxu0
      %695 = vmatprep.mubr.bf16.mxu0 0
      %696 = vmatmul.mubr.bf16.gmra.mrb[0].mxu0 %v647
      %v697 = vpop.f32.mrb[0].mxu0
      %v698 = vadd.f32 0.0, %v697
      %v699 = vpop.f32.mrb[0].mxu0
      %v700 = vpop.f32.mrb[0].mxu0
      %v701 = vadd.f32 0.0, %v700
      %v702 = vpop.f32.mrb[0].mxu0
      %703 = vmatprep.mubr.bf16.mxu0 0
      %704 = vmatmul.mubr.bf16.gmra.mrb[0].mxu0 %v650
      %v705 = vpop.f32.mrb[0].mxu0
      %v706 = vadd.f32 0.0, %v705
      %v707 = vpop.f32.mrb[0].mxu0
      %v708 = vpop.f32.mrb[0].mxu0
      %v709 = vadd.f32 0.0, %v708
      %v710 = vpop.f32.mrb[0].mxu0
      %711 = vmatprep.mubr.bf16.mxu0 0
      %712 = vmatmul.mubr.bf16.gmra.mrb[0].mxu0 %v653
      %v713 = vpop.f32.mrb[0].mxu0
      %v714 = vadd.f32 0.0, %v713
      %v715 = vpop.f32.mrb[0].mxu0
      %v716 = vpop.f32.mrb[0].mxu0
      %v717 = vadd.f32 0.0, %v716
      %v718 = vpop.f32.mrb[0].mxu0
      %719 = vdwg.mxu0
      %v720 = vadd.f32 %v526, %v690
      %v721 = vadd.f32 %v529, %v693
      %v722 = vadd.f32 %v534, %v698
      %v723 = vadd.f32 %v537, %v701
      %v724 = vadd.f32 %v542, %v706
      %v725 = vadd.f32 %v545, %v709
      %v726 = vadd.f32 %v550, %v714
      %v727 = vadd.f32 %v553, %v717
      %v728 = vld [vmem:[%s1 + $0x60] sm:$0xf]
      %v729 = vld [vmem:[%s1 + $0x64] sm:$0xf]
      %v730 = vld [vmem:[%s1 + $0x68] sm:$0xf]
      %v731 = vld [vmem:[%s1 + $0x6c] sm:$0xf]
      %v732 = vld [vmem:[%s1 + $0x70] sm:$0xf]
      %v733 = vld [vmem:[%s1 + $0x74] sm:$0xf]
      %v734 = vld [vmem:[%s1 + $0x78] sm:$0xf]
      %v735 = vld [vmem:[%s1 + $0x7c] sm:$0xf]
      %v737 = vunpack.c.l.b16 %v186
      %v738 = vpack.c.b16 %v445, %v444
      %v739 = vpack.c.b16 %v447, %v446
      %v740 = vpack.c.b16 %v449, %v448
      %v741 = vpack.c.b16 %v737, %v450
      %v750 = vunpack.c.l.b16 %v728
      %v751 = vunpack.c.l.b16 %v729
      %v752 = vunpack.c.l.b16 %v730
      %v753 = vunpack.c.l.b16 %v731
      %v754 = vunpack.c.l.b16 %v732
      %v755 = vunpack.c.l.b16 %v733
      %v756 = vunpack.c.l.b16 %v734
      %v757 = vunpack.c.l.b16 %v735
      %v758 = vpack.c.b16 %v751, %v750
      %v759 = vpack.c.b16 %v753, %v752
      %v760 = vpack.c.b16 %v755, %v754
      %v761 = vpack.c.b16 %v757, %v756
      %v767 = vsel %vm357, %v738, 0
      %v770 = vsel %vm357, %v739, 0
      %v773 = vsel %vm357, %v740, 0
      %v776 = vsel %vm357, %v741, 0
      %778 = vmatprep.subr.bf16.mxu0 0
      %779 = vmatpush1.bf16.msra.mxu0 %v758
      %780 = vmatprep.subr.bf16.mxu0 0
      %781 = vmatpush1.bf16.msra.mxu0 %v759
      %782 = vmatprep.subr.bf16.mxu0 0
      %783 = vmatpush1.bf16.msra.mxu0 %v760
      %784 = vmatprep.subr.bf16.mxu0 0
      %785 = vmatpush1.bf16.msra.mxu0 %v761
      %786 = vmatprep.subr.bf16.mxu0 0
      %787 = vmatpush1.bf16.msra.mxu0 0
      %788 = vmatprep.subr.bf16.mxu0 0
      %789 = vmatpush1.bf16.msra.mxu0 0
      %790 = vmatprep.subr.bf16.mxu0 0
      %791 = vmatpush1.bf16.msra.mxu0 0
      %792 = vmatprep.subr.bf16.mxu0 0
      %793 = vmatpush1.bf16.msra.mxu0 0
      %794 = vmatprep.subr.bf16.mxu0 0
      %795 = vmatpush1.bf16.msra.mxu0 0
      %796 = vmatprep.subr.bf16.mxu0 0
      %797 = vmatpush1.bf16.msra.mxu0 0
      %798 = vmatprep.subr.bf16.mxu0 0
      %799 = vmatpush1.bf16.msra.mxu0 0
      %800 = vmatprep.subr.bf16.mxu0 0
      %801 = vmatpush1.bf16.msra.mxu0 0
      %802 = vmatprep.subr.bf16.mxu0 0
      %803 = vmatpush1.bf16.msra.mxu0 0
      %804 = vmatprep.subr.bf16.mxu0 0
      %805 = vmatpush1.bf16.msra.mxu0 0
      %806 = vmatprep.subr.bf16.mxu0 0
      %807 = vmatpush1.bf16.msra.mxu0 0
      %808 = vmatprep.subr.bf16.mxu0 0
      %809 = vmatpush1.bf16.msra.mxu0 0
      %810 = vmatprep.mubr.bf16.mxu0 0
      %811 = vmatmul.mubr.bf16.gmra.mrb[0].mxu0 %v767
      %v812 = vpop.f32.mrb[0].mxu0
      %v813 = vadd.f32 0.0, %v812
      %v814 = vpop.f32.mrb[0].mxu0
      %v815 = vpop.f32.mrb[0].mxu0
      %v816 = vadd.f32 0.0, %v815
      %v817 = vpop.f32.mrb[0].mxu0
      %818 = vmatprep.mubr.bf16.mxu0 0
      %819 = vmatmul.mubr.bf16.gmra.mrb[0].mxu0 %v770
      %v820 = vpop.f32.mrb[0].mxu0
      %v821 = vadd.f32 0.0, %v820
      %v822 = vpop.f32.mrb[0].mxu0
      %v823 = vpop.f32.mrb[0].mxu0
      %v824 = vadd.f32 0.0, %v823
      %v825 = vpop.f32.mrb[0].mxu0
      %826 = vmatprep.mubr.bf16.mxu0 0
      %827 = vmatmul.mubr.bf16.gmra.mrb[0].mxu0 %v773
      %v828 = vpop.f32.mrb[0].mxu0
      %v829 = vadd.f32 0.0, %v828
      %v830 = vpop.f32.mrb[0].mxu0
      %v831 = vpop.f32.mrb[0].mxu0
      %v832 = vadd.f32 0.0, %v831
      %v833 = vpop.f32.mrb[0].mxu0
      %834 = vmatprep.mubr.bf16.mxu0 0
      %835 = vmatmul.mubr.bf16.gmra.mrb[0].mxu0 %v776
      %v836 = vpop.f32.mrb[0].mxu0
      %v837 = vadd.f32 0.0, %v836
      %v838 = vpop.f32.mrb[0].mxu0
      %v839 = vpop.f32.mrb[0].mxu0
      %v840 = vadd.f32 0.0, %v839
      %v841 = vpop.f32.mrb[0].mxu0
      %842 = vdwg.mxu0
      %v843 = vadd.f32 %v720, %v813
      %v844 = vadd.f32 %v721, %v816
      %v845 = vadd.f32 %v722, %v821
      %v846 = vadd.f32 %v723, %v824
      %v847 = vadd.f32 %v724, %v829
      %v848 = vadd.f32 %v725, %v832
      %v849 = vadd.f32 %v726, %v837
      %v850 = vadd.f32 %v727, %v840
      %v852 = vshrl.u32 %v186, 16
      %v854 = vrot.slane %v852, 4
      %v855 = vshll.u32 %v186, 16
      %v857 = vrot.slane %v855, 5
      %v858 = vor.u32 %v854, %v857
      %v859 = vrot.slane %v858, 4
      %v861 = vshll.u32 %v187, 16
      %v863 = vrot.slane %v861, 5
      %v864 = vsel %vm200, %v859, %v863
      %v865 = vld [vmem:[%s1 + $0x80] sm:$0xf]
      %v866 = vld [vmem:[%s1 + $0x84] sm:$0xf]
      %v867 = vld [vmem:[%s1 + $0x88] sm:$0xf]
      %v868 = vld [vmem:[%s1 + $0x8c] sm:$0xf]
      %v869 = vld [vmem:[%s1 + $0x90] sm:$0xf]
      %v870 = vld [vmem:[%s1 + $0x94] sm:$0xf]
      %v871 = vld [vmem:[%s1 + $0x98] sm:$0xf]
      %v872 = vld [vmem:[%s1 + $0x9c] sm:$0xf]
      %v873 = vunpack.c.l.b16 %v864
      %v874 = vpack.c.b16 %v323, %v322
      %v875 = vpack.c.b16 %v325, %v324
      %v876 = vpack.c.b16 %v327, %v326
      %v877 = vpack.c.b16 %v873, %v328
      %v886 = vunpack.c.l.b16 %v865
      %v887 = vunpack.c.l.b16 %v866
      %v888 = vunpack.c.l.b16 %v867
      %v889 = vunpack.c.l.b16 %v868
      %v890 = vunpack.c.l.b16 %v869
      %v891 = vunpack.c.l.b16 %v870
      %v892 = vunpack.c.l.b16 %v871
      %v893 = vunpack.c.l.b16 %v872
      %v894 = vpack.c.b16 %v887, %v886
      %v895 = vpack.c.b16 %v889, %v888
      %v896 = vpack.c.b16 %v891, %v890
      %v897 = vpack.c.b16 %v893, %v892
      %v903 = vsel %vm357, %v874, 0
      %v906 = vsel %vm357, %v875, 0
      %v909 = vsel %vm357, %v876, 0
      %v912 = vsel %vm357, %v877, 0
      %914 = vmatprep.subr.bf16.mxu0 0
      %915 = vmatpush1.bf16.msra.mxu0 %v894
      %916 = vmatprep.subr.bf16.mxu0 0
      %917 = vmatpush1.bf16.msra.mxu0 %v895
      %918 = vmatprep.subr.bf16.mxu0 0
      %919 = vmatpush1.bf16.msra.mxu0 %v896
      %920 = vmatprep.subr.bf16.mxu0 0
      %921 = vmatpush1.bf16.msra.mxu0 %v897
      %922 = vmatprep.subr.bf16.mxu0 0
      %923 = vmatpush1.bf16.msra.mxu0 0
      %924 = vmatprep.subr.bf16.mxu0 0
      %925 = vmatpush1.bf16.msra.mxu0 0
      %926 = vmatprep.subr.bf16.mxu0 0
      %927 = vmatpush1.bf16.msra.mxu0 0
      %928 = vmatprep.subr.bf16.mxu0 0
      %929 = vmatpush1.bf16.msra.mxu0 0
      %930 = vmatprep.subr.bf16.mxu0 0
      %931 = vmatpush1.bf16.msra.mxu0 0
      %932 = vmatprep.subr.bf16.mxu0 0
      %933 = vmatpush1.bf16.msra.mxu0 0
      %934 = vmatprep.subr.bf16.mxu0 0
      %935 = vmatpush1.bf16.msra.mxu0 0
      %936 = vmatprep.subr.bf16.mxu0 0
      %937 = vmatpush1.bf16.msra.mxu0 0
      %938 = vmatprep.subr.bf16.mxu0 0
      %939 = vmatpush1.bf16.msra.mxu0 0
      %940 = vmatprep.subr.bf16.mxu0 0
      %941 = vmatpush1.bf16.msra.mxu0 0
      %942 = vmatprep.subr.bf16.mxu0 0
      %943 = vmatpush1.bf16.msra.mxu0 0
      %944 = vmatprep.subr.bf16.mxu0 0
      %945 = vmatpush1.bf16.msra.mxu0 0
      %946 = vmatprep.mubr.bf16.mxu0 0
      %947 = vmatmul.mubr.bf16.gmra.mrb[0].mxu0 %v903
      %v948 = vpop.f32.mrb[0].mxu0
      %v949 = vadd.f32 0.0, %v948
      %v950 = vpop.f32.mrb[0].mxu0
      %v951 = vpop.f32.mrb[0].mxu0
      %v952 = vadd.f32 0.0, %v951
      %v953 = vpop.f32.mrb[0].mxu0
      %954 = vmatprep.mubr.bf16.mxu0 0
      %955 = vmatmul.mubr.bf16.gmra.mrb[0].mxu0 %v906
      %v956 = vpop.f32.mrb[0].mxu0
      %v957 = vadd.f32 0.0, %v956
      %v958 = vpop.f32.mrb[0].mxu0
      %v959 = vpop.f32.mrb[0].mxu0
      %v960 = vadd.f32 0.0, %v959
      %v961 = vpop.f32.mrb[0].mxu0
      %962 = vmatprep.mubr.bf16.mxu0 0
      %963 = vmatmul.mubr.bf16.gmra.mrb[0].mxu0 %v909
      %v964 = vpop.f32.mrb[0].mxu0
      %v965 = vadd.f32 0.0, %v964
      %v966 = vpop.f32.mrb[0].mxu0
      %v967 = vpop.f32.mrb[0].mxu0
      %v968 = vadd.f32 0.0, %v967
      %v969 = vpop.f32.mrb[0].mxu0
      %970 = vmatprep.mubr.bf16.mxu0 0
      %971 = vmatmul.mubr.bf16.gmra.mrb[0].mxu0 %v912
      %v972 = vpop.f32.mrb[0].mxu0
      %v973 = vadd.f32 0.0, %v972
      %v974 = vpop.f32.mrb[0].mxu0
      %v975 = vpop.f32.mrb[0].mxu0
      %v976 = vadd.f32 0.0, %v975
      %v977 = vpop.f32.mrb[0].mxu0
      %978 = vdwg.mxu0
      %v979 = vadd.f32 %v843, %v949
      %v980 = vadd.f32 %v844, %v952
      %v981 = vadd.f32 %v845, %v957
      %v982 = vadd.f32 %v846, %v960
      %v983 = vadd.f32 %v847, %v965
      %v984 = vadd.f32 %v848, %v968
      %v985 = vadd.f32 %v849, %v973
      %v986 = vadd.f32 %v850, %v976
      %v988 = vrot.slane %v186, 5
      %v989 = vrot.slane %v988, 4
      %v990 = vrot.slane %v187, 5
      %v991 = vsel %vm566, %v989, %v990
      %v992 = vld [vmem:[%s1 + $0xa0] sm:$0xf]
      %v993 = vld [vmem:[%s1 + $0xa4] sm:$0xf]
      %v994 = vld [vmem:[%s1 + $0xa8] sm:$0xf]
      %v995 = vld [vmem:[%s1 + $0xac] sm:$0xf]
      %v996 = vld [vmem:[%s1 + $0xb0] sm:$0xf]
      %v997 = vld [vmem:[%s1 + $0xb4] sm:$0xf]
      %v998 = vld [vmem:[%s1 + $0xb8] sm:$0xf]
      %v999 = vld [vmem:[%s1 + $0xbc] sm:$0xf]
      %v1000 = vunpack.c.l.b16 %v991
      %v1001 = vpack.c.b16 %v609, %v608
      %v1002 = vpack.c.b16 %v611, %v610
      %v1003 = vpack.c.b16 %v613, %v612
      %v1004 = vpack.c.b16 %v1000, %v614
      %v1013 = vunpack.c.l.b16 %v992
      %v1014 = vunpack.c.l.b16 %v993
      %v1015 = vunpack.c.l.b16 %v994
      %v1016 = vunpack.c.l.b16 %v995
      %v1017 = vunpack.c.l.b16 %v996
      %v1018 = vunpack.c.l.b16 %v997
      %v1019 = vunpack.c.l.b16 %v998
      %v1020 = vunpack.c.l.b16 %v999
      %v1021 = vpack.c.b16 %v1014, %v1013
      %v1022 = vpack.c.b16 %v1016, %v1015
      %v1023 = vpack.c.b16 %v1018, %v1017
      %v1024 = vpack.c.b16 %v1020, %v1019
      %v1030 = vsel %vm357, %v1001, 0
      %v1033 = vsel %vm357, %v1002, 0
      %v1036 = vsel %vm357, %v1003, 0
      %v1039 = vsel %vm357, %v1004, 0
      %1041 = vmatprep.subr.bf16.mxu0 0
      %1042 = vmatpush1.bf16.msra.mxu0 %v1021
      %1043 = vmatprep.subr.bf16.mxu0 0
      %1044 = vmatpush1.bf16.msra.mxu0 %v1022
      %1045 = vmatprep.subr.bf16.mxu0 0
      %1046 = vmatpush1.bf16.msra.mxu0 %v1023
      %1047 = vmatprep.subr.bf16.mxu0 0
      %1048 = vmatpush1.bf16.msra.mxu0 %v1024
      %1049 = vmatprep.subr.bf16.mxu0 0
      %1050 = vmatpush1.bf16.msra.mxu0 0
      %1051 = vmatprep.subr.bf16.mxu0 0
      %1052 = vmatpush1.bf16.msra.mxu0 0
      %1053 = vmatprep.subr.bf16.mxu0 0
      %1054 = vmatpush1.bf16.msra.mxu0 0
      %1055 = vmatprep.subr.bf16.mxu0 0
      %1056 = vmatpush1.bf16.msra.mxu0 0
      %1057 = vmatprep.subr.bf16.mxu0 0
      %1058 = vmatpush1.bf16.msra.mxu0 0
      %1059 = vmatprep.subr.bf16.mxu0 0
      %1060 = vmatpush1.bf16.msra.mxu0 0
      %1061 = vmatprep.subr.bf16.mxu0 0
      %1062 = vmatpush1.bf16.msra.mxu0 0
      %1063 = vmatprep.subr.bf16.mxu0 0
      %1064 = vmatpush1.bf16.msra.mxu0 0
      %1065 = vmatprep.subr.bf16.mxu0 0
      %1066 = vmatpush1.bf16.msra.mxu0 0
      %1067 = vmatprep.subr.bf16.mxu0 0
      %1068 = vmatpush1.bf16.msra.mxu0 0
      %1069 = vmatprep.subr.bf16.mxu0 0
      %1070 = vmatpush1.bf16.msra.mxu0 0
      %1071 = vmatprep.subr.bf16.mxu0 0
      %1072 = vmatpush1.bf16.msra.mxu0 0
      %1073 = vmatprep.mubr.bf16.mxu0 0
      %1074 = vmatmul.mubr.bf16.gmra.mrb[0].mxu0 %v1030
      %v1075 = vpop.f32.mrb[0].mxu0
      %v1076 = vadd.f32 0.0, %v1075
      %v1077 = vpop.f32.mrb[0].mxu0
      %v1078 = vpop.f32.mrb[0].mxu0
      %v1079 = vadd.f32 0.0, %v1078
      %v1080 = vpop.f32.mrb[0].mxu0
      %1081 = vmatprep.mubr.bf16.mxu0 0
      %1082 = vmatmul.mubr.bf16.gmra.mrb[0].mxu0 %v1033
      %v1083 = vpop.f32.mrb[0].mxu0
      %v1084 = vadd.f32 0.0, %v1083
      %v1085 = vpop.f32.mrb[0].mxu0
      %v1086 = vpop.f32.mrb[0].mxu0
      %v1087 = vadd.f32 0.0, %v1086
      %v1088 = vpop.f32.mrb[0].mxu0
      %1089 = vmatprep.mubr.bf16.mxu0 0
      %1090 = vmatmul.mubr.bf16.gmra.mrb[0].mxu0 %v1036
      %v1091 = vpop.f32.mrb[0].mxu0
      %v1092 = vadd.f32 0.0, %v1091
      %v1093 = vpop.f32.mrb[0].mxu0
      %v1094 = vpop.f32.mrb[0].mxu0
      %v1095 = vadd.f32 0.0, %v1094
      %v1096 = vpop.f32.mrb[0].mxu0
      %1097 = vmatprep.mubr.bf16.mxu0 0
      %1098 = vmatmul.mubr.bf16.gmra.mrb[0].mxu0 %v1039
      %v1099 = vpop.f32.mrb[0].mxu0
      %v1100 = vadd.f32 0.0, %v1099
      %v1101 = vpop.f32.mrb[0].mxu0
      %v1102 = vpop.f32.mrb[0].mxu0
      %v1103 = vadd.f32 0.0, %v1102
      %v1104 = vpop.f32.mrb[0].mxu0
      %1105 = vdwg.mxu0
      %v1106 = vadd.f32 %v979, %v1076
      %v1107 = vadd.f32 %v980, %v1079
      %v1108 = vadd.f32 %v981, %v1084
      %v1109 = vadd.f32 %v982, %v1087
      %v1110 = vadd.f32 %v983, %v1092
      %v1111 = vadd.f32 %v984, %v1095
      %v1112 = vadd.f32 %v985, %v1100
      %v1113 = vadd.f32 %v986, %v1103
      %v1114 = vld [vmem:[%s1 + $0xc0] sm:$0xf]
      %v1115 = vld [vmem:[%s1 + $0xc4] sm:$0xf]
      %v1116 = vld [vmem:[%s1 + $0xc8] sm:$0xf]
      %v1117 = vld [vmem:[%s1 + $0xcc] sm:$0xf]
      %v1118 = vld [vmem:[%s1 + $0xd0] sm:$0xf]
      %v1119 = vld [vmem:[%s1 + $0xd4] sm:$0xf]
      %v1120 = vld [vmem:[%s1 + $0xd8] sm:$0xf]
      %v1121 = vld [vmem:[%s1 + $0xdc] sm:$0xf]
      %v1123 = vunpack.c.l.b16 %v188
      %v1124 = vpack.c.b16 %v1123, %v737
      %v1133 = vunpack.c.l.b16 %v1114
      %v1134 = vunpack.c.l.b16 %v1115
      %v1135 = vunpack.c.l.b16 %v1116
      %v1136 = vunpack.c.l.b16 %v1117
      %v1137 = vunpack.c.l.b16 %v1118
      %v1138 = vunpack.c.l.b16 %v1119
      %v1139 = vunpack.c.l.b16 %v1120
      %v1140 = vunpack.c.l.b16 %v1121
      %v1141 = vpack.c.b16 %v1134, %v1133
      %v1142 = vpack.c.b16 %v1136, %v1135
      %v1143 = vpack.c.b16 %v1138, %v1137
      %v1144 = vpack.c.b16 %v1140, %v1139
      %v1150 = vsel %vm357, %v1124, 0
      %1152 = vmatprep.subr.bf16.mxu0 0
      %1153 = vmatpush1.bf16.msra.mxu0 %v1141
      %1154 = vmatprep.subr.bf16.mxu0 0
      %1155 = vmatpush1.bf16.msra.mxu0 %v1142
      %1156 = vmatprep.subr.bf16.mxu0 0
      %1157 = vmatpush1.bf16.msra.mxu0 %v1143
      %1158 = vmatprep.subr.bf16.mxu0 0
      %1159 = vmatpush1.bf16.msra.mxu0 %v1144
      %1160 = vmatprep.subr.bf16.mxu0 0
      %1161 = vmatpush1.bf16.msra.mxu0 0
      %1162 = vmatprep.subr.bf16.mxu0 0
      %1163 = vmatpush1.bf16.msra.mxu0 0
      %1164 = vmatprep.subr.bf16.mxu0 0
      %1165 = vmatpush1.bf16.msra.mxu0 0
      %1166 = vmatprep.subr.bf16.mxu0 0
      %1167 = vmatpush1.bf16.msra.mxu0 0
      %1168 = vmatprep.subr.bf16.mxu0 0
      %1169 = vmatpush1.bf16.msra.mxu0 0
      %1170 = vmatprep.subr.bf16.mxu0 0
      %1171 = vmatpush1.bf16.msra.mxu0 0
      %1172 = vmatprep.subr.bf16.mxu0 0
      %1173 = vmatpush1.bf16.msra.mxu0 0
      %1174 = vmatprep.subr.bf16.mxu0 0
      %1175 = vmatpush1.bf16.msra.mxu0 0
      %1176 = vmatprep.subr.bf16.mxu0 0
      %1177 = vmatpush1.bf16.msra.mxu0 0
      %1178 = vmatprep.subr.bf16.mxu0 0
      %1179 = vmatpush1.bf16.msra.mxu0 0
      %1180 = vmatprep.subr.bf16.mxu0 0
      %1181 = vmatpush1.bf16.msra.mxu0 0
      %1182 = vmatprep.subr.bf16.mxu0 0
      %1183 = vmatpush1.bf16.msra.mxu0 0
      %1184 = vmatprep.mubr.bf16.mxu0 0
      %1185 = vmatmul.mubr.bf16.gmra.mrb[0].mxu0 %v483
      %v1186 = vpop.f32.mrb[0].mxu0
      %v1187 = vadd.f32 0.0, %v1186
      %v1188 = vpop.f32.mrb[0].mxu0
      %v1189 = vpop.f32.mrb[0].mxu0
      %v1190 = vadd.f32 0.0, %v1189
      %v1191 = vpop.f32.mrb[0].mxu0
      %1192 = vmatprep.mubr.bf16.mxu0 0
      %1193 = vmatmul.mubr.bf16.gmra.mrb[0].mxu0 %v486
      %v1194 = vpop.f32.mrb[0].mxu0
      %v1195 = vadd.f32 0.0, %v1194
      %v1196 = vpop.f32.mrb[0].mxu0
      %v1197 = vpop.f32.mrb[0].mxu0
      %v1198 = vadd.f32 0.0, %v1197
      %v1199 = vpop.f32.mrb[0].mxu0
      %1200 = vmatprep.mubr.bf16.mxu0 0
      %1201 = vmatmul.mubr.bf16.gmra.mrb[0].mxu0 %v489
      %v1202 = vpop.f32.mrb[0].mxu0
      %v1203 = vadd.f32 0.0, %v1202
      %v1204 = vpop.f32.mrb[0].mxu0
      %v1205 = vpop.f32.mrb[0].mxu0
      %v1206 = vadd.f32 0.0, %v1205
      %v1207 = vpop.f32.mrb[0].mxu0
      %1208 = vmatprep.mubr.bf16.mxu0 0
      %1209 = vmatmul.mubr.bf16.gmra.mrb[0].mxu0 %v1150
      %v1210 = vpop.f32.mrb[0].mxu0
      %v1211 = vadd.f32 0.0, %v1210
      %v1212 = vpop.f32.mrb[0].mxu0
      %v1213 = vpop.f32.mrb[0].mxu0
      %v1214 = vadd.f32 0.0, %v1213
      %v1215 = vpop.f32.mrb[0].mxu0
      %1216 = vdwg.mxu0
      %v1217 = vadd.f32 %v1106, %v1187
      %v1218 = vadd.f32 %v1107, %v1190
      %v1219 = vadd.f32 %v1108, %v1195
      %v1220 = vadd.f32 %v1109, %v1198
      %v1221 = vadd.f32 %v1110, %v1203
      %v1222 = vadd.f32 %v1111, %v1206
      %v1223 = vadd.f32 %v1112, %v1211
      %v1224 = vadd.f32 %v1113, %v1214
      %v1226 = vshrl.u32 %v188, 16
      %v1228 = vrot.slane %v1226, 4
      %v1229 = vshll.u32 %v188, 16
      %v1231 = vrot.slane %v1229, 5
      %v1232 = vor.u32 %v1228, %v1231
      %v1233 = vrot.slane %v1232, 4
      %v1235 = vshll.u32 %v189, 16
      %v1237 = vrot.slane %v1235, 5
      %v1238 = vsel %vm200, %v1233, %v1237
      %v1239 = vld [vmem:[%s1 + $0xe0] sm:$0xf]
      %v1240 = vld [vmem:[%s1 + $0xe4] sm:$0xf]
      %v1241 = vld [vmem:[%s1 + $0xe8] sm:$0xf]
      %v1242 = vld [vmem:[%s1 + $0xec] sm:$0xf]
      %v1243 = vld [vmem:[%s1 + $0xf0] sm:$0xf]
      %v1244 = vld [vmem:[%s1 + $0xf4] sm:$0xf]
      %v1245 = vld [vmem:[%s1 + $0xf8] sm:$0xf]
      %v1246 = vld [vmem:[%s1 + $0xfc] sm:$0xf]
      %v1247 = vunpack.c.l.b16 %v1238
      %v1248 = vpack.c.b16 %v1247, %v873
      %v1257 = vunpack.c.l.b16 %v1239
      %v1258 = vunpack.c.l.b16 %v1240
      %v1259 = vunpack.c.l.b16 %v1241
      %v1260 = vunpack.c.l.b16 %v1242
      %v1261 = vunpack.c.l.b16 %v1243
      %v1262 = vunpack.c.l.b16 %v1244
      %v1263 = vunpack.c.l.b16 %v1245
      %v1264 = vunpack.c.l.b16 %v1246
      %v1265 = vpack.c.b16 %v1258, %v1257
      %v1266 = vpack.c.b16 %v1260, %v1259
      %v1267 = vpack.c.b16 %v1262, %v1261
      %v1268 = vpack.c.b16 %v1264, %v1263
      %v1274 = vsel %vm357, %v1248, 0
      %1276 = vmatprep.subr.bf16.mxu0 0
      %1277 = vmatpush1.bf16.msra.mxu0 %v1265
      %1278 = vmatprep.subr.bf16.mxu0 0
      %1279 = vmatpush1.bf16.msra.mxu0 %v1266
      %1280 = vmatprep.subr.bf16.mxu0 0
      %1281 = vmatpush1.bf16.msra.mxu0 %v1267
      %1282 = vmatprep.subr.bf16.mxu0 0
      %1283 = vmatpush1.bf16.msra.mxu0 %v1268
      %1284 = vmatprep.subr.bf16.mxu0 0
      %1285 = vmatpush1.bf16.msra.mxu0 0
      %1286 = vmatprep.subr.bf16.mxu0 0
      %1287 = vmatpush1.bf16.msra.mxu0 0
      %1288 = vmatprep.subr.bf16.mxu0 0
      %1289 = vmatpush1.bf16.msra.mxu0 0
      %1290 = vmatprep.subr.bf16.mxu0 0
      %1291 = vmatpush1.bf16.msra.mxu0 0
      %1292 = vmatprep.subr.bf16.mxu0 0
      %1293 = vmatpush1.bf16.msra.mxu0 0
      %1294 = vmatprep.subr.bf16.mxu0 0
      %1295 = vmatpush1.bf16.msra.mxu0 0
      %1296 = vmatprep.subr.bf16.mxu0 0
      %1297 = vmatpush1.bf16.msra.mxu0 0
      %1298 = vmatprep.subr.bf16.mxu0 0
      %1299 = vmatpush1.bf16.msra.mxu0 0
      %1300 = vmatprep.subr.bf16.mxu0 0
      %1301 = vmatpush1.bf16.msra.mxu0 0
      %1302 = vmatprep.subr.bf16.mxu0 0
      %1303 = vmatpush1.bf16.msra.mxu0 0
      %1304 = vmatprep.subr.bf16.mxu0 0
      %1305 = vmatpush1.bf16.msra.mxu0 0
      %1306 = vmatprep.subr.bf16.mxu0 0
      %1307 = vmatpush1.bf16.msra.mxu0 0
      %1308 = vmatprep.mubr.bf16.mxu0 0
      %1309 = vmatmul.mubr.bf16.gmra.mrb[0].mxu0 %v362
      %v1310 = vpop.f32.mrb[0].mxu0
      %v1311 = vadd.f32 0.0, %v1310
      %v1312 = vpop.f32.mrb[0].mxu0
      %v1313 = vpop.f32.mrb[0].mxu0
      %v1314 = vadd.f32 0.0, %v1313
      %v1315 = vpop.f32.mrb[0].mxu0
      %1316 = vmatprep.mubr.bf16.mxu0 0
      %1317 = vmatmul.mubr.bf16.gmra.mrb[0].mxu0 %v365
      %v1318 = vpop.f32.mrb[0].mxu0
      %v1319 = vadd.f32 0.0, %v1318
      %v1320 = vpop.f32.mrb[0].mxu0
      %v1321 = vpop.f32.mrb[0].mxu0
      %v1322 = vadd.f32 0.0, %v1321
      %v1323 = vpop.f32.mrb[0].mxu0
      %1324 = vmatprep.mubr.bf16.mxu0 0
      %1325 = vmatmul.mubr.bf16.gmra.mrb[0].mxu0 %v368
      %v1326 = vpop.f32.mrb[0].mxu0
      %v1327 = vadd.f32 0.0, %v1326
      %v1328 = vpop.f32.mrb[0].mxu0
      %v1329 = vpop.f32.mrb[0].mxu0
      %v1330 = vadd.f32 0.0, %v1329
      %v1331 = vpop.f32.mrb[0].mxu0
      %1332 = vmatprep.mubr.bf16.mxu0 0
      %1333 = vmatmul.mubr.bf16.gmra.mrb[0].mxu0 %v1274
      %v1334 = vpop.f32.mrb[0].mxu0
      %v1335 = vadd.f32 0.0, %v1334
      %v1336 = vpop.f32.mrb[0].mxu0
      %v1337 = vpop.f32.mrb[0].mxu0
      %v1338 = vadd.f32 0.0, %v1337
      %v1339 = vpop.f32.mrb[0].mxu0
      %1340 = vdwg.mxu0
      %v1341 = vadd.f32 %v1217, %v1311
      %v1342 = vadd.f32 %v1218, %v1314
      %v1343 = vadd.f32 %v1219, %v1319
      %v1344 = vadd.f32 %v1220, %v1322
      %v1345 = vadd.f32 %v1221, %v1327
      %v1346 = vadd.f32 %v1222, %v1330
      %v1347 = vadd.f32 %v1223, %v1335
      %v1348 = vadd.f32 %v1224, %v1338
      %v1350 = vrot.slane %v188, 5
      %v1351 = vrot.slane %v1350, 4
      %v1352 = vrot.slane %v189, 5
      %v1353 = vsel %vm566, %v1351, %v1352
      %v1354 = vld [vmem:[%s1 + $0x100] sm:$0xf]
      %v1355 = vld [vmem:[%s1 + $0x104] sm:$0xf]
      %v1356 = vld [vmem:[%s1 + $0x108] sm:$0xf]
      %v1357 = vld [vmem:[%s1 + $0x10c] sm:$0xf]
      %v1358 = vld [vmem:[%s1 + $0x110] sm:$0xf]
      %v1359 = vld [vmem:[%s1 + $0x114] sm:$0xf]
      %v1360 = vld [vmem:[%s1 + $0x118] sm:$0xf]
      %v1361 = vld [vmem:[%s1 + $0x11c] sm:$0xf]
      %v1362 = vunpack.c.l.b16 %v1353
      %v1363 = vpack.c.b16 %v1362, %v1000
      %v1372 = vunpack.c.l.b16 %v1354
      %v1373 = vunpack.c.l.b16 %v1355
      %v1374 = vunpack.c.l.b16 %v1356
      %v1375 = vunpack.c.l.b16 %v1357
      %v1376 = vunpack.c.l.b16 %v1358
      %v1377 = vunpack.c.l.b16 %v1359
      %v1378 = vunpack.c.l.b16 %v1360
      %v1379 = vunpack.c.l.b16 %v1361
      %v1380 = vpack.c.b16 %v1373, %v1372
      %v1381 = vpack.c.b16 %v1375, %v1374
      %v1382 = vpack.c.b16 %v1377, %v1376
      %v1383 = vpack.c.b16 %v1379, %v1378
      %v1389 = vsel %vm357, %v1363, 0
      %1391 = vmatprep.subr.bf16.mxu0 0
      %1392 = vmatpush1.bf16.msra.mxu0 %v1380
      %1393 = vmatprep.subr.bf16.mxu0 0
      %1394 = vmatpush1.bf16.msra.mxu0 %v1381
      %1395 = vmatprep.subr.bf16.mxu0 0
      %1396 = vmatpush1.bf16.msra.mxu0 %v1382
      %1397 = vmatprep.subr.bf16.mxu0 0
      %1398 = vmatpush1.bf16.msra.mxu0 %v1383
      %1399 = vmatprep.subr.bf16.mxu0 0
      %1400 = vmatpush1.bf16.msra.mxu0 0
      %1401 = vmatprep.subr.bf16.mxu0 0
      %1402 = vmatpush1.bf16.msra.mxu0 0
      %1403 = vmatprep.subr.bf16.mxu0 0
      %1404 = vmatpush1.bf16.msra.mxu0 0
      %1405 = vmatprep.subr.bf16.mxu0 0
      %1406 = vmatpush1.bf16.msra.mxu0 0
      %1407 = vmatprep.subr.bf16.mxu0 0
      %1408 = vmatpush1.bf16.msra.mxu0 0
      %1409 = vmatprep.subr.bf16.mxu0 0
      %1410 = vmatpush1.bf16.msra.mxu0 0
      %1411 = vmatprep.subr.bf16.mxu0 0
      %1412 = vmatpush1.bf16.msra.mxu0 0
      %1413 = vmatprep.subr.bf16.mxu0 0
      %1414 = vmatpush1.bf16.msra.mxu0 0
      %1415 = vmatprep.subr.bf16.mxu0 0
      %1416 = vmatpush1.bf16.msra.mxu0 0
      %1417 = vmatprep.subr.bf16.mxu0 0
      %1418 = vmatpush1.bf16.msra.mxu0 0
      %1419 = vmatprep.subr.bf16.mxu0 0
      %1420 = vmatpush1.bf16.msra.mxu0 0
      %1421 = vmatprep.subr.bf16.mxu0 0
      %1422 = vmatpush1.bf16.msra.mxu0 0
      %1423 = vmatprep.mubr.bf16.mxu0 0
      %1424 = vmatmul.mubr.bf16.gmra.mrb[0].mxu0 %v647
      %v1425 = vpop.f32.mrb[0].mxu0
      %v1426 = vadd.f32 0.0, %v1425
      %v1427 = vpop.f32.mrb[0].mxu0
      %v1428 = vpop.f32.mrb[0].mxu0
      %v1429 = vadd.f32 0.0, %v1428
      %v1430 = vpop.f32.mrb[0].mxu0
      %1431 = vmatprep.mubr.bf16.mxu0 0
      %1432 = vmatmul.mubr.bf16.gmra.mrb[0].mxu0 %v650
      %v1433 = vpop.f32.mrb[0].mxu0
      %v1434 = vadd.f32 0.0, %v1433
      %v1435 = vpop.f32.mrb[0].mxu0
      %v1436 = vpop.f32.mrb[0].mxu0
      %v1437 = vadd.f32 0.0, %v1436
      %v1438 = vpop.f32.mrb[0].mxu0
      %1439 = vmatprep.mubr.bf16.mxu0 0
      %1440 = vmatmul.mubr.bf16.gmra.mrb[0].mxu0 %v653
      %v1441 = vpop.f32.mrb[0].mxu0
      %v1442 = vadd.f32 0.0, %v1441
      %v1443 = vpop.f32.mrb[0].mxu0
      %v1444 = vpop.f32.mrb[0].mxu0
      %v1445 = vadd.f32 0.0, %v1444
      %v1446 = vpop.f32.mrb[0].mxu0
      %1447 = vmatprep.mubr.bf16.mxu0 0
      %1448 = vmatmul.mubr.bf16.gmra.mrb[0].mxu0 %v1389
      %v1449 = vpop.f32.mrb[0].mxu0
      %v1450 = vadd.f32 0.0, %v1449
      %v1451 = vpop.f32.mrb[0].mxu0
      %v1452 = vpop.f32.mrb[0].mxu0
      %v1453 = vadd.f32 0.0, %v1452
      %v1454 = vpop.f32.mrb[0].mxu0
      %1455 = vdwg.mxu0
      %v1456 = vadd.f32 %v1341, %v1426
      %v1457 = vadd.f32 %v1342, %v1429
      %v1458 = vadd.f32 %v1343, %v1434
      %v1459 = vadd.f32 %v1344, %v1437
      %v1460 = vadd.f32 %v1345, %v1442
      %v1461 = vadd.f32 %v1346, %v1445
      %v1462 = vadd.f32 %v1347, %v1450
      %v1463 = vadd.f32 %v1348, %v1453
      %v1464 = vpack.c.bf16 %v1457, %v1456
      %v1465 = vpack.c.bf16 %v1459, %v1458
      %v1466 = vpack.c.bf16 %v1461, %v1460
      %v1467 = vpack.c.bf16 %v1463, %v1462
      %v1472 = vunpack.c.l.b16 %v1464
      %v1473 = vunpack.c.h.b16 %v1464
      %v1474 = vunpack.c.l.b16 %v1465
      %v1475 = vunpack.c.h.b16 %v1465
      %v1476 = vunpack.c.l.b16 %v1466
      %v1477 = vunpack.c.h.b16 %v1466
      %v1478 = vunpack.c.l.b16 %v1467
      %v1479 = vunpack.c.h.b16 %v1467
      %v1480 = vpack.c.b16 %v1472, %v1472
      %v1481 = vpack.c.b16 %v1473, %v1473
      %v1482 = vpack.c.b16 %v1474, %v1474
      %v1483 = vpack.c.b16 %v1475, %v1475
      %v1484 = vpack.c.b16 %v1476, %v1476
      %v1485 = vpack.c.b16 %v1477, %v1477
      %v1486 = vpack.c.b16 %v1478, %v1478
      %v1487 = vpack.c.b16 %v1479, %v1479
      %vm1496 = vcmask 125952
      %1497 = vst.msk [vmem:[%s168] sm:$0xf] %vm1496, %v1480
      %1498 = vst.msk [vmem:[%s168 + $0x4] sm:$0xf] %vm1496, %v1481
      %1499 = vst.msk [vmem:[%s168 + $0x8] sm:$0xf] %vm1496, %v1482
      %1500 = vst.msk [vmem:[%s168 + $0xc] sm:$0xf] %vm1496, %v1483
      %1501 = vst.msk [vmem:[%s168 + $0x10] sm:$0xf] %vm1496, %v1484
      %1502 = vst.msk [vmem:[%s168 + $0x14] sm:$0xf] %vm1496, %v1485
      %1503 = vst.msk [vmem:[%s168 + $0x18] sm:$0xf] %vm1496, %v1486
      %1504 = vst.msk [vmem:[%s168 + $0x1c] sm:$0xf] %vm1496, %v1487
      %p1505 = scmp.eq.s32.totalorder %s15, 0
      // Predicated region
      $region29: #{rcca_forward.6} parent=27 // pred_check
        %p1506 = pneg %p1505
      $region30: #{rcca_forward.6} parent=27 // pred_check_branch
        %1508 = sbr.rel (%p1506) target = $region32
      $region31: #{rcca_forward.6} parent=27 // pred_region
        %vm1509 = vcmask 123904
        %1510 = vst.msk [vmem:[#allocation2] sm:$0x3] %vm1509, 0.0
      $region32: #{rcca_forward.6} parent=27 // pred_fallthru
        _
      %v1511 = vunpack.c.l.bf16 %v1464
      %v1512 = vunpack.c.h.bf16 %v1464
      %v1513 = vunpack.c.l.bf16 %v1465
      %v1514 = vunpack.c.h.bf16 %v1465
      %v1515 = vunpack.c.l.bf16 %v1466
      %v1516 = vunpack.c.h.bf16 %v1466
      %v1517 = vunpack.c.l.bf16 %v1467
      %v1518 = vunpack.c.h.bf16 %v1467
      %v1519 = vld [vmem:[#allocation2] sm:$0x1]
      %vm1520 = vcmask 130048
      %v1521 = vsel %vm1520, %v1511, 0.0
      %v1522 = vsel %vm1520, %v1512, 0.0
      %v1523 = vadd.f32 %v1521, %v1522
      %v1524 = vsel %vm1520, %v1513, 0.0
      %v1525 = vadd.f32 %v1523, %v1524
      %v1526 = vsel %vm1520, %v1514, 0.0
      %v1527 = vadd.f32 %v1525, %v1526
      %v1528 = vsel %vm1520, %v1515, 0.0
      %v1529 = vadd.f32 %v1527, %v1528
      %v1530 = vsel %vm1520, %v1516, 0.0
      %v1531 = vadd.f32 %v1529, %v1530
      %v1532 = vsel %vm1520, %v1517, 0.0
      %v1533 = vadd.f32 %v1531, %v1532
      %v1534 = vsel %vm1520, %v1518, 0.0
      %v1535 = vadd.f32 %v1533, %v1534
      %v1536 = vrot.slane %v1535, 4
      %v1537 = vadd.f32 %v1535, %v1536
      %v1538 = vrot.slane %v1537, 2
      %v1539 = vadd.f32 %v1537, %v1538
      %v1540 = vrot.slane %v1539, 1
      %v1541 = vadd.f32 %v1539, %v1540
      %v1542 = vadd.f32 %v1519, %v1541
      %vm1543 = vcmask 122880
      %1544 = vst.msk [vmem:[#allocation2] sm:$0x1] %vm1543, %v1542
      %v1545 = vld [vmem:[#allocation2 + $0x1] sm:$0x1]
      %v1546 = vmul.f32 %v1511, %v1511
      %v1547 = vmul.f32 %v1512, %v1512
      %v1548 = vmul.f32 %v1513, %v1513
      %v1549 = vmul.f32 %v1514, %v1514
      %v1550 = vmul.f32 %v1515, %v1515
      %v1551 = vmul.f32 %v1516, %v1516
      %v1552 = vmul.f32 %v1517, %v1517
      %v1553 = vmul.f32 %v1518, %v1518
      %v1554 = vsel %vm1520, %v1546, 0.0
      %v1555 = vsel %vm1520, %v1547, 0.0
      %v1556 = vadd.f32 %v1554, %v1555
      %v1557 = vsel %vm1520, %v1548, 0.0
      %v1558 = vadd.f32 %v1556, %v1557
      %v1559 = vsel %vm1520, %v1549, 0.0
      %v1560 = vadd.f32 %v1558, %v1559
      %v1561 = vsel %vm1520, %v1550, 0.0
      %v1562 = vadd.f32 %v1560, %v1561
      %v1563 = vsel %vm1520, %v1551, 0.0
      %v1564 = vadd.f32 %v1562, %v1563
      %v1565 = vsel %vm1520, %v1552, 0.0
      %v1566 = vadd.f32 %v1564, %v1565
      %v1567 = vsel %vm1520, %v1553, 0.0
      %v1568 = vadd.f32 %v1566, %v1567
      %v1569 = vrot.slane %v1568, 4
      %v1570 = vadd.f32 %v1568, %v1569
      %v1571 = vrot.slane %v1570, 2
      %v1572 = vadd.f32 %v1570, %v1571
      %v1573 = vrot.slane %v1572, 1
      %v1574 = vadd.f32 %v1572, %v1573
      %v1575 = vadd.f32 %v1545, %v1574
      %1576 = vst.msk [vmem:[#allocation2 + $0x1] sm:$0x1] %vm1543, %v1575
      %p1577 = scmp.eq.s32.totalorder %s15, 1
      // Predicated region
      $region33: #{rcca_forward.6} parent=27 // pred_check
        %p1578 = pneg %p1577
      $region34: #{rcca_forward.6} parent=27 // pred_check_branch
        %1580 = sbr.rel (%p1578) target = $region36
      $region35: #{rcca_forward.6} parent=27 // pred_region
        %v1581 = vld [vmem:[#allocation2] sm:$0x3]
        %vm1582 = vcmask 123904
        %1583 = vst.msk [vmem:[%s3] sm:$0x3] %vm1582, %v1581
      $region36: #{rcca_forward.6} parent=27 // pred_fallthru
        _
      %p1584 = scmp.lt.s32.totalorder %s15, 1
      %s1585 = scalar_select %p1584, %s15, 1
      %s1586 = smul.addr %s1585, 8
      %s1587 = smul.addr %s1586, 4
      %s1588 = scalar_lea.vmem %s2, %s1587
      // Predicated region
      $region37: #{rcca_forward.6} parent=27 // pred_check
        %p1589 = pneg %p80
      $region38: #{rcca_forward.6} parent=27 // pred_check_branch
        %1591 = sbr.rel (%p1589) target = $region40
      $region39: #{rcca_forward.6} parent=27 // pred_region
        _
      $region40: #{rcca_forward.6} parent=27 // pred_fallthru
        _
      // Predicated region
      $region41: #{rcca_forward.6} parent=27 // pred_check
        %p1592 = pneg %p101
      $region42: #{rcca_forward.6} parent=27 // pred_check_branch
        %1594 = sbr.rel (%p1592) target = $region44
      $region43: #{rcca_forward.6} parent=27 // pred_region
        _
      $region44: #{rcca_forward.6} parent=27 // pred_fallthru
        _
      // Predicated region
      $region45: #{rcca_forward.6} parent=27 // pred_check
        %p1595 = pneg %p101
      $region46: #{rcca_forward.6} parent=27 // pred_check_branch
        %1597 = sbr.rel (%p1595) target = $region48
      $region47: #{rcca_forward.6} parent=27 // pred_region
        _
      $region48: #{rcca_forward.6} parent=27 // pred_fallthru
        _
    $region28: #{rcca_forward.6} parent=5 // pred_fallthru
      _
    %p1598 = scmp.le.s32.totalorder 2, %s10
    // Predicated region
    $region49: #{rcca_forward.6} parent=5 // pred_check
      %p1599 = pneg %p1598
    $region50: #{rcca_forward.6} parent=5 // pred_check_branch
      %1601 = sbr.rel (%p1599) target = $region52
    $region51: #{rcca_forward.6} parent=5 // pred_region
      %s1602 = ssub.s32 %s10, 2
      // Predicated region
      $region53: #{rcca_forward.6} parent=51 // pred_check
        %p1603 = pneg %p86
      $region54: #{rcca_forward.6} parent=51 // pred_check_branch
        %1605 = sbr.rel (%p1603) target = $region56
      $region55: #{rcca_forward.6} parent=51 // pred_region
        %p1606 = scmp.lt.s32.totalorder %s16, 1
        %s1607 = scalar_select %p1606, %s16, 1
        %s1608 = smul.addr %s1607, 8
        %s1609 = smul.addr %s1608, 4
        %s1610 = scalar_lea.vmem %s2, %s1609
      $region56: #{rcca_forward.6} parent=51 // pred_fallthru
        _
    $region52: #{rcca_forward.6} parent=5 // pred_fallthru
      _
  $region6: #{rcca_forward.6} parent=0 // loop_footer
    %s14 = sadd.s32 1, %s10
  $region7: #{rcca_forward.6} parent=0 // loop_footer_branch
    %9 = sbr.rel target = $region3
  $region8: #{rcca_forward.6} parent=0 // loop_exit
    _

// kernel: rcca_forward.10
$region0: #{rcca_forward.10}
  #allocation0 [shape = 'u32[]', space=smem, size = 0x4, offset = 0x4, fixed_abs, tag = 'smem constant byte address 0x4 - core index']
  #allocation1 [shape = 'u32[144,128]{1,0:T(1,128)}', space=vmem, size = 0x12000, scoped, tag = 'internal scratch']
  %s0 = inlined_call_operand.vmem [shape: bf16[128,16], index: 0, kind: input, shape index: {}]
  %s1 = inlined_call_operand.vmem [shape: f32[2,16], index: 1, kind: input, shape index: {}]
  %s2 = inlined_call_operand.vmem [shape: f32[1,16], index: 2, kind: input, shape index: {}]
  %s3 = inlined_call_operand.vmem [shape: f32[1,16], index: 3, kind: input, shape index: {}]
  %s4 = inlined_call_operand.vmem [shape: bf16[16,5], index: 4, kind: input, shape index: {}]
  %s5 = inlined_call_operand.vmem [shape: f32[1,5], index: 5, kind: input, shape index: {}]
  %s6 = inlined_call_operand.vmem [shape: f32[128,5], index: 6, kind: output, shape index: {}]
  %s7 = sld [smem:[#allocation0]]
  $region34: #{rcca_forward.10} parent=0
    _
  %s9 = ssub.s32 1, %s7
  %s10 = scalar_select 0, %s9, %s7
  // Predicated region
  $region2: #{rcca_forward.10} parent=0 // pred_check
    _
  $region3: #{rcca_forward.10} parent=0 // pred_check_branch
    %12 = sbr.rel (0) target = $region5
  $region4: #{rcca_forward.10} parent=0 // pred_region
    _
  $region5: #{rcca_forward.10} parent=0 // pred_fallthru
    _
  // Predicated region
  $region6: #{rcca_forward.10} parent=0 // pred_check
    _
  $region7: #{rcca_forward.10} parent=0 // pred_check_branch
    %14 = sbr.rel (0) target = $region9
  $region8: #{rcca_forward.10} parent=0 // pred_region
    _
  $region9: #{rcca_forward.10} parent=0 // pred_fallthru
    _
  // Predicated region
  $region10: #{rcca_forward.10} parent=0 // pred_check
    _
  $region11: #{rcca_forward.10} parent=0 // pred_check_branch
    %16 = sbr.rel (0) target = $region13
  $region12: #{rcca_forward.10} parent=0 // pred_region
    _
  $region13: #{rcca_forward.10} parent=0 // pred_fallthru
    _
  // Predicated region
  $region14: #{rcca_forward.10} parent=0 // pred_check
    _
  $region15: #{rcca_forward.10} parent=0 // pred_check_branch
    %18 = sbr.rel (0) target = $region17
  $region16: #{rcca_forward.10} parent=0 // pred_region
    _
  $region17: #{rcca_forward.10} parent=0 // pred_fallthru
    _
  // Predicated region
  $region18: #{rcca_forward.10} parent=0 // pred_check
    _
  $region19: #{rcca_forward.10} parent=0 // pred_check_branch
    %20 = sbr.rel (0) target = $region21
  $region20: #{rcca_forward.10} parent=0 // pred_region
    _
  $region21: #{rcca_forward.10} parent=0 // pred_fallthru
    _
  // Predicated region
  $region22: #{rcca_forward.10} parent=0 // pred_check
    _
  $region23: #{rcca_forward.10} parent=0 // pred_check_branch
    %22 = sbr.rel (0) target = $region25
  $region24: #{rcca_forward.10} parent=0 // pred_region
    _
  $region25: #{rcca_forward.10} parent=0 // pred_fallthru
    _
  %v24 = vld [vmem:[%s1] sm:$0x1]
  %v25 = vmul.f32 %v24, 0.0078125
  %v26 = vld [vmem:[%s1 + $0x1] sm:$0x1]
  %v27 = vmul.f32 %v26, 0.0078125
  %v28 = vmul.f32 %v25, %v25
  %v29 = vsub.f32 %v27, %v28
  %v30 = vld [vmem:[%s2] sm:$0x1]
  %v31 = vadd.f32 %v29, 1e-05
  %v32 = vrsqrt.pop %v31
  %v33 = vmul.f32 %v30, %v32
  %v34 = vld [vmem:[%s3] sm:$0x1]
  %v35 = vmul.f32 %v25, %v33
  %v36 = vsub.f32 %v34, %v35
  %v37 = vld [vmem:[%s0] sm:$0xf]
  %v38 = vld [vmem:[%s0 + $0x4] sm:$0xf]
  %v39 = vld [vmem:[%s0 + $0x8] sm:$0xf]
  %v40 = vld [vmem:[%s0 + $0xc] sm:$0xf]
  %v41 = vld [vmem:[%s0 + $0x10] sm:$0xf]
  %v42 = vld [vmem:[%s0 + $0x14] sm:$0xf]
  %v43 = vld [vmem:[%s0 + $0x18] sm:$0xf]
  %v44 = vld [vmem:[%s0 + $0x1c] sm:$0xf]
  %v45 = vld [vmem:[%s0 + $0x20] sm:$0xf]
  %v46 = vld [vmem:[%s0 + $0x24] sm:$0xf]
  %v47 = vld [vmem:[%s0 + $0x28] sm:$0xf]
  %v48 = vld [vmem:[%s0 + $0x2c] sm:$0xf]
  %v49 = vld [vmem:[%s0 + $0x30] sm:$0xf]
  %v50 = vld [vmem:[%s0 + $0x34] sm:$0xf]
  %v51 = vld [vmem:[%s0 + $0x38] sm:$0xf]
  %v52 = vld [vmem:[%s0 + $0x3c] sm:$0xf]
  %v53 = vunpack.c.l.bf16 %v37
  %v54 = vunpack.c.l.bf16 %v38
  %v55 = vunpack.c.l.bf16 %v39
  %v56 = vunpack.c.l.bf16 %v40
  %v57 = vunpack.c.l.bf16 %v41
  %v58 = vunpack.c.l.bf16 %v42
  %v59 = vunpack.c.l.bf16 %v43
  %v60 = vunpack.c.l.bf16 %v44
  %v61 = vunpack.c.l.bf16 %v45
  %v62 = vunpack.c.l.bf16 %v46
  %v63 = vunpack.c.l.bf16 %v47
  %v64 = vunpack.c.l.bf16 %v48
  %v65 = vunpack.c.l.bf16 %v49
  %v66 = vunpack.c.l.bf16 %v50
  %v67 = vunpack.c.l.bf16 %v51
  %v68 = vunpack.c.l.bf16 %v52
  %v70 = vlaneseq
  %v71 = vshrl.u32 %v70, 7
  %v72 = vsub.s32 0, %v71
  %v73 = vrot.slane %v33, %v72
  %v75 = vmul.f32 %v53, %v73
  %v76 = vmul.f32 %v54, %v73
  %v77 = vmul.f32 %v55, %v73
  %v78 = vmul.f32 %v56, %v73
  %v79 = vmul.f32 %v57, %v73
  %v80 = vmul.f32 %v58, %v73
  %v81 = vmul.f32 %v59, %v73
  %v82 = vmul.f32 %v60, %v73
  %v83 = vmul.f32 %v61, %v73
  %v84 = vmul.f32 %v62, %v73
  %v85 = vmul.f32 %v63, %v73
  %v86 = vmul.f32 %v64, %v73
  %v87 = vmul.f32 %v65, %v73
  %v88 = vmul.f32 %v66, %v73
  %v89 = vmul.f32 %v67, %v73
  %v90 = vmul.f32 %v68, %v73
  %v92 = vlaneseq
  %v93 = vshrl.u32 %v92, 7
  %v94 = vsub.s32 0, %v93
  %v95 = vrot.slane %v36, %v94
  %v97 = vadd.f32 %v75, %v95
  %v98 = vadd.f32 %v76, %v95
  %v99 = vadd.f32 %v77, %v95
  %v100 = vadd.f32 %v78, %v95
  %v101 = vadd.f32 %v79, %v95
  %v102 = vadd.f32 %v80, %v95
  %v103 = vadd.f32 %v81, %v95
  %v104 = vadd.f32 %v82, %v95
  %v105 = vadd.f32 %v83, %v95
  %v106 = vadd.f32 %v84, %v95
  %v107 = vadd.f32 %v85, %v95
  %v108 = vadd.f32 %v86, %v95
  %v109 = vadd.f32 %v87, %v95
  %v110 = vadd.f32 %v88, %v95
  %v111 = vadd.f32 %v89, %v95
  %v112 = vadd.f32 %v90, %v95
  %v113 = vpack.c.bf16 %v98, %v97
  %v114 = vpack.c.bf16 %v100, %v99
  %v115 = vpack.c.bf16 %v102, %v101
  %v116 = vpack.c.bf16 %v104, %v103
  %v117 = vpack.c.bf16 %v106, %v105
  %v118 = vpack.c.bf16 %v108, %v107
  %v119 = vpack.c.bf16 %v110, %v109
  %v120 = vpack.c.bf16 %v112, %v111
  %v121 = vld [vmem:[%s4] sm:$0xf]
  %v122 = vld [vmem:[%s4 + $0x4] sm:$0xf]
  %v123 = vld [vmem:[%s5] sm:$0x1]
  %v125 = vlaneseq
  %v126 = vshrl.u32 %v125, 7
  %v127 = vsub.s32 0, %v126
  %v128 = vrot.slane %v123, %v127
  %v132 = vunpack.c.l.b16 %v121
  %v133 = vunpack.c.l.b16 %v122
  %v134 = vpack.c.b16 %v133, %v132
  %vm136 = vcmask 130048
  %v138 = vsel %vm136, %v113, 0
  %v141 = vsel %vm136, %v114, 0
  %v144 = vsel %vm136, %v115, 0
  %v147 = vsel %vm136, %v116, 0
  %v150 = vsel %vm136, %v117, 0
  %v153 = vsel %vm136, %v118, 0
  %v156 = vsel %vm136, %v119, 0
  %v159 = vsel %vm136, %v120, 0
  %161 = vmatprep.subr.bf16.mxu0 0
  %162 = vmatpush1.bf16.msra.mxu0 %v134
  %163 = vmatprep.subr.bf16.mxu0 0
  %164 = vmatpush1.bf16.msra.mxu0 0
  %165 = vmatprep.subr.bf16.mxu0 0
  %166 = vmatpush1.bf16.msra.mxu0 0
  %167 = vmatprep.subr.bf16.mxu0 0
  %168 = vmatpush1.bf16.msra.mxu0 0
  %169 = vmatprep.subr.bf16.mxu0 0
  %170 = vmatpush1.bf16.msra.mxu0 0
  %171 = vmatprep.subr.bf16.mxu0 0
  %172 = vmatpush1.bf16.msra.mxu0 0
  %173 = vmatprep.subr.bf16.mxu0 0
  %174 = vmatpush1.bf16.msra.mxu0 0
  %175 = vmatprep.subr.bf16.mxu0 0
  %176 = vmatpush1.bf16.msra.mxu0 0
  %177 = vmatprep.subr.bf16.mxu0 0
  %178 = vmatpush1.bf16.msra.mxu0 0
  %179 = vmatprep.subr.bf16.mxu0 0
  %180 = vmatpush1.bf16.msra.mxu0 0
  %181 = vmatprep.subr.bf16.mxu0 0
  %182 = vmatpush1.bf16.msra.mxu0 0
  %183 = vmatprep.subr.bf16.mxu0 0
  %184 = vmatpush1.bf16.msra.mxu0 0
  %185 = vmatprep.subr.bf16.mxu0 0
  %186 = vmatpush1.bf16.msra.mxu0 0
  %187 = vmatprep.subr.bf16.mxu0 0
  %188 = vmatpush1.bf16.msra.mxu0 0
  %189 = vmatprep.subr.bf16.mxu0 0
  %190 = vmatpush1.bf16.msra.mxu0 0
  %191 = vmatprep.subr.bf16.mxu0 0
  %192 = vmatpush1.bf16.msra.mxu0 0
  %193 = vmatprep.mubr.bf16.mxu0 0
  %194 = vmatmul.mubr.bf16.gmra.mrb[0].mxu0 %v138
  %v195 = vpop.f32.mrb[0].mxu0
  %v196 = vadd.f32 %v128, %v195
  %v197 = vpop.f32.mrb[0].mxu0
  %v198 = vpop.f32.mrb[0].mxu0
  %v199 = vadd.f32 %v128, %v198
  %v200 = vpop.f32.mrb[0].mxu0
  %201 = vmatprep.mubr.bf16.mxu0 0
  %202 = vmatmul.mubr.bf16.gmra.mrb[0].mxu0 %v141
  %v203 = vpop.f32.mrb[0].mxu0
  %v204 = vadd.f32 %v128, %v203
  %v205 = vpop.f32.mrb[0].mxu0
  %v206 = vpop.f32.mrb[0].mxu0
  %v207 = vadd.f32 %v128, %v206
  %v208 = vpop.f32.mrb[0].mxu0
  %209 = vmatprep.mubr.bf16.mxu0 0
  %210 = vmatmul.mubr.bf16.gmra.mrb[0].mxu0 %v144
  %v211 = vpop.f32.mrb[0].mxu0
  %v212 = vadd.f32 %v128, %v211
  %v213 = vpop.f32.mrb[0].mxu0
  %v214 = vpop.f32.mrb[0].mxu0
  %v215 = vadd.f32 %v128, %v214
  %v216 = vpop.f32.mrb[0].mxu0
  %217 = vmatprep.mubr.bf16.mxu0 0
  %218 = vmatmul.mubr.bf16.gmra.mrb[0].mxu0 %v147
  %v219 = vpop.f32.mrb[0].mxu0
  %v220 = vadd.f32 %v128, %v219
  %v221 = vpop.f32.mrb[0].mxu0
  %v222 = vpop.f32.mrb[0].mxu0
  %v223 = vadd.f32 %v128, %v222
  %v224 = vpop.f32.mrb[0].mxu0
  %225 = vmatprep.mubr.bf16.mxu0 0
  %226 = vmatmul.mubr.bf16.gmra.mrb[0].mxu0 %v150
  %v227 = vpop.f32.mrb[0].mxu0
  %v228 = vadd.f32 %v128, %v227
  %v229 = vpop.f32.mrb[0].mxu0
  %v230 = vpop.f32.mrb[0].mxu0
  %v231 = vadd.f32 %v128, %v230
  %v232 = vpop.f32.mrb[0].mxu0
  %233 = vmatprep.mubr.bf16.mxu0 0
  %234 = vmatmul.mubr.bf16.gmra.mrb[0].mxu0 %v153
  %v235 = vpop.f32.mrb[0].mxu0
  %v236 = vadd.f32 %v128, %v235
  %v237 = vpop.f32.mrb[0].mxu0
  %v238 = vpop.f32.mrb[0].mxu0
  %v239 = vadd.f32 %v128, %v238
  %v240 = vpop.f32.mrb[0].mxu0
  %241 = vmatprep.mubr.bf16.mxu0 0
  %242 = vmatmul.mubr.bf16.gmra.mrb[0].mxu0 %v156
  %v243 = vpop.f32.mrb[0].mxu0
  %v244 = vadd.f32 %v128, %v243
  %v245 = vpop.f32.mrb[0].mxu0
  %v246 = vpop.f32.mrb[0].mxu0
  %v247 = vadd.f32 %v128, %v246
  %v248 = vpop.f32.mrb[0].mxu0
  %249 = vmatprep.mubr.bf16.mxu0 0
  %250 = vmatmul.mubr.bf16.gmra.mrb[0].mxu0 %v159
  %v251 = vpop.f32.mrb[0].mxu0
  %v252 = vadd.f32 %v128, %v251
  %v253 = vpop.f32.mrb[0].mxu0
  %v254 = vpop.f32.mrb[0].mxu0
  %v255 = vadd.f32 %v128, %v254
  %v256 = vpop.f32.mrb[0].mxu0
  %257 = vdwg.mxu0
  %vm258 = vcmask 39936
  %259 = vst.msk [vmem:[%s6] sm:$0xff] %vm258, %v196
  %260 = vst.msk [vmem:[%s6 + $0x8] sm:$0xff] %vm258, %v199
  %261 = vst.msk [vmem:[%s6 + $0x10] sm:$0xff] %vm258, %v204
  %262 = vst.msk [vmem:[%s6 + $0x18] sm:$0xff] %vm258, %v207
  %263 = vst.msk [vmem:[%s6 + $0x20] sm:$0xff] %vm258, %v212
  %264 = vst.msk [vmem:[%s6 + $0x28] sm:$0xff] %vm258, %v215
  %265 = vst.msk [vmem:[%s6 + $0x30] sm:$0xff] %vm258, %v220
  %266 = vst.msk [vmem:[%s6 + $0x38] sm:$0xff] %vm258, %v223
  %267 = vst.msk [vmem:[%s6 + $0x40] sm:$0xff] %vm258, %v228
  %268 = vst.msk [vmem:[%s6 + $0x48] sm:$0xff] %vm258, %v231
  %269 = vst.msk [vmem:[%s6 + $0x50] sm:$0xff] %vm258, %v236
  %270 = vst.msk [vmem:[%s6 + $0x58] sm:$0xff] %vm258, %v239
  %271 = vst.msk [vmem:[%s6 + $0x60] sm:$0xff] %vm258, %v244
  %272 = vst.msk [vmem:[%s6 + $0x68] sm:$0xff] %vm258, %v247
  %273 = vst.msk [vmem:[%s6 + $0x70] sm:$0xff] %vm258, %v252
  %274 = vst.msk [vmem:[%s6 + $0x78] sm:$0xff] %vm258, %v255
  // Predicated region
  $region26: #{rcca_forward.10} parent=0 // pred_check
    _
  $region27: #{rcca_forward.10} parent=0 // pred_check_branch
    %276 = sbr.rel (0) target = $region29
  $region28: #{rcca_forward.10} parent=0 // pred_region
    _
  $region29: #{rcca_forward.10} parent=0 // pred_fallthru
    _
  // Predicated region
  $region30: #{rcca_forward.10} parent=0 // pred_check
    _
  $region31: #{rcca_forward.10} parent=0 // pred_check_branch
    %278 = sbr.rel (0) target = $region33
  $region32: #{rcca_forward.10} parent=0 // pred_region
    _
  $region33: #{rcca_forward.10} parent=0 // pred_fallthru
    _

// kernel: rcca_forward.11
$region0: #{rcca_forward.11}
  #allocation0 [shape = 'u32[]', space=smem, size = 0x4, offset = 0x4, fixed_abs, tag = 'smem constant byte address 0x4 - core index']
  #allocation1 [shape = 'u32[144,128]{1,0:T(1,128)}', space=vmem, size = 0x12000, scoped, tag = 'internal scratch']
  %s0 = inlined_call_operand.vmem [shape: f32[2,5,8,8], index: 0, kind: input, shape index: {}]
  %s1 = inlined_call_operand.vmem [shape: bf16[128,8], index: 1, kind: input, shape index: {}]
  %s2 = inlined_call_operand.vmem [shape: bf16[8,128], index: 2, kind: input, shape index: {}]
  %s3 = inlined_call_operand.hbm [shape: f32[2,5,128,128], index: 3, kind: output, shape index: {}]
  %s4 = sld [smem:[#allocation0]]
  $region45: #{rcca_forward.11} parent=0
    _
  %s6 = ssub.s32 1, %s4
  %s7 = scalar_select 0, %s6, %s4
  $region1: #{rcca_forward.11} parent=0
    #allocation2 [shape = 'u8[131072]{0}', space=vmem, size = 0x20000, scoped, tag = 'output window, operand 0']
    #allocation3 [shape = 's32[2]{0}', space=sflag, size = 0x8, scoped, tag = 'scoped memory for rcca_forward.11']
    %8 = vsyncpa [#allocation3], 0
    %s9 = scalar_lea.sflag [#allocation3], 1
    %10 = vsyncpa %s9, 0
    loop: start=0, step=1, limit=12
    $region2: #{rcca_forward.11} parent=1 // loop_pre_header
      _
    $region3: #{rcca_forward.11} parent=1 // loop_header
      %s12 = sphi 0, %s16
      %p13 = scmp.ge.s32.totalorder %s12, 12
      %s19 = sphi 0, %s31
      %s20 = sphi 0, %s27
      %s21 = sphi 0, %s19
      %s22 = sphi 0, %s20
      %s23 = sphi 0, %s21
      %s24 = sphi 0, %s22
      %s36 = sphi 0, %s38
      %s39 = sphi 0, %s36
      %s40 = sphi 0, %s39
      %s56 = sphi 0, %s40
      %s60 = sphi 0, %s60
      %s62 = sphi 0, %s60
      %s63 = sphi 0, %s62
      %s77 = sphi 0, %s63
      %s81 = sphi 0, %s81
      %s83 = sphi 0, %s81
      %s84 = sphi 0, %s83
      %s98 = sphi 0, %s84
      %s106 = sphi 0, %s108
      %s109 = sphi 0, %s106
      %s110 = sphi 0, %s109
      %s126 = sphi 0, %s110
    $region4: #{rcca_forward.11} parent=1 // loop_header_branch
      %15 = sbr.rel (%p13) target = $region8
    $region5: #{rcca_forward.11} parent=1 // loop_body
      %s17 = ssub.s32 %s12, 1
      %s18 = ssub.s32 %s12, 2
      %s25 = sadd.s32 1, %s20
      %p26 = scmp.ge.s32.totalorder %s25, 5
      %s27 = scalar_select %p26, 0, %s25
      %s28 = sadd.s32 1, %s19
      %s29 = scalar_select %p26, %s28, %s19
      %p30 = scmp.ge.s32.totalorder %s29, 2
      %s31 = scalar_select %p30, 0, %s29
      %s32 = ssub.s32 %s19, %s31
      %s33 = ssub.s32 %s20, %s27
      %s34 = sor.u32 %s32, %s33
      %p35 = scmp.eq.s32.totalorder %s34, 0
      %s37 = sadd.s32 %s36, 1
      %s38 = scalar_select %p35, %s36, %s37
      %p41 = pneg %p35
      %p42 = scmp.eq.s32.totalorder %s12, 9
      %p43 = por %p41, %p42
      %p44 = scmp.ne.s32.totalorder %s36, %s39
      %p45 = scmp.eq.s32.totalorder %s12, 0
      %p46 = por %p44, %p45
      %p47 = scmp.ne.s32.totalorder %s36, %s39
      %p48 = scmp.eq.s32.totalorder %s17, 9
      %p49 = por %p47, %p48
      %p50 = scmp.ne.s32.totalorder %s39, %s40
      %p51 = scmp.eq.s32.totalorder %s17, 0
      %p52 = por %p50, %p51
      %p53 = scmp.ne.s32.totalorder %s39, %s40
      %p54 = scmp.eq.s32.totalorder %s18, 9
      %p55 = por %p53, %p54
      %p57 = scmp.ne.s32.totalorder %s40, %s56
      %p58 = scmp.eq.s32.totalorder %s18, 0
      %p59 = por %p57, %p58
      %s61 = sadd.s32 %s60, 1
      %p64 = scmp.eq.s32.totalorder %s12, 9
      %p65 = scmp.ne.s32.totalorder %s60, %s62
      %p66 = scmp.eq.s32.totalorder %s12, 0
      %p67 = por %p65, %p66
      %p68 = scmp.ne.s32.totalorder %s60, %s62
      %p69 = scmp.eq.s32.totalorder %s17, 9
      %p70 = por %p68, %p69
      %p71 = scmp.ne.s32.totalorder %s62, %s63
      %p72 = scmp.eq.s32.totalorder %s17, 0
      %p73 = por %p71, %p72
      %p74 = scmp.ne.s32.totalorder %s62, %s63
      %p75 = scmp.eq.s32.totalorder %s18, 9
      %p76 = por %p74, %p75
      %p78 = scmp.ne.s32.totalorder %s63, %s77
      %p79 = scmp.eq.s32.totalorder %s18, 0
      %p80 = por %p78, %p79
      %s82 = sadd.s32 %s81, 1
      %p85 = scmp.eq.s32.totalorder %s12, 9
      %p86 = scmp.ne.s32.totalorder %s81, %s83
      %p87 = scmp.eq.s32.totalorder %s12, 0
      %p88 = por %p86, %p87
      %p89 = scmp.ne.s32.totalorder %s81, %s83
      %p90 = scmp.eq.s32.totalorder %s17, 9
      %p91 = por %p89, %p90
      %p92 = scmp.ne.s32.totalorder %s83, %s84
      %p93 = scmp.eq.s32.totalorder %s17, 0
      %p94 = por %p92, %p93
      %p95 = scmp.ne.s32.totalorder %s83, %s84
      %p96 = scmp.eq.s32.totalorder %s18, 9
      %p97 = por %p95, %p96
      %p99 = scmp.ne.s32.totalorder %s84, %s98
      %p100 = scmp.eq.s32.totalorder %s18, 0
      %p101 = por %p99, %p100
      %s102 = ssub.s32 %s19, %s31
      %s103 = ssub.s32 %s20, %s27
      %s104 = sor.u32 %s102, %s103
      %p105 = scmp.eq.s32.totalorder %s104, 0
      %s107 = sadd.s32 %s106, 1
      %s108 = scalar_select %p105, %s106, %s107
      %p111 = pneg %p105
      %p112 = scmp.eq.s32.totalorder %s12, 9
      %p113 = por %p111, %p112
      %p114 = scmp.ne.s32.totalorder %s106, %s109
      %p115 = scmp.eq.s32.totalorder %s12, 0
      %p116 = por %p114, %p115
      %p117 = scmp.ne.s32.totalorder %s106, %s109
      %p118 = scmp.eq.s32.totalorder %s17, 9
      %p119 = por %p117, %p118
      %p120 = scmp.ne.s32.totalorder %s109, %s110
      %p121 = scmp.eq.s32.totalorder %s17, 0
      %p122 = por %p120, %p121
      %p123 = scmp.ne.s32.totalorder %s109, %s110
      %p124 = scmp.eq.s32.totalorder %s18, 9
      %p125 = por %p123, %p124
      %p127 = scmp.ne.s32.totalorder %s110, %s126
      %p128 = scmp.eq.s32.totalorder %s18, 0
      %p129 = por %p127, %p128
      %p130 = scmp.le.s32.totalorder 1, %s12
      %p131 = scmp.lt.s32.totalorder %s12, 11
      %p132 = pnand %p130, %p131
      %p133 = pneg %p132
      // Predicated region
      $region9: #{rcca_forward.11} parent=5 // pred_check
        _
      $region10: #{rcca_forward.11} parent=5 // pred_check_branch
        %135 = sbr.rel (%p132) target = $region12
      $region11: #{rcca_forward.11} parent=5 // pred_region
        %s136 = ssub.s32 %s12, 1
        // Predicated region
        $region13: #{rcca_forward.11} parent=11 // pred_check
          %p137 = pneg %p73
        $region14: #{rcca_forward.11} parent=11 // pred_check_branch
          %139 = sbr.rel (%p137) target = $region16
        $region15: #{rcca_forward.11} parent=11 // pred_region
          _
        $region16: #{rcca_forward.11} parent=11 // pred_fallthru
          _
        // Predicated region
        $region17: #{rcca_forward.11} parent=11 // pred_check
          %p140 = pneg %p94
        $region18: #{rcca_forward.11} parent=11 // pred_check_branch
          %142 = sbr.rel (%p140) target = $region20
        $region19: #{rcca_forward.11} parent=11 // pred_region
          _
        $region20: #{rcca_forward.11} parent=11 // pred_fallthru
          _
      $region12: #{rcca_forward.11} parent=5 // pred_fallthru
        _
      %p143 = scmp.lt.s32.totalorder %s12, 10
      // Predicated region
      $region21: #{rcca_forward.11} parent=5 // pred_check
        %p144 = pneg %p143
      $region22: #{rcca_forward.11} parent=5 // pred_check_branch
        %146 = sbr.rel (%p144) target = $region24
      $region23: #{rcca_forward.11} parent=5 // pred_region
        // Predicated region
        $region25: #{rcca_forward.11} parent=23 // pred_check
          %p147 = pneg %p46
        $region26: #{rcca_forward.11} parent=23 // pred_check_branch
          %149 = sbr.rel (%p147) target = $region28
        $region27: #{rcca_forward.11} parent=23 // pred_region
          %p150 = scmp.lt.s32.totalorder %s19, 1
          %s151 = scalar_select %p150, %s19, 1
          %p152 = scmp.lt.s32.totalorder %s20, 4
          %s153 = scalar_select %p152, %s20, 4
          %s154 = smul.addr %s151, 5
          %s155 = sadd.s32 %s153, %s154
          %s156 = smul.addr %s155, 8
          %s157 = scalar_lea.vmem %s0, %s156
        $region28: #{rcca_forward.11} parent=23 // pred_fallthru
          _
      $region24: #{rcca_forward.11} parent=5 // pred_fallthru
        _
      %p158 = scmp.le.s32.totalorder 1, %s12
      %p159 = scmp.lt.s32.totalorder %s12, 11
      %p160 = pnand %p158, %p159
      %p161 = pneg %p160
      // Predicated region
      $region29: #{rcca_forward.11} parent=5 // pred_check
        _
      $region30: #{rcca_forward.11} parent=5 // pred_check_branch
        %163 = sbr.rel (%p160) target = $region32
      $region31: #{rcca_forward.11} parent=5 // pred_region
        %s164 = ssub.s32 %s12, 1
        %p165 = scmp.lt.s32.totalorder %s21, 1
        %s166 = scalar_select %p165, %s21, 1
        %p167 = scmp.lt.s32.totalorder %s22, 4
        %s168 = scalar_select %p167, %s22, 4
        %s169 = smul.addr %s166, 5
        %s170 = sadd.s32 %s168, %s169
        %s171 = smul.addr %s170, 8
        %s172 = scalar_lea.vmem %s0, %s171
        %p173 = pneg %p52
        %p174 = pneg %p49
        %p175 = pneg %p73
        %p176 = pneg %p70
        %p177 = pneg %p94
        %p178 = pneg %p91
        %p179 = pneg %p122
        %p180 = pneg %p119
        %s181 = sand.u32 %s109, 1
        %s182 = scalar_lea.sflag [#allocation3], %s181
        %s183 = sand.u32 %s109, 1
        %s184 = smul.addr %s183, 128
        %s185 = scalar_lea.vmem [#allocation2], %s184
        %p186 = scmp.lt.s32.totalorder %s21, 1
        %s187 = scalar_select %p186, %s21, 1
        %p188 = scmp.lt.s32.totalorder %s22, 4
        %s189 = scalar_select %p188, %s22, 4
        %s190 = smul.addr %s187, 5
        %s191 = sadd.s32 %s189, %s190
        %s192 = smul.addr %s191, 8
        %s193 = scalar_lea.vmem %s0, %s192
        %v195 = vld [vmem:[%s193] sm:$0xff]
        %v196 = vpack.c.bf16 %v195, %v195
        %v197 = vld [vmem:[%s1] sm:$0xf]
        %v198 = vld [vmem:[%s1 + $0x4] sm:$0xf]
        %v199 = vld [vmem:[%s1 + $0x8] sm:$0xf]
        %v200 = vld [vmem:[%s1 + $0xc] sm:$0xf]
        %v201 = vld [vmem:[%s1 + $0x10] sm:$0xf]
        %v202 = vld [vmem:[%s1 + $0x14] sm:$0xf]
        %v203 = vld [vmem:[%s1 + $0x18] sm:$0xf]
        %v204 = vld [vmem:[%s1 + $0x1c] sm:$0xf]
        %v205 = vld [vmem:[%s1 + $0x20] sm:$0xf]
        %v206 = vld [vmem:[%s1 + $0x24] sm:$0xf]
        %v207 = vld [vmem:[%s1 + $0x28] sm:$0xf]
        %v208 = vld [vmem:[%s1 + $0x2c] sm:$0xf]
        %v209 = vld [vmem:[%s1 + $0x30] sm:$0xf]
        %v210 = vld [vmem:[%s1 + $0x34] sm:$0xf]
        %v211 = vld [vmem:[%s1 + $0x38] sm:$0xf]
        %v212 = vld [vmem:[%s1 + $0x3c] sm:$0xf]
        %v229 = vunpack.c.l.b16 %v197
        %v230 = vunpack.c.l.b16 %v198
        %v231 = vunpack.c.l.b16 %v199
        %v232 = vunpack.c.l.b16 %v200
        %v233 = vunpack.c.l.b16 %v201
        %v234 = vunpack.c.l.b16 %v202
        %v235 = vunpack.c.l.b16 %v203
        %v236 = vunpack.c.l.b16 %v204
        %v237 = vunpack.c.l.b16 %v205
        %v238 = vunpack.c.l.b16 %v206
        %v239 = vunpack.c.l.b16 %v207
        %v240 = vunpack.c.l.b16 %v208
        %v241 = vunpack.c.l.b16 %v209
        %v242 = vunpack.c.l.b16 %v210
        %v243 = vunpack.c.l.b16 %v211
        %v244 = vunpack.c.l.b16 %v212
        %v245 = vpack.c.b16 %v230, %v229
        %v246 = vpack.c.b16 %v232, %v231
        %v247 = vpack.c.b16 %v234, %v233
        %v248 = vpack.c.b16 %v236, %v235
        %v249 = vpack.c.b16 %v238, %v237
        %v250 = vpack.c.b16 %v240, %v239
        %v251 = vpack.c.b16 %v242, %v241
        %v252 = vpack.c.b16 %v244, %v243
        %vm253 = vcmask 64512
        %v255 = vsel %vm253, %v245, 0
        %v258 = vsel %vm253, %v246, 0
        %v261 = vsel %vm253, %v247, 0
        %v264 = vsel %vm253, %v248, 0
        %v267 = vsel %vm253, %v249, 0
        %v270 = vsel %vm253, %v250, 0
        %v273 = vsel %vm253, %v251, 0
        %v276 = vsel %vm253, %v252, 0
        %vm278 = vcmask 1043456
        %v280 = vsel %vm278, %v196, 0
        %282 = vmatprep.subr.bf16.mxu0 0
        %283 = vmatpush1.bf16.msra.mxu0 %v280
        %284 = vmatprep.subr.bf16.mxu0 0
        %285 = vmatpush1.bf16.msra.mxu0 0
        %286 = vmatprep.subr.bf16.mxu0 0
        %287 = vmatpush1.bf16.msra.mxu0 0
        %288 = vmatprep.subr.bf16.mxu0 0
        %289 = vmatpush1.bf16.msra.mxu0 0
        %290 = vmatprep.subr.bf16.mxu0 0
        %291 = vmatpush1.bf16.msra.mxu0 0
        %292 = vmatprep.subr.bf16.mxu0 0
        %293 = vmatpush1.bf16.msra.mxu0 0
        %294 = vmatprep.subr.bf16.mxu0 0
        %295 = vmatpush1.bf16.msra.mxu0 0
        %296 = vmatprep.subr.bf16.mxu0 0
        %297 = vmatpush1.bf16.msra.mxu0 0
        %298 = vmatprep.subr.bf16.mxu0 0
        %299 = vmatpush1.bf16.msra.mxu0 0
        %300 = vmatprep.subr.bf16.mxu0 0
        %301 = vmatpush1.bf16.msra.mxu0 0
        %302 = vmatprep.subr.bf16.mxu0 0
        %303 = vmatpush1.bf16.msra.mxu0 0
        %304 = vmatprep.subr.bf16.mxu0 0
        %305 = vmatpush1.bf16.msra.mxu0 0
        %306 = vmatprep.subr.bf16.mxu0 0
        %307 = vmatpush1.bf16.msra.mxu0 0
        %308 = vmatprep.subr.bf16.mxu0 0
        %309 = vmatpush1.bf16.msra.mxu0 0
        %310 = vmatprep.subr.bf16.mxu0 0
        %311 = vmatpush1.bf16.msra.mxu0 0
        %312 = vmatprep.subr.bf16.mxu0 0
        %313 = vmatpush1.bf16.msra.mxu0 0
        %314 = vmatprep.mubr.bf16.mxu0 0
        %315 = vmatmul.mubr.bf16.gmra.mrb[0].mxu0 %v255
        %v316 = vpop.f32.mrb[0].mxu0
        %v317 = vadd.f32 0.0, %v316
        %v318 = vpop.f32.mrb[0].mxu0
        %v319 = vpop.f32.mrb[0].mxu0
        %v320 = vadd.f32 0.0, %v319
        %v321 = vpop.f32.mrb[0].mxu0
        %322 = vmatprep.mubr.bf16.mxu0 0
        %323 = vmatmul.mubr.bf16.gmra.mrb[0].mxu0 %v258
        %v324 = vpop.f32.mrb[0].mxu0
        %v325 = vadd.f32 0.0, %v324
        %v326 = vpop.f32.mrb[0].mxu0
        %v327 = vpop.f32.mrb[0].mxu0
        %v328 = vadd.f32 0.0, %v327
        %v329 = vpop.f32.mrb[0].mxu0
        %330 = vmatprep.mubr.bf16.mxu0 0
        %331 = vmatmul.mubr.bf16.gmra.mrb[0].mxu0 %v261
        %v332 = vpop.f32.mrb[0].mxu0
        %v333 = vadd.f32 0.0, %v332
        %v334 = vpop.f32.mrb[0].mxu0
        %v335 = vpop.f32.mrb[0].mxu0
        %v336 = vadd.f32 0.0, %v335
        %v337 = vpop.f32.mrb[0].mxu0
        %338 = vmatprep.mubr.bf16.mxu0 0
        %339 = vmatmul.mubr.bf16.gmra.mrb[0].mxu0 %v264
        %v340 = vpop.f32.mrb[0].mxu0
        %v341 = vadd.f32 0.0, %v340
        %v342 = vpop.f32.mrb[0].mxu0
        %v343 = vpop.f32.mrb[0].mxu0
        %v344 = vadd.f32 0.0, %v343
        %v345 = vpop.f32.mrb[0].mxu0
        %346 = vmatprep.mubr.bf16.mxu0 0
        %347 = vmatmul.mubr.bf16.gmra.mrb[0].mxu0 %v267
        %v348 = vpop.f32.mrb[0].mxu0
        %v349 = vadd.f32 0.0, %v348
        %v350 = vpop.f32.mrb[0].mxu0
        %v351 = vpop.f32.mrb[0].mxu0
        %v352 = vadd.f32 0.0, %v351
        %v353 = vpop.f32.mrb[0].mxu0
        %354 = vmatprep.mubr.bf16.mxu0 0
        %355 = vmatmul.mubr.bf16.gmra.mrb[0].mxu0 %v270
        %v356 = vpop.f32.mrb[0].mxu0
        %v357 = vadd.f32 0.0, %v356
        %v358 = vpop.f32.mrb[0].mxu0
        %v359 = vpop.f32.mrb[0].mxu0
        %v360 = vadd.f32 0.0, %v359
        %v361 = vpop.f32.mrb[0].mxu0
        %362 = vmatprep.mubr.bf16.mxu0 0
        %363 = vmatmul.mubr.bf16.gmra.mrb[0].mxu0 %v273
        %v364 = vpop.f32.mrb[0].mxu0
        %v365 = vadd.f32 0.0, %v364
        %v366 = vpop.f32.mrb[0].mxu0
        %v367 = vpop.f32.mrb[0].mxu0
        %v368 = vadd.f32 0.0, %v367
        %v369 = vpop.f32.mrb[0].mxu0
        %370 = vmatprep.mubr.bf16.mxu0 0
        %371 = vmatmul.mubr.bf16.gmra.mrb[0].mxu0 %v276
        %v372 = vpop.f32.mrb[0].mxu0
        %v373 = vadd.f32 0.0, %v372
        %v374 = vpop.f32.mrb[0].mxu0
        %v375 = vpop.f32.mrb[0].mxu0
        %v376 = vadd.f32 0.0, %v375
        %v377 = vpop.f32.mrb[0].mxu0
        %378 = vdwg.mxu0
        %v379 = vpack.c.bf16 %v320, %v317
        %v380 = vpack.c.bf16 %v328, %v325
        %v381 = vpack.c.bf16 %v336, %v333
        %v382 = vpack.c.bf16 %v344, %v341
        %v383 = vpack.c.bf16 %v352, %v349
        %v384 = vpack.c.bf16 %v360, %v357
        %v385 = vpack.c.bf16 %v368, %v365
        %v386 = vpack.c.bf16 %v376, %v373
        %v387 = vld [vmem:[%s2] sm:$0xf]
        %v389 = vsel %vm253, %v379, 0
        %v392 = vsel %vm253, %v380, 0
        %v395 = vsel %vm253, %v381, 0
        %v398 = vsel %vm253, %v382, 0
        %v401 = vsel %vm253, %v383, 0
        %v404 = vsel %vm253, %v384, 0
        %v407 = vsel %vm253, %v385, 0
        %v410 = vsel %vm253, %v386, 0
        %v413 = vsel %vm278, %v387, 0
        %415 = vmatprep.subr.bf16.mxu0 0
        %416 = vmatpush1.bf16.msra.mxu0 %v413
        %417 = vmatprep.subr.bf16.mxu0 0
        %418 = vmatpush1.bf16.msra.mxu0 0
        %419 = vmatprep.subr.bf16.mxu0 0
        %420 = vmatpush1.bf16.msra.mxu0 0
        %421 = vmatprep.subr.bf16.mxu0 0
        %422 = vmatpush1.bf16.msra.mxu0 0
        %423 = vmatprep.subr.bf16.mxu0 0
        %424 = vmatpush1.bf16.msra.mxu0 0
        %425 = vmatprep.subr.bf16.mxu0 0
        %426 = vmatpush1.bf16.msra.mxu0 0
        %427 = vmatprep.subr.bf16.mxu0 0
        %428 = vmatpush1.bf16.msra.mxu0 0
        %429 = vmatprep.subr.bf16.mxu0 0
        %430 = vmatpush1.bf16.msra.mxu0 0
        %431 = vmatprep.subr.bf16.mxu0 0
        %432 = vmatpush1.bf16.msra.mxu0 0
        %433 = vmatprep.subr.bf16.mxu0 0
        %434 = vmatpush1.bf16.msra.mxu0 0
        %435 = vmatprep.subr.bf16.mxu0 0
        %436 = vmatpush1.bf16.msra.mxu0 0
        %437 = vmatprep.subr.bf16.mxu0 0
        %438 = vmatpush1.bf16.msra.mxu0 0
        %439 = vmatprep.subr.bf16.mxu0 0
        %440 = vmatpush1.bf16.msra.mxu0 0
        %441 = vmatprep.subr.bf16.mxu0 0
        %442 = vmatpush1.bf16.msra.mxu0 0
        %443 = vmatprep.subr.bf16.mxu0 0
        %444 = vmatpush1.bf16.msra.mxu0 0
        %445 = vmatprep.subr.bf16.mxu0 0
        %446 = vmatpush1.bf16.msra.mxu0 0
        %447 = vmatprep.mubr.bf16.mxu0 0
        %448 = vmatmul.mubr.bf16.gmra.mrb[0].mxu0 %v389
        %v449 = vpop.f32.mrb[0].mxu0
        %v450 = vadd.f32 0.0, %v449
        %v451 = vpop.f32.mrb[0].mxu0
        %v452 = vpop.f32.mrb[0].mxu0
        %v453 = vadd.f32 0.0, %v452
        %v454 = vpop.f32.mrb[0].mxu0
        %455 = vmatprep.mubr.bf16.mxu0 0
        %456 = vmatmul.mubr.bf16.gmra.mrb[0].mxu0 %v392
        %v457 = vpop.f32.mrb[0].mxu0
        %v458 = vadd.f32 0.0, %v457
        %v459 = vpop.f32.mrb[0].mxu0
        %v460 = vpop.f32.mrb[0].mxu0
        %v461 = vadd.f32 0.0, %v460
        %v462 = vpop.f32.mrb[0].mxu0
        %463 = vmatprep.mubr.bf16.mxu0 0
        %464 = vmatmul.mubr.bf16.gmra.mrb[0].mxu0 %v395
        %v465 = vpop.f32.mrb[0].mxu0
        %v466 = vadd.f32 0.0, %v465
        %v467 = vpop.f32.mrb[0].mxu0
        %v468 = vpop.f32.mrb[0].mxu0
        %v469 = vadd.f32 0.0, %v468
        %v470 = vpop.f32.mrb[0].mxu0
        %471 = vmatprep.mubr.bf16.mxu0 0
        %472 = vmatmul.mubr.bf16.gmra.mrb[0].mxu0 %v398
        %v473 = vpop.f32.mrb[0].mxu0
        %v474 = vadd.f32 0.0, %v473
        %v475 = vpop.f32.mrb[0].mxu0
        %v476 = vpop.f32.mrb[0].mxu0
        %v477 = vadd.f32 0.0, %v476
        %v478 = vpop.f32.mrb[0].mxu0
        %479 = vmatprep.mubr.bf16.mxu0 0
        %480 = vmatmul.mubr.bf16.gmra.mrb[0].mxu0 %v401
        %v481 = vpop.f32.mrb[0].mxu0
        %v482 = vadd.f32 0.0, %v481
        %v483 = vpop.f32.mrb[0].mxu0
        %v484 = vpop.f32.mrb[0].mxu0
        %v485 = vadd.f32 0.0, %v484
        %v486 = vpop.f32.mrb[0].mxu0
        %487 = vmatprep.mubr.bf16.mxu0 0
        %488 = vmatmul.mubr.bf16.gmra.mrb[0].mxu0 %v404
        %v489 = vpop.f32.mrb[0].mxu0
        %v490 = vadd.f32 0.0, %v489
        %v491 = vpop.f32.mrb[0].mxu0
        %v492 = vpop.f32.mrb[0].mxu0
        %v493 = vadd.f32 0.0, %v492
        %v494 = vpop.f32.mrb[0].mxu0
        %495 = vmatprep.mubr.bf16.mxu0 0
        %496 = vmatmul.mubr.bf16.gmra.mrb[0].mxu0 %v407
        %v497 = vpop.f32.mrb[0].mxu0
        %v498 = vadd.f32 0.0, %v497
        %v499 = vpop.f32.mrb[0].mxu0
        %v500 = vpop.f32.mrb[0].mxu0
        %v501 = vadd.f32 0.0, %v500
        %v502 = vpop.f32.mrb[0].mxu0
        %503 = vmatprep.mubr.bf16.mxu0 0
        %504 = vmatmul.mubr.bf16.gmra.mrb[0].mxu0 %v410
        %v505 = vpop.f32.mrb[0].mxu0
        %v506 = vadd.f32 0.0, %v505
        %v507 = vpop.f32.mrb[0].mxu0
        %v508 = vpop.f32.mrb[0].mxu0
        %v509 = vadd.f32 0.0, %v508
        %v510 = vpop.f32.mrb[0].mxu0
        %511 = vdwg.mxu0
        %512 = vst [vmem:[%s185] sm:$0xff] %v450
        %513 = vst [vmem:[%s185 + $0x8] sm:$0xff] %v453
        %514 = vst [vmem:[%s185 + $0x10] sm:$0xff] %v458
        %515 = vst [vmem:[%s185 + $0x18] sm:$0xff] %v461
        %516 = vst [vmem:[%s185 + $0x20] sm:$0xff] %v466
        %517 = vst [vmem:[%s185 + $0x28] sm:$0xff] %v469
        %518 = vst [vmem:[%s185 + $0x30] sm:$0xff] %v474
        %519 = vst [vmem:[%s185 + $0x38] sm:$0xff] %v477
        %520 = vst [vmem:[%s185 + $0x40] sm:$0xff] %v482
        %521 = vst [vmem:[%s185 + $0x48] sm:$0xff] %v485
        %522 = vst [vmem:[%s185 + $0x50] sm:$0xff] %v490
        %523 = vst [vmem:[%s185 + $0x58] sm:$0xff] %v493
        %524 = vst [vmem:[%s185 + $0x60] sm:$0xff] %v498
        %525 = vst [vmem:[%s185 + $0x68] sm:$0xff] %v501
        %526 = vst [vmem:[%s185 + $0x70] sm:$0xff] %v506
        %527 = vst [vmem:[%s185 + $0x78] sm:$0xff] %v509
        %s528 = sand.u32 %s109, 1
        %s529 = scalar_lea.sflag [#allocation3], %s528
        %s530 = sand.u32 %s109, 1
        %s531 = smul.addr %s530, 128
        %s532 = scalar_lea.vmem [#allocation2], %s531
        // Predicated region
        $region33: #{rcca_forward.11} parent=31 // pred_check
          %p533 = pneg %p119
        $region34: #{rcca_forward.11} parent=31 // pred_check_branch
          %535 = sbr.rel (%p533) target = $region36
        $region35: #{rcca_forward.11} parent=31 // pred_region
          %s537 = ssub.s32 2048, 2048
          %538 = vsyncadd %s529, %s537
          %s539 = smul.addr %s22, 16
          %s540 = smul.addr %s21, 80
          %s541 = sadd.s32 %s539, %s540
          %s542 = smul.addr %s541, 128
          %s543 = scalar_lea.hbm %s3, %s542
          %s544 = sshll.u32 %s532, 4
          %s545 = int_to_ptr.vmem [resolvable:$true] %s544
          %550 = dma.vmem_to_hbm [thread:$0]  %s545, 2048, %s543, %s529, 128, 128, 8
        $region36: #{rcca_forward.11} parent=31 // pred_fallthru
          _
      $region32: #{rcca_forward.11} parent=5 // pred_fallthru
        _
      %p551 = scmp.le.s32.totalorder 2, %s12
      // Predicated region
      $region37: #{rcca_forward.11} parent=5 // pred_check
        %p552 = pneg %p551
      $region38: #{rcca_forward.11} parent=5 // pred_check_branch
        %554 = sbr.rel (%p552) target = $region40
      $region39: #{rcca_forward.11} parent=5 // pred_region
        %s555 = ssub.s32 %s12, 2
        // Predicated region
        $region41: #{rcca_forward.11} parent=39 // pred_check
          %p556 = pneg %p125
        $region42: #{rcca_forward.11} parent=39 // pred_check_branch
          %558 = sbr.rel (%p556) target = $region44
        $region43: #{rcca_forward.11} parent=39 // pred_region
          %s559 = sand.u32 %s110, 1
          %s560 = scalar_lea.sflag [#allocation3], %s559
          %s561 = sand.u32 %s110, 1
          %s562 = smul.addr %s561, 128
          %s563 = scalar_lea.vmem [#allocation2], %s562
          %564 = dma.done %s560, 2048
        $region44: #{rcca_forward.11} parent=39 // pred_fallthru
          _
      $region40: #{rcca_forward.11} parent=5 // pred_fallthru
        _
    $region6: #{rcca_forward.11} parent=1 // loop_footer
      %s16 = sadd.s32 1, %s12
    $region7: #{rcca_forward.11} parent=1 // loop_footer_branch
      %11 = sbr.rel target = $region3
    $region8: #{rcca_forward.11} parent=1 // loop_exit
      _
    %565 = vsyncpa [#allocation3], 1
    %s566 = scalar_lea.sflag [#allocation3], 1
    %567 = vsyncpa %s566, 1

// kernel: rcca_forward.9
$region0: #{rcca_forward.9}
  #allocation0 [shape = 'u32[]', space=smem, size = 0x4, offset = 0x4, fixed_abs, tag = 'smem constant byte address 0x4 - core index']
  #allocation1 [shape = 'u32[144,128]{1,0:T(1,128)}', space=vmem, size = 0x12000, scoped, tag = 'internal scratch']
  #allocation2 [shape = 'f32[2,16]{1,0:T(2,128)}', space=vmem, size = 0x400, scoped, tag = 'scratch operand']
  %s0 = inlined_call_operand.vmem [shape: bf16[2,10,10,80], index: 0, kind: input, shape index: {}]
  %s1 = inlined_call_operand.vmem [shape: bf16[720,16], index: 1, kind: input, shape index: {}]
  %s2 = inlined_call_operand.vmem [shape: bf16[2,8,8,16], index: 2, kind: output, shape index: {0}]
  %s3 = inlined_call_operand.vmem [shape: f32[2,16], index: 3, kind: output, shape index: {1}]
  %4 = xla_tuple %s2, %s3
  %s5 = sld [smem:[#allocation0]]
  $region57: #{rcca_forward.9} parent=0
    _
  %s7 = ssub.s32 1, %s5
  %s8 = scalar_select 0, %s7, %s5
  loop: start=0, step=1, limit=4
  $region2: #{rcca_forward.9} parent=0 // loop_pre_header
    _
  $region3: #{rcca_forward.9} parent=0 // loop_header
    %s10 = sphi 0, %s14
    %p11 = scmp.ge.s32.totalorder %s10, 4
    %s20 = sphi 0, %s22
    %s23 = sphi 0, %s20
    %s24 = sphi 0, %s23
    %s40 = sphi 0, %s24
    %s44 = sphi 0, %s44
    %s46 = sphi 0, %s44
    %s47 = sphi 0, %s46
    %s61 = sphi 0, %s47
    %s67 = sphi 0, %s69
    %s70 = sphi 0, %s67
    %s71 = sphi 0, %s70
    %s87 = sphi 0, %s71
    %s91 = sphi 0, %s91
    %s93 = sphi 0, %s91
    %s94 = sphi 0, %s93
    %s108 = sphi 0, %s94
  $region4: #{rcca_forward.9} parent=0 // loop_header_branch
    %13 = sbr.rel (%p11) target = $region8
  $region5: #{rcca_forward.9} parent=0 // loop_body
    %s15 = ssub.s32 %s10, 1
    %s16 = ssub.s32 %s10, 2
    %s17 = sadd.s32 %s10, 1
    %s18 = ssub.s32 %s10, %s17
    %p19 = scmp.eq.s32.totalorder %s18, 0
    %s21 = sadd.s32 %s20, 1
    %s22 = scalar_select %p19, %s20, %s21
    %p25 = pneg %p19
    %p26 = scmp.eq.s32.totalorder %s10, 1
    %p27 = por %p25, %p26
    %p28 = scmp.ne.s32.totalorder %s20, %s23
    %p29 = scmp.eq.s32.totalorder %s10, 0
    %p30 = por %p28, %p29
    %p31 = scmp.ne.s32.totalorder %s20, %s23
    %p32 = scmp.eq.s32.totalorder %s15, 1
    %p33 = por %p31, %p32
    %p34 = scmp.ne.s32.totalorder %s23, %s24
    %p35 = scmp.eq.s32.totalorder %s15, 0
    %p36 = por %p34, %p35
    %p37 = scmp.ne.s32.totalorder %s23, %s24
    %p38 = scmp.eq.s32.totalorder %s16, 1
    %p39 = por %p37, %p38
    %p41 = scmp.ne.s32.totalorder %s24, %s40
    %p42 = scmp.eq.s32.totalorder %s16, 0
    %p43 = por %p41, %p42
    %s45 = sadd.s32 %s44, 1
    %p48 = scmp.eq.s32.totalorder %s10, 1
    %p49 = scmp.ne.s32.totalorder %s44, %s46
    %p50 = scmp.eq.s32.totalorder %s10, 0
    %p51 = por %p49, %p50
    %p52 = scmp.ne.s32.totalorder %s44, %s46
    %p53 = scmp.eq.s32.totalorder %s15, 1
    %p54 = por %p52, %p53
    %p55 = scmp.ne.s32.totalorder %s46, %s47
    %p56 = scmp.eq.s32.totalorder %s15, 0
    %p57 = por %p55, %p56
    %p58 = scmp.ne.s32.totalorder %s46, %s47
    %p59 = scmp.eq.s32.totalorder %s16, 1
    %p60 = por %p58, %p59
    %p62 = scmp.ne.s32.totalorder %s47, %s61
    %p63 = scmp.eq.s32.totalorder %s16, 0
    %p64 = por %p62, %p63
    %s65 = ssub.s32 %s10, %s17
    %p66 = scmp.eq.s32.totalorder %s65, 0
    %s68 = sadd.s32 %s67, 1
    %s69 = scalar_select %p66, %s67, %s68
    %p72 = pneg %p66
    %p73 = scmp.eq.s32.totalorder %s10, 1
    %p74 = por %p72, %p73
    %p75 = scmp.ne.s32.totalorder %s67, %s70
    %p76 = scmp.eq.s32.totalorder %s10, 0
    %p77 = por %p75, %p76
    %p78 = scmp.ne.s32.totalorder %s67, %s70
    %p79 = scmp.eq.s32.totalorder %s15, 1
    %p80 = por %p78, %p79
    %p81 = scmp.ne.s32.totalorder %s70, %s71
    %p82 = scmp.eq.s32.totalorder %s15, 0
    %p83 = por %p81, %p82
    %p84 = scmp.ne.s32.totalorder %s70, %s71
    %p85 = scmp.eq.s32.totalorder %s16, 1
    %p86 = por %p84, %p85
    %p88 = scmp.ne.s32.totalorder %s71, %s87
    %p89 = scmp.eq.s32.totalorder %s16, 0
    %p90 = por %p88, %p89
    %s92 = sadd.s32 %s91, 1
    %p95 = scmp.eq.s32.totalorder %s10, 1
    %p96 = scmp.ne.s32.totalorder %s91, %s93
    %p97 = scmp.eq.s32.totalorder %s10, 0
    %p98 = por %p96, %p97
    %p99 = scmp.ne.s32.totalorder %s91, %s93
    %p100 = scmp.eq.s32.totalorder %s15, 1
    %p101 = por %p99, %p100
    %p102 = scmp.ne.s32.totalorder %s93, %s94
    %p103 = scmp.eq.s32.totalorder %s15, 0
    %p104 = por %p102, %p103
    %p105 = scmp.ne.s32.totalorder %s93, %s94
    %p106 = scmp.eq.s32.totalorder %s16, 1
    %p107 = por %p105, %p106
    %p109 = scmp.ne.s32.totalorder %s94, %s108
    %p110 = scmp.eq.s32.totalorder %s16, 0
    %p111 = por %p109, %p110
    %p112 = scmp.le.s32.totalorder 1, %s10
    %p113 = scmp.lt.s32.totalorder %s10, 3
    %p114 = pnand %p112, %p113
    %p115 = pneg %p114
    // Predicated region
    $region9: #{rcca_forward.9} parent=5 // pred_check
      _
    $region10: #{rcca_forward.9} parent=5 // pred_check_branch
      %117 = sbr.rel (%p114) target = $region12
    $region11: #{rcca_forward.9} parent=5 // pred_region
      %s118 = ssub.s32 %s10, 1
      // Predicated region
      $region13: #{rcca_forward.9} parent=11 // pred_check
        %p119 = pneg %p57
      $region14: #{rcca_forward.9} parent=11 // pred_check_branch
        %121 = sbr.rel (%p119) target = $region16
      $region15: #{rcca_forward.9} parent=11 // pred_region
        _
      $region16: #{rcca_forward.9} parent=11 // pred_fallthru
        _
    $region12: #{rcca_forward.9} parent=5 // pred_fallthru
      _
    %p122 = scmp.lt.s32.totalorder %s10, 2
    // Predicated region
    $region17: #{rcca_forward.9} parent=5 // pred_check
      %p123 = pneg %p122
    $region18: #{rcca_forward.9} parent=5 // pred_check_branch
      %125 = sbr.rel (%p123) target = $region20
    $region19: #{rcca_forward.9} parent=5 // pred_region
      // Predicated region
      $region21: #{rcca_forward.9} parent=19 // pred_check
        %p126 = pneg %p30
      $region22: #{rcca_forward.9} parent=19 // pred_check_branch
        %128 = sbr.rel (%p126) target = $region24
      $region23: #{rcca_forward.9} parent=19 // pred_region
        %p129 = scmp.lt.s32.totalorder %s10, 1
        %s130 = scalar_select %p129, %s10, 1
        %s131 = smul.addr %s130, 20
        %s132 = smul.addr %s131, 4
        %s133 = scalar_lea.vmem %s0, %s132
      $region24: #{rcca_forward.9} parent=19 // pred_fallthru
        _
    $region20: #{rcca_forward.9} parent=5 // pred_fallthru
      _
    %p134 = scmp.le.s32.totalorder 1, %s10
    %p135 = scmp.lt.s32.totalorder %s10, 3
    %p136 = pnand %p134, %p135
    %p137 = pneg %p136
    // Predicated region
    $region25: #{rcca_forward.9} parent=5 // pred_check
      _
    $region26: #{rcca_forward.9} parent=5 // pred_check_branch
      %139 = sbr.rel (%p136) target = $region28
    $region27: #{rcca_forward.9} parent=5 // pred_region
      %s140 = ssub.s32 %s10, 1
      %p141 = scmp.lt.s32.totalorder %s15, 1
      %s142 = scalar_select %p141, %s15, 1
      %s143 = smul.addr %s142, 20
      %s144 = smul.addr %s143, 4
      %s145 = scalar_lea.vmem %s0, %s144
      %p146 = pneg %p36
      %p147 = pneg %p33
      %p148 = pneg %p57
      %p149 = pneg %p54
      %p150 = pneg %p83
      %p151 = pneg %p80
      %p152 = scmp.lt.s32.totalorder %s15, 1
      %s153 = scalar_select %p152, %s15, 1
      %s154 = smul.addr %s153, 8
      %s155 = smul.addr %s154, 4
      %s156 = scalar_lea.vmem %s2, %s155
      %p157 = pneg %p104
      %p158 = pneg %p101
      %p159 = scmp.lt.s32.totalorder %s15, 1
      %s160 = scalar_select %p159, %s15, 1
      %s161 = smul.addr %s160, 20
      %s162 = smul.addr %s161, 4
      %s163 = scalar_lea.vmem %s0, %s162
      %p164 = scmp.lt.s32.totalorder %s15, 1
      %s165 = scalar_select %p164, %s15, 1
      %s166 = smul.addr %s165, 8
      %s167 = smul.addr %s166, 4
      %s168 = scalar_lea.vmem %s2, %s167
      %v170 = vld [vmem:[%s163] sm:$0xf]
      %v171 = vld [vmem:[%s163 + $0x4] sm:$0x1]
      %v172 = vld [vmem:[%s163 + $0x8] sm:$0xf]
      %v173 = vld [vmem:[%s163 + $0xc] sm:$0x1]
      %v174 = vld [vmem:[%s163 + $0x10] sm:$0xf]
      %v175 = vld [vmem:[%s163 + $0x14] sm:$0x1]
      %v176 = vld [vmem:[%s163 + $0x18] sm:$0xf]
      %v177 = vld [vmem:[%s163 + $0x1c] sm:$0x1]
      %v178 = vld [vmem:[%s163 + $0x20] sm:$0xf]
      %v179 = vld [vmem:[%s163 + $0x24] sm:$0x1]
      %v180 = vld [vmem:[%s163 + $0x28] sm:$0xf]
      %v181 = vld [vmem:[%s163 + $0x2c] sm:$0x1]
      %v182 = vld [vmem:[%s163 + $0x30] sm:$0xf]
      %v183 = vld [vmem:[%s163 + $0x34] sm:$0x1]
      %v184 = vld [vmem:[%s163 + $0x38] sm:$0xf]
      %v185 = vld [vmem:[%s163 + $0x3c] sm:$0x1]
      %v186 = vld [vmem:[%s163 + $0x40] sm:$0xf]
      %v187 = vld [vmem:[%s163 + $0x44] sm:$0x1]
      %v188 = vld [vmem:[%s163 + $0x48] sm:$0xf]
      %v189 = vld [vmem:[%s163 + $0x4c] sm:$0x1]
      %v190 = vld [vmem:[%s1] sm:$0xf]
      %v191 = vld [vmem:[%s1 + $0x4] sm:$0xf]
      %v192 = vld [vmem:[%s1 + $0x8] sm:$0xf]
      %v193 = vld [vmem:[%s1 + $0xc] sm:$0xf]
      %v194 = vld [vmem:[%s1 + $0x10] sm:$0xf]
      %v195 = vld [vmem:[%s1 + $0x14] sm:$0xf]
      %v196 = vld [vmem:[%s1 + $0x18] sm:$0xf]
      %v197 = vld [vmem:[%s1 + $0x1c] sm:$0xf]
      %v198 = vld [vmem:[%s1 + $0x20] sm:$0xf]
      %v199 = vld [vmem:[%s1 + $0x24] sm:$0xf]
      %vm200 = vsmask.f32 3328
      %vm201 = vsmask.f32 7440
      %vm202 = vmor %vm200, %vm201
      %v204 = vshrl.u32 %v170, 16
      %v206 = vrot.slane %v204, 4
      %v207 = vshll.u32 %v170, 16
      %v209 = vrot.slane %v207, 5
      %v210 = vor.u32 %v206, %v209
      %v211 = vrot.slane %v210, 4
      %v213 = vshll.u32 %v171, 16
      %v215 = vrot.slane %v213, 5
      %v216 = vsel %vm202, %v211, %v215
      %v218 = vshrl.u32 %v172, 16
      %v220 = vrot.slane %v218, 4
      %v221 = vshll.u32 %v172, 16
      %v223 = vrot.slane %v221, 5
      %v224 = vor.u32 %v220, %v223
      %v225 = vrot.slane %v224, 4
      %v227 = vshll.u32 %v173, 16
      %v229 = vrot.slane %v227, 5
      %v230 = vsel %vm202, %v225, %v229
      %v232 = vshrl.u32 %v174, 16
      %v234 = vrot.slane %v232, 4
      %v235 = vshll.u32 %v174, 16
      %v237 = vrot.slane %v235, 5
      %v238 = vor.u32 %v234, %v237
      %v239 = vrot.slane %v238, 4
      %v241 = vshll.u32 %v175, 16
      %v243 = vrot.slane %v241, 5
      %v244 = vsel %vm202, %v239, %v243
      %v246 = vshrl.u32 %v176, 16
      %v248 = vrot.slane %v246, 4
      %v249 = vshll.u32 %v176, 16
      %v251 = vrot.slane %v249, 5
      %v252 = vor.u32 %v248, %v251
      %v253 = vrot.slane %v252, 4
      %v255 = vshll.u32 %v177, 16
      %v257 = vrot.slane %v255, 5
      %v258 = vsel %vm202, %v253, %v257
      %v260 = vshrl.u32 %v178, 16
      %v262 = vrot.slane %v260, 4
      %v263 = vshll.u32 %v178, 16
      %v265 = vrot.slane %v263, 5
      %v266 = vor.u32 %v262, %v265
      %v267 = vrot.slane %v266, 4
      %v269 = vshll.u32 %v179, 16
      %v271 = vrot.slane %v269, 5
      %v272 = vsel %vm202, %v267, %v271
      %v274 = vshrl.u32 %v180, 16
      %v276 = vrot.slane %v274, 4
      %v277 = vshll.u32 %v180, 16
      %v279 = vrot.slane %v277, 5
      %v280 = vor.u32 %v276, %v279
      %v281 = vrot.slane %v280, 4
      %v283 = vshll.u32 %v181, 16
      %v285 = vrot.slane %v283, 5
      %v286 = vsel %vm202, %v281, %v285
      %v288 = vshrl.u32 %v182, 16
      %v290 = vrot.slane %v288, 4
      %v291 = vshll.u32 %v182, 16
      %v293 = vrot.slane %v291, 5
      %v294 = vor.u32 %v290, %v293
      %v295 = vrot.slane %v294, 4
      %v297 = vshll.u32 %v183, 16
      %v299 = vrot.slane %v297, 5
      %v300 = vsel %vm202, %v295, %v299
      %v302 = vshrl.u32 %v184, 16
      %v304 = vrot.slane %v302, 4
      %v305 = vshll.u32 %v184, 16
      %v307 = vrot.slane %v305, 5
      %v308 = vor.u32 %v304, %v307
      %v309 = vrot.slane %v308, 4
      %v311 = vshll.u32 %v185, 16
      %v313 = vrot.slane %v311, 5
      %v314 = vsel %vm202, %v309, %v313
      %v315 = vld [vmem:[%s1 + $0x28] sm:$0xf]
      %v316 = vld [vmem:[%s1 + $0x2c] sm:$0xf]
      %v317 = vld [vmem:[%s1 + $0x30] sm:$0xf]
      %v318 = vld [vmem:[%s1 + $0x34] sm:$0xf]
      %v319 = vld [vmem:[%s1 + $0x38] sm:$0xf]
      %v320 = vld [vmem:[%s1 + $0x3c] sm:$0xf]
      %v321 = vld [vmem:[%s1 + $0x40] sm:$0xf]
      %v322 = vld [vmem:[%s1 + $0x44] sm:$0xf]
      %v323 = vld [vmem:[%s1 + $0x48] sm:$0xf]
      %v324 = vld [vmem:[%s1 + $0x4c] sm:$0xf]
      %v325 = vunpack.c.l.b16 %v216
      %v326 = vunpack.c.l.b16 %v230
      %v327 = vunpack.c.l.b16 %v244
      %v328 = vunpack.c.l.b16 %v258
      %v329 = vunpack.c.l.b16 %v272
      %v330 = vunpack.c.l.b16 %v286
      %v331 = vunpack.c.l.b16 %v300
      %v332 = vunpack.c.l.b16 %v314
      %v333 = vpack.c.b16 %v326, %v325
      %v334 = vpack.c.b16 %v328, %v327
      %v335 = vpack.c.b16 %v330, %v329
      %v336 = vpack.c.b16 %v332, %v331
      %v347 = vunpack.c.l.b16 %v315
      %v348 = vunpack.c.l.b16 %v316
      %v349 = vunpack.c.l.b16 %v317
      %v350 = vunpack.c.l.b16 %v318
      %v351 = vunpack.c.l.b16 %v319
      %v352 = vunpack.c.l.b16 %v320
      %v353 = vunpack.c.l.b16 %v321
      %v354 = vunpack.c.l.b16 %v322
      %v355 = vunpack.c.l.b16 %v323
      %v356 = vunpack.c.l.b16 %v324
      %v357 = vpack.c.b16 %v348, %v347
      %v358 = vpack.c.b16 %v350, %v349
      %v359 = vpack.c.b16 %v352, %v351
      %v360 = vpack.c.b16 %v354, %v353
      %v361 = vpack.c.b16 %v356, %v355
      %vm367 = vcmask 654336
      %v369 = vsel %vm367, %v333, 0
      %v372 = vsel %vm367, %v334, 0
      %v375 = vsel %vm367, %v335, 0
      %v378 = vsel %vm367, %v336, 0
      %380 = vmatprep.subr.bf16.mxu0 0
      %381 = vmatpush1.bf16.msra.mxu0 %v357
      %382 = vmatprep.subr.bf16.mxu0 0
      %383 = vmatpush1.bf16.msra.mxu0 %v358
      %384 = vmatprep.subr.bf16.mxu0 0
      %385 = vmatpush1.bf16.msra.mxu0 %v359
      %386 = vmatprep.subr.bf16.mxu0 0
      %387 = vmatpush1.bf16.msra.mxu0 %v360
      %388 = vmatprep.subr.bf16.mxu0 0
      %389 = vmatpush1.bf16.msra.mxu0 %v361
      %390 = vmatprep.subr.bf16.mxu0 0
      %391 = vmatpush1.bf16.msra.mxu0 0
      %392 = vmatprep.subr.bf16.mxu0 0
      %393 = vmatpush1.bf16.msra.mxu0 0
      %394 = vmatprep.subr.bf16.mxu0 0
      %395 = vmatpush1.bf16.msra.mxu0 0
      %396 = vmatprep.subr.bf16.mxu0 0
      %397 = vmatpush1.bf16.msra.mxu0 0
      %398 = vmatprep.subr.bf16.mxu0 0
      %399 = vmatpush1.bf16.msra.mxu0 0
      %400 = vmatprep.subr.bf16.mxu0 0
      %401 = vmatpush1.bf16.msra.mxu0 0
      %402 = vmatprep.subr.bf16.mxu0 0
      %403 = vmatpush1.bf16.msra.mxu0 0
      %404 = vmatprep.subr.bf16.mxu0 0
      %405 = vmatpush1.bf16.msra.mxu0 0
      %406 = vmatprep.subr.bf16.mxu0 0
      %407 = vmatpush1.bf16.msra.mxu0 0
      %408 = vmatprep.subr.bf16.mxu0 0
      %409 = vmatpush1.bf16.msra.mxu0 0
      %410 = vmatprep.subr.bf16.mxu0 0
      %411 = vmatpush1.bf16.msra.mxu0 0
      %412 = vmatprep.mubr.bf16.mxu0 0
      %413 = vmatmul.mubr.bf16.gmra.mrb[0].mxu0 %v369
      %v414 = vpop.f32.mrb[0].mxu0
      %v415 = vadd.f32 0.0, %v414
      %v416 = vpop.f32.mrb[0].mxu0
      %v417 = vpop.f32.mrb[0].mxu0
      %v418 = vadd.f32 0.0, %v417
      %v419 = vpop.f32.mrb[0].mxu0
      %420 = vmatprep.mubr.bf16.mxu0 0
      %421 = vmatmul.mubr.bf16.gmra.mrb[0].mxu0 %v372
      %v422 = vpop.f32.mrb[0].mxu0
      %v423 = vadd.f32 0.0, %v422
      %v424 = vpop.f32.mrb[0].mxu0
      %v425 = vpop.f32.mrb[0].mxu0
      %v426 = vadd.f32 0.0, %v425
      %v427 = vpop.f32.mrb[0].mxu0
      %428 = vmatprep.mubr.bf16.mxu0 0
      %429 = vmatmul.mubr.bf16.gmra.mrb[0].mxu0 %v375
      %v430 = vpop.f32.mrb[0].mxu0
      %v431 = vadd.f32 0.0, %v430
      %v432 = vpop.f32.mrb[0].mxu0
      %v433 = vpop.f32.mrb[0].mxu0
      %v434 = vadd.f32 0.0, %v433
      %v435 = vpop.f32.mrb[0].mxu0
      %436 = vmatprep.mubr.bf16.mxu0 0
      %437 = vmatmul.mubr.bf16.gmra.mrb[0].mxu0 %v378
      %v438 = vpop.f32.mrb[0].mxu0
      %v439 = vadd.f32 0.0, %v438
      %v440 = vpop.f32.mrb[0].mxu0
      %v441 = vpop.f32.mrb[0].mxu0
      %v442 = vadd.f32 0.0, %v441
      %v443 = vpop.f32.mrb[0].mxu0
      %444 = vdwg.mxu0
      %v453 = vunpack.c.l.b16 %v170
      %v454 = vunpack.c.l.b16 %v172
      %v455 = vunpack.c.l.b16 %v174
      %v456 = vunpack.c.l.b16 %v176
      %v457 = vunpack.c.l.b16 %v178
      %v458 = vunpack.c.l.b16 %v180
      %v459 = vunpack.c.l.b16 %v182
      %v460 = vunpack.c.l.b16 %v184
      %v461 = vpack.c.b16 %v454, %v453
      %v462 = vpack.c.b16 %v456, %v455
      %v463 = vpack.c.b16 %v458, %v457
      %v464 = vpack.c.b16 %v460, %v459
      %v475 = vunpack.c.l.b16 %v190
      %v476 = vunpack.c.l.b16 %v191
      %v477 = vunpack.c.l.b16 %v192
      %v478 = vunpack.c.l.b16 %v193
      %v479 = vunpack.c.l.b16 %v194
      %v480 = vunpack.c.l.b16 %v195
      %v481 = vunpack.c.l.b16 %v196
      %v482 = vunpack.c.l.b16 %v197
      %v483 = vunpack.c.l.b16 %v198
      %v484 = vunpack.c.l.b16 %v199
      %v485 = vpack.c.b16 %v476, %v475
      %v486 = vpack.c.b16 %v478, %v477
      %v487 = vpack.c.b16 %v480, %v479
      %v488 = vpack.c.b16 %v482, %v481
      %v489 = vpack.c.b16 %v484, %v483
      %v496 = vsel %vm367, %v461, 0
      %v499 = vsel %vm367, %v462, 0
      %v502 = vsel %vm367, %v463, 0
      %v505 = vsel %vm367, %v464, 0
      %507 = vmatprep.subr.bf16.mxu0 0
      %508 = vmatpush1.bf16.msra.mxu0 %v485
      %509 = vmatprep.subr.bf16.mxu0 0
      %510 = vmatpush1.bf16.msra.mxu0 %v486
      %511 = vmatprep.subr.bf16.mxu0 0
      %512 = vmatpush1.bf16.msra.mxu0 %v487
      %513 = vmatprep.subr.bf16.mxu0 0
      %514 = vmatpush1.bf16.msra.mxu0 %v488
      %515 = vmatprep.subr.bf16.mxu0 0
      %516 = vmatpush1.bf16.msra.mxu0 %v489
      %517 = vmatprep.subr.bf16.mxu0 0
      %518 = vmatpush1.bf16.msra.mxu0 0
      %519 = vmatprep.subr.bf16.mxu0 0
      %520 = vmatpush1.bf16.msra.mxu0 0
      %521 = vmatprep.subr.bf16.mxu0 0
      %522 = vmatpush1.bf16.msra.mxu0 0
      %523 = vmatprep.subr.bf16.mxu0 0
      %524 = vmatpush1.bf16.msra.mxu0 0
      %525 = vmatprep.subr.bf16.mxu0 0
      %526 = vmatpush1.bf16.msra.mxu0 0
      %527 = vmatprep.subr.bf16.mxu0 0
      %528 = vmatpush1.bf16.msra.mxu0 0
      %529 = vmatprep.subr.bf16.mxu0 0
      %530 = vmatpush1.bf16.msra.mxu0 0
      %531 = vmatprep.subr.bf16.mxu0 0
      %532 = vmatpush1.bf16.msra.mxu0 0
      %533 = vmatprep.subr.bf16.mxu0 0
      %534 = vmatpush1.bf16.msra.mxu0 0
      %535 = vmatprep.subr.bf16.mxu0 0
      %536 = vmatpush1.bf16.msra.mxu0 0
      %537 = vmatprep.subr.bf16.mxu0 0
      %538 = vmatpush1.bf16.msra.mxu0 0
      %539 = vmatprep.mubr.bf16.mxu0 0
      %540 = vmatmul.mubr.bf16.gmra.mrb[0].mxu0 %v496
      %v541 = vpop.f32.mrb[0].mxu0
      %v542 = vadd.f32 %v415, %v541
      %v543 = vpop.f32.mrb[0].mxu0
      %v544 = vpop.f32.mrb[0].mxu0
      %v545 = vadd.f32 %v418, %v544
      %v546 = vpop.f32.mrb[0].mxu0
      %547 = vmatprep.mubr.bf16.mxu0 0
      %548 = vmatmul.mubr.bf16.gmra.mrb[0].mxu0 %v499
      %v549 = vpop.f32.mrb[0].mxu0
      %v550 = vadd.f32 %v423, %v549
      %v551 = vpop.f32.mrb[0].mxu0
      %v552 = vpop.f32.mrb[0].mxu0
      %v553 = vadd.f32 %v426, %v552
      %v554 = vpop.f32.mrb[0].mxu0
      %555 = vmatprep.mubr.bf16.mxu0 0
      %556 = vmatmul.mubr.bf16.gmra.mrb[0].mxu0 %v502
      %v557 = vpop.f32.mrb[0].mxu0
      %v558 = vadd.f32 %v431, %v557
      %v559 = vpop.f32.mrb[0].mxu0
      %v560 = vpop.f32.mrb[0].mxu0
      %v561 = vadd.f32 %v434, %v560
      %v562 = vpop.f32.mrb[0].mxu0
      %563 = vmatprep.mubr.bf16.mxu0 0
      %564 = vmatmul.mubr.bf16.gmra.mrb[0].mxu0 %v505
      %v565 = vpop.f32.mrb[0].mxu0
      %v566 = vadd.f32 %v439, %v565
      %v567 = vpop.f32.mrb[0].mxu0
      %v568 = vpop.f32.mrb[0].mxu0
      %v569 = vadd.f32 %v442, %v568
      %v570 = vpop.f32.mrb[0].mxu0
      %571 = vdwg.mxu0
      %vm580 = vcmask 1042432
      %vm581 = vcmask 1046532
      %vm582 = vmor %vm580, %vm581
      %v583 = vrot.slane %v170, 5
      %v584 = vrot.slane %v583, 4
      %v585 = vrot.slane %v171, 5
      %v586 = vsel %vm582, %v584, %v585
      %v587 = vrot.slane %v172, 5
      %v588 = vrot.slane %v587, 4
      %v589 = vrot.slane %v173, 5
      %v590 = vsel %vm582, %v588, %v589
      %v591 = vrot.slane %v174, 5
      %v592 = vrot.slane %v591, 4
      %v593 = vrot.slane %v175, 5
      %v594 = vsel %vm582, %v592, %v593
      %v595 = vrot.slane %v176, 5
      %v596 = vrot.slane %v595, 4
      %v597 = vrot.slane %v177, 5
      %v598 = vsel %vm582, %v596, %v597
      %v599 = vrot.slane %v178, 5
      %v600 = vrot.slane %v599, 4
      %v601 = vrot.slane %v179, 5
      %v602 = vsel %vm582, %v600, %v601
      %v603 = vrot.slane %v180, 5
      %v604 = vrot.slane %v603, 4
      %v605 = vrot.slane %v181, 5
      %v606 = vsel %vm582, %v604, %v605
      %v607 = vrot.slane %v182, 5
      %v608 = vrot.slane %v607, 4
      %v609 = vrot.slane %v183, 5
      %v610 = vsel %vm582, %v608, %v609
      %v611 = vrot.slane %v184, 5
      %v612 = vrot.slane %v611, 4
      %v613 = vrot.slane %v185, 5
      %v614 = vsel %vm582, %v612, %v613
      %v615 = vld [vmem:[%s1 + $0x50] sm:$0xf]
      %v616 = vld [vmem:[%s1 + $0x54] sm:$0xf]
      %v617 = vld [vmem:[%s1 + $0x58] sm:$0xf]
      %v618 = vld [vmem:[%s1 + $0x5c] sm:$0xf]
      %v619 = vld [vmem:[%s1 + $0x60] sm:$0xf]
      %v620 = vld [vmem:[%s1 + $0x64] sm:$0xf]
      %v621 = vld [vmem:[%s1 + $0x68] sm:$0xf]
      %v622 = vld [vmem:[%s1 + $0x6c] sm:$0xf]
      %v623 = vld [vmem:[%s1 + $0x70] sm:$0xf]
      %v624 = vld [vmem:[%s1 + $0x74] sm:$0xf]
      %v625 = vunpack.c.l.b16 %v586
      %v626 = vunpack.c.l.b16 %v590
      %v627 = vunpack.c.l.b16 %v594
      %v628 = vunpack.c.l.b16 %v598
      %v629 = vunpack.c.l.b16 %v602
      %v630 = vunpack.c.l.b16 %v606
      %v631 = vunpack.c.l.b16 %v610
      %v632 = vunpack.c.l.b16 %v614
      %v633 = vpack.c.b16 %v626, %v625
      %v634 = vpack.c.b16 %v628, %v627
      %v635 = vpack.c.b16 %v630, %v629
      %v636 = vpack.c.b16 %v632, %v631
      %v647 = vunpack.c.l.b16 %v615
      %v648 = vunpack.c.l.b16 %v616
      %v649 = vunpack.c.l.b16 %v617
      %v650 = vunpack.c.l.b16 %v618
      %v651 = vunpack.c.l.b16 %v619
      %v652 = vunpack.c.l.b16 %v620
      %v653 = vunpack.c.l.b16 %v621
      %v654 = vunpack.c.l.b16 %v622
      %v655 = vunpack.c.l.b16 %v623
      %v656 = vunpack.c.l.b16 %v624
      %v657 = vpack.c.b16 %v648, %v647
      %v658 = vpack.c.b16 %v650, %v649
      %v659 = vpack.c.b16 %v652, %v651
      %v660 = vpack.c.b16 %v654, %v653
      %v661 = vpack.c.b16 %v656, %v655
      %v668 = vsel %vm367, %v633, 0
      %v671 = vsel %vm367, %v634, 0
      %v674 = vsel %vm367, %v635, 0
      %v677 = vsel %vm367, %v636, 0
      %679 = vmatprep.subr.bf16.mxu0 0
      %680 = vmatpush1.bf16.msra.mxu0 %v657
      %681 = vmatprep.subr.bf16.mxu0 0
      %682 = vmatpush1.bf16.msra.mxu0 %v658
      %683 = vmatprep.subr.bf16.mxu0 0
      %684 = vmatpush1.bf16.msra.mxu0 %v659
      %685 = vmatprep.subr.bf16.mxu0 0
      %686 = vmatpush1.bf16.msra.mxu0 %v660
      %687 = vmatprep.subr.bf16.mxu0 0
      %688 = vmatpush1.bf16.msra.mxu0 %v661
      %689 = vmatprep.subr.bf16.mxu0 0
      %690 = vmatpush1.bf16.msra.mxu0 0
      %691 = vmatprep.subr.bf16.mxu0 0
      %692 = vmatpush1.bf16.msra.mxu0 0
      %693 = vmatprep.subr.bf16.mxu0 0
      %694 = vmatpush1.bf16.msra.mxu0 0
      %695 = vmatprep.subr.bf16.mxu0 0
      %696 = vmatpush1.bf16.msra.mxu0 0
      %697 = vmatprep.subr.bf16.mxu0 0
      %698 = vmatpush1.bf16.msra.mxu0 0
      %699 = vmatprep.subr.bf16.mxu0 0
      %700 = vmatpush1.bf16.msra.mxu0 0
      %701 = vmatprep.subr.bf16.mxu0 0
      %702 = vmatpush1.bf16.msra.mxu0 0
      %703 = vmatprep.subr.bf16.mxu0 0
      %704 = vmatpush1.bf16.msra.mxu0 0
      %705 = vmatprep.subr.bf16.mxu0 0
      %706 = vmatpush1.bf16.msra.mxu0 0
      %707 = vmatprep.subr.bf16.mxu0 0
      %708 = vmatpush1.bf16.msra.mxu0 0
      %709 = vmatprep.subr.bf16.mxu0 0
      %710 = vmatpush1.bf16.msra.mxu0 0
      %711 = vmatprep.mubr.bf16.mxu0 0
      %712 = vmatmul.mubr.bf16.gmra.mrb[0].mxu0 %v668
      %v713 = vpop.f32.mrb[0].mxu0
      %v714 = vadd.f32 0.0, %v713
      %v715 = vpop.f32.mrb[0].mxu0
      %v716 = vpop.f32.mrb[0].mxu0
      %v717 = vadd.f32 0.0, %v716
      %v718 = vpop.f32.mrb[0].mxu0
      %719 = vmatprep.mubr.bf16.mxu0 0
      %720 = vmatmul.mubr.bf16.gmra.mrb[0].mxu0 %v671
      %v721 = vpop.f32.mrb[0].mxu0
      %v722 = vadd.f32 0.0, %v721
      %v723 = vpop.f32.mrb[0].mxu0
      %v724 = vpop.f32.mrb[0].mxu0
      %v725 = vadd.f32 0.0, %v724
      %v726 = vpop.f32.mrb[0].mxu0
      %727 = vmatprep.mubr.bf16.mxu0 0
      %728 = vmatmul.mubr.bf16.gmra.mrb[0].mxu0 %v674
      %v729 = vpop.f32.mrb[0].mxu0
      %v730 = vadd.f32 0.0, %v729
      %v731 = vpop.f32.mrb[0].mxu0
      %v732 = vpop.f32.mrb[0].mxu0
      %v733 = vadd.f32 0.0, %v732
      %v734 = vpop.f32.mrb[0].mxu0
      %735 = vmatprep.mubr.bf16.mxu0 0
      %736 = vmatmul.mubr.bf16.gmra.mrb[0].mxu0 %v677
      %v737 = vpop.f32.mrb[0].mxu0
      %v738 = vadd.f32 0.0, %v737
      %v739 = vpop.f32.mrb[0].mxu0
      %v740 = vpop.f32.mrb[0].mxu0
      %v741 = vadd.f32 0.0, %v740
      %v742 = vpop.f32.mrb[0].mxu0
      %743 = vdwg.mxu0
      %v744 = vadd.f32 %v542, %v714
      %v745 = vadd.f32 %v545, %v717
      %v746 = vadd.f32 %v550, %v722
      %v747 = vadd.f32 %v553, %v725
      %v748 = vadd.f32 %v558, %v730
      %v749 = vadd.f32 %v561, %v733
      %v750 = vadd.f32 %v566, %v738
      %v751 = vadd.f32 %v569, %v741
      %v752 = vld [vmem:[%s1 + $0x78] sm:$0xf]
      %v753 = vld [vmem:[%s1 + $0x7c] sm:$0xf]
      %v754 = vld [vmem:[%s1 + $0x80] sm:$0xf]
      %v755 = vld [vmem:[%s1 + $0x84] sm:$0xf]
      %v756 = vld [vmem:[%s1 + $0x88] sm:$0xf]
      %v757 = vld [vmem:[%s1 + $0x8c] sm:$0xf]
      %v758 = vld [vmem:[%s1 + $0x90] sm:$0xf]
      %v759 = vld [vmem:[%s1 + $0x94] sm:$0xf]
      %v760 = vld [vmem:[%s1 + $0x98] sm:$0xf]
      %v761 = vld [vmem:[%s1 + $0x9c] sm:$0xf]
      %v763 = vunpack.c.l.b16 %v186
      %v764 = vpack.c.b16 %v455, %v454
      %v765 = vpack.c.b16 %v457, %v456
      %v766 = vpack.c.b16 %v459, %v458
      %v767 = vpack.c.b16 %v763, %v460
      %v778 = vunpack.c.l.b16 %v752
      %v779 = vunpack.c.l.b16 %v753
      %v780 = vunpack.c.l.b16 %v754
      %v781 = vunpack.c.l.b16 %v755
      %v782 = vunpack.c.l.b16 %v756
      %v783 = vunpack.c.l.b16 %v757
      %v784 = vunpack.c.l.b16 %v758
      %v785 = vunpack.c.l.b16 %v759
      %v786 = vunpack.c.l.b16 %v760
      %v787 = vunpack.c.l.b16 %v761
      %v788 = vpack.c.b16 %v779, %v778
      %v789 = vpack.c.b16 %v781, %v780
      %v790 = vpack.c.b16 %v783, %v782
      %v791 = vpack.c.b16 %v785, %v784
      %v792 = vpack.c.b16 %v787, %v786
      %v799 = vsel %vm367, %v764, 0
      %v802 = vsel %vm367, %v765, 0
      %v805 = vsel %vm367, %v766, 0
      %v808 = vsel %vm367, %v767, 0
      %810 = vmatprep.subr.bf16.mxu0 0
      %811 = vmatpush1.bf16.msra.mxu0 %v788
      %812 = vmatprep.subr.bf16.mxu0 0
      %813 = vmatpush1.bf16.msra.mxu0 %v789
      %814 = vmatprep.subr.bf16.mxu0 0
      %815 = vmatpush1.bf16.msra.mxu0 %v790
      %816 = vmatprep.subr.bf16.mxu0 0
      %817 = vmatpush1.bf16.msra.mxu0 %v791
      %818 = vmatprep.subr.bf16.mxu0 0
      %819 = vmatpush1.bf16.msra.mxu0 %v792
      %820 = vmatprep.subr.bf16.mxu0 0
      %821 = vmatpush1.bf16.msra.mxu0 0
      %822 = vmatprep.subr.bf16.mxu0 0
      %823 = vmatpush1.bf16.msra.mxu0 0
      %824 = vmatprep.subr.bf16.mxu0 0
      %825 = vmatpush1.bf16.msra.mxu0 0
      %826 = vmatprep.subr.bf16.mxu0 0
      %827 = vmatpush1.bf16.msra.mxu0 0
      %828 = vmatprep.subr.bf16.mxu0 0
      %829 = vmatpush1.bf16.msra.mxu0 0
      %830 = vmatprep.subr.bf16.mxu0 0
      %831 = vmatpush1.bf16.msra.mxu0 0
      %832 = vmatprep.subr.bf16.mxu0 0
      %833 = vmatpush1.bf16.msra.mxu0 0
      %834 = vmatprep.subr.bf16.mxu0 0
      %835 = vmatpush1.bf16.msra.mxu0 0
      %836 = vmatprep.subr.bf16.mxu0 0
      %837 = vmatpush1.bf16.msra.mxu0 0
      %838 = vmatprep.subr.bf16.mxu0 0
      %839 = vmatpush1.bf16.msra.mxu0 0
      %840 = vmatprep.subr.bf16.mxu0 0
      %841 = vmatpush1.bf16.msra.mxu0 0
      %842 = vmatprep.mubr.bf16.mxu0 0
      %843 = vmatmul.mubr.bf16.gmra.mrb[0].mxu0 %v799
      %v844 = vpop.f32.mrb[0].mxu0
      %v845 = vadd.f32 0.0, %v844
      %v846 = vpop.f32.mrb[0].mxu0
      %v847 = vpop.f32.mrb[0].mxu0
      %v848 = vadd.f32 0.0, %v847
      %v849 = vpop.f32.mrb[0].mxu0
      %850 = vmatprep.mubr.bf16.mxu0 0
      %851 = vmatmul.mubr.bf16.gmra.mrb[0].mxu0 %v802
      %v852 = vpop.f32.mrb[0].mxu0
      %v853 = vadd.f32 0.0, %v852
      %v854 = vpop.f32.mrb[0].mxu0
      %v855 = vpop.f32.mrb[0].mxu0
      %v856 = vadd.f32 0.0, %v855
      %v857 = vpop.f32.mrb[0].mxu0
      %858 = vmatprep.mubr.bf16.mxu0 0
      %859 = vmatmul.mubr.bf16.gmra.mrb[0].mxu0 %v805
      %v860 = vpop.f32.mrb[0].mxu0
      %v861 = vadd.f32 0.0, %v860
      %v862 = vpop.f32.mrb[0].mxu0
      %v863 = vpop.f32.mrb[0].mxu0
      %v864 = vadd.f32 0.0, %v863
      %v865 = vpop.f32.mrb[0].mxu0
      %866 = vmatprep.mubr.bf16.mxu0 0
      %867 = vmatmul.mubr.bf16.gmra.mrb[0].mxu0 %v808
      %v868 = vpop.f32.mrb[0].mxu0
      %v869 = vadd.f32 0.0, %v868
      %v870 = vpop.f32.mrb[0].mxu0
      %v871 = vpop.f32.mrb[0].mxu0
      %v872 = vadd.f32 0.0, %v871
      %v873 = vpop.f32.mrb[0].mxu0
      %874 = vdwg.mxu0
      %v875 = vadd.f32 %v744, %v845
      %v876 = vadd.f32 %v745, %v848
      %v877 = vadd.f32 %v746, %v853
      %v878 = vadd.f32 %v747, %v856
      %v879 = vadd.f32 %v748, %v861
      %v880 = vadd.f32 %v749, %v864
      %v881 = vadd.f32 %v750, %v869
      %v882 = vadd.f32 %v751, %v872
      %v884 = vshrl.u32 %v186, 16
      %v886 = vrot.slane %v884, 4
      %v887 = vshll.u32 %v186, 16
      %v889 = vrot.slane %v887, 5
      %v890 = vor.u32 %v886, %v889
      %v891 = vrot.slane %v890, 4
      %v893 = vshll.u32 %v187, 16
      %v895 = vrot.slane %v893, 5
      %v896 = vsel %vm202, %v891, %v895
      %v897 = vld [vmem:[%s1 + $0xa0] sm:$0xf]
      %v898 = vld [vmem:[%s1 + $0xa4] sm:$0xf]
      %v899 = vld [vmem:[%s1 + $0xa8] sm:$0xf]
      %v900 = vld [vmem:[%s1 + $0xac] sm:$0xf]
      %v901 = vld [vmem:[%s1 + $0xb0] sm:$0xf]
      %v902 = vld [vmem:[%s1 + $0xb4] sm:$0xf]
      %v903 = vld [vmem:[%s1 + $0xb8] sm:$0xf]
      %v904 = vld [vmem:[%s1 + $0xbc] sm:$0xf]
      %v905 = vld [vmem:[%s1 + $0xc0] sm:$0xf]
      %v906 = vld [vmem:[%s1 + $0xc4] sm:$0xf]
      %v907 = vunpack.c.l.b16 %v896
      %v908 = vpack.c.b16 %v327, %v326
      %v909 = vpack.c.b16 %v329, %v328
      %v910 = vpack.c.b16 %v331, %v330
      %v911 = vpack.c.b16 %v907, %v332
      %v922 = vunpack.c.l.b16 %v897
      %v923 = vunpack.c.l.b16 %v898
      %v924 = vunpack.c.l.b16 %v899
      %v925 = vunpack.c.l.b16 %v900
      %v926 = vunpack.c.l.b16 %v901
      %v927 = vunpack.c.l.b16 %v902
      %v928 = vunpack.c.l.b16 %v903
      %v929 = vunpack.c.l.b16 %v904
      %v930 = vunpack.c.l.b16 %v905
      %v931 = vunpack.c.l.b16 %v906
      %v932 = vpack.c.b16 %v923, %v922
      %v933 = vpack.c.b16 %v925, %v924
      %v934 = vpack.c.b16 %v927, %v926
      %v935 = vpack.c.b16 %v929, %v928
      %v936 = vpack.c.b16 %v931, %v930
      %v943 = vsel %vm367, %v908, 0
      %v946 = vsel %vm367, %v909, 0
      %v949 = vsel %vm367, %v910, 0
      %v952 = vsel %vm367, %v911, 0
      %954 = vmatprep.subr.bf16.mxu0 0
      %955 = vmatpush1.bf16.msra.mxu0 %v932
      %956 = vmatprep.subr.bf16.mxu0 0
      %957 = vmatpush1.bf16.msra.mxu0 %v933
      %958 = vmatprep.subr.bf16.mxu0 0
      %959 = vmatpush1.bf16.msra.mxu0 %v934
      %960 = vmatprep.subr.bf16.mxu0 0
      %961 = vmatpush1.bf16.msra.mxu0 %v935
      %962 = vmatprep.subr.bf16.mxu0 0
      %963 = vmatpush1.bf16.msra.mxu0 %v936
      %964 = vmatprep.subr.bf16.mxu0 0
      %965 = vmatpush1.bf16.msra.mxu0 0
      %966 = vmatprep.subr.bf16.mxu0 0
      %967 = vmatpush1.bf16.msra.mxu0 0
      %968 = vmatprep.subr.bf16.mxu0 0
      %969 = vmatpush1.bf16.msra.mxu0 0
      %970 = vmatprep.subr.bf16.mxu0 0
      %971 = vmatpush1.bf16.msra.mxu0 0
      %972 = vmatprep.subr.bf16.mxu0 0
      %973 = vmatpush1.bf16.msra.mxu0 0
      %974 = vmatprep.subr.bf16.mxu0 0
      %975 = vmatpush1.bf16.msra.mxu0 0
      %976 = vmatprep.subr.bf16.mxu0 0
      %977 = vmatpush1.bf16.msra.mxu0 0
      %978 = vmatprep.subr.bf16.mxu0 0
      %979 = vmatpush1.bf16.msra.mxu0 0
      %980 = vmatprep.subr.bf16.mxu0 0
      %981 = vmatpush1.bf16.msra.mxu0 0
      %982 = vmatprep.subr.bf16.mxu0 0
      %983 = vmatpush1.bf16.msra.mxu0 0
      %984 = vmatprep.subr.bf16.mxu0 0
      %985 = vmatpush1.bf16.msra.mxu0 0
      %986 = vmatprep.mubr.bf16.mxu0 0
      %987 = vmatmul.mubr.bf16.gmra.mrb[0].mxu0 %v943
      %v988 = vpop.f32.mrb[0].mxu0
      %v989 = vadd.f32 0.0, %v988
      %v990 = vpop.f32.mrb[0].mxu0
      %v991 = vpop.f32.mrb[0].mxu0
      %v992 = vadd.f32 0.0, %v991
      %v993 = vpop.f32.mrb[0].mxu0
      %994 = vmatprep.mubr.bf16.mxu0 0
      %995 = vmatmul.mubr.bf16.gmra.mrb[0].mxu0 %v946
      %v996 = vpop.f32.mrb[0].mxu0
      %v997 = vadd.f32 0.0, %v996
      %v998 = vpop.f32.mrb[0].mxu0
      %v999 = vpop.f32.mrb[0].mxu0
      %v1000 = vadd.f32 0.0, %v999
      %v1001 = vpop.f32.mrb[0].mxu0
      %1002 = vmatprep.mubr.bf16.mxu0 0
      %1003 = vmatmul.mubr.bf16.gmra.mrb[0].mxu0 %v949
      %v1004 = vpop.f32.mrb[0].mxu0
      %v1005 = vadd.f32 0.0, %v1004
      %v1006 = vpop.f32.mrb[0].mxu0
      %v1007 = vpop.f32.mrb[0].mxu0
      %v1008 = vadd.f32 0.0, %v1007
      %v1009 = vpop.f32.mrb[0].mxu0
      %1010 = vmatprep.mubr.bf16.mxu0 0
      %1011 = vmatmul.mubr.bf16.gmra.mrb[0].mxu0 %v952
      %v1012 = vpop.f32.mrb[0].mxu0
      %v1013 = vadd.f32 0.0, %v1012
      %v1014 = vpop.f32.mrb[0].mxu0
      %v1015 = vpop.f32.mrb[0].mxu0
      %v1016 = vadd.f32 0.0, %v1015
      %v1017 = vpop.f32.mrb[0].mxu0
      %1018 = vdwg.mxu0
      %v1019 = vadd.f32 %v875, %v989
      %v1020 = vadd.f32 %v876, %v992
      %v1021 = vadd.f32 %v877, %v997
      %v1022 = vadd.f32 %v878, %v1000
      %v1023 = vadd.f32 %v879, %v1005
      %v1024 = vadd.f32 %v880, %v1008
      %v1025 = vadd.f32 %v881, %v1013
      %v1026 = vadd.f32 %v882, %v1016
      %v1028 = vrot.slane %v186, 5
      %v1029 = vrot.slane %v1028, 4
      %v1030 = vrot.slane %v187, 5
      %v1031 = vsel %vm582, %v1029, %v1030
      %v1032 = vld [vmem:[%s1 + $0xc8] sm:$0xf]
      %v1033 = vld [vmem:[%s1 + $0xcc] sm:$0xf]
      %v1034 = vld [vmem:[%s1 + $0xd0] sm:$0xf]
      %v1035 = vld [vmem:[%s1 + $0xd4] sm:$0xf]
      %v1036 = vld [vmem:[%s1 + $0xd8] sm:$0xf]
      %v1037 = vld [vmem:[%s1 + $0xdc] sm:$0xf]
      %v1038 = vld [vmem:[%s1 + $0xe0] sm:$0xf]
      %v1039 = vld [vmem:[%s1 + $0xe4] sm:$0xf]
      %v1040 = vld [vmem:[%s1 + $0xe8] sm:$0xf]
      %v1041 = vld [vmem:[%s1 + $0xec] sm:$0xf]
      %v1042 = vunpack.c.l.b16 %v1031
      %v1043 = vpack.c.b16 %v627, %v626
      %v1044 = vpack.c.b16 %v629, %v628
      %v1045 = vpack.c.b16 %v631, %v630
      %v1046 = vpack.c.b16 %v1042, %v632
      %v1057 = vunpack.c.l.b16 %v1032
      %v1058 = vunpack.c.l.b16 %v1033
      %v1059 = vunpack.c.l.b16 %v1034
      %v1060 = vunpack.c.l.b16 %v1035
      %v1061 = vunpack.c.l.b16 %v1036
      %v1062 = vunpack.c.l.b16 %v1037
      %v1063 = vunpack.c.l.b16 %v1038
      %v1064 = vunpack.c.l.b16 %v1039
      %v1065 = vunpack.c.l.b16 %v1040
      %v1066 = vunpack.c.l.b16 %v1041
      %v1067 = vpack.c.b16 %v1058, %v1057
      %v1068 = vpack.c.b16 %v1060, %v1059
      %v1069 = vpack.c.b16 %v1062, %v1061
      %v1070 = vpack.c.b16 %v1064, %v1063
      %v1071 = vpack.c.b16 %v1066, %v1065
      %v1078 = vsel %vm367, %v1043, 0
      %v1081 = vsel %vm367, %v1044, 0
      %v1084 = vsel %vm367, %v1045, 0
      %v1087 = vsel %vm367, %v1046, 0
      %1089 = vmatprep.subr.bf16.mxu0 0
      %1090 = vmatpush1.bf16.msra.mxu0 %v1067
      %1091 = vmatprep.subr.bf16.mxu0 0
      %1092 = vmatpush1.bf16.msra.mxu0 %v1068
      %1093 = vmatprep.subr.bf16.mxu0 0
      %1094 = vmatpush1.bf16.msra.mxu0 %v1069
      %1095 = vmatprep.subr.bf16.mxu0 0
      %1096 = vmatpush1.bf16.msra.mxu0 %v1070
      %1097 = vmatprep.subr.bf16.mxu0 0
      %1098 = vmatpush1.bf16.msra.mxu0 %v1071
      %1099 = vmatprep.subr.bf16.mxu0 0
      %1100 = vmatpush1.bf16.msra.mxu0 0
      %1101 = vmatprep.subr.bf16.mxu0 0
      %1102 = vmatpush1.bf16.msra.mxu0 0
      %1103 = vmatprep.subr.bf16.mxu0 0
      %1104 = vmatpush1.bf16.msra.mxu0 0
      %1105 = vmatprep.subr.bf16.mxu0 0
      %1106 = vmatpush1.bf16.msra.mxu0 0
      %1107 = vmatprep.subr.bf16.mxu0 0
      %1108 = vmatpush1.bf16.msra.mxu0 0
      %1109 = vmatprep.subr.bf16.mxu0 0
      %1110 = vmatpush1.bf16.msra.mxu0 0
      %1111 = vmatprep.subr.bf16.mxu0 0
      %1112 = vmatpush1.bf16.msra.mxu0 0
      %1113 = vmatprep.subr.bf16.mxu0 0
      %1114 = vmatpush1.bf16.msra.mxu0 0
      %1115 = vmatprep.subr.bf16.mxu0 0
      %1116 = vmatpush1.bf16.msra.mxu0 0
      %1117 = vmatprep.subr.bf16.mxu0 0
      %1118 = vmatpush1.bf16.msra.mxu0 0
      %1119 = vmatprep.subr.bf16.mxu0 0
      %1120 = vmatpush1.bf16.msra.mxu0 0
      %1121 = vmatprep.mubr.bf16.mxu0 0
      %1122 = vmatmul.mubr.bf16.gmra.mrb[0].mxu0 %v1078
      %v1123 = vpop.f32.mrb[0].mxu0
      %v1124 = vadd.f32 0.0, %v1123
      %v1125 = vpop.f32.mrb[0].mxu0
      %v1126 = vpop.f32.mrb[0].mxu0
      %v1127 = vadd.f32 0.0, %v1126
      %v1128 = vpop.f32.mrb[0].mxu0
      %1129 = vmatprep.mubr.bf16.mxu0 0
      %1130 = vmatmul.mubr.bf16.gmra.mrb[0].mxu0 %v1081
      %v1131 = vpop.f32.mrb[0].mxu0
      %v1132 = vadd.f32 0.0, %v1131
      %v1133 = vpop.f32.mrb[0].mxu0
      %v1134 = vpop.f32.mrb[0].mxu0
      %v1135 = vadd.f32 0.0, %v1134
      %v1136 = vpop.f32.mrb[0].mxu0
      %1137 = vmatprep.mubr.bf16.mxu0 0
      %1138 = vmatmul.mubr.bf16.gmra.mrb[0].mxu0 %v1084
      %v1139 = vpop.f32.mrb[0].mxu0
      %v1140 = vadd.f32 0.0, %v1139
      %v1141 = vpop.f32.mrb[0].mxu0
      %v1142 = vpop.f32.mrb[0].mxu0
      %v1143 = vadd.f32 0.0, %v1142
      %v1144 = vpop.f32.mrb[0].mxu0
      %1145 = vmatprep.mubr.bf16.mxu0 0
      %1146 = vmatmul.mubr.bf16.gmra.mrb[0].mxu0 %v1087
      %v1147 = vpop.f32.mrb[0].mxu0
      %v1148 = vadd.f32 0.0, %v1147
      %v1149 = vpop.f32.mrb[0].mxu0
      %v1150 = vpop.f32.mrb[0].mxu0
      %v1151 = vadd.f32 0.0, %v1150
      %v1152 = vpop.f32.mrb[0].mxu0
      %1153 = vdwg.mxu0
      %v1154 = vadd.f32 %v1019, %v1124
      %v1155 = vadd.f32 %v1020, %v1127
      %v1156 = vadd.f32 %v1021, %v1132
      %v1157 = vadd.f32 %v1022, %v1135
      %v1158 = vadd.f32 %v1023, %v1140
      %v1159 = vadd.f32 %v1024, %v1143
      %v1160 = vadd.f32 %v1025, %v1148
      %v1161 = vadd.f32 %v1026, %v1151
      %v1162 = vld [vmem:[%s1 + $0xf0] sm:$0xf]
      %v1163 = vld [vmem:[%s1 + $0xf4] sm:$0xf]
      %v1164 = vld [vmem:[%s1 + $0xf8] sm:$0xf]
      %v1165 = vld [vmem:[%s1 + $0xfc] sm:$0xf]
      %v1166 = vld [vmem:[%s1 + $0x100] sm:$0xf]
      %v1167 = vld [vmem:[%s1 + $0x104] sm:$0xf]
      %v1168 = vld [vmem:[%s1 + $0x108] sm:$0xf]
      %v1169 = vld [vmem:[%s1 + $0x10c] sm:$0xf]
      %v1170 = vld [vmem:[%s1 + $0x110] sm:$0xf]
      %v1171 = vld [vmem:[%s1 + $0x114] sm:$0xf]
      %v1173 = vunpack.c.l.b16 %v188
      %v1174 = vpack.c.b16 %v1173, %v763
      %v1185 = vunpack.c.l.b16 %v1162
      %v1186 = vunpack.c.l.b16 %v1163
      %v1187 = vunpack.c.l.b16 %v1164
      %v1188 = vunpack.c.l.b16 %v1165
      %v1189 = vunpack.c.l.b16 %v1166
      %v1190 = vunpack.c.l.b16 %v1167
      %v1191 = vunpack.c.l.b16 %v1168
      %v1192 = vunpack.c.l.b16 %v1169
      %v1193 = vunpack.c.l.b16 %v1170
      %v1194 = vunpack.c.l.b16 %v1171
      %v1195 = vpack.c.b16 %v1186, %v1185
      %v1196 = vpack.c.b16 %v1188, %v1187
      %v1197 = vpack.c.b16 %v1190, %v1189
      %v1198 = vpack.c.b16 %v1192, %v1191
      %v1199 = vpack.c.b16 %v1194, %v1193
      %v1206 = vsel %vm367, %v1174, 0
      %1208 = vmatprep.subr.bf16.mxu0 0
      %1209 = vmatpush1.bf16.msra.mxu0 %v1195
      %1210 = vmatprep.subr.bf16.mxu0 0
      %1211 = vmatpush1.bf16.msra.mxu0 %v1196
      %1212 = vmatprep.subr.bf16.mxu0 0
      %1213 = vmatpush1.bf16.msra.mxu0 %v1197
      %1214 = vmatprep.subr.bf16.mxu0 0
      %1215 = vmatpush1.bf16.msra.mxu0 %v1198
      %1216 = vmatprep.subr.bf16.mxu0 0
      %1217 = vmatpush1.bf16.msra.mxu0 %v1199
      %1218 = vmatprep.subr.bf16.mxu0 0
      %1219 = vmatpush1.bf16.msra.mxu0 0
      %1220 = vmatprep.subr.bf16.mxu0 0
      %1221 = vmatpush1.bf16.msra.mxu0 0
      %1222 = vmatprep.subr.bf16.mxu0 0
      %1223 = vmatpush1.bf16.msra.mxu0 0
      %1224 = vmatprep.subr.bf16.mxu0 0
      %1225 = vmatpush1.bf16.msra.mxu0 0
      %1226 = vmatprep.subr.bf16.mxu0 0
      %1227 = vmatpush1.bf16.msra.mxu0 0
      %1228 = vmatprep.subr.bf16.mxu0 0
      %1229 = vmatpush1.bf16.msra.mxu0 0
      %1230 = vmatprep.subr.bf16.mxu0 0
      %1231 = vmatpush1.bf16.msra.mxu0 0
      %1232 = vmatprep.subr.bf16.mxu0 0
      %1233 = vmatpush1.bf16.msra.mxu0 0
      %1234 = vmatprep.subr.bf16.mxu0 0
      %1235 = vmatpush1.bf16.msra.mxu0 0
      %1236 = vmatprep.subr.bf16.mxu0 0
      %1237 = vmatpush1.bf16.msra.mxu0 0
      %1238 = vmatprep.subr.bf16.mxu0 0
      %1239 = vmatpush1.bf16.msra.mxu0 0
      %1240 = vmatprep.mubr.bf16.mxu0 0
      %1241 = vmatmul.mubr.bf16.gmra.mrb[0].mxu0 %v499
      %v1242 = vpop.f32.mrb[0].mxu0
      %v1243 = vadd.f32 0.0, %v1242
      %v1244 = vpop.f32.mrb[0].mxu0
      %v1245 = vpop.f32.mrb[0].mxu0
      %v1246 = vadd.f32 0.0, %v1245
      %v1247 = vpop.f32.mrb[0].mxu0
      %1248 = vmatprep.mubr.bf16.mxu0 0
      %1249 = vmatmul.mubr.bf16.gmra.mrb[0].mxu0 %v502
      %v1250 = vpop.f32.mrb[0].mxu0
      %v1251 = vadd.f32 0.0, %v1250
      %v1252 = vpop.f32.mrb[0].mxu0
      %v1253 = vpop.f32.mrb[0].mxu0
      %v1254 = vadd.f32 0.0, %v1253
      %v1255 = vpop.f32.mrb[0].mxu0
      %1256 = vmatprep.mubr.bf16.mxu0 0
      %1257 = vmatmul.mubr.bf16.gmra.mrb[0].mxu0 %v505
      %v1258 = vpop.f32.mrb[0].mxu0
      %v1259 = vadd.f32 0.0, %v1258
      %v1260 = vpop.f32.mrb[0].mxu0
      %v1261 = vpop.f32.mrb[0].mxu0
      %v1262 = vadd.f32 0.0, %v1261
      %v1263 = vpop.f32.mrb[0].mxu0
      %1264 = vmatprep.mubr.bf16.mxu0 0
      %1265 = vmatmul.mubr.bf16.gmra.mrb[0].mxu0 %v1206
      %v1266 = vpop.f32.mrb[0].mxu0
      %v1267 = vadd.f32 0.0, %v1266
      %v1268 = vpop.f32.mrb[0].mxu0
      %v1269 = vpop.f32.mrb[0].mxu0
      %v1270 = vadd.f32 0.0, %v1269
      %v1271 = vpop.f32.mrb[0].mxu0
      %1272 = vdwg.mxu0
      %v1273 = vadd.f32 %v1154, %v1243
      %v1274 = vadd.f32 %v1155, %v1246
      %v1275 = vadd.f32 %v1156, %v1251
      %v1276 = vadd.f32 %v1157, %v1254
      %v1277 = vadd.f32 %v1158, %v1259
      %v1278 = vadd.f32 %v1159, %v1262
      %v1279 = vadd.f32 %v1160, %v1267
      %v1280 = vadd.f32 %v1161, %v1270
      %v1282 = vshrl.u32 %v188, 16
      %v1284 = vrot.slane %v1282, 4
      %v1285 = vshll.u32 %v188, 16
      %v1287 = vrot.slane %v1285, 5
      %v1288 = vor.u32 %v1284, %v1287
      %v1289 = vrot.slane %v1288, 4
      %v1291 = vshll.u32 %v189, 16
      %v1293 = vrot.slane %v1291, 5
      %v1294 = vsel %vm202, %v1289, %v1293
      %v1295 = vld [vmem:[%s1 + $0x118] sm:$0xf]
      %v1296 = vld [vmem:[%s1 + $0x11c] sm:$0xf]
      %v1297 = vld [vmem:[%s1 + $0x120] sm:$0xf]
      %v1298 = vld [vmem:[%s1 + $0x124] sm:$0xf]
      %v1299 = vld [vmem:[%s1 + $0x128] sm:$0xf]
      %v1300 = vld [vmem:[%s1 + $0x12c] sm:$0xf]
      %v1301 = vld [vmem:[%s1 + $0x130] sm:$0xf]
      %v1302 = vld [vmem:[%s1 + $0x134] sm:$0xf]
      %v1303 = vld [vmem:[%s1 + $0x138] sm:$0xf]
      %v1304 = vld [vmem:[%s1 + $0x13c] sm:$0xf]
      %v1305 = vunpack.c.l.b16 %v1294
      %v1306 = vpack.c.b16 %v1305, %v907
      %v1317 = vunpack.c.l.b16 %v1295
      %v1318 = vunpack.c.l.b16 %v1296
      %v1319 = vunpack.c.l.b16 %v1297
      %v1320 = vunpack.c.l.b16 %v1298
      %v1321 = vunpack.c.l.b16 %v1299
      %v1322 = vunpack.c.l.b16 %v1300
      %v1323 = vunpack.c.l.b16 %v1301
      %v1324 = vunpack.c.l.b16 %v1302
      %v1325 = vunpack.c.l.b16 %v1303
      %v1326 = vunpack.c.l.b16 %v1304
      %v1327 = vpack.c.b16 %v1318, %v1317
      %v1328 = vpack.c.b16 %v1320, %v1319
      %v1329 = vpack.c.b16 %v1322, %v1321
      %v1330 = vpack.c.b16 %v1324, %v1323
      %v1331 = vpack.c.b16 %v1326, %v1325
      %v1338 = vsel %vm367, %v1306, 0
      %1340 = vmatprep.subr.bf16.mxu0 0
      %1341 = vmatpush1.bf16.msra.mxu0 %v1327
      %1342 = vmatprep.subr.bf16.mxu0 0
      %1343 = vmatpush1.bf16.msra.mxu0 %v1328
      %1344 = vmatprep.subr.bf16.mxu0 0
      %1345 = vmatpush1.bf16.msra.mxu0 %v1329
      %1346 = vmatprep.subr.bf16.mxu0 0
      %1347 = vmatpush1.bf16.msra.mxu0 %v1330
      %1348 = vmatprep.subr.bf16.mxu0 0
      %1349 = vmatpush1.bf16.msra.mxu0 %v1331
      %1350 = vmatprep.subr.bf16.mxu0 0
      %1351 = vmatpush1.bf16.msra.mxu0 0
      %1352 = vmatprep.subr.bf16.mxu0 0
      %1353 = vmatpush1.bf16.msra.mxu0 0
      %1354 = vmatprep.subr.bf16.mxu0 0
      %1355 = vmatpush1.bf16.msra.mxu0 0
      %1356 = vmatprep.subr.bf16.mxu0 0
      %1357 = vmatpush1.bf16.msra.mxu0 0
      %1358 = vmatprep.subr.bf16.mxu0 0
      %1359 = vmatpush1.bf16.msra.mxu0 0
      %1360 = vmatprep.subr.bf16.mxu0 0
      %1361 = vmatpush1.bf16.msra.mxu0 0
      %1362 = vmatprep.subr.bf16.mxu0 0
      %1363 = vmatpush1.bf16.msra.mxu0 0
      %1364 = vmatprep.subr.bf16.mxu0 0
      %1365 = vmatpush1.bf16.msra.mxu0 0
      %1366 = vmatprep.subr.bf16.mxu0 0
      %1367 = vmatpush1.bf16.msra.mxu0 0
      %1368 = vmatprep.subr.bf16.mxu0 0
      %1369 = vmatpush1.bf16.msra.mxu0 0
      %1370 = vmatprep.subr.bf16.mxu0 0
      %1371 = vmatpush1.bf16.msra.mxu0 0
      %1372 = vmatprep.mubr.bf16.mxu0 0
      %1373 = vmatmul.mubr.bf16.gmra.mrb[0].mxu0 %v372
      %v1374 = vpop.f32.mrb[0].mxu0
      %v1375 = vadd.f32 0.0, %v1374
      %v1376 = vpop.f32.mrb[0].mxu0
      %v1377 = vpop.f32.mrb[0].mxu0
      %v1378 = vadd.f32 0.0, %v1377
      %v1379 = vpop.f32.mrb[0].mxu0
      %1380 = vmatprep.mubr.bf16.mxu0 0
      %1381 = vmatmul.mubr.bf16.gmra.mrb[0].mxu0 %v375
      %v1382 = vpop.f32.mrb[0].mxu0
      %v1383 = vadd.f32 0.0, %v1382
      %v1384 = vpop.f32.mrb[0].mxu0
      %v1385 = vpop.f32.mrb[0].mxu0
      %v1386 = vadd.f32 0.0, %v1385
      %v1387 = vpop.f32.mrb[0].mxu0
      %1388 = vmatprep.mubr.bf16.mxu0 0
      %1389 = vmatmul.mubr.bf16.gmra.mrb[0].mxu0 %v378
      %v1390 = vpop.f32.mrb[0].mxu0
      %v1391 = vadd.f32 0.0, %v1390
      %v1392 = vpop.f32.mrb[0].mxu0
      %v1393 = vpop.f32.mrb[0].mxu0
      %v1394 = vadd.f32 0.0, %v1393
      %v1395 = vpop.f32.mrb[0].mxu0
      %1396 = vmatprep.mubr.bf16.mxu0 0
      %1397 = vmatmul.mubr.bf16.gmra.mrb[0].mxu0 %v1338
      %v1398 = vpop.f32.mrb[0].mxu0
      %v1399 = vadd.f32 0.0, %v1398
      %v1400 = vpop.f32.mrb[0].mxu0
      %v1401 = vpop.f32.mrb[0].mxu0
      %v1402 = vadd.f32 0.0, %v1401
      %v1403 = vpop.f32.mrb[0].mxu0
      %1404 = vdwg.mxu0
      %v1405 = vadd.f32 %v1273, %v1375
      %v1406 = vadd.f32 %v1274, %v1378
      %v1407 = vadd.f32 %v1275, %v1383
      %v1408 = vadd.f32 %v1276, %v1386
      %v1409 = vadd.f32 %v1277, %v1391
      %v1410 = vadd.f32 %v1278, %v1394
      %v1411 = vadd.f32 %v1279, %v1399
      %v1412 = vadd.f32 %v1280, %v1402
      %v1414 = vrot.slane %v188, 5
      %v1415 = vrot.slane %v1414, 4
      %v1416 = vrot.slane %v189, 5
      %v1417 = vsel %vm582, %v1415, %v1416
      %v1418 = vld [vmem:[%s1 + $0x140] sm:$0xf]
      %v1419 = vld [vmem:[%s1 + $0x144] sm:$0xf]
      %v1420 = vld [vmem:[%s1 + $0x148] sm:$0xf]
      %v1421 = vld [vmem:[%s1 + $0x14c] sm:$0xf]
      %v1422 = vld [vmem:[%s1 + $0x150] sm:$0xf]
      %v1423 = vld [vmem:[%s1 + $0x154] sm:$0xf]
      %v1424 = vld [vmem:[%s1 + $0x158] sm:$0xf]
      %v1425 = vld [vmem:[%s1 + $0x15c] sm:$0xf]
      %v1426 = vld [vmem:[%s1 + $0x160] sm:$0xf]
      %v1427 = vld [vmem:[%s1 + $0x164] sm:$0xf]
      %v1428 = vunpack.c.l.b16 %v1417
      %v1429 = vpack.c.b16 %v1428, %v1042
      %v1440 = vunpack.c.l.b16 %v1418
      %v1441 = vunpack.c.l.b16 %v1419
      %v1442 = vunpack.c.l.b16 %v1420
      %v1443 = vunpack.c.l.b16 %v1421
      %v1444 = vunpack.c.l.b16 %v1422
      %v1445 = vunpack.c.l.b16 %v1423
      %v1446 = vunpack.c.l.b16 %v1424
      %v1447 = vunpack.c.l.b16 %v1425
      %v1448 = vunpack.c.l.b16 %v1426
      %v1449 = vunpack.c.l.b16 %v1427
      %v1450 = vpack.c.b16 %v1441, %v1440
      %v1451 = vpack.c.b16 %v1443, %v1442
      %v1452 = vpack.c.b16 %v1445, %v1444
      %v1453 = vpack.c.b16 %v1447, %v1446
      %v1454 = vpack.c.b16 %v1449, %v1448
      %v1461 = vsel %vm367, %v1429, 0
      %1463 = vmatprep.subr.bf16.mxu0 0
      %1464 = vmatpush1.bf16.msra.mxu0 %v1450
      %1465 = vmatprep.subr.bf16.mxu0 0
      %1466 = vmatpush1.bf16.msra.mxu0 %v1451
      %1467 = vmatprep.subr.bf16.mxu0 0
      %1468 = vmatpush1.bf16.msra.mxu0 %v1452
      %1469 = vmatprep.subr.bf16.mxu0 0
      %1470 = vmatpush1.bf16.msra.mxu0 %v1453
      %1471 = vmatprep.subr.bf16.mxu0 0
      %1472 = vmatpush1.bf16.msra.mxu0 %v1454
      %1473 = vmatprep.subr.bf16.mxu0 0
      %1474 = vmatpush1.bf16.msra.mxu0 0
      %1475 = vmatprep.subr.bf16.mxu0 0
      %1476 = vmatpush1.bf16.msra.mxu0 0
      %1477 = vmatprep.subr.bf16.mxu0 0
      %1478 = vmatpush1.bf16.msra.mxu0 0
      %1479 = vmatprep.subr.bf16.mxu0 0
      %1480 = vmatpush1.bf16.msra.mxu0 0
      %1481 = vmatprep.subr.bf16.mxu0 0
      %1482 = vmatpush1.bf16.msra.mxu0 0
      %1483 = vmatprep.subr.bf16.mxu0 0
      %1484 = vmatpush1.bf16.msra.mxu0 0
      %1485 = vmatprep.subr.bf16.mxu0 0
      %1486 = vmatpush1.bf16.msra.mxu0 0
      %1487 = vmatprep.subr.bf16.mxu0 0
      %1488 = vmatpush1.bf16.msra.mxu0 0
      %1489 = vmatprep.subr.bf16.mxu0 0
      %1490 = vmatpush1.bf16.msra.mxu0 0
      %1491 = vmatprep.subr.bf16.mxu0 0
      %1492 = vmatpush1.bf16.msra.mxu0 0
      %1493 = vmatprep.subr.bf16.mxu0 0
      %1494 = vmatpush1.bf16.msra.mxu0 0
      %1495 = vmatprep.mubr.bf16.mxu0 0
      %1496 = vmatmul.mubr.bf16.gmra.mrb[0].mxu0 %v671
      %v1497 = vpop.f32.mrb[0].mxu0
      %v1498 = vadd.f32 0.0, %v1497
      %v1499 = vpop.f32.mrb[0].mxu0
      %v1500 = vpop.f32.mrb[0].mxu0
      %v1501 = vadd.f32 0.0, %v1500
      %v1502 = vpop.f32.mrb[0].mxu0
      %1503 = vmatprep.mubr.bf16.mxu0 0
      %1504 = vmatmul.mubr.bf16.gmra.mrb[0].mxu0 %v674
      %v1505 = vpop.f32.mrb[0].mxu0
      %v1506 = vadd.f32 0.0, %v1505
      %v1507 = vpop.f32.mrb[0].mxu0
      %v1508 = vpop.f32.mrb[0].mxu0
      %v1509 = vadd.f32 0.0, %v1508
      %v1510 = vpop.f32.mrb[0].mxu0
      %1511 = vmatprep.mubr.bf16.mxu0 0
      %1512 = vmatmul.mubr.bf16.gmra.mrb[0].mxu0 %v677
      %v1513 = vpop.f32.mrb[0].mxu0
      %v1514 = vadd.f32 0.0, %v1513
      %v1515 = vpop.f32.mrb[0].mxu0
      %v1516 = vpop.f32.mrb[0].mxu0
      %v1517 = vadd.f32 0.0, %v1516
      %v1518 = vpop.f32.mrb[0].mxu0
      %1519 = vmatprep.mubr.bf16.mxu0 0
      %1520 = vmatmul.mubr.bf16.gmra.mrb[0].mxu0 %v1461
      %v1521 = vpop.f32.mrb[0].mxu0
      %v1522 = vadd.f32 0.0, %v1521
      %v1523 = vpop.f32.mrb[0].mxu0
      %v1524 = vpop.f32.mrb[0].mxu0
      %v1525 = vadd.f32 0.0, %v1524
      %v1526 = vpop.f32.mrb[0].mxu0
      %1527 = vdwg.mxu0
      %v1528 = vadd.f32 %v1405, %v1498
      %v1529 = vadd.f32 %v1406, %v1501
      %v1530 = vadd.f32 %v1407, %v1506
      %v1531 = vadd.f32 %v1408, %v1509
      %v1532 = vadd.f32 %v1409, %v1514
      %v1533 = vadd.f32 %v1410, %v1517
      %v1534 = vadd.f32 %v1411, %v1522
      %v1535 = vadd.f32 %v1412, %v1525
      %v1536 = vpack.c.bf16 %v1529, %v1528
      %v1537 = vpack.c.bf16 %v1531, %v1530
      %v1538 = vpack.c.bf16 %v1533, %v1532
      %v1539 = vpack.c.bf16 %v1535, %v1534
      %v1544 = vunpack.c.l.b16 %v1536
      %v1545 = vunpack.c.h.b16 %v1536
      %v1546 = vunpack.c.l.b16 %v1537
      %v1547 = vunpack.c.h.b16 %v1537
      %v1548 = vunpack.c.l.b16 %v1538
      %v1549 = vunpack.c.h.b16 %v1538
      %v1550 = vunpack.c.l.b16 %v1539
      %v1551 = vunpack.c.h.b16 %v1539
      %v1552 = vpack.c.b16 %v1544, %v1544
      %v1553 = vpack.c.b16 %v1545, %v1545
      %v1554 = vpack.c.b16 %v1546, %v1546
      %v1555 = vpack.c.b16 %v1547, %v1547
      %v1556 = vpack.c.b16 %v1548, %v1548
      %v1557 = vpack.c.b16 %v1549, %v1549
      %v1558 = vpack.c.b16 %v1550, %v1550
      %v1559 = vpack.c.b16 %v1551, %v1551
      %vm1568 = vcmask 125952
      %1569 = vst.msk [vmem:[%s168] sm:$0xf] %vm1568, %v1552
      %1570 = vst.msk [vmem:[%s168 + $0x4] sm:$0xf] %vm1568, %v1553
      %1571 = vst.msk [vmem:[%s168 + $0x8] sm:$0xf] %vm1568, %v1554
      %1572 = vst.msk [vmem:[%s168 + $0xc] sm:$0xf] %vm1568, %v1555
      %1573 = vst.msk [vmem:[%s168 + $0x10] sm:$0xf] %vm1568, %v1556
      %1574 = vst.msk [vmem:[%s168 + $0x14] sm:$0xf] %vm1568, %v1557
      %1575 = vst.msk [vmem:[%s168 + $0x18] sm:$0xf] %vm1568, %v1558
      %1576 = vst.msk [vmem:[%s168 + $0x1c] sm:$0xf] %vm1568, %v1559
      %p1577 = scmp.eq.s32.totalorder %s15, 0
      // Predicated region
      $region29: #{rcca_forward.9} parent=27 // pred_check
        %p1578 = pneg %p1577
      $region30: #{rcca_forward.9} parent=27 // pred_check_branch
        %1580 = sbr.rel (%p1578) target = $region32
      $region31: #{rcca_forward.9} parent=27 // pred_region
        %vm1581 = vcmask 123904
        %1582 = vst.msk [vmem:[#allocation2] sm:$0x3] %vm1581, 0.0
      $region32: #{rcca_forward.9} parent=27 // pred_fallthru
        _
      %v1583 = vunpack.c.l.bf16 %v1536
      %v1584 = vunpack.c.h.bf16 %v1536
      %v1585 = vunpack.c.l.bf16 %v1537
      %v1586 = vunpack.c.h.bf16 %v1537
      %v1587 = vunpack.c.l.bf16 %v1538
      %v1588 = vunpack.c.h.bf16 %v1538
      %v1589 = vunpack.c.l.bf16 %v1539
      %v1590 = vunpack.c.h.bf16 %v1539
      %v1591 = vld [vmem:[#allocation2] sm:$0x1]
      %vm1592 = vcmask 130048
      %v1593 = vsel %vm1592, %v1583, 0.0
      %v1594 = vsel %vm1592, %v1584, 0.0
      %v1595 = vadd.f32 %v1593, %v1594
      %v1596 = vsel %vm1592, %v1585, 0.0
      %v1597 = vadd.f32 %v1595, %v1596
      %v1598 = vsel %vm1592, %v1586, 0.0
      %v1599 = vadd.f32 %v1597, %v1598
      %v1600 = vsel %vm1592, %v1587, 0.0
      %v1601 = vadd.f32 %v1599, %v1600
      %v1602 = vsel %vm1592, %v1588, 0.0
      %v1603 = vadd.f32 %v1601, %v1602
      %v1604 = vsel %vm1592, %v1589, 0.0
      %v1605 = vadd.f32 %v1603, %v1604
      %v1606 = vsel %vm1592, %v1590, 0.0
      %v1607 = vadd.f32 %v1605, %v1606
      %v1608 = vrot.slane %v1607, 4
      %v1609 = vadd.f32 %v1607, %v1608
      %v1610 = vrot.slane %v1609, 2
      %v1611 = vadd.f32 %v1609, %v1610
      %v1612 = vrot.slane %v1611, 1
      %v1613 = vadd.f32 %v1611, %v1612
      %v1614 = vadd.f32 %v1591, %v1613
      %vm1615 = vcmask 122880
      %1616 = vst.msk [vmem:[#allocation2] sm:$0x1] %vm1615, %v1614
      %v1617 = vld [vmem:[#allocation2 + $0x1] sm:$0x1]
      %v1618 = vmul.f32 %v1583, %v1583
      %v1619 = vmul.f32 %v1584, %v1584
      %v1620 = vmul.f32 %v1585, %v1585
      %v1621 = vmul.f32 %v1586, %v1586
      %v1622 = vmul.f32 %v1587, %v1587
      %v1623 = vmul.f32 %v1588, %v1588
      %v1624 = vmul.f32 %v1589, %v1589
      %v1625 = vmul.f32 %v1590, %v1590
      %v1626 = vsel %vm1592, %v1618, 0.0
      %v1627 = vsel %vm1592, %v1619, 0.0
      %v1628 = vadd.f32 %v1626, %v1627
      %v1629 = vsel %vm1592, %v1620, 0.0
      %v1630 = vadd.f32 %v1628, %v1629
      %v1631 = vsel %vm1592, %v1621, 0.0
      %v1632 = vadd.f32 %v1630, %v1631
      %v1633 = vsel %vm1592, %v1622, 0.0
      %v1634 = vadd.f32 %v1632, %v1633
      %v1635 = vsel %vm1592, %v1623, 0.0
      %v1636 = vadd.f32 %v1634, %v1635
      %v1637 = vsel %vm1592, %v1624, 0.0
      %v1638 = vadd.f32 %v1636, %v1637
      %v1639 = vsel %vm1592, %v1625, 0.0
      %v1640 = vadd.f32 %v1638, %v1639
      %v1641 = vrot.slane %v1640, 4
      %v1642 = vadd.f32 %v1640, %v1641
      %v1643 = vrot.slane %v1642, 2
      %v1644 = vadd.f32 %v1642, %v1643
      %v1645 = vrot.slane %v1644, 1
      %v1646 = vadd.f32 %v1644, %v1645
      %v1647 = vadd.f32 %v1617, %v1646
      %1648 = vst.msk [vmem:[#allocation2 + $0x1] sm:$0x1] %vm1615, %v1647
      %p1649 = scmp.eq.s32.totalorder %s15, 1
      // Predicated region
      $region33: #{rcca_forward.9} parent=27 // pred_check
        %p1650 = pneg %p1649
      $region34: #{rcca_forward.9} parent=27 // pred_check_branch
        %1652 = sbr.rel (%p1650) target = $region36
      $region35: #{rcca_forward.9} parent=27 // pred_region
        %v1653 = vld [vmem:[#allocation2] sm:$0x3]
        %vm1654 = vcmask 123904
        %1655 = vst.msk [vmem:[%s3] sm:$0x3] %vm1654, %v1653
      $region36: #{rcca_forward.9} parent=27 // pred_fallthru
        _
      %p1656 = scmp.lt.s32.totalorder %s15, 1
      %s1657 = scalar_select %p1656, %s15, 1
      %s1658 = smul.addr %s1657, 8
      %s1659 = smul.addr %s1658, 4
      %s1660 = scalar_lea.vmem %s2, %s1659
      // Predicated region
      $region37: #{rcca_forward.9} parent=27 // pred_check
        %p1661 = pneg %p80
      $region38: #{rcca_forward.9} parent=27 // pred_check_branch
        %1663 = sbr.rel (%p1661) target = $region40
      $region39: #{rcca_forward.9} parent=27 // pred_region
        _
      $region40: #{rcca_forward.9} parent=27 // pred_fallthru
        _
      // Predicated region
      $region41: #{rcca_forward.9} parent=27 // pred_check
        %p1664 = pneg %p101
      $region42: #{rcca_forward.9} parent=27 // pred_check_branch
        %1666 = sbr.rel (%p1664) target = $region44
      $region43: #{rcca_forward.9} parent=27 // pred_region
        _
      $region44: #{rcca_forward.9} parent=27 // pred_fallthru
        _
      // Predicated region
      $region45: #{rcca_forward.9} parent=27 // pred_check
        %p1667 = pneg %p101
      $region46: #{rcca_forward.9} parent=27 // pred_check_branch
        %1669 = sbr.rel (%p1667) target = $region48
      $region47: #{rcca_forward.9} parent=27 // pred_region
        _
      $region48: #{rcca_forward.9} parent=27 // pred_fallthru
        _
    $region28: #{rcca_forward.9} parent=5 // pred_fallthru
      _
    %p1670 = scmp.le.s32.totalorder 2, %s10
    // Predicated region
    $region49: #{rcca_forward.9} parent=5 // pred_check
      %p1671 = pneg %p1670
    $region50: #{rcca_forward.9} parent=5 // pred_check_branch
      %1673 = sbr.rel (%p1671) target = $region52
    $region51: #{rcca_forward.9} parent=5 // pred_region
      %s1674 = ssub.s32 %s10, 2
      // Predicated region
      $region53: #{rcca_forward.9} parent=51 // pred_check
        %p1675 = pneg %p86
      $region54: #{rcca_forward.9} parent=51 // pred_check_branch
        %1677 = sbr.rel (%p1675) target = $region56
      $region55: #{rcca_forward.9} parent=51 // pred_region
        %p1678 = scmp.lt.s32.totalorder %s16, 1
        %s1679 = scalar_select %p1678, %s16, 1
        %s1680 = smul.addr %s1679, 8
        %s1681 = smul.addr %s1680, 4
        %s1682 = scalar_lea.vmem %s2, %s1681
      $region56: #{rcca_forward.9} parent=51 // pred_fallthru
        _
    $region52: #{rcca_forward.9} parent=5 // pred_fallthru
      _
  $region6: #{rcca_forward.9} parent=0 // loop_footer
    %s14 = sadd.s32 1, %s10
  $region7: #{rcca_forward.9} parent=0 // loop_footer_branch
    %9 = sbr.rel target = $region3
  $region8: #{rcca_forward.9} parent=0 // loop_exit
    _

// kernel: rcca_forward.7
$region0: #{rcca_forward.7}
  #allocation0 [shape = 'u32[]', space=smem, size = 0x4, offset = 0x4, fixed_abs, tag = 'smem constant byte address 0x4 - core index']
  #allocation1 [shape = 'u32[144,128]{1,0:T(1,128)}', space=vmem, size = 0x12000, scoped, tag = 'internal scratch']
  #allocation2 [shape = 'f32[1,1]{1,0:T(1,128)S(1)}', space=vmem, size = 0x200, scoped, tag = 'scoped memory for rcca_forward.7']
  %s0 = inlined_call_operand.vmem [shape: bf16[2,8,8,16], index: 0, kind: input, shape index: {}]
  %s1 = inlined_call_operand.vmem [shape: f32[2,16], index: 1, kind: input, shape index: {}]
  %s2 = inlined_call_operand.vmem [shape: f32[1,16], index: 2, kind: input, shape index: {}]
  %s3 = inlined_call_operand.vmem [shape: f32[1,16], index: 3, kind: input, shape index: {}]
  %s4 = inlined_call_operand.<no memory space> [shape: f32[1,1], index: 4, kind: input, shape index: {}]
  %s5 = inlined_call_operand.vmem [shape: bf16[16,272], index: 5, kind: input, shape index: {}]
  %s6 = inlined_call_operand.vmem [shape: f32[1,272], index: 6, kind: input, shape index: {}]
  %s7 = inlined_call_operand.vmem [shape: f32[2,8,8,16], index: 7, kind: output, shape index: {}]
  %s8 = sld [smem:[#allocation0]]
  $region61: #{rcca_forward.7} parent=0
    _
  %s10 = ssub.s32 1, %s8
  %s11 = scalar_select 0, %s10, %s8
  %v12 = vstv %s4
  %13 = vst [vmem:[#allocation2] sm:$0x1] %v12
  loop: start=0, step=1, limit=4
  $region2: #{rcca_forward.7} parent=0 // loop_pre_header
    _
  $region3: #{rcca_forward.7} parent=0 // loop_header
    %s15 = sphi 0, %s19
    %p16 = scmp.ge.s32.totalorder %s15, 4
    %s25 = sphi 0, %s27
    %s28 = sphi 0, %s25
    %s29 = sphi 0, %s28
    %s45 = sphi 0, %s29
    %s49 = sphi 0, %s49
    %s51 = sphi 0, %s49
    %s52 = sphi 0, %s51
    %s66 = sphi 0, %s52
    %s70 = sphi 0, %s70
    %s72 = sphi 0, %s70
    %s73 = sphi 0, %s72
    %s87 = sphi 0, %s73
    %s91 = sphi 0, %s91
    %s93 = sphi 0, %s91
    %s94 = sphi 0, %s93
    %s108 = sphi 0, %s94
    %s112 = sphi 0, %s112
    %s114 = sphi 0, %s112
    %s115 = sphi 0, %s114
    %s129 = sphi 0, %s115
    %s133 = sphi 0, %s133
    %s135 = sphi 0, %s133
    %s136 = sphi 0, %s135
    %s150 = sphi 0, %s136
    %s154 = sphi 0, %s154
    %s156 = sphi 0, %s154
    %s157 = sphi 0, %s156
    %s171 = sphi 0, %s157
    %s177 = sphi 0, %s179
    %s180 = sphi 0, %s177
    %s181 = sphi 0, %s180
    %s197 = sphi 0, %s181
  $region4: #{rcca_forward.7} parent=0 // loop_header_branch
    %18 = sbr.rel (%p16) target = $region8
  $region5: #{rcca_forward.7} parent=0 // loop_body
    %s20 = ssub.s32 %s15, 1
    %s21 = ssub.s32 %s15, 2
    %s22 = sadd.s32 %s15, 1
    %s23 = ssub.s32 %s15, %s22
    %p24 = scmp.eq.s32.totalorder %s23, 0
    %s26 = sadd.s32 %s25, 1
    %s27 = scalar_select %p24, %s25, %s26
    %p30 = pneg %p24
    %p31 = scmp.eq.s32.totalorder %s15, 1
    %p32 = por %p30, %p31
    %p33 = scmp.ne.s32.totalorder %s25, %s28
    %p34 = scmp.eq.s32.totalorder %s15, 0
    %p35 = por %p33, %p34
    %p36 = scmp.ne.s32.totalorder %s25, %s28
    %p37 = scmp.eq.s32.totalorder %s20, 1
    %p38 = por %p36, %p37
    %p39 = scmp.ne.s32.totalorder %s28, %s29
    %p40 = scmp.eq.s32.totalorder %s20, 0
    %p41 = por %p39, %p40
    %p42 = scmp.ne.s32.totalorder %s28, %s29
    %p43 = scmp.eq.s32.totalorder %s21, 1
    %p44 = por %p42, %p43
    %p46 = scmp.ne.s32.totalorder %s29, %s45
    %p47 = scmp.eq.s32.totalorder %s21, 0
    %p48 = por %p46, %p47
    %s50 = sadd.s32 %s49, 1
    %p53 = scmp.eq.s32.totalorder %s15, 1
    %p54 = scmp.ne.s32.totalorder %s49, %s51
    %p55 = scmp.eq.s32.totalorder %s15, 0
    %p56 = por %p54, %p55
    %p57 = scmp.ne.s32.totalorder %s49, %s51
    %p58 = scmp.eq.s32.totalorder %s20, 1
    %p59 = por %p57, %p58
    %p60 = scmp.ne.s32.totalorder %s51, %s52
    %p61 = scmp.eq.s32.totalorder %s20, 0
    %p62 = por %p60, %p61
    %p63 = scmp.ne.s32.totalorder %s51, %s52
    %p64 = scmp.eq.s32.totalorder %s21, 1
    %p65 = por %p63, %p64
    %p67 = scmp.ne.s32.totalorder %s52, %s66
    %p68 = scmp.eq.s32.totalorder %s21, 0
    %p69 = por %p67, %p68
    %s71 = sadd.s32 %s70, 1
    %p74 = scmp.eq.s32.totalorder %s15, 1
    %p75 = scmp.ne.s32.totalorder %s70, %s72
    %p76 = scmp.eq.s32.totalorder %s15, 0
    %p77 = por %p75, %p76
    %p78 = scmp.ne.s32.totalorder %s70, %s72
    %p79 = scmp.eq.s32.totalorder %s20, 1
    %p80 = por %p78, %p79
    %p81 = scmp.ne.s32.totalorder %s72, %s73
    %p82 = scmp.eq.s32.totalorder %s20, 0
    %p83 = por %p81, %p82
    %p84 = scmp.ne.s32.totalorder %s72, %s73
    %p85 = scmp.eq.s32.totalorder %s21, 1
    %p86 = por %p84, %p85
    %p88 = scmp.ne.s32.totalorder %s73, %s87
    %p89 = scmp.eq.s32.totalorder %s21, 0
    %p90 = por %p88, %p89
    %s92 = sadd.s32 %s91, 1
    %p95 = scmp.eq.s32.totalorder %s15, 1
    %p96 = scmp.ne.s32.totalorder %s91, %s93
    %p97 = scmp.eq.s32.totalorder %s15, 0
    %p98 = por %p96, %p97
    %p99 = scmp.ne.s32.totalorder %s91, %s93
    %p100 = scmp.eq.s32.totalorder %s20, 1
    %p101 = por %p99, %p100
    %p102 = scmp.ne.s32.totalorder %s93, %s94
    %p103 = scmp.eq.s32.totalorder %s20, 0
    %p104 = por %p102, %p103
    %p105 = scmp.ne.s32.totalorder %s93, %s94
    %p106 = scmp.eq.s32.totalorder %s21, 1
    %p107 = por %p105, %p106
    %p109 = scmp.ne.s32.totalorder %s94, %s108
    %p110 = scmp.eq.s32.totalorder %s21, 0
    %p111 = por %p109, %p110
    %s113 = sadd.s32 %s112, 1
    %p116 = scmp.eq.s32.totalorder %s15, 1
    %p117 = scmp.ne.s32.totalorder %s112, %s114
    %p118 = scmp.eq.s32.totalorder %s15, 0
    %p119 = por %p117, %p118
    %p120 = scmp.ne.s32.totalorder %s112, %s114
    %p121 = scmp.eq.s32.totalorder %s20, 1
    %p122 = por %p120, %p121
    %p123 = scmp.ne.s32.totalorder %s114, %s115
    %p124 = scmp.eq.s32.totalorder %s20, 0
    %p125 = por %p123, %p124
    %p126 = scmp.ne.s32.totalorder %s114, %s115
    %p127 = scmp.eq.s32.totalorder %s21, 1
    %p128 = por %p126, %p127
    %p130 = scmp.ne.s32.totalorder %s115, %s129
    %p131 = scmp.eq.s32.totalorder %s21, 0
    %p132 = por %p130, %p131
    %s134 = sadd.s32 %s133, 1
    %p137 = scmp.eq.s32.totalorder %s15, 1
    %p138 = scmp.ne.s32.totalorder %s133, %s135
    %p139 = scmp.eq.s32.totalorder %s15, 0
    %p140 = por %p138, %p139
    %p141 = scmp.ne.s32.totalorder %s133, %s135
    %p142 = scmp.eq.s32.totalorder %s20, 1
    %p143 = por %p141, %p142
    %p144 = scmp.ne.s32.totalorder %s135, %s136
    %p145 = scmp.eq.s32.totalorder %s20, 0
    %p146 = por %p144, %p145
    %p147 = scmp.ne.s32.totalorder %s135, %s136
    %p148 = scmp.eq.s32.totalorder %s21, 1
    %p149 = por %p147, %p148
    %p151 = scmp.ne.s32.totalorder %s136, %s150
    %p152 = scmp.eq.s32.totalorder %s21, 0
    %p153 = por %p151, %p152
    %s155 = sadd.s32 %s154, 1
    %p158 = scmp.eq.s32.totalorder %s15, 1
    %p159 = scmp.ne.s32.totalorder %s154, %s156
    %p160 = scmp.eq.s32.totalorder %s15, 0
    %p161 = por %p159, %p160
    %p162 = scmp.ne.s32.totalorder %s154, %s156
    %p163 = scmp.eq.s32.totalorder %s20, 1
    %p164 = por %p162, %p163
    %p165 = scmp.ne.s32.totalorder %s156, %s157
    %p166 = scmp.eq.s32.totalorder %s20, 0
    %p167 = por %p165, %p166
    %p168 = scmp.ne.s32.totalorder %s156, %s157
    %p169 = scmp.eq.s32.totalorder %s21, 1
    %p170 = por %p168, %p169
    %p172 = scmp.ne.s32.totalorder %s157, %s171
    %p173 = scmp.eq.s32.totalorder %s21, 0
    %p174 = por %p172, %p173
    %s175 = ssub.s32 %s15, %s22
    %p176 = scmp.eq.s32.totalorder %s175, 0
    %s178 = sadd.s32 %s177, 1
    %s179 = scalar_select %p176, %s177, %s178
    %p182 = pneg %p176
    %p183 = scmp.eq.s32.totalorder %s15, 1
    %p184 = por %p182, %p183
    %p185 = scmp.ne.s32.totalorder %s177, %s180
    %p186 = scmp.eq.s32.totalorder %s15, 0
    %p187 = por %p185, %p186
    %p188 = scmp.ne.s32.totalorder %s177, %s180
    %p189 = scmp.eq.s32.totalorder %s20, 1
    %p190 = por %p188, %p189
    %p191 = scmp.ne.s32.totalorder %s180, %s181
    %p192 = scmp.eq.s32.totalorder %s20, 0
    %p193 = por %p191, %p192
    %p194 = scmp.ne.s32.totalorder %s180, %s181
    %p195 = scmp.eq.s32.totalorder %s21, 1
    %p196 = por %p194, %p195
    %p198 = scmp.ne.s32.totalorder %s181, %s197
    %p199 = scmp.eq.s32.totalorder %s21, 0
    %p200 = por %p198, %p199
    %p201 = scmp.le.s32.totalorder 1, %s15
    %p202 = scmp.lt.s32.totalorder %s15, 3
    %p203 = pnand %p201, %p202
    %p204 = pneg %p203
    // Predicated region
    $region9: #{rcca_forward.7} parent=5 // pred_check
      _
    $region10: #{rcca_forward.7} parent=5 // pred_check_branch
      %206 = sbr.rel (%p203) target = $region12
    $region11: #{rcca_forward.7} parent=5 // pred_region
      %s207 = ssub.s32 %s15, 1
      // Predicated region
      $region13: #{rcca_forward.7} parent=11 // pred_check
        %p208 = pneg %p62
      $region14: #{rcca_forward.7} parent=11 // pred_check_branch
        %210 = sbr.rel (%p208) target = $region16
      $region15: #{rcca_forward.7} parent=11 // pred_region
        _
      $region16: #{rcca_forward.7} parent=11 // pred_fallthru
        _
      // Predicated region
      $region17: #{rcca_forward.7} parent=11 // pred_check
        %p211 = pneg %p83
      $region18: #{rcca_forward.7} parent=11 // pred_check_branch
        %213 = sbr.rel (%p211) target = $region20
      $region19: #{rcca_forward.7} parent=11 // pred_region
        _
      $region20: #{rcca_forward.7} parent=11 // pred_fallthru
        _
      // Predicated region
      $region21: #{rcca_forward.7} parent=11 // pred_check
        %p214 = pneg %p104
      $region22: #{rcca_forward.7} parent=11 // pred_check_branch
        %216 = sbr.rel (%p214) target = $region24
      $region23: #{rcca_forward.7} parent=11 // pred_region
        _
      $region24: #{rcca_forward.7} parent=11 // pred_fallthru
        _
      // Predicated region
      $region25: #{rcca_forward.7} parent=11 // pred_check
        %p217 = pneg %p125
      $region26: #{rcca_forward.7} parent=11 // pred_check_branch
        %219 = sbr.rel (%p217) target = $region28
      $region27: #{rcca_forward.7} parent=11 // pred_region
        _
      $region28: #{rcca_forward.7} parent=11 // pred_fallthru
        _
      // Predicated region
      $region29: #{rcca_forward.7} parent=11 // pred_check
        %p220 = pneg %p146
      $region30: #{rcca_forward.7} parent=11 // pred_check_branch
        %222 = sbr.rel (%p220) target = $region32
      $region31: #{rcca_forward.7} parent=11 // pred_region
        _
      $region32: #{rcca_forward.7} parent=11 // pred_fallthru
        _
      // Predicated region
      $region33: #{rcca_forward.7} parent=11 // pred_check
        %p223 = pneg %p167
      $region34: #{rcca_forward.7} parent=11 // pred_check_branch
        %225 = sbr.rel (%p223) target = $region36
      $region35: #{rcca_forward.7} parent=11 // pred_region
        _
      $region36: #{rcca_forward.7} parent=11 // pred_fallthru
        _
    $region12: #{rcca_forward.7} parent=5 // pred_fallthru
      _
    %p226 = scmp.lt.s32.totalorder %s15, 2
    // Predicated region
    $region37: #{rcca_forward.7} parent=5 // pred_check
      %p227 = pneg %p226
    $region38: #{rcca_forward.7} parent=5 // pred_check_branch
      %229 = sbr.rel (%p227) target = $region40
    $region39: #{rcca_forward.7} parent=5 // pred_region
      // Predicated region
      $region41: #{rcca_forward.7} parent=39 // pred_check
        %p230 = pneg %p35
      $region42: #{rcca_forward.7} parent=39 // pred_check_branch
        %232 = sbr.rel (%p230) target = $region44
      $region43: #{rcca_forward.7} parent=39 // pred_region
        %p233 = scmp.lt.s32.totalorder %s15, 1
        %s234 = scalar_select %p233, %s15, 1
        %s235 = smul.addr %s234, 8
        %s236 = smul.addr %s235, 4
        %s237 = scalar_lea.vmem %s0, %s236
      $region44: #{rcca_forward.7} parent=39 // pred_fallthru
        _
    $region40: #{rcca_forward.7} parent=5 // pred_fallthru
      _
    %p238 = scmp.le.s32.totalorder 1, %s15
    %p239 = scmp.lt.s32.totalorder %s15, 3
    %p240 = pnand %p238, %p239
    %p241 = pneg %p240
    // Predicated region
    $region45: #{rcca_forward.7} parent=5 // pred_check
      _
    $region46: #{rcca_forward.7} parent=5 // pred_check_branch
      %243 = sbr.rel (%p240) target = $region48
    $region47: #{rcca_forward.7} parent=5 // pred_region
      %s244 = ssub.s32 %s15, 1
      %p245 = scmp.lt.s32.totalorder %s20, 1
      %s246 = scalar_select %p245, %s20, 1
      %s247 = smul.addr %s246, 8
      %s248 = smul.addr %s247, 4
      %s249 = scalar_lea.vmem %s0, %s248
      %p250 = pneg %p41
      %p251 = pneg %p38
      %p252 = pneg %p62
      %p253 = pneg %p59
      %p254 = pneg %p83
      %p255 = pneg %p80
      %p256 = pneg %p104
      %p257 = pneg %p101
      %p258 = pneg %p125
      %p259 = pneg %p122
      %p260 = pneg %p146
      %p261 = pneg %p143
      %p262 = pneg %p167
      %p263 = pneg %p164
      %p264 = pneg %p193
      %p265 = pneg %p190
      %p266 = scmp.lt.s32.totalorder %s20, 1
      %s267 = scalar_select %p266, %s20, 1
      %s268 = smul.addr %s267, 8
      %s269 = smul.addr %s268, 8
      %s270 = scalar_lea.vmem %s7, %s269
      %p271 = scmp.lt.s32.totalorder %s20, 1
      %s272 = scalar_select %p271, %s20, 1
      %s273 = smul.addr %s272, 8
      %s274 = smul.addr %s273, 4
      %s275 = scalar_lea.vmem %s0, %s274
      %p276 = scmp.lt.s32.totalorder %s20, 1
      %s277 = scalar_select %p276, %s20, 1
      %s278 = smul.addr %s277, 8
      %s279 = smul.addr %s278, 8
      %s280 = scalar_lea.vmem %s7, %s279
      %v282 = vld [vmem:[%s1] sm:$0x1]
      %v283 = vmul.f32 %v282, 0.0078125
      %v284 = vld [vmem:[%s1 + $0x1] sm:$0x1]
      %v285 = vmul.f32 %v284, 0.0078125
      %v286 = vmul.f32 %v283, %v283
      %v287 = vsub.f32 %v285, %v286
      %v288 = vld [vmem:[%s2] sm:$0x1]
      %v289 = vadd.f32 %v287, 1e-05
      %v290 = vrsqrt.pop %v289
      %v291 = vmul.f32 %v288, %v290
      %v292 = vld [vmem:[%s3] sm:$0x1]
      %v293 = vmul.f32 %v283, %v291
      %v294 = vsub.f32 %v292, %v293
      %v295 = vld [vmem:[%s275] sm:$0xf]
      %v296 = vld [vmem:[%s275 + $0x4] sm:$0xf]
      %v297 = vld [vmem:[%s275 + $0x8] sm:$0xf]
      %v298 = vld [vmem:[%s275 + $0xc] sm:$0xf]
      %v299 = vld [vmem:[%s275 + $0x10] sm:$0xf]
      %v300 = vld [vmem:[%s275 + $0x14] sm:$0xf]
      %v301 = vld [vmem:[%s275 + $0x18] sm:$0xf]
      %v302 = vld [vmem:[%s275 + $0x1c] sm:$0xf]
      %v303 = vunpack.c.l.bf16 %v295
      %v304 = vunpack.c.l.bf16 %v296
      %v305 = vunpack.c.l.bf16 %v297
      %v306 = vunpack.c.l.bf16 %v298
      %v307 = vunpack.c.l.bf16 %v299
      %v308 = vunpack.c.l.bf16 %v300
      %v309 = vunpack.c.l.bf16 %v301
      %v310 = vunpack.c.l.bf16 %v302
      %v312 = vlaneseq
      %v313 = vshrl.u32 %v312, 7
      %v314 = vsub.s32 0, %v313
      %v315 = vrot.slane %v291, %v314
      %v317 = vmul.f32 %v303, %v315
      %v318 = vmul.f32 %v304, %v315
      %v319 = vmul.f32 %v305, %v315
      %v320 = vmul.f32 %v306, %v315
      %v321 = vmul.f32 %v307, %v315
      %v322 = vmul.f32 %v308, %v315
      %v323 = vmul.f32 %v309, %v315
      %v324 = vmul.f32 %v310, %v315
      %v326 = vlaneseq
      %v327 = vshrl.u32 %v326, 7
      %v328 = vsub.s32 0, %v327
      %v329 = vrot.slane %v294, %v328
      %v331 = vadd.f32 %v317, %v329
      %v332 = vadd.f32 %v318, %v329
      %v333 = vadd.f32 %v319, %v329
      %v334 = vadd.f32 %v320, %v329
      %v335 = vadd.f32 %v321, %v329
      %v336 = vadd.f32 %v322, %v329
      %v337 = vadd.f32 %v323, %v329
      %v338 = vadd.f32 %v324, %v329
      %v339 = vld [vmem:[#allocation2] sm:$0x1]
      %v340 = vlaneseq
      %v341 = vshrl.u32 %v340, 7
      %v342 = vlaneseq
      %v343 = vand.u32 %v342, 127
      %vm344 = vcmp.eq.s32.totalorder %v341, %v343
      %v345 = vsel %vm344, -1e+30, 0.0
      %v346 = vpack.c.bf16 %v332, %v331
      %v347 = vpack.c.bf16 %v334, %v333
      %v348 = vpack.c.bf16 %v336, %v335
      %v349 = vpack.c.bf16 %v338, %v337
      %v350 = vld [vmem:[%s5] sm:$0xff]
      %v351 = vld [vmem:[%s5 + $0x8] sm:$0xf]
      %v352 = vld [vmem:[%s5 + $0xc] sm:$0xff]
      %v353 = vld [vmem:[%s5 + $0x14] sm:$0xf]
      %v354 = vld [vmem:[%s6] sm:$0x7]
      %v356 = vlaneseq
      %v357 = vshrl.u32 %v356, 7
      %v358 = vsub.s32 0, %v357
      %v359 = vrot.slane %v354, %v358
      %v360 = vlaneseq
      %v361 = vshrl.u32 %v360, 7
      %v362 = vsub.s32 1, %v361
      %v363 = vrot.slane %v354, %v362
      %v364 = vlaneseq
      %v365 = vshrl.u32 %v364, 7
      %v366 = vsub.s32 2, %v365
      %v367 = vrot.slane %v354, %v366
      %v375 = vunpack.c.l.b16 %v350
      %v376 = vunpack.c.h.b16 %v350
      %v377 = vunpack.c.l.b16 %v351
      %v378 = vunpack.c.l.b16 %v352
      %v379 = vunpack.c.h.b16 %v352
      %v380 = vunpack.c.l.b16 %v353
      %v381 = vpack.c.b16 %v378, %v375
      %v382 = vpack.c.b16 %v379, %v376
      %v383 = vpack.c.b16 %v380, %v377
      %vm387 = vcmask 130048
      %v389 = vsel %vm387, %v346, 0
      %v392 = vsel %vm387, %v347, 0
      %v395 = vsel %vm387, %v348, 0
      %v398 = vsel %vm387, %v349, 0
      %400 = vmatprep.subr.bf16.mxu0 %v382
      %401 = vmatpush1.bf16.msra.mxu0 %v381
      %402 = vmatprep.subr.bf16.mxu0 0
      %403 = vmatpush1.bf16.msra.mxu0 0
      %404 = vmatprep.subr.bf16.mxu0 0
      %405 = vmatpush1.bf16.msra.mxu0 0
      %406 = vmatprep.subr.bf16.mxu0 0
      %407 = vmatpush1.bf16.msra.mxu0 0
      %408 = vmatprep.subr.bf16.mxu0 0
      %409 = vmatpush1.bf16.msra.mxu0 0
      %410 = vmatprep.subr.bf16.mxu0 0
      %411 = vmatpush1.bf16.msra.mxu0 0
      %412 = vmatprep.subr.bf16.mxu0 0
      %413 = vmatpush1.bf16.msra.mxu0 0
      %414 = vmatprep.subr.bf16.mxu0 0
      %415 = vmatpush1.bf16.msra.mxu0 0
      %416 = vmatprep.subr.bf16.mxu0 0
      %417 = vmatpush1.bf16.msra.mxu0 0
      %418 = vmatprep.subr.bf16.mxu0 0
      %419 = vmatpush1.bf16.msra.mxu0 0
      %420 = vmatprep.subr.bf16.mxu0 0
      %421 = vmatpush1.bf16.msra.mxu0 0
      %422 = vmatprep.subr.bf16.mxu0 0
      %423 = vmatpush1.bf16.msra.mxu0 0
      %424 = vmatprep.subr.bf16.mxu0 0
      %425 = vmatpush1.bf16.msra.mxu0 0
      %426 = vmatprep.subr.bf16.mxu0 0
      %427 = vmatpush1.bf16.msra.mxu0 0
      %428 = vmatprep.subr.bf16.mxu0 0
      %429 = vmatpush1.bf16.msra.mxu0 0
      %430 = vmatprep.subr.bf16.mxu0 0
      %431 = vmatpush1.bf16.msra.mxu0 0
      %432 = vmatprep.mubr.bf16.mxu0 0
      %433 = vmatmul.mubr.bf16.gmra.mrb[0].mxu0 %v389
      %v434 = vpop.f32.mrb[0].mxu0
      %v435 = vadd.f32 %v359, %v434
      %v436 = vpop.f32.mrb[0].mxu0
      %v437 = vadd.f32 %v363, %v436
      %v438 = vpop.f32.mrb[0].mxu0
      %v439 = vadd.f32 %v359, %v438
      %v440 = vpop.f32.mrb[0].mxu0
      %v441 = vadd.f32 %v363, %v440
      %442 = vmatprep.mubr.bf16.mxu0 0
      %443 = vmatmul.mubr.bf16.gmra.mrb[0].mxu0 %v392
      %v444 = vpop.f32.mrb[0].mxu0
      %v445 = vadd.f32 %v359, %v444
      %v446 = vpop.f32.mrb[0].mxu0
      %v447 = vadd.f32 %v363, %v446
      %v448 = vpop.f32.mrb[0].mxu0
      %v449 = vadd.f32 %v359, %v448
      %v450 = vpop.f32.mrb[0].mxu0
      %v451 = vadd.f32 %v363, %v450
      %452 = vmatprep.mubr.bf16.mxu0 0
      %453 = vmatmul.mubr.bf16.gmra.mrb[0].mxu0 %v395
      %v454 = vpop.f32.mrb[0].mxu0
      %v455 = vadd.f32 %v359, %v454
      %v456 = vpop.f32.mrb[0].mxu0
      %v457 = vadd.f32 %v363, %v456
      %v458 = vpop.f32.mrb[0].mxu0
      %v459 = vadd.f32 %v359, %v458
      %v460 = vpop.f32.mrb[0].mxu0
      %v461 = vadd.f32 %v363, %v460
      %462 = vmatprep.mubr.bf16.mxu0 0
      %463 = vmatmul.mubr.bf16.gmra.mrb[0].mxu0 %v398
      %v464 = vpop.f32.mrb[0].mxu0
      %v465 = vadd.f32 %v359, %v464
      %v466 = vpop.f32.mrb[0].mxu0
      %v467 = vadd.f32 %v363, %v466
      %v468 = vpop.f32.mrb[0].mxu0
      %v469 = vadd.f32 %v359, %v468
      %v470 = vpop.f32.mrb[0].mxu0
      %v471 = vadd.f32 %v363, %v470
      %472 = vdwg.mxu0
      %473 = vmatprep.subr.bf16.mxu0 0
      %474 = vmatpush1.bf16.msra.mxu0 %v383
      %475 = vmatprep.subr.bf16.mxu0 0
      %476 = vmatpush1.bf16.msra.mxu0 0
      %477 = vmatprep.subr.bf16.mxu0 0
      %478 = vmatpush1.bf16.msra.mxu0 0
      %479 = vmatprep.subr.bf16.mxu0 0
      %480 = vmatpush1.bf16.msra.mxu0 0
      %481 = vmatprep.subr.bf16.mxu0 0
      %482 = vmatpush1.bf16.msra.mxu0 0
      %483 = vmatprep.subr.bf16.mxu0 0
      %484 = vmatpush1.bf16.msra.mxu0 0
      %485 = vmatprep.subr.bf16.mxu0 0
      %486 = vmatpush1.bf16.msra.mxu0 0
      %487 = vmatprep.subr.bf16.mxu0 0
      %488 = vmatpush1.bf16.msra.mxu0 0
      %489 = vmatprep.subr.bf16.mxu0 0
      %490 = vmatpush1.bf16.msra.mxu0 0
      %491 = vmatprep.subr.bf16.mxu0 0
      %492 = vmatpush1.bf16.msra.mxu0 0
      %493 = vmatprep.subr.bf16.mxu0 0
      %494 = vmatpush1.bf16.msra.mxu0 0
      %495 = vmatprep.subr.bf16.mxu0 0
      %496 = vmatpush1.bf16.msra.mxu0 0
      %497 = vmatprep.subr.bf16.mxu0 0
      %498 = vmatpush1.bf16.msra.mxu0 0
      %499 = vmatprep.subr.bf16.mxu0 0
      %500 = vmatpush1.bf16.msra.mxu0 0
      %501 = vmatprep.subr.bf16.mxu0 0
      %502 = vmatpush1.bf16.msra.mxu0 0
      %503 = vmatprep.subr.bf16.mxu0 0
      %504 = vmatpush1.bf16.msra.mxu0 0
      %505 = vmatprep.mubr.bf16.mxu0 0
      %506 = vmatmul.mubr.bf16.gmra.mrb[0].mxu0 %v389
      %v507 = vpop.f32.mrb[0].mxu0
      %v508 = vadd.f32 %v367, %v507
      %v509 = vpop.f32.mrb[0].mxu0
      %v510 = vpop.f32.mrb[0].mxu0
      %v511 = vadd.f32 %v367, %v510
      %v512 = vpop.f32.mrb[0].mxu0
      %513 = vmatprep.mubr.bf16.mxu0 0
      %514 = vmatmul.mubr.bf16.gmra.mrb[0].mxu0 %v392
      %v515 = vpop.f32.mrb[0].mxu0
      %v516 = vadd.f32 %v367, %v515
      %v517 = vpop.f32.mrb[0].mxu0
      %v518 = vpop.f32.mrb[0].mxu0
      %v519 = vadd.f32 %v367, %v518
      %v520 = vpop.f32.mrb[0].mxu0
      %521 = vmatprep.mubr.bf16.mxu0 0
      %522 = vmatmul.mubr.bf16.gmra.mrb[0].mxu0 %v395
      %v523 = vpop.f32.mrb[0].mxu0
      %v524 = vadd.f32 %v367, %v523
      %v525 = vpop.f32.mrb[0].mxu0
      %v526 = vpop.f32.mrb[0].mxu0
      %v527 = vadd.f32 %v367, %v526
      %v528 = vpop.f32.mrb[0].mxu0
      %529 = vmatprep.mubr.bf16.mxu0 0
      %530 = vmatmul.mubr.bf16.gmra.mrb[0].mxu0 %v398
      %v531 = vpop.f32.mrb[0].mxu0
      %v532 = vadd.f32 %v367, %v531
      %v533 = vpop.f32.mrb[0].mxu0
      %v534 = vpop.f32.mrb[0].mxu0
      %v535 = vadd.f32 %v367, %v534
      %v536 = vpop.f32.mrb[0].mxu0
      %537 = vdwg.mxu0
      %v538 = vpack.c.bf16 %v435, %v435
      %v539 = vpack.c.bf16 %v439, %v439
      %v540 = vpack.c.bf16 %v445, %v445
      %v541 = vpack.c.bf16 %v449, %v449
      %v542 = vpack.c.bf16 %v455, %v455
      %v543 = vpack.c.bf16 %v459, %v459
      %v544 = vpack.c.bf16 %v465, %v465
      %v545 = vpack.c.bf16 %v469, %v469
      %v546 = vpack.c.bf16 %v437, %v437
      %v547 = vpack.c.bf16 %v441, %v441
      %v548 = vpack.c.bf16 %v447, %v447
      %v549 = vpack.c.bf16 %v451, %v451
      %v550 = vpack.c.bf16 %v457, %v457
      %v551 = vpack.c.bf16 %v461, %v461
      %v552 = vpack.c.bf16 %v467, %v467
      %v553 = vpack.c.bf16 %v471, %v471
      %v554 = vpack.c.bf16 %v508, %v508
      %v555 = vpack.c.bf16 %v511, %v511
      %v556 = vpack.c.bf16 %v516, %v516
      %v557 = vpack.c.bf16 %v519, %v519
      %v558 = vpack.c.bf16 %v524, %v524
      %v559 = vpack.c.bf16 %v527, %v527
      %v560 = vpack.c.bf16 %v532, %v532
      %v561 = vpack.c.bf16 %v535, %v535
      %v562 = vcombine.low %v538, %v542
      %v564 = vunpack.c.l.s4 1983009808
      %v565 = vunpack.c.0.s8 %v564
      %v566 = vlaneseq
      %v567 = vshrl.u32 %v566, 7
      %v568 = vsub.s32 %v565, %v567
      %v569 = vrot.slane %v562, %v568
      %v570 = vcombine.low %v540, %v544
      %v572 = vunpack.c.l.s4 1983009808
      %v573 = vunpack.c.0.s8 %v572
      %v574 = vlaneseq
      %v575 = vshrl.u32 %v574, 7
      %v576 = vsub.s32 %v573, %v575
      %v577 = vrot.slane %v570, %v576
      %v578 = vcombine.low %v569, %v577
      %v579 = vcombine.high %v569, %v577
      %v581 = vunpack.c.l.s4 1934713408
      %v582 = vunpack.c.0.s8 %v581
      %v583 = vlaneseq
      %v584 = vshrl.u32 %v583, 7
      %v585 = vsub.s32 %v582, %v584
      %v586 = vrot.slane %v578, %v585
      %v588 = vunpack.c.l.s4 1934713408
      %v589 = vunpack.c.0.s8 %v588
      %v590 = vlaneseq
      %v591 = vshrl.u32 %v590, 7
      %v592 = vsub.s32 %v589, %v591
      %v593 = vrot.slane %v579, %v592
      %v594 = vcombine.high %v586, 0
      %v595 = vcombine.high %v593, 0
      %v596 = vcombine.low %v539, %v543
      %v598 = vunpack.c.l.s4 1983009808
      %v599 = vunpack.c.0.s8 %v598
      %v600 = vlaneseq
      %v601 = vshrl.u32 %v600, 7
      %v602 = vsub.s32 %v599, %v601
      %v603 = vrot.slane %v596, %v602
      %v604 = vcombine.low %v541, %v545
      %v606 = vunpack.c.l.s4 1983009808
      %v607 = vunpack.c.0.s8 %v606
      %v608 = vlaneseq
      %v609 = vshrl.u32 %v608, 7
      %v610 = vsub.s32 %v607, %v609
      %v611 = vrot.slane %v604, %v610
      %v612 = vcombine.low %v603, %v611
      %v613 = vcombine.high %v603, %v611
      %v615 = vunpack.c.l.s4 1934713408
      %v616 = vunpack.c.0.s8 %v615
      %v617 = vlaneseq
      %v618 = vshrl.u32 %v617, 7
      %v619 = vsub.s32 %v616, %v618
      %v620 = vrot.slane %v612, %v619
      %v622 = vunpack.c.l.s4 1934713408
      %v623 = vunpack.c.0.s8 %v622
      %v624 = vlaneseq
      %v625 = vshrl.u32 %v624, 7
      %v626 = vsub.s32 %v623, %v625
      %v627 = vrot.slane %v613, %v626
      %v628 = vcombine.high %v620, 0
      %v629 = vcombine.high %v627, 0
      %v632 = vpack.i.b16 %v620, %v586
      %v634 = vshrl.u32 %v586, 16
      %v635 = vshrl.u32 %v620, 16
      %v636 = vpack.i.b16 %v635, %v634
      %v640 = vpack.i.b16 %v628, %v594
      %v642 = vshrl.u32 %v594, 16
      %v643 = vshrl.u32 %v628, 16
      %v644 = vpack.i.b16 %v643, %v642
      %v648 = vpack.i.b16 %v627, %v593
      %v650 = vshrl.u32 %v593, 16
      %v651 = vshrl.u32 %v627, 16
      %v652 = vpack.i.b16 %v651, %v650
      %v656 = vpack.i.b16 %v629, %v595
      %v658 = vshrl.u32 %v595, 16
      %v659 = vshrl.u32 %v629, 16
      %v660 = vpack.i.b16 %v659, %v658
      %v662 = vcombine.low %v546, %v550
      %v664 = vunpack.c.l.s4 1983009808
      %v665 = vunpack.c.0.s8 %v664
      %v666 = vlaneseq
      %v667 = vshrl.u32 %v666, 7
      %v668 = vsub.s32 %v665, %v667
      %v669 = vrot.slane %v662, %v668
      %v670 = vcombine.low %v548, %v552
      %v672 = vunpack.c.l.s4 1983009808
      %v673 = vunpack.c.0.s8 %v672
      %v674 = vlaneseq
      %v675 = vshrl.u32 %v674, 7
      %v676 = vsub.s32 %v673, %v675
      %v677 = vrot.slane %v670, %v676
      %v678 = vcombine.low %v669, %v677
      %v679 = vcombine.high %v669, %v677
      %v681 = vunpack.c.l.s4 1934713408
      %v682 = vunpack.c.0.s8 %v681
      %v683 = vlaneseq
      %v684 = vshrl.u32 %v683, 7
      %v685 = vsub.s32 %v682, %v684
      %v686 = vrot.slane %v678, %v685
      %v688 = vunpack.c.l.s4 1934713408
      %v689 = vunpack.c.0.s8 %v688
      %v690 = vlaneseq
      %v691 = vshrl.u32 %v690, 7
      %v692 = vsub.s32 %v689, %v691
      %v693 = vrot.slane %v679, %v692
      %v694 = vcombine.high %v686, 0
      %v695 = vcombine.high %v693, 0
      %v696 = vcombine.low %v547, %v551
      %v698 = vunpack.c.l.s4 1983009808
      %v699 = vunpack.c.0.s8 %v698
      %v700 = vlaneseq
      %v701 = vshrl.u32 %v700, 7
      %v702 = vsub.s32 %v699, %v701
      %v703 = vrot.slane %v696, %v702
      %v704 = vcombine.low %v549, %v553
      %v706 = vunpack.c.l.s4 1983009808
      %v707 = vunpack.c.0.s8 %v706
      %v708 = vlaneseq
      %v709 = vshrl.u32 %v708, 7
      %v710 = vsub.s32 %v707, %v709
      %v711 = vrot.slane %v704, %v710
      %v712 = vcombine.low %v703, %v711
      %v713 = vcombine.high %v703, %v711
      %v715 = vunpack.c.l.s4 1934713408
      %v716 = vunpack.c.0.s8 %v715
      %v717 = vlaneseq
      %v718 = vshrl.u32 %v717, 7
      %v719 = vsub.s32 %v716, %v718
      %v720 = vrot.slane %v712, %v719
      %v722 = vunpack.c.l.s4 1934713408
      %v723 = vunpack.c.0.s8 %v722
      %v724 = vlaneseq
      %v725 = vshrl.u32 %v724, 7
      %v726 = vsub.s32 %v723, %v725
      %v727 = vrot.slane %v713, %v726
      %v728 = vcombine.high %v720, 0
      %v729 = vcombine.high %v727, 0
      %v732 = vpack.i.b16 %v720, %v686
      %v734 = vshrl.u32 %v686, 16
      %v735 = vshrl.u32 %v720, 16
      %v736 = vpack.i.b16 %v735, %v734
      %v740 = vpack.i.b16 %v728, %v694
      %v742 = vshrl.u32 %v694, 16
      %v743 = vshrl.u32 %v728, 16
      %v744 = vpack.i.b16 %v743, %v742
      %v748 = vpack.i.b16 %v727, %v693
      %v750 = vshrl.u32 %v693, 16
      %v751 = vshrl.u32 %v727, 16
      %v752 = vpack.i.b16 %v751, %v750
      %v756 = vpack.i.b16 %v729, %v695
      %v758 = vshrl.u32 %v695, 16
      %v759 = vshrl.u32 %v729, 16
      %v760 = vpack.i.b16 %v759, %v758
      %v762 = vcombine.low %v554, %v558
      %v764 = vunpack.c.l.s4 1983009808
      %v765 = vunpack.c.0.s8 %v764
      %v766 = vlaneseq
      %v767 = vshrl.u32 %v766, 7
      %v768 = vsub.s32 %v765, %v767
      %v769 = vrot.slane %v762, %v768
      %v770 = vcombine.low %v556, %v560
      %v772 = vunpack.c.l.s4 1983009808
      %v773 = vunpack.c.0.s8 %v772
      %v774 = vlaneseq
      %v775 = vshrl.u32 %v774, 7
      %v776 = vsub.s32 %v773, %v775
      %v777 = vrot.slane %v770, %v776
      %v778 = vcombine.low %v769, %v777
      %v779 = vcombine.high %v769, %v777
      %v781 = vunpack.c.l.s4 1934713408
      %v782 = vunpack.c.0.s8 %v781
      %v783 = vlaneseq
      %v784 = vshrl.u32 %v783, 7
      %v785 = vsub.s32 %v782, %v784
      %v786 = vrot.slane %v778, %v785
      %v788 = vunpack.c.l.s4 1934713408
      %v789 = vunpack.c.0.s8 %v788
      %v790 = vlaneseq
      %v791 = vshrl.u32 %v790, 7
      %v792 = vsub.s32 %v789, %v791
      %v793 = vrot.slane %v779, %v792
      %v794 = vcombine.high %v786, 0
      %v795 = vcombine.high %v793, 0
      %v796 = vcombine.low %v555, %v559
      %v798 = vunpack.c.l.s4 1983009808
      %v799 = vunpack.c.0.s8 %v798
      %v800 = vlaneseq
      %v801 = vshrl.u32 %v800, 7
      %v802 = vsub.s32 %v799, %v801
      %v803 = vrot.slane %v796, %v802
      %v804 = vcombine.low %v557, %v561
      %v806 = vunpack.c.l.s4 1983009808
      %v807 = vunpack.c.0.s8 %v806
      %v808 = vlaneseq
      %v809 = vshrl.u32 %v808, 7
      %v810 = vsub.s32 %v807, %v809
      %v811 = vrot.slane %v804, %v810
      %v812 = vcombine.low %v803, %v811
      %v813 = vcombine.high %v803, %v811
      %v815 = vunpack.c.l.s4 1934713408
      %v816 = vunpack.c.0.s8 %v815
      %v817 = vlaneseq
      %v818 = vshrl.u32 %v817, 7
      %v819 = vsub.s32 %v816, %v818
      %v820 = vrot.slane %v812, %v819
      %v822 = vunpack.c.l.s4 1934713408
      %v823 = vunpack.c.0.s8 %v822
      %v824 = vlaneseq
      %v825 = vshrl.u32 %v824, 7
      %v826 = vsub.s32 %v823, %v825
      %v827 = vrot.slane %v813, %v826
      %v828 = vcombine.high %v820, 0
      %v829 = vcombine.high %v827, 0
      %v832 = vpack.i.b16 %v820, %v786
      %v833 = vshrl.u32 %v786, 16
      %v834 = vshrl.u32 %v820, 16
      %v835 = vpack.i.b16 %v834, %v833
      %v838 = vpack.i.b16 %v828, %v794
      %v839 = vshrl.u32 %v794, 16
      %v840 = vshrl.u32 %v828, 16
      %v841 = vpack.i.b16 %v840, %v839
      %v844 = vpack.i.b16 %v827, %v793
      %v845 = vshrl.u32 %v793, 16
      %v846 = vshrl.u32 %v827, 16
      %v847 = vpack.i.b16 %v846, %v845
      %v850 = vpack.i.b16 %v829, %v795
      %v851 = vshrl.u32 %v795, 16
      %v852 = vshrl.u32 %v829, 16
      %v853 = vpack.i.b16 %v852, %v851
      %854 = vmatprep.subr.bf16.mxu0 0
      %855 = vmatpush1.bf16.xpose.msra.mxu0 %v546
      %856 = vmatprep.subr.bf16.mxu0 0
      %857 = vmatpush1.bf16.xpose.msra.mxu0 0
      %858 = vmatprep.subr.bf16.mxu0 0
      %859 = vmatpush1.bf16.xpose.msra.mxu0 0
      %860 = vmatprep.subr.bf16.mxu0 0
      %861 = vmatpush1.bf16.xpose.msra.mxu0 0
      %862 = vmatprep.subr.bf16.mxu0 0
      %863 = vmatpush1.bf16.xpose.msra.mxu0 0
      %864 = vmatprep.subr.bf16.mxu0 0
      %865 = vmatpush1.bf16.xpose.msra.mxu0 0
      %866 = vmatprep.subr.bf16.mxu0 0
      %867 = vmatpush1.bf16.xpose.msra.mxu0 0
      %868 = vmatprep.subr.bf16.mxu0 0
      %869 = vmatpush1.bf16.xpose.msra.mxu0 0
      %870 = vmatprep.subr.bf16.mxu0 0
      %871 = vmatpush1.bf16.xpose.msra.mxu0 0
      %872 = vmatprep.subr.bf16.mxu0 0
      %873 = vmatpush1.bf16.xpose.msra.mxu0 0
      %874 = vmatprep.subr.bf16.mxu0 0
      %875 = vmatpush1.bf16.xpose.msra.mxu0 0
      %876 = vmatprep.subr.bf16.mxu0 0
      %877 = vmatpush1.bf16.xpose.msra.mxu0 0
      %878 = vmatprep.subr.bf16.mxu0 0
      %879 = vmatpush1.bf16.xpose.msra.mxu0 0
      %880 = vmatprep.subr.bf16.mxu0 0
      %881 = vmatpush1.bf16.xpose.msra.mxu0 0
      %882 = vmatprep.subr.bf16.mxu0 0
      %883 = vmatpush1.bf16.xpose.msra.mxu0 0
      %884 = vmatprep.subr.bf16.mxu0 0
      %885 = vmatpush1.bf16.xpose.msra.mxu0 0
      %886 = vmatprep.mubr.bf16.mxu0 0
      %887 = vmatmul.mubr.bf16.gmra.mrb[0].mxu0 %v538
      %v888 = vpop.f32.mrb[0].mxu0
      %v889 = vadd.f32 0.0, %v888
      %v890 = vpop.f32.mrb[0].mxu0
      %v891 = vpop.f32.mrb[0].mxu0
      %v892 = vpop.f32.mrb[0].mxu0
      %893 = vdwg.mxu0
      %894 = vmatprep.subr.bf16.mxu0 0
      %895 = vmatpush1.bf16.xpose.msra.mxu0 %v547
      %896 = vmatprep.subr.bf16.mxu0 0
      %897 = vmatpush1.bf16.xpose.msra.mxu0 0
      %898 = vmatprep.subr.bf16.mxu0 0
      %899 = vmatpush1.bf16.xpose.msra.mxu0 0
      %900 = vmatprep.subr.bf16.mxu0 0
      %901 = vmatpush1.bf16.xpose.msra.mxu0 0
      %902 = vmatprep.subr.bf16.mxu0 0
      %903 = vmatpush1.bf16.xpose.msra.mxu0 0
      %904 = vmatprep.subr.bf16.mxu0 0
      %905 = vmatpush1.bf16.xpose.msra.mxu0 0
      %906 = vmatprep.subr.bf16.mxu0 0
      %907 = vmatpush1.bf16.xpose.msra.mxu0 0
      %908 = vmatprep.subr.bf16.mxu0 0
      %909 = vmatpush1.bf16.xpose.msra.mxu0 0
      %910 = vmatprep.subr.bf16.mxu0 0
      %911 = vmatpush1.bf16.xpose.msra.mxu0 0
      %912 = vmatprep.subr.bf16.mxu0 0
      %913 = vmatpush1.bf16.xpose.msra.mxu0 0
      %914 = vmatprep.subr.bf16.mxu0 0
      %915 = vmatpush1.bf16.xpose.msra.mxu0 0
      %916 = vmatprep.subr.bf16.mxu0 0
      %917 = vmatpush1.bf16.xpose.msra.mxu0 0
      %918 = vmatprep.subr.bf16.mxu0 0
      %919 = vmatpush1.bf16.xpose.msra.mxu0 0
      %920 = vmatprep.subr.bf16.mxu0 0
      %921 = vmatpush1.bf16.xpose.msra.mxu0 0
      %922 = vmatprep.subr.bf16.mxu0 0
      %923 = vmatpush1.bf16.xpose.msra.mxu0 0
      %924 = vmatprep.subr.bf16.mxu0 0
      %925 = vmatpush1.bf16.xpose.msra.mxu0 0
      %926 = vmatprep.mubr.bf16.mxu0 0
      %927 = vmatmul.mubr.bf16.gmra.mrb[0].mxu0 %v539
      %v928 = vpop.f32.mrb[0].mxu0
      %v929 = vadd.f32 0.0, %v928
      %v930 = vpop.f32.mrb[0].mxu0
      %v931 = vpop.f32.mrb[0].mxu0
      %v932 = vpop.f32.mrb[0].mxu0
      %933 = vdwg.mxu0
      %934 = vmatprep.subr.bf16.mxu0 0
      %935 = vmatpush1.bf16.xpose.msra.mxu0 %v548
      %936 = vmatprep.subr.bf16.mxu0 0
      %937 = vmatpush1.bf16.xpose.msra.mxu0 0
      %938 = vmatprep.subr.bf16.mxu0 0
      %939 = vmatpush1.bf16.xpose.msra.mxu0 0
      %940 = vmatprep.subr.bf16.mxu0 0
      %941 = vmatpush1.bf16.xpose.msra.mxu0 0
      %942 = vmatprep.subr.bf16.mxu0 0
      %943 = vmatpush1.bf16.xpose.msra.mxu0 0
      %944 = vmatprep.subr.bf16.mxu0 0
      %945 = vmatpush1.bf16.xpose.msra.mxu0 0
      %946 = vmatprep.subr.bf16.mxu0 0
      %947 = vmatpush1.bf16.xpose.msra.mxu0 0
      %948 = vmatprep.subr.bf16.mxu0 0
      %949 = vmatpush1.bf16.xpose.msra.mxu0 0
      %950 = vmatprep.subr.bf16.mxu0 0
      %951 = vmatpush1.bf16.xpose.msra.mxu0 0
      %952 = vmatprep.subr.bf16.mxu0 0
      %953 = vmatpush1.bf16.xpose.msra.mxu0 0
      %954 = vmatprep.subr.bf16.mxu0 0
      %955 = vmatpush1.bf16.xpose.msra.mxu0 0
      %956 = vmatprep.subr.bf16.mxu0 0
      %957 = vmatpush1.bf16.xpose.msra.mxu0 0
      %958 = vmatprep.subr.bf16.mxu0 0
      %959 = vmatpush1.bf16.xpose.msra.mxu0 0
      %960 = vmatprep.subr.bf16.mxu0 0
      %961 = vmatpush1.bf16.xpose.msra.mxu0 0
      %962 = vmatprep.subr.bf16.mxu0 0
      %963 = vmatpush1.bf16.xpose.msra.mxu0 0
      %964 = vmatprep.subr.bf16.mxu0 0
      %965 = vmatpush1.bf16.xpose.msra.mxu0 0
      %966 = vmatprep.mubr.bf16.mxu0 0
      %967 = vmatmul.mubr.bf16.gmra.mrb[0].mxu0 %v540
      %v968 = vpop.f32.mrb[0].mxu0
      %v969 = vadd.f32 0.0, %v968
      %v970 = vpop.f32.mrb[0].mxu0
      %v971 = vpop.f32.mrb[0].mxu0
      %v972 = vpop.f32.mrb[0].mxu0
      %973 = vdwg.mxu0
      %974 = vmatprep.subr.bf16.mxu0 0
      %975 = vmatpush1.bf16.xpose.msra.mxu0 %v549
      %976 = vmatprep.subr.bf16.mxu0 0
      %977 = vmatpush1.bf16.xpose.msra.mxu0 0
      %978 = vmatprep.subr.bf16.mxu0 0
      %979 = vmatpush1.bf16.xpose.msra.mxu0 0
      %980 = vmatprep.subr.bf16.mxu0 0
      %981 = vmatpush1.bf16.xpose.msra.mxu0 0
      %982 = vmatprep.subr.bf16.mxu0 0
      %983 = vmatpush1.bf16.xpose.msra.mxu0 0
      %984 = vmatprep.subr.bf16.mxu0 0
      %985 = vmatpush1.bf16.xpose.msra.mxu0 0
      %986 = vmatprep.subr.bf16.mxu0 0
      %987 = vmatpush1.bf16.xpose.msra.mxu0 0
      %988 = vmatprep.subr.bf16.mxu0 0
      %989 = vmatpush1.bf16.xpose.msra.mxu0 0
      %990 = vmatprep.subr.bf16.mxu0 0
      %991 = vmatpush1.bf16.xpose.msra.mxu0 0
      %992 = vmatprep.subr.bf16.mxu0 0
      %993 = vmatpush1.bf16.xpose.msra.mxu0 0
      %994 = vmatprep.subr.bf16.mxu0 0
      %995 = vmatpush1.bf16.xpose.msra.mxu0 0
      %996 = vmatprep.subr.bf16.mxu0 0
      %997 = vmatpush1.bf16.xpose.msra.mxu0 0
      %998 = vmatprep.subr.bf16.mxu0 0
      %999 = vmatpush1.bf16.xpose.msra.mxu0 0
      %1000 = vmatprep.subr.bf16.mxu0 0
      %1001 = vmatpush1.bf16.xpose.msra.mxu0 0
      %1002 = vmatprep.subr.bf16.mxu0 0
      %1003 = vmatpush1.bf16.xpose.msra.mxu0 0
      %1004 = vmatprep.subr.bf16.mxu0 0
      %1005 = vmatpush1.bf16.xpose.msra.mxu0 0
      %1006 = vmatprep.mubr.bf16.mxu0 0
      %1007 = vmatmul.mubr.bf16.gmra.mrb[0].mxu0 %v541
      %v1008 = vpop.f32.mrb[0].mxu0
      %v1009 = vadd.f32 0.0, %v1008
      %v1010 = vpop.f32.mrb[0].mxu0
      %v1011 = vpop.f32.mrb[0].mxu0
      %v1012 = vpop.f32.mrb[0].mxu0
      %1013 = vdwg.mxu0
      %1014 = vmatprep.subr.bf16.mxu0 0
      %1015 = vmatpush1.bf16.xpose.msra.mxu0 %v550
      %1016 = vmatprep.subr.bf16.mxu0 0
      %1017 = vmatpush1.bf16.xpose.msra.mxu0 0
      %1018 = vmatprep.subr.bf16.mxu0 0
      %1019 = vmatpush1.bf16.xpose.msra.mxu0 0
      %1020 = vmatprep.subr.bf16.mxu0 0
      %1021 = vmatpush1.bf16.xpose.msra.mxu0 0
      %1022 = vmatprep.subr.bf16.mxu0 0
      %1023 = vmatpush1.bf16.xpose.msra.mxu0 0
      %1024 = vmatprep.subr.bf16.mxu0 0
      %1025 = vmatpush1.bf16.xpose.msra.mxu0 0
      %1026 = vmatprep.subr.bf16.mxu0 0
      %1027 = vmatpush1.bf16.xpose.msra.mxu0 0
      %1028 = vmatprep.subr.bf16.mxu0 0
      %1029 = vmatpush1.bf16.xpose.msra.mxu0 0
      %1030 = vmatprep.subr.bf16.mxu0 0
      %1031 = vmatpush1.bf16.xpose.msra.mxu0 0
      %1032 = vmatprep.subr.bf16.mxu0 0
      %1033 = vmatpush1.bf16.xpose.msra.mxu0 0
      %1034 = vmatprep.subr.bf16.mxu0 0
      %1035 = vmatpush1.bf16.xpose.msra.mxu0 0
      %1036 = vmatprep.subr.bf16.mxu0 0
      %1037 = vmatpush1.bf16.xpose.msra.mxu0 0
      %1038 = vmatprep.subr.bf16.mxu0 0
      %1039 = vmatpush1.bf16.xpose.msra.mxu0 0
      %1040 = vmatprep.subr.bf16.mxu0 0
      %1041 = vmatpush1.bf16.xpose.msra.mxu0 0
      %1042 = vmatprep.subr.bf16.mxu0 0
      %1043 = vmatpush1.bf16.xpose.msra.mxu0 0
      %1044 = vmatprep.subr.bf16.mxu0 0
      %1045 = vmatpush1.bf16.xpose.msra.mxu0 0
      %1046 = vmatprep.mubr.bf16.mxu0 0
      %1047 = vmatmul.mubr.bf16.gmra.mrb[0].mxu0 %v542
      %v1048 = vpop.f32.mrb[0].mxu0
      %v1049 = vadd.f32 0.0, %v1048
      %v1050 = vpop.f32.mrb[0].mxu0
      %v1051 = vpop.f32.mrb[0].mxu0
      %v1052 = vpop.f32.mrb[0].mxu0
      %1053 = vdwg.mxu0
      %1054 = vmatprep.subr.bf16.mxu0 0
      %1055 = vmatpush1.bf16.xpose.msra.mxu0 %v551
      %1056 = vmatprep.subr.bf16.mxu0 0
      %1057 = vmatpush1.bf16.xpose.msra.mxu0 0
      %1058 = vmatprep.subr.bf16.mxu0 0
      %1059 = vmatpush1.bf16.xpose.msra.mxu0 0
      %1060 = vmatprep.subr.bf16.mxu0 0
      %1061 = vmatpush1.bf16.xpose.msra.mxu0 0
      %1062 = vmatprep.subr.bf16.mxu0 0
      %1063 = vmatpush1.bf16.xpose.msra.mxu0 0
      %1064 = vmatprep.subr.bf16.mxu0 0
      %1065 = vmatpush1.bf16.xpose.msra.mxu0 0
      %1066 = vmatprep.subr.bf16.mxu0 0
      %1067 = vmatpush1.bf16.xpose.msra.mxu0 0
      %1068 = vmatprep.subr.bf16.mxu0 0
      %1069 = vmatpush1.bf16.xpose.msra.mxu0 0
      %1070 = vmatprep.subr.bf16.mxu0 0
      %1071 = vmatpush1.bf16.xpose.msra.mxu0 0
      %1072 = vmatprep.subr.bf16.mxu0 0
      %1073 = vmatpush1.bf16.xpose.msra.mxu0 0
      %1074 = vmatprep.subr.bf16.mxu0 0
      %1075 = vmatpush1.bf16.xpose.msra.mxu0 0
      %1076 = vmatprep.subr.bf16.mxu0 0
      %1077 = vmatpush1.bf16.xpose.msra.mxu0 0
      %1078 = vmatprep.subr.bf16.mxu0 0
      %1079 = vmatpush1.bf16.xpose.msra.mxu0 0
      %1080 = vmatprep.subr.bf16.mxu0 0
      %1081 = vmatpush1.bf16.xpose.msra.mxu0 0
      %1082 = vmatprep.subr.bf16.mxu0 0
      %1083 = vmatpush1.bf16.xpose.msra.mxu0 0
      %1084 = vmatprep.subr.bf16.mxu0 0
      %1085 = vmatpush1.bf16.xpose.msra.mxu0 0
      %1086 = vmatprep.mubr.bf16.mxu0 0
      %1087 = vmatmul.mubr.bf16.gmra.mrb[0].mxu0 %v543
      %v1088 = vpop.f32.mrb[0].mxu0
      %v1089 = vadd.f32 0.0, %v1088
      %v1090 = vpop.f32.mrb[0].mxu0
      %v1091 = vpop.f32.mrb[0].mxu0
      %v1092 = vpop.f32.mrb[0].mxu0
      %1093 = vdwg.mxu0
      %1094 = vmatprep.subr.bf16.mxu0 0
      %1095 = vmatpush1.bf16.xpose.msra.mxu0 %v552
      %1096 = vmatprep.subr.bf16.mxu0 0
      %1097 = vmatpush1.bf16.xpose.msra.mxu0 0
      %1098 = vmatprep.subr.bf16.mxu0 0
      %1099 = vmatpush1.bf16.xpose.msra.mxu0 0
      %1100 = vmatprep.subr.bf16.mxu0 0
      %1101 = vmatpush1.bf16.xpose.msra.mxu0 0
      %1102 = vmatprep.subr.bf16.mxu0 0
      %1103 = vmatpush1.bf16.xpose.msra.mxu0 0
      %1104 = vmatprep.subr.bf16.mxu0 0
      %1105 = vmatpush1.bf16.xpose.msra.mxu0 0
      %1106 = vmatprep.subr.bf16.mxu0 0
      %1107 = vmatpush1.bf16.xpose.msra.mxu0 0
      %1108 = vmatprep.subr.bf16.mxu0 0
      %1109 = vmatpush1.bf16.xpose.msra.mxu0 0
      %1110 = vmatprep.subr.bf16.mxu0 0
      %1111 = vmatpush1.bf16.xpose.msra.mxu0 0
      %1112 = vmatprep.subr.bf16.mxu0 0
      %1113 = vmatpush1.bf16.xpose.msra.mxu0 0
      %1114 = vmatprep.subr.bf16.mxu0 0
      %1115 = vmatpush1.bf16.xpose.msra.mxu0 0
      %1116 = vmatprep.subr.bf16.mxu0 0
      %1117 = vmatpush1.bf16.xpose.msra.mxu0 0
      %1118 = vmatprep.subr.bf16.mxu0 0
      %1119 = vmatpush1.bf16.xpose.msra.mxu0 0
      %1120 = vmatprep.subr.bf16.mxu0 0
      %1121 = vmatpush1.bf16.xpose.msra.mxu0 0
      %1122 = vmatprep.subr.bf16.mxu0 0
      %1123 = vmatpush1.bf16.xpose.msra.mxu0 0
      %1124 = vmatprep.subr.bf16.mxu0 0
      %1125 = vmatpush1.bf16.xpose.msra.mxu0 0
      %1126 = vmatprep.mubr.bf16.mxu0 0
      %1127 = vmatmul.mubr.bf16.gmra.mrb[0].mxu0 %v544
      %v1128 = vpop.f32.mrb[0].mxu0
      %v1129 = vadd.f32 0.0, %v1128
      %v1130 = vpop.f32.mrb[0].mxu0
      %v1131 = vpop.f32.mrb[0].mxu0
      %v1132 = vpop.f32.mrb[0].mxu0
      %1133 = vdwg.mxu0
      %1134 = vmatprep.subr.bf16.mxu0 0
      %1135 = vmatpush1.bf16.xpose.msra.mxu0 %v553
      %1136 = vmatprep.subr.bf16.mxu0 0
      %1137 = vmatpush1.bf16.xpose.msra.mxu0 0
      %1138 = vmatprep.subr.bf16.mxu0 0
      %1139 = vmatpush1.bf16.xpose.msra.mxu0 0
      %1140 = vmatprep.subr.bf16.mxu0 0
      %1141 = vmatpush1.bf16.xpose.msra.mxu0 0
      %1142 = vmatprep.subr.bf16.mxu0 0
      %1143 = vmatpush1.bf16.xpose.msra.mxu0 0
      %1144 = vmatprep.subr.bf16.mxu0 0
      %1145 = vmatpush1.bf16.xpose.msra.mxu0 0
      %1146 = vmatprep.subr.bf16.mxu0 0
      %1147 = vmatpush1.bf16.xpose.msra.mxu0 0
      %1148 = vmatprep.subr.bf16.mxu0 0
      %1149 = vmatpush1.bf16.xpose.msra.mxu0 0
      %1150 = vmatprep.subr.bf16.mxu0 0
      %1151 = vmatpush1.bf16.xpose.msra.mxu0 0
      %1152 = vmatprep.subr.bf16.mxu0 0
      %1153 = vmatpush1.bf16.xpose.msra.mxu0 0
      %1154 = vmatprep.subr.bf16.mxu0 0
      %1155 = vmatpush1.bf16.xpose.msra.mxu0 0
      %1156 = vmatprep.subr.bf16.mxu0 0
      %1157 = vmatpush1.bf16.xpose.msra.mxu0 0
      %1158 = vmatprep.subr.bf16.mxu0 0
      %1159 = vmatpush1.bf16.xpose.msra.mxu0 0
      %1160 = vmatprep.subr.bf16.mxu0 0
      %1161 = vmatpush1.bf16.xpose.msra.mxu0 0
      %1162 = vmatprep.subr.bf16.mxu0 0
      %1163 = vmatpush1.bf16.xpose.msra.mxu0 0
      %1164 = vmatprep.subr.bf16.mxu0 0
      %1165 = vmatpush1.bf16.xpose.msra.mxu0 0
      %1166 = vmatprep.mubr.bf16.mxu0 0
      %1167 = vmatmul.mubr.bf16.gmra.mrb[0].mxu0 %v545
      %v1168 = vpop.f32.mrb[0].mxu0
      %v1169 = vadd.f32 0.0, %v1168
      %v1170 = vpop.f32.mrb[0].mxu0
      %v1171 = vpop.f32.mrb[0].mxu0
      %v1172 = vpop.f32.mrb[0].mxu0
      %1173 = vdwg.mxu0
      %1174 = vmatprep.subr.bf16.mxu0 0
      %1175 = vmatpush1.bf16.xpose.msra.mxu0 %v732
      %1176 = vmatprep.subr.bf16.mxu0 0
      %1177 = vmatpush1.bf16.xpose.msra.mxu0 0
      %1178 = vmatprep.subr.bf16.mxu0 0
      %1179 = vmatpush1.bf16.xpose.msra.mxu0 0
      %1180 = vmatprep.subr.bf16.mxu0 0
      %1181 = vmatpush1.bf16.xpose.msra.mxu0 0
      %1182 = vmatprep.subr.bf16.mxu0 0
      %1183 = vmatpush1.bf16.xpose.msra.mxu0 0
      %1184 = vmatprep.subr.bf16.mxu0 0
      %1185 = vmatpush1.bf16.xpose.msra.mxu0 0
      %1186 = vmatprep.subr.bf16.mxu0 0
      %1187 = vmatpush1.bf16.xpose.msra.mxu0 0
      %1188 = vmatprep.subr.bf16.mxu0 0
      %1189 = vmatpush1.bf16.xpose.msra.mxu0 0
      %1190 = vmatprep.subr.bf16.mxu0 0
      %1191 = vmatpush1.bf16.xpose.msra.mxu0 0
      %1192 = vmatprep.subr.bf16.mxu0 0
      %1193 = vmatpush1.bf16.xpose.msra.mxu0 0
      %1194 = vmatprep.subr.bf16.mxu0 0
      %1195 = vmatpush1.bf16.xpose.msra.mxu0 0
      %1196 = vmatprep.subr.bf16.mxu0 0
      %1197 = vmatpush1.bf16.xpose.msra.mxu0 0
      %1198 = vmatprep.subr.bf16.mxu0 0
      %1199 = vmatpush1.bf16.xpose.msra.mxu0 0
      %1200 = vmatprep.subr.bf16.mxu0 0
      %1201 = vmatpush1.bf16.xpose.msra.mxu0 0
      %1202 = vmatprep.subr.bf16.mxu0 0
      %1203 = vmatpush1.bf16.xpose.msra.mxu0 0
      %1204 = vmatprep.subr.bf16.mxu0 0
      %1205 = vmatpush1.bf16.xpose.msra.mxu0 0
      %1206 = vmatprep.mubr.bf16.mxu0 0
      %1207 = vmatmul.mubr.bf16.gmra.mrb[0].mxu0 %v632
      %v1208 = vpop.f32.mrb[0].mxu0
      %v1209 = vadd.f32 %v345, %v1208
      %v1210 = vpop.f32.mrb[0].mxu0
      %v1211 = vpop.f32.mrb[0].mxu0
      %v1212 = vpop.f32.mrb[0].mxu0
      %1213 = vdwg.mxu0
      %1214 = vmatprep.subr.bf16.mxu0 0
      %1215 = vmatpush1.bf16.xpose.msra.mxu0 %v736
      %1216 = vmatprep.subr.bf16.mxu0 0
      %1217 = vmatpush1.bf16.xpose.msra.mxu0 0
      %1218 = vmatprep.subr.bf16.mxu0 0
      %1219 = vmatpush1.bf16.xpose.msra.mxu0 0
      %1220 = vmatprep.subr.bf16.mxu0 0
      %1221 = vmatpush1.bf16.xpose.msra.mxu0 0
      %1222 = vmatprep.subr.bf16.mxu0 0
      %1223 = vmatpush1.bf16.xpose.msra.mxu0 0
      %1224 = vmatprep.subr.bf16.mxu0 0
      %1225 = vmatpush1.bf16.xpose.msra.mxu0 0
      %1226 = vmatprep.subr.bf16.mxu0 0
      %1227 = vmatpush1.bf16.xpose.msra.mxu0 0
      %1228 = vmatprep.subr.bf16.mxu0 0
      %1229 = vmatpush1.bf16.xpose.msra.mxu0 0
      %1230 = vmatprep.subr.bf16.mxu0 0
      %1231 = vmatpush1.bf16.xpose.msra.mxu0 0
      %1232 = vmatprep.subr.bf16.mxu0 0
      %1233 = vmatpush1.bf16.xpose.msra.mxu0 0
      %1234 = vmatprep.subr.bf16.mxu0 0
      %1235 = vmatpush1.bf16.xpose.msra.mxu0 0
      %1236 = vmatprep.subr.bf16.mxu0 0
      %1237 = vmatpush1.bf16.xpose.msra.mxu0 0
      %1238 = vmatprep.subr.bf16.mxu0 0
      %1239 = vmatpush1.bf16.xpose.msra.mxu0 0
      %1240 = vmatprep.subr.bf16.mxu0 0
      %1241 = vmatpush1.bf16.xpose.msra.mxu0 0
      %1242 = vmatprep.subr.bf16.mxu0 0
      %1243 = vmatpush1.bf16.xpose.msra.mxu0 0
      %1244 = vmatprep.subr.bf16.mxu0 0
      %1245 = vmatpush1.bf16.xpose.msra.mxu0 0
      %1246 = vmatprep.mubr.bf16.mxu0 0
      %1247 = vmatmul.mubr.bf16.gmra.mrb[0].mxu0 %v636
      %v1248 = vpop.f32.mrb[0].mxu0
      %v1249 = vadd.f32 %v345, %v1248
      %v1250 = vpop.f32.mrb[0].mxu0
      %v1251 = vpop.f32.mrb[0].mxu0
      %v1252 = vpop.f32.mrb[0].mxu0
      %1253 = vdwg.mxu0
      %1254 = vmatprep.subr.bf16.mxu0 0
      %1255 = vmatpush1.bf16.xpose.msra.mxu0 %v740
      %1256 = vmatprep.subr.bf16.mxu0 0
      %1257 = vmatpush1.bf16.xpose.msra.mxu0 0
      %1258 = vmatprep.subr.bf16.mxu0 0
      %1259 = vmatpush1.bf16.xpose.msra.mxu0 0
      %1260 = vmatprep.subr.bf16.mxu0 0
      %1261 = vmatpush1.bf16.xpose.msra.mxu0 0
      %1262 = vmatprep.subr.bf16.mxu0 0
      %1263 = vmatpush1.bf16.xpose.msra.mxu0 0
      %1264 = vmatprep.subr.bf16.mxu0 0
      %1265 = vmatpush1.bf16.xpose.msra.mxu0 0
      %1266 = vmatprep.subr.bf16.mxu0 0
      %1267 = vmatpush1.bf16.xpose.msra.mxu0 0
      %1268 = vmatprep.subr.bf16.mxu0 0
      %1269 = vmatpush1.bf16.xpose.msra.mxu0 0
      %1270 = vmatprep.subr.bf16.mxu0 0
      %1271 = vmatpush1.bf16.xpose.msra.mxu0 0
      %1272 = vmatprep.subr.bf16.mxu0 0
      %1273 = vmatpush1.bf16.xpose.msra.mxu0 0
      %1274 = vmatprep.subr.bf16.mxu0 0
      %1275 = vmatpush1.bf16.xpose.msra.mxu0 0
      %1276 = vmatprep.subr.bf16.mxu0 0
      %1277 = vmatpush1.bf16.xpose.msra.mxu0 0
      %1278 = vmatprep.subr.bf16.mxu0 0
      %1279 = vmatpush1.bf16.xpose.msra.mxu0 0
      %1280 = vmatprep.subr.bf16.mxu0 0
      %1281 = vmatpush1.bf16.xpose.msra.mxu0 0
      %1282 = vmatprep.subr.bf16.mxu0 0
      %1283 = vmatpush1.bf16.xpose.msra.mxu0 0
      %1284 = vmatprep.subr.bf16.mxu0 0
      %1285 = vmatpush1.bf16.xpose.msra.mxu0 0
      %1286 = vmatprep.mubr.bf16.mxu0 0
      %1287 = vmatmul.mubr.bf16.gmra.mrb[0].mxu0 %v640
      %v1288 = vpop.f32.mrb[0].mxu0
      %v1289 = vadd.f32 %v345, %v1288
      %v1290 = vpop.f32.mrb[0].mxu0
      %v1291 = vpop.f32.mrb[0].mxu0
      %v1292 = vpop.f32.mrb[0].mxu0
      %1293 = vdwg.mxu0
      %1294 = vmatprep.subr.bf16.mxu0 0
      %1295 = vmatpush1.bf16.xpose.msra.mxu0 %v744
      %1296 = vmatprep.subr.bf16.mxu0 0
      %1297 = vmatpush1.bf16.xpose.msra.mxu0 0
      %1298 = vmatprep.subr.bf16.mxu0 0
      %1299 = vmatpush1.bf16.xpose.msra.mxu0 0
      %1300 = vmatprep.subr.bf16.mxu0 0
      %1301 = vmatpush1.bf16.xpose.msra.mxu0 0
      %1302 = vmatprep.subr.bf16.mxu0 0
      %1303 = vmatpush1.bf16.xpose.msra.mxu0 0
      %1304 = vmatprep.subr.bf16.mxu0 0
      %1305 = vmatpush1.bf16.xpose.msra.mxu0 0
      %1306 = vmatprep.subr.bf16.mxu0 0
      %1307 = vmatpush1.bf16.xpose.msra.mxu0 0
      %1308 = vmatprep.subr.bf16.mxu0 0
      %1309 = vmatpush1.bf16.xpose.msra.mxu0 0
      %1310 = vmatprep.subr.bf16.mxu0 0
      %1311 = vmatpush1.bf16.xpose.msra.mxu0 0
      %1312 = vmatprep.subr.bf16.mxu0 0
      %1313 = vmatpush1.bf16.xpose.msra.mxu0 0
      %1314 = vmatprep.subr.bf16.mxu0 0
      %1315 = vmatpush1.bf16.xpose.msra.mxu0 0
      %1316 = vmatprep.subr.bf16.mxu0 0
      %1317 = vmatpush1.bf16.xpose.msra.mxu0 0
      %1318 = vmatprep.subr.bf16.mxu0 0
      %1319 = vmatpush1.bf16.xpose.msra.mxu0 0
      %1320 = vmatprep.subr.bf16.mxu0 0
      %1321 = vmatpush1.bf16.xpose.msra.mxu0 0
      %1322 = vmatprep.subr.bf16.mxu0 0
      %1323 = vmatpush1.bf16.xpose.msra.mxu0 0
      %1324 = vmatprep.subr.bf16.mxu0 0
      %1325 = vmatpush1.bf16.xpose.msra.mxu0 0
      %1326 = vmatprep.mubr.bf16.mxu0 0
      %1327 = vmatmul.mubr.bf16.gmra.mrb[0].mxu0 %v644
      %v1328 = vpop.f32.mrb[0].mxu0
      %v1329 = vadd.f32 %v345, %v1328
      %v1330 = vpop.f32.mrb[0].mxu0
      %v1331 = vpop.f32.mrb[0].mxu0
      %v1332 = vpop.f32.mrb[0].mxu0
      %1333 = vdwg.mxu0
      %1334 = vmatprep.subr.bf16.mxu0 0
      %1335 = vmatpush1.bf16.xpose.msra.mxu0 %v748
      %1336 = vmatprep.subr.bf16.mxu0 0
      %1337 = vmatpush1.bf16.xpose.msra.mxu0 0
      %1338 = vmatprep.subr.bf16.mxu0 0
      %1339 = vmatpush1.bf16.xpose.msra.mxu0 0
      %1340 = vmatprep.subr.bf16.mxu0 0
      %1341 = vmatpush1.bf16.xpose.msra.mxu0 0
      %1342 = vmatprep.subr.bf16.mxu0 0
      %1343 = vmatpush1.bf16.xpose.msra.mxu0 0
      %1344 = vmatprep.subr.bf16.mxu0 0
      %1345 = vmatpush1.bf16.xpose.msra.mxu0 0
      %1346 = vmatprep.subr.bf16.mxu0 0
      %1347 = vmatpush1.bf16.xpose.msra.mxu0 0
      %1348 = vmatprep.subr.bf16.mxu0 0
      %1349 = vmatpush1.bf16.xpose.msra.mxu0 0
      %1350 = vmatprep.subr.bf16.mxu0 0
      %1351 = vmatpush1.bf16.xpose.msra.mxu0 0
      %1352 = vmatprep.subr.bf16.mxu0 0
      %1353 = vmatpush1.bf16.xpose.msra.mxu0 0
      %1354 = vmatprep.subr.bf16.mxu0 0
      %1355 = vmatpush1.bf16.xpose.msra.mxu0 0
      %1356 = vmatprep.subr.bf16.mxu0 0
      %1357 = vmatpush1.bf16.xpose.msra.mxu0 0
      %1358 = vmatprep.subr.bf16.mxu0 0
      %1359 = vmatpush1.bf16.xpose.msra.mxu0 0
      %1360 = vmatprep.subr.bf16.mxu0 0
      %1361 = vmatpush1.bf16.xpose.msra.mxu0 0
      %1362 = vmatprep.subr.bf16.mxu0 0
      %1363 = vmatpush1.bf16.xpose.msra.mxu0 0
      %1364 = vmatprep.subr.bf16.mxu0 0
      %1365 = vmatpush1.bf16.xpose.msra.mxu0 0
      %1366 = vmatprep.mubr.bf16.mxu0 0
      %1367 = vmatmul.mubr.bf16.gmra.mrb[0].mxu0 %v648
      %v1368 = vpop.f32.mrb[0].mxu0
      %v1369 = vadd.f32 %v345, %v1368
      %v1370 = vpop.f32.mrb[0].mxu0
      %v1371 = vpop.f32.mrb[0].mxu0
      %v1372 = vpop.f32.mrb[0].mxu0
      %1373 = vdwg.mxu0
      %1374 = vmatprep.subr.bf16.mxu0 0
      %1375 = vmatpush1.bf16.xpose.msra.mxu0 %v752
      %1376 = vmatprep.subr.bf16.mxu0 0
      %1377 = vmatpush1.bf16.xpose.msra.mxu0 0
      %1378 = vmatprep.subr.bf16.mxu0 0
      %1379 = vmatpush1.bf16.xpose.msra.mxu0 0
      %1380 = vmatprep.subr.bf16.mxu0 0
      %1381 = vmatpush1.bf16.xpose.msra.mxu0 0
      %1382 = vmatprep.subr.bf16.mxu0 0
      %1383 = vmatpush1.bf16.xpose.msra.mxu0 0
      %1384 = vmatprep.subr.bf16.mxu0 0
      %1385 = vmatpush1.bf16.xpose.msra.mxu0 0
      %1386 = vmatprep.subr.bf16.mxu0 0
      %1387 = vmatpush1.bf16.xpose.msra.mxu0 0
      %1388 = vmatprep.subr.bf16.mxu0 0
      %1389 = vmatpush1.bf16.xpose.msra.mxu0 0
      %1390 = vmatprep.subr.bf16.mxu0 0
      %1391 = vmatpush1.bf16.xpose.msra.mxu0 0
      %1392 = vmatprep.subr.bf16.mxu0 0
      %1393 = vmatpush1.bf16.xpose.msra.mxu0 0
      %1394 = vmatprep.subr.bf16.mxu0 0
      %1395 = vmatpush1.bf16.xpose.msra.mxu0 0
      %1396 = vmatprep.subr.bf16.mxu0 0
      %1397 = vmatpush1.bf16.xpose.msra.mxu0 0
      %1398 = vmatprep.subr.bf16.mxu0 0
      %1399 = vmatpush1.bf16.xpose.msra.mxu0 0
      %1400 = vmatprep.subr.bf16.mxu0 0
      %1401 = vmatpush1.bf16.xpose.msra.mxu0 0
      %1402 = vmatprep.subr.bf16.mxu0 0
      %1403 = vmatpush1.bf16.xpose.msra.mxu0 0
      %1404 = vmatprep.subr.bf16.mxu0 0
      %1405 = vmatpush1.bf16.xpose.msra.mxu0 0
      %1406 = vmatprep.mubr.bf16.mxu0 0
      %1407 = vmatmul.mubr.bf16.gmra.mrb[0].mxu0 %v652
      %v1408 = vpop.f32.mrb[0].mxu0
      %v1409 = vadd.f32 %v345, %v1408
      %v1410 = vpop.f32.mrb[0].mxu0
      %v1411 = vpop.f32.mrb[0].mxu0
      %v1412 = vpop.f32.mrb[0].mxu0
      %1413 = vdwg.mxu0
      %1414 = vmatprep.subr.bf16.mxu0 0
      %1415 = vmatpush1.bf16.xpose.msra.mxu0 %v756
      %1416 = vmatprep.subr.bf16.mxu0 0
      %1417 = vmatpush1.bf16.xpose.msra.mxu0 0
      %1418 = vmatprep.subr.bf16.mxu0 0
      %1419 = vmatpush1.bf16.xpose.msra.mxu0 0
      %1420 = vmatprep.subr.bf16.mxu0 0
      %1421 = vmatpush1.bf16.xpose.msra.mxu0 0
      %1422 = vmatprep.subr.bf16.mxu0 0
      %1423 = vmatpush1.bf16.xpose.msra.mxu0 0
      %1424 = vmatprep.subr.bf16.mxu0 0
      %1425 = vmatpush1.bf16.xpose.msra.mxu0 0
      %1426 = vmatprep.subr.bf16.mxu0 0
      %1427 = vmatpush1.bf16.xpose.msra.mxu0 0
      %1428 = vmatprep.subr.bf16.mxu0 0
      %1429 = vmatpush1.bf16.xpose.msra.mxu0 0
      %1430 = vmatprep.subr.bf16.mxu0 0
      %1431 = vmatpush1.bf16.xpose.msra.mxu0 0
      %1432 = vmatprep.subr.bf16.mxu0 0
      %1433 = vmatpush1.bf16.xpose.msra.mxu0 0
      %1434 = vmatprep.subr.bf16.mxu0 0
      %1435 = vmatpush1.bf16.xpose.msra.mxu0 0
      %1436 = vmatprep.subr.bf16.mxu0 0
      %1437 = vmatpush1.bf16.xpose.msra.mxu0 0
      %1438 = vmatprep.subr.bf16.mxu0 0
      %1439 = vmatpush1.bf16.xpose.msra.mxu0 0
      %1440 = vmatprep.subr.bf16.mxu0 0
      %1441 = vmatpush1.bf16.xpose.msra.mxu0 0
      %1442 = vmatprep.subr.bf16.mxu0 0
      %1443 = vmatpush1.bf16.xpose.msra.mxu0 0
      %1444 = vmatprep.subr.bf16.mxu0 0
      %1445 = vmatpush1.bf16.xpose.msra.mxu0 0
      %1446 = vmatprep.mubr.bf16.mxu0 0
      %1447 = vmatmul.mubr.bf16.gmra.mrb[0].mxu0 %v656
      %v1448 = vpop.f32.mrb[0].mxu0
      %v1449 = vadd.f32 %v345, %v1448
      %v1450 = vpop.f32.mrb[0].mxu0
      %v1451 = vpop.f32.mrb[0].mxu0
      %v1452 = vpop.f32.mrb[0].mxu0
      %1453 = vdwg.mxu0
      %1454 = vmatprep.subr.bf16.mxu0 0
      %1455 = vmatpush1.bf16.xpose.msra.mxu0 %v760
      %1456 = vmatprep.subr.bf16.mxu0 0
      %1457 = vmatpush1.bf16.xpose.msra.mxu0 0
      %1458 = vmatprep.subr.bf16.mxu0 0
      %1459 = vmatpush1.bf16.xpose.msra.mxu0 0
      %1460 = vmatprep.subr.bf16.mxu0 0
      %1461 = vmatpush1.bf16.xpose.msra.mxu0 0
      %1462 = vmatprep.subr.bf16.mxu0 0
      %1463 = vmatpush1.bf16.xpose.msra.mxu0 0
      %1464 = vmatprep.subr.bf16.mxu0 0
      %1465 = vmatpush1.bf16.xpose.msra.mxu0 0
      %1466 = vmatprep.subr.bf16.mxu0 0
      %1467 = vmatpush1.bf16.xpose.msra.mxu0 0
      %1468 = vmatprep.subr.bf16.mxu0 0
      %1469 = vmatpush1.bf16.xpose.msra.mxu0 0
      %1470 = vmatprep.subr.bf16.mxu0 0
      %1471 = vmatpush1.bf16.xpose.msra.mxu0 0
      %1472 = vmatprep.subr.bf16.mxu0 0
      %1473 = vmatpush1.bf16.xpose.msra.mxu0 0
      %1474 = vmatprep.subr.bf16.mxu0 0
      %1475 = vmatpush1.bf16.xpose.msra.mxu0 0
      %1476 = vmatprep.subr.bf16.mxu0 0
      %1477 = vmatpush1.bf16.xpose.msra.mxu0 0
      %1478 = vmatprep.subr.bf16.mxu0 0
      %1479 = vmatpush1.bf16.xpose.msra.mxu0 0
      %1480 = vmatprep.subr.bf16.mxu0 0
      %1481 = vmatpush1.bf16.xpose.msra.mxu0 0
      %1482 = vmatprep.subr.bf16.mxu0 0
      %1483 = vmatpush1.bf16.xpose.msra.mxu0 0
      %1484 = vmatprep.subr.bf16.mxu0 0
      %1485 = vmatpush1.bf16.xpose.msra.mxu0 0
      %1486 = vmatprep.mubr.bf16.mxu0 0
      %1487 = vmatmul.mubr.bf16.gmra.mrb[0].mxu0 %v660
      %v1488 = vpop.f32.mrb[0].mxu0
      %v1489 = vadd.f32 %v345, %v1488
      %v1490 = vpop.f32.mrb[0].mxu0
      %v1491 = vpop.f32.mrb[0].mxu0
      %v1492 = vpop.f32.mrb[0].mxu0
      %1493 = vdwg.mxu0
      %vm1494 = vcmask 64512
      %v1495 = vsel %vm1494, %v889, -inf
      %1496 = vmax.xlane.f32.xlu0 %v1495
      %v1497 = vpop.xlane.xlu0 %1496
      %v1498 = vsel %vm1494, %v929, -inf
      %1499 = vmax.xlane.f32.xlu0 %v1498
      %v1500 = vpop.xlane.xlu0 %1499
      %v1501 = vsel %vm1494, %v969, -inf
      %1502 = vmax.xlane.f32.xlu0 %v1501
      %v1503 = vpop.xlane.xlu0 %1502
      %v1504 = vsel %vm1494, %v1009, -inf
      %1505 = vmax.xlane.f32.xlu0 %v1504
      %v1506 = vpop.xlane.xlu0 %1505
      %v1507 = vsel %vm1494, %v1049, -inf
      %1508 = vmax.xlane.f32.xlu0 %v1507
      %v1509 = vpop.xlane.xlu0 %1508
      %v1510 = vsel %vm1494, %v1089, -inf
      %1511 = vmax.xlane.f32.xlu0 %v1510
      %v1512 = vpop.xlane.xlu0 %1511
      %v1513 = vsel %vm1494, %v1129, -inf
      %1514 = vmax.xlane.f32.xlu0 %v1513
      %v1515 = vpop.xlane.xlu0 %1514
      %v1516 = vsel %vm1494, %v1169, -inf
      %1517 = vmax.xlane.f32.xlu0 %v1516
      %v1518 = vpop.xlane.xlu0 %1517
      %v1519 = vsel %vm1494, %v1209, -inf
      %1520 = vmax.xlane.f32.xlu0 %v1519
      %v1521 = vpop.xlane.xlu0 %1520
      %v1522 = vsel %vm1494, %v1249, -inf
      %1523 = vmax.xlane.f32.xlu0 %v1522
      %v1524 = vpop.xlane.xlu0 %1523
      %v1525 = vsel %vm1494, %v1289, -inf
      %1526 = vmax.xlane.f32.xlu0 %v1525
      %v1527 = vpop.xlane.xlu0 %1526
      %v1528 = vsel %vm1494, %v1329, -inf
      %1529 = vmax.xlane.f32.xlu0 %v1528
      %v1530 = vpop.xlane.xlu0 %1529
      %v1531 = vsel %vm1494, %v1369, -inf
      %1532 = vmax.xlane.f32.xlu0 %v1531
      %v1533 = vpop.xlane.xlu0 %1532
      %v1534 = vsel %vm1494, %v1409, -inf
      %1535 = vmax.xlane.f32.xlu0 %v1534
      %v1536 = vpop.xlane.xlu0 %1535
      %v1537 = vsel %vm1494, %v1449, -inf
      %1538 = vmax.xlane.f32.xlu0 %v1537
      %v1539 = vpop.xlane.xlu0 %1538
      %v1540 = vsel %vm1494, %v1489, -inf
      %1541 = vmax.xlane.f32.xlu0 %v1540
      %v1542 = vpop.xlane.xlu0 %1541
      %v1551 = vlaneseq
      %v1552 = vshrl.u32 %v1551, 7
      %v1553 = vsub.s32 %v343, %v1552
      %v1554 = vrot.slane %v1521, %v1553
      %v1555 = vlaneseq
      %v1556 = vshrl.u32 %v1555, 7
      %v1557 = vsub.s32 %v343, %v1556
      %v1558 = vrot.slane %v1524, %v1557
      %v1559 = vlaneseq
      %v1560 = vshrl.u32 %v1559, 7
      %v1561 = vsub.s32 %v343, %v1560
      %v1562 = vrot.slane %v1527, %v1561
      %v1563 = vlaneseq
      %v1564 = vshrl.u32 %v1563, 7
      %v1565 = vsub.s32 %v343, %v1564
      %v1566 = vrot.slane %v1530, %v1565
      %v1567 = vlaneseq
      %v1568 = vshrl.u32 %v1567, 7
      %v1569 = vsub.s32 %v343, %v1568
      %v1570 = vrot.slane %v1533, %v1569
      %v1571 = vlaneseq
      %v1572 = vshrl.u32 %v1571, 7
      %v1573 = vsub.s32 %v343, %v1572
      %v1574 = vrot.slane %v1536, %v1573
      %v1575 = vlaneseq
      %v1576 = vshrl.u32 %v1575, 7
      %v1577 = vsub.s32 %v343, %v1576
      %v1578 = vrot.slane %v1539, %v1577
      %v1579 = vlaneseq
      %v1580 = vshrl.u32 %v1579, 7
      %v1581 = vsub.s32 %v343, %v1580
      %v1582 = vrot.slane %v1542, %v1581
      %vm1583 = vcmask 1041409
      %v1584 = vsel %vm1583, %v1558, %v1554
      %vm1585 = vcmask 1042434
      %v1586 = vsel %vm1585, %v1562, %v1584
      %vm1587 = vcmask 1043459
      %v1588 = vsel %vm1587, %v1566, %v1586
      %vm1589 = vcmask 1044484
      %v1590 = vsel %vm1589, %v1570, %v1588
      %vm1591 = vcmask 1045509
      %v1592 = vsel %vm1591, %v1574, %v1590
      %vm1593 = vcmask 1046534
      %v1594 = vsel %vm1593, %v1578, %v1592
      %vm1595 = vcmask 1047559
      %v1596 = vsel %vm1595, %v1582, %v1594
      %1598 = vxpose.xlu0.b32.start [1/16] %v1596, 128
      %1599 = vxpose.xlu0.b32.cont [2/16] 0.0, 128
      %1600 = vxpose.xlu0.b32.cont [3/16] 0.0, 128
      %1601 = vxpose.xlu0.b32.cont [4/16] 0.0, 128
      %1602 = vxpose.xlu0.b32.cont [5/16] 0.0, 128
      %1603 = vxpose.xlu0.b32.cont [6/16] 0.0, 128
      %1604 = vxpose.xlu0.b32.cont [7/16] 0.0, 128
      %1605 = vxpose.xlu0.b32.cont [8/16] 0.0, 128
      %1606 = vxpose.xlu0.b32.cont [9/16] 0.0, 128
      %1607 = vxpose.xlu0.b32.cont [10/16] 0.0, 128
      %1608 = vxpose.xlu0.b32.cont [11/16] 0.0, 128
      %1609 = vxpose.xlu0.b32.cont [12/16] 0.0, 128
      %1610 = vxpose.xlu0.b32.cont [13/16] 0.0, 128
      %1611 = vxpose.xlu0.b32.cont [14/16] 0.0, 128
      %1612 = vxpose.xlu0.b32.cont [15/16] 0.0, 128
      %1613 = vxpose.xlu0.b32.end [16/16] 0.0, 128
      %v1614 = vpop.trf.xlu0
      %v1615 = vpop.trf.xlu0
      %v1616 = vpop.trf.xlu0
      %v1617 = vpop.trf.xlu0
      %v1618 = vpop.trf.xlu0
      %v1619 = vpop.trf.xlu0
      %v1620 = vpop.trf.xlu0
      %v1621 = vpop.trf.xlu0
      %v1622 = vpop.trf.xlu0
      %v1623 = vpop.trf.xlu0
      %v1624 = vpop.trf.xlu0
      %v1625 = vpop.trf.xlu0
      %v1626 = vpop.trf.xlu0
      %v1627 = vpop.trf.xlu0
      %v1628 = vpop.trf.xlu0
      %v1629 = vpop.trf.xlu0
      %v1631 = vlaneseq
      %v1632 = vshrl.u32 %v1631, 7
      %v1633 = vsub.s32 0, %v1632
      %v1634 = vrot.slane %v1614, %v1633
      %1636 = vbcast.lane.b32.xlu0 %v1634, 256
      %v1637 = vpop.permute.xlu0 %1636
      %v1638 = vlaneseq
      %v1639 = vshrl.u32 %v1638, 7
      %v1640 = vsub.s32 1, %v1639
      %v1641 = vrot.slane %v1614, %v1640
      %1643 = vbcast.lane.b32.xlu0 %v1641, 256
      %v1644 = vpop.permute.xlu0 %1643
      %v1645 = vlaneseq
      %v1646 = vshrl.u32 %v1645, 7
      %v1647 = vsub.s32 2, %v1646
      %v1648 = vrot.slane %v1614, %v1647
      %1650 = vbcast.lane.b32.xlu0 %v1648, 256
      %v1651 = vpop.permute.xlu0 %1650
      %v1652 = vlaneseq
      %v1653 = vshrl.u32 %v1652, 7
      %v1654 = vsub.s32 3, %v1653
      %v1655 = vrot.slane %v1614, %v1654
      %1657 = vbcast.lane.b32.xlu0 %v1655, 256
      %v1658 = vpop.permute.xlu0 %1657
      %v1659 = vlaneseq
      %v1660 = vshrl.u32 %v1659, 7
      %v1661 = vsub.s32 4, %v1660
      %v1662 = vrot.slane %v1614, %v1661
      %1664 = vbcast.lane.b32.xlu0 %v1662, 256
      %v1665 = vpop.permute.xlu0 %1664
      %v1666 = vlaneseq
      %v1667 = vshrl.u32 %v1666, 7
      %v1668 = vsub.s32 5, %v1667
      %v1669 = vrot.slane %v1614, %v1668
      %1671 = vbcast.lane.b32.xlu0 %v1669, 256
      %v1672 = vpop.permute.xlu0 %1671
      %v1673 = vlaneseq
      %v1674 = vshrl.u32 %v1673, 7
      %v1675 = vsub.s32 6, %v1674
      %v1676 = vrot.slane %v1614, %v1675
      %1678 = vbcast.lane.b32.xlu0 %v1676, 256
      %v1679 = vpop.permute.xlu0 %1678
      %v1680 = vlaneseq
      %v1681 = vshrl.u32 %v1680, 7
      %v1682 = vsub.s32 7, %v1681
      %v1683 = vrot.slane %v1614, %v1682
      %1685 = vbcast.lane.b32.xlu0 %v1683, 256
      %v1686 = vpop.permute.xlu0 %1685
      %v1695 = vmax.f32 %v1497, %v1637
      %v1696 = vmax.f32 %v1500, %v1644
      %v1697 = vmax.f32 %v1503, %v1651
      %v1698 = vmax.f32 %v1506, %v1658
      %v1699 = vmax.f32 %v1509, %v1665
      %v1700 = vmax.f32 %v1512, %v1672
      %v1701 = vmax.f32 %v1515, %v1679
      %v1702 = vmax.f32 %v1518, %v1686
      %1704 = vset.pattern.permute.xlu0 0
      %1705 = vperm.xlu0 %1704, %v1695
      %v1706 = vpop.permute.xlu0 %1705
      %1709 = vset.pattern.permute.xlu0 0
      %1710 = vperm.xlu0 %1709, %v1696
      %v1711 = vpop.permute.xlu0 %1710
      %1714 = vset.pattern.permute.xlu0 0
      %1715 = vperm.xlu0 %1714, %v1697
      %v1716 = vpop.permute.xlu0 %1715
      %1719 = vset.pattern.permute.xlu0 0
      %1720 = vperm.xlu0 %1719, %v1698
      %v1721 = vpop.permute.xlu0 %1720
      %1724 = vset.pattern.permute.xlu0 0
      %1725 = vperm.xlu0 %1724, %v1699
      %v1726 = vpop.permute.xlu0 %1725
      %1729 = vset.pattern.permute.xlu0 0
      %1730 = vperm.xlu0 %1729, %v1700
      %v1731 = vpop.permute.xlu0 %1730
      %1734 = vset.pattern.permute.xlu0 0
      %1735 = vperm.xlu0 %1734, %v1701
      %v1736 = vpop.permute.xlu0 %1735
      %1739 = vset.pattern.permute.xlu0 0
      %1740 = vperm.xlu0 %1739, %v1702
      %v1741 = vpop.permute.xlu0 %1740
      %v1743 = vsub.f32 %v889, %v1706
      %v1744 = vsub.f32 %v929, %v1711
      %v1745 = vsub.f32 %v969, %v1716
      %v1746 = vsub.f32 %v1009, %v1721
      %v1747 = vsub.f32 %v1049, %v1726
      %v1748 = vsub.f32 %v1089, %v1731
      %v1749 = vsub.f32 %v1129, %v1736
      %v1750 = vsub.f32 %v1169, %v1741
      %v1751 = vmul.f32 %v1743, 1.442695
      %v1752 = vpow.pop %v1751
      %v1753 = vmul.f32 %v1744, 1.442695
      %v1754 = vpow.pop %v1753
      %v1755 = vmul.f32 %v1745, 1.442695
      %v1756 = vpow.pop %v1755
      %v1757 = vmul.f32 %v1746, 1.442695
      %v1758 = vpow.pop %v1757
      %v1759 = vmul.f32 %v1747, 1.442695
      %v1760 = vpow.pop %v1759
      %v1761 = vmul.f32 %v1748, 1.442695
      %v1762 = vpow.pop %v1761
      %v1763 = vmul.f32 %v1749, 1.442695
      %v1764 = vpow.pop %v1763
      %v1765 = vmul.f32 %v1750, 1.442695
      %v1766 = vpow.pop %v1765
      %v1767 = vlaneseq
      %v1768 = vshrl.u32 %v1767, 7
      %v1769 = vsub.s32 %v343, %v1768
      %v1770 = vrot.slane %v1706, %v1769
      %v1771 = vlaneseq
      %v1772 = vshrl.u32 %v1771, 7
      %v1773 = vsub.s32 %v343, %v1772
      %v1774 = vrot.slane %v1711, %v1773
      %v1775 = vlaneseq
      %v1776 = vshrl.u32 %v1775, 7
      %v1777 = vsub.s32 %v343, %v1776
      %v1778 = vrot.slane %v1716, %v1777
      %v1779 = vlaneseq
      %v1780 = vshrl.u32 %v1779, 7
      %v1781 = vsub.s32 %v343, %v1780
      %v1782 = vrot.slane %v1721, %v1781
      %v1783 = vlaneseq
      %v1784 = vshrl.u32 %v1783, 7
      %v1785 = vsub.s32 %v343, %v1784
      %v1786 = vrot.slane %v1726, %v1785
      %v1787 = vlaneseq
      %v1788 = vshrl.u32 %v1787, 7
      %v1789 = vsub.s32 %v343, %v1788
      %v1790 = vrot.slane %v1731, %v1789
      %v1791 = vlaneseq
      %v1792 = vshrl.u32 %v1791, 7
      %v1793 = vsub.s32 %v343, %v1792
      %v1794 = vrot.slane %v1736, %v1793
      %v1795 = vlaneseq
      %v1796 = vshrl.u32 %v1795, 7
      %v1797 = vsub.s32 %v343, %v1796
      %v1798 = vrot.slane %v1741, %v1797
      %v1799 = vsel %vm1583, %v1774, %v1770
      %v1800 = vsel %vm1585, %v1778, %v1799
      %v1801 = vsel %vm1587, %v1782, %v1800
      %v1802 = vsel %vm1589, %v1786, %v1801
      %v1803 = vsel %vm1591, %v1790, %v1802
      %v1804 = vsel %vm1593, %v1794, %v1803
      %v1805 = vsel %vm1595, %v1798, %v1804
      %1807 = vxpose.xlu0.b32.start [1/16] %v1805, 128
      %1808 = vxpose.xlu0.b32.cont [2/16] 0.0, 128
      %1809 = vxpose.xlu0.b32.cont [3/16] 0.0, 128
      %1810 = vxpose.xlu0.b32.cont [4/16] 0.0, 128
      %1811 = vxpose.xlu0.b32.cont [5/16] 0.0, 128
      %1812 = vxpose.xlu0.b32.cont [6/16] 0.0, 128
      %1813 = vxpose.xlu0.b32.cont [7/16] 0.0, 128
      %1814 = vxpose.xlu0.b32.cont [8/16] 0.0, 128
      %1815 = vxpose.xlu0.b32.cont [9/16] 0.0, 128
      %1816 = vxpose.xlu0.b32.cont [10/16] 0.0, 128
      %1817 = vxpose.xlu0.b32.cont [11/16] 0.0, 128
      %1818 = vxpose.xlu0.b32.cont [12/16] 0.0, 128
      %1819 = vxpose.xlu0.b32.cont [13/16] 0.0, 128
      %1820 = vxpose.xlu0.b32.cont [14/16] 0.0, 128
      %1821 = vxpose.xlu0.b32.cont [15/16] 0.0, 128
      %1822 = vxpose.xlu0.b32.end [16/16] 0.0, 128
      %v1823 = vpop.trf.xlu0
      %v1824 = vpop.trf.xlu0
      %v1825 = vpop.trf.xlu0
      %v1826 = vpop.trf.xlu0
      %v1827 = vpop.trf.xlu0
      %v1828 = vpop.trf.xlu0
      %v1829 = vpop.trf.xlu0
      %v1830 = vpop.trf.xlu0
      %v1831 = vpop.trf.xlu0
      %v1832 = vpop.trf.xlu0
      %v1833 = vpop.trf.xlu0
      %v1834 = vpop.trf.xlu0
      %v1835 = vpop.trf.xlu0
      %v1836 = vpop.trf.xlu0
      %v1837 = vpop.trf.xlu0
      %v1838 = vpop.trf.xlu0
      %v1839 = vlaneseq
      %v1840 = vshrl.u32 %v1839, 7
      %v1841 = vsub.s32 0, %v1840
      %v1842 = vrot.slane %v1823, %v1841
      %1844 = vbcast.lane.b32.xlu0 %v1842, 256
      %v1845 = vpop.permute.xlu0 %1844
      %v1846 = vlaneseq
      %v1847 = vshrl.u32 %v1846, 7
      %v1848 = vsub.s32 1, %v1847
      %v1849 = vrot.slane %v1823, %v1848
      %1851 = vbcast.lane.b32.xlu0 %v1849, 256
      %v1852 = vpop.permute.xlu0 %1851
      %v1853 = vlaneseq
      %v1854 = vshrl.u32 %v1853, 7
      %v1855 = vsub.s32 2, %v1854
      %v1856 = vrot.slane %v1823, %v1855
      %1858 = vbcast.lane.b32.xlu0 %v1856, 256
      %v1859 = vpop.permute.xlu0 %1858
      %v1860 = vlaneseq
      %v1861 = vshrl.u32 %v1860, 7
      %v1862 = vsub.s32 3, %v1861
      %v1863 = vrot.slane %v1823, %v1862
      %1865 = vbcast.lane.b32.xlu0 %v1863, 256
      %v1866 = vpop.permute.xlu0 %1865
      %v1867 = vlaneseq
      %v1868 = vshrl.u32 %v1867, 7
      %v1869 = vsub.s32 4, %v1868
      %v1870 = vrot.slane %v1823, %v1869
      %1872 = vbcast.lane.b32.xlu0 %v1870, 256
      %v1873 = vpop.permute.xlu0 %1872
      %v1874 = vlaneseq
      %v1875 = vshrl.u32 %v1874, 7
      %v1876 = vsub.s32 5, %v1875
      %v1877 = vrot.slane %v1823, %v1876
      %1879 = vbcast.lane.b32.xlu0 %v1877, 256
      %v1880 = vpop.permute.xlu0 %1879
      %v1881 = vlaneseq
      %v1882 = vshrl.u32 %v1881, 7
      %v1883 = vsub.s32 6, %v1882
      %v1884 = vrot.slane %v1823, %v1883
      %1886 = vbcast.lane.b32.xlu0 %v1884, 256
      %v1887 = vpop.permute.xlu0 %1886
      %v1888 = vlaneseq
      %v1889 = vshrl.u32 %v1888, 7
      %v1890 = vsub.s32 7, %v1889
      %v1891 = vrot.slane %v1823, %v1890
      %1893 = vbcast.lane.b32.xlu0 %v1891, 256
      %v1894 = vpop.permute.xlu0 %1893
      %v1895 = vsub.f32 %v1209, %v1845
      %v1896 = vsub.f32 %v1249, %v1852
      %v1897 = vsub.f32 %v1289, %v1859
      %v1898 = vsub.f32 %v1329, %v1866
      %v1899 = vsub.f32 %v1369, %v1873
      %v1900 = vsub.f32 %v1409, %v1880
      %v1901 = vsub.f32 %v1449, %v1887
      %v1902 = vsub.f32 %v1489, %v1894
      %v1903 = vmul.f32 %v1895, 1.442695
      %v1904 = vpow.pop %v1903
      %v1905 = vmul.f32 %v1896, 1.442695
      %v1906 = vpow.pop %v1905
      %v1907 = vmul.f32 %v1897, 1.442695
      %v1908 = vpow.pop %v1907
      %v1909 = vmul.f32 %v1898, 1.442695
      %v1910 = vpow.pop %v1909
      %v1911 = vmul.f32 %v1899, 1.442695
      %v1912 = vpow.pop %v1911
      %v1913 = vmul.f32 %v1900, 1.442695
      %v1914 = vpow.pop %v1913
      %v1915 = vmul.f32 %v1901, 1.442695
      %v1916 = vpow.pop %v1915
      %v1917 = vmul.f32 %v1902, 1.442695
      %v1918 = vpow.pop %v1917
      %v1919 = vsel %vm1494, %v1752, 0.0
      %1920 = vadd.xlane.f32.xlu0 %v1919
      %v1921 = vpop.xlane.xlu0 %1920
      %v1922 = vsel %vm1494, %v1754, 0.0
      %1923 = vadd.xlane.f32.xlu0 %v1922
      %v1924 = vpop.xlane.xlu0 %1923
      %v1925 = vsel %vm1494, %v1756, 0.0
      %1926 = vadd.xlane.f32.xlu0 %v1925
      %v1927 = vpop.xlane.xlu0 %1926
      %v1928 = vsel %vm1494, %v1758, 0.0
      %1929 = vadd.xlane.f32.xlu0 %v1928
      %v1930 = vpop.xlane.xlu0 %1929
      %v1931 = vsel %vm1494, %v1760, 0.0
      %1932 = vadd.xlane.f32.xlu0 %v1931
      %v1933 = vpop.xlane.xlu0 %1932
      %v1934 = vsel %vm1494, %v1762, 0.0
      %1935 = vadd.xlane.f32.xlu0 %v1934
      %v1936 = vpop.xlane.xlu0 %1935
      %v1937 = vsel %vm1494, %v1764, 0.0
      %1938 = vadd.xlane.f32.xlu0 %v1937
      %v1939 = vpop.xlane.xlu0 %1938
      %v1940 = vsel %vm1494, %v1766, 0.0
      %1941 = vadd.xlane.f32.xlu0 %v1940
      %v1942 = vpop.xlane.xlu0 %1941
      %v1943 = vsel %vm1494, %v1904, 0.0
      %1944 = vadd.xlane.f32.xlu0 %v1943
      %v1945 = vpop.xlane.xlu0 %1944
      %v1946 = vsel %vm1494, %v1906, 0.0
      %1947 = vadd.xlane.f32.xlu0 %v1946
      %v1948 = vpop.xlane.xlu0 %1947
      %v1949 = vsel %vm1494, %v1908, 0.0
      %1950 = vadd.xlane.f32.xlu0 %v1949
      %v1951 = vpop.xlane.xlu0 %1950
      %v1952 = vsel %vm1494, %v1910, 0.0
      %1953 = vadd.xlane.f32.xlu0 %v1952
      %v1954 = vpop.xlane.xlu0 %1953
      %v1955 = vsel %vm1494, %v1912, 0.0
      %1956 = vadd.xlane.f32.xlu0 %v1955
      %v1957 = vpop.xlane.xlu0 %1956
      %v1958 = vsel %vm1494, %v1914, 0.0
      %1959 = vadd.xlane.f32.xlu0 %v1958
      %v1960 = vpop.xlane.xlu0 %1959
      %v1961 = vsel %vm1494, %v1916, 0.0
      %1962 = vadd.xlane.f32.xlu0 %v1961
      %v1963 = vpop.xlane.xlu0 %1962
      %v1964 = vsel %vm1494, %v1918, 0.0
      %1965 = vadd.xlane.f32.xlu0 %v1964
      %v1966 = vpop.xlane.xlu0 %1965
      %v1975 = vlaneseq
      %v1976 = vshrl.u32 %v1975, 7
      %v1977 = vsub.s32 %v343, %v1976
      %v1978 = vrot.slane %v1945, %v1977
      %v1979 = vlaneseq
      %v1980 = vshrl.u32 %v1979, 7
      %v1981 = vsub.s32 %v343, %v1980
      %v1982 = vrot.slane %v1948, %v1981
      %v1983 = vlaneseq
      %v1984 = vshrl.u32 %v1983, 7
      %v1985 = vsub.s32 %v343, %v1984
      %v1986 = vrot.slane %v1951, %v1985
      %v1987 = vlaneseq
      %v1988 = vshrl.u32 %v1987, 7
      %v1989 = vsub.s32 %v343, %v1988
      %v1990 = vrot.slane %v1954, %v1989
      %v1991 = vlaneseq
      %v1992 = vshrl.u32 %v1991, 7
      %v1993 = vsub.s32 %v343, %v1992
      %v1994 = vrot.slane %v1957, %v1993
      %v1995 = vlaneseq
      %v1996 = vshrl.u32 %v1995, 7
      %v1997 = vsub.s32 %v343, %v1996
      %v1998 = vrot.slane %v1960, %v1997
      %v1999 = vlaneseq
      %v2000 = vshrl.u32 %v1999, 7
      %v2001 = vsub.s32 %v343, %v2000
      %v2002 = vrot.slane %v1963, %v2001
      %v2003 = vlaneseq
      %v2004 = vshrl.u32 %v2003, 7
      %v2005 = vsub.s32 %v343, %v2004
      %v2006 = vrot.slane %v1966, %v2005
      %v2007 = vsel %vm1583, %v1982, %v1978
      %v2008 = vsel %vm1585, %v1986, %v2007
      %v2009 = vsel %vm1587, %v1990, %v2008
      %v2010 = vsel %vm1589, %v1994, %v2009
      %v2011 = vsel %vm1591, %v1998, %v2010
      %v2012 = vsel %vm1593, %v2002, %v2011
      %v2013 = vsel %vm1595, %v2006, %v2012
      %2015 = vxpose.xlu0.b32.start [1/16] %v2013, 128
      %2016 = vxpose.xlu0.b32.cont [2/16] 0.0, 128
      %2017 = vxpose.xlu0.b32.cont [3/16] 0.0, 128
      %2018 = vxpose.xlu0.b32.cont [4/16] 0.0, 128
      %2019 = vxpose.xlu0.b32.cont [5/16] 0.0, 128
      %2020 = vxpose.xlu0.b32.cont [6/16] 0.0, 128
      %2021 = vxpose.xlu0.b32.cont [7/16] 0.0, 128
      %2022 = vxpose.xlu0.b32.cont [8/16] 0.0, 128
      %2023 = vxpose.xlu0.b32.cont [9/16] 0.0, 128
      %2024 = vxpose.xlu0.b32.cont [10/16] 0.0, 128
      %2025 = vxpose.xlu0.b32.cont [11/16] 0.0, 128
      %2026 = vxpose.xlu0.b32.cont [12/16] 0.0, 128
      %2027 = vxpose.xlu0.b32.cont [13/16] 0.0, 128
      %2028 = vxpose.xlu0.b32.cont [14/16] 0.0, 128
      %2029 = vxpose.xlu0.b32.cont [15/16] 0.0, 128
      %2030 = vxpose.xlu0.b32.end [16/16] 0.0, 128
      %v2031 = vpop.trf.xlu0
      %v2032 = vpop.trf.xlu0
      %v2033 = vpop.trf.xlu0
      %v2034 = vpop.trf.xlu0
      %v2035 = vpop.trf.xlu0
      %v2036 = vpop.trf.xlu0
      %v2037 = vpop.trf.xlu0
      %v2038 = vpop.trf.xlu0
      %v2039 = vpop.trf.xlu0
      %v2040 = vpop.trf.xlu0
      %v2041 = vpop.trf.xlu0
      %v2042 = vpop.trf.xlu0
      %v2043 = vpop.trf.xlu0
      %v2044 = vpop.trf.xlu0
      %v2045 = vpop.trf.xlu0
      %v2046 = vpop.trf.xlu0
      %v2048 = vlaneseq
      %v2049 = vshrl.u32 %v2048, 7
      %v2050 = vsub.s32 0, %v2049
      %v2051 = vrot.slane %v2031, %v2050
      %2053 = vbcast.lane.b32.xlu0 %v2051, 256
      %v2054 = vpop.permute.xlu0 %2053
      %v2055 = vlaneseq
      %v2056 = vshrl.u32 %v2055, 7
      %v2057 = vsub.s32 1, %v2056
      %v2058 = vrot.slane %v2031, %v2057
      %2060 = vbcast.lane.b32.xlu0 %v2058, 256
      %v2061 = vpop.permute.xlu0 %2060
      %v2062 = vlaneseq
      %v2063 = vshrl.u32 %v2062, 7
      %v2064 = vsub.s32 2, %v2063
      %v2065 = vrot.slane %v2031, %v2064
      %2067 = vbcast.lane.b32.xlu0 %v2065, 256
      %v2068 = vpop.permute.xlu0 %2067
      %v2069 = vlaneseq
      %v2070 = vshrl.u32 %v2069, 7
      %v2071 = vsub.s32 3, %v2070
      %v2072 = vrot.slane %v2031, %v2071
      %2074 = vbcast.lane.b32.xlu0 %v2072, 256
      %v2075 = vpop.permute.xlu0 %2074
      %v2076 = vlaneseq
      %v2077 = vshrl.u32 %v2076, 7
      %v2078 = vsub.s32 4, %v2077
      %v2079 = vrot.slane %v2031, %v2078
      %2081 = vbcast.lane.b32.xlu0 %v2079, 256
      %v2082 = vpop.permute.xlu0 %2081
      %v2083 = vlaneseq
      %v2084 = vshrl.u32 %v2083, 7
      %v2085 = vsub.s32 5, %v2084
      %v2086 = vrot.slane %v2031, %v2085
      %2088 = vbcast.lane.b32.xlu0 %v2086, 256
      %v2089 = vpop.permute.xlu0 %2088
      %v2090 = vlaneseq
      %v2091 = vshrl.u32 %v2090, 7
      %v2092 = vsub.s32 6, %v2091
      %v2093 = vrot.slane %v2031, %v2092
      %2095 = vbcast.lane.b32.xlu0 %v2093, 256
      %v2096 = vpop.permute.xlu0 %2095
      %v2097 = vlaneseq
      %v2098 = vshrl.u32 %v2097, 7
      %v2099 = vsub.s32 7, %v2098
      %v2100 = vrot.slane %v2031, %v2099
      %2102 = vbcast.lane.b32.xlu0 %v2100, 256
      %v2103 = vpop.permute.xlu0 %2102
      %v2112 = vadd.f32 %v1921, %v2054
      %v2113 = vadd.f32 %v1924, %v2061
      %v2114 = vadd.f32 %v1927, %v2068
      %v2115 = vadd.f32 %v1930, %v2075
      %v2116 = vadd.f32 %v1933, %v2082
      %v2117 = vadd.f32 %v1936, %v2089
      %v2118 = vadd.f32 %v1939, %v2096
      %v2119 = vadd.f32 %v1942, %v2103
      %v2120 = vrcp.pop %v2112
      %v2121 = vrcp.pop %v2113
      %v2122 = vrcp.pop %v2114
      %v2123 = vrcp.pop %v2115
      %v2124 = vrcp.pop %v2116
      %v2125 = vrcp.pop %v2117
      %v2126 = vrcp.pop %v2118
      %v2127 = vrcp.pop %v2119
      %v2128 = vpack.c.bf16 %v1752, %v1752
      %v2129 = vpack.c.bf16 %v1754, %v1754
      %v2130 = vpack.c.bf16 %v1756, %v1756
      %v2131 = vpack.c.bf16 %v1758, %v1758
      %v2132 = vpack.c.bf16 %v1760, %v1760
      %v2133 = vpack.c.bf16 %v1762, %v1762
      %v2134 = vpack.c.bf16 %v1764, %v1764
      %v2135 = vpack.c.bf16 %v1766, %v1766
      %v2137 = vsel %vm1494, %v2128, 0
      %vm2139 = vcmask 1043456
      %v2141 = vsel %vm2139, %v554, 0
      %2143 = vmatprep.subr.bf16.mxu0 0
      %2144 = vmatpush1.bf16.msra.mxu0 %v2141
      %2145 = vmatprep.subr.bf16.mxu0 0
      %2146 = vmatpush1.bf16.msra.mxu0 0
      %2147 = vmatprep.subr.bf16.mxu0 0
      %2148 = vmatpush1.bf16.msra.mxu0 0
      %2149 = vmatprep.subr.bf16.mxu0 0
      %2150 = vmatpush1.bf16.msra.mxu0 0
      %2151 = vmatprep.subr.bf16.mxu0 0
      %2152 = vmatpush1.bf16.msra.mxu0 0
      %2153 = vmatprep.subr.bf16.mxu0 0
      %2154 = vmatpush1.bf16.msra.mxu0 0
      %2155 = vmatprep.subr.bf16.mxu0 0
      %2156 = vmatpush1.bf16.msra.mxu0 0
      %2157 = vmatprep.subr.bf16.mxu0 0
      %2158 = vmatpush1.bf16.msra.mxu0 0
      %2159 = vmatprep.subr.bf16.mxu0 0
      %2160 = vmatpush1.bf16.msra.mxu0 0
      %2161 = vmatprep.subr.bf16.mxu0 0
      %2162 = vmatpush1.bf16.msra.mxu0 0
      %2163 = vmatprep.subr.bf16.mxu0 0
      %2164 = vmatpush1.bf16.msra.mxu0 0
      %2165 = vmatprep.subr.bf16.mxu0 0
      %2166 = vmatpush1.bf16.msra.mxu0 0
      %2167 = vmatprep.subr.bf16.mxu0 0
      %2168 = vmatpush1.bf16.msra.mxu0 0
      %2169 = vmatprep.subr.bf16.mxu0 0
      %2170 = vmatpush1.bf16.msra.mxu0 0
      %2171 = vmatprep.subr.bf16.mxu0 0
      %2172 = vmatpush1.bf16.msra.mxu0 0
      %2173 = vmatprep.subr.bf16.mxu0 0
      %2174 = vmatpush1.bf16.msra.mxu0 0
      %2175 = vmatprep.mubr.bf16.mxu0 0
      %2176 = vmatmul.mubr.bf16.gmra.mrb[0].mxu0 %v2137
      %v2177 = vpop.f32.mrb[0].mxu0
      %v2178 = vadd.f32 0.0, %v2177
      %v2179 = vpop.f32.mrb[0].mxu0
      %v2180 = vpop.f32.mrb[0].mxu0
      %v2181 = vpop.f32.mrb[0].mxu0
      %2182 = vdwg.mxu0
      %v2184 = vsel %vm1494, %v2129, 0
      %v2187 = vsel %vm2139, %v555, 0
      %2189 = vmatprep.subr.bf16.mxu0 0
      %2190 = vmatpush1.bf16.msra.mxu0 %v2187
      %2191 = vmatprep.subr.bf16.mxu0 0
      %2192 = vmatpush1.bf16.msra.mxu0 0
      %2193 = vmatprep.subr.bf16.mxu0 0
      %2194 = vmatpush1.bf16.msra.mxu0 0
      %2195 = vmatprep.subr.bf16.mxu0 0
      %2196 = vmatpush1.bf16.msra.mxu0 0
      %2197 = vmatprep.subr.bf16.mxu0 0
      %2198 = vmatpush1.bf16.msra.mxu0 0
      %2199 = vmatprep.subr.bf16.mxu0 0
      %2200 = vmatpush1.bf16.msra.mxu0 0
      %2201 = vmatprep.subr.bf16.mxu0 0
      %2202 = vmatpush1.bf16.msra.mxu0 0
      %2203 = vmatprep.subr.bf16.mxu0 0
      %2204 = vmatpush1.bf16.msra.mxu0 0
      %2205 = vmatprep.subr.bf16.mxu0 0
      %2206 = vmatpush1.bf16.msra.mxu0 0
      %2207 = vmatprep.subr.bf16.mxu0 0
      %2208 = vmatpush1.bf16.msra.mxu0 0
      %2209 = vmatprep.subr.bf16.mxu0 0
      %2210 = vmatpush1.bf16.msra.mxu0 0
      %2211 = vmatprep.subr.bf16.mxu0 0
      %2212 = vmatpush1.bf16.msra.mxu0 0
      %2213 = vmatprep.subr.bf16.mxu0 0
      %2214 = vmatpush1.bf16.msra.mxu0 0
      %2215 = vmatprep.subr.bf16.mxu0 0
      %2216 = vmatpush1.bf16.msra.mxu0 0
      %2217 = vmatprep.subr.bf16.mxu0 0
      %2218 = vmatpush1.bf16.msra.mxu0 0
      %2219 = vmatprep.subr.bf16.mxu0 0
      %2220 = vmatpush1.bf16.msra.mxu0 0
      %2221 = vmatprep.mubr.bf16.mxu0 0
      %2222 = vmatmul.mubr.bf16.gmra.mrb[0].mxu0 %v2184
      %v2223 = vpop.f32.mrb[0].mxu0
      %v2224 = vadd.f32 0.0, %v2223
      %v2225 = vpop.f32.mrb[0].mxu0
      %v2226 = vpop.f32.mrb[0].mxu0
      %v2227 = vpop.f32.mrb[0].mxu0
      %2228 = vdwg.mxu0
      %v2230 = vsel %vm1494, %v2130, 0
      %v2233 = vsel %vm2139, %v556, 0
      %2235 = vmatprep.subr.bf16.mxu0 0
      %2236 = vmatpush1.bf16.msra.mxu0 %v2233
      %2237 = vmatprep.subr.bf16.mxu0 0
      %2238 = vmatpush1.bf16.msra.mxu0 0
      %2239 = vmatprep.subr.bf16.mxu0 0
      %2240 = vmatpush1.bf16.msra.mxu0 0
      %2241 = vmatprep.subr.bf16.mxu0 0
      %2242 = vmatpush1.bf16.msra.mxu0 0
      %2243 = vmatprep.subr.bf16.mxu0 0
      %2244 = vmatpush1.bf16.msra.mxu0 0
      %2245 = vmatprep.subr.bf16.mxu0 0
      %2246 = vmatpush1.bf16.msra.mxu0 0
      %2247 = vmatprep.subr.bf16.mxu0 0
      %2248 = vmatpush1.bf16.msra.mxu0 0
      %2249 = vmatprep.subr.bf16.mxu0 0
      %2250 = vmatpush1.bf16.msra.mxu0 0
      %2251 = vmatprep.subr.bf16.mxu0 0
      %2252 = vmatpush1.bf16.msra.mxu0 0
      %2253 = vmatprep.subr.bf16.mxu0 0
      %2254 = vmatpush1.bf16.msra.mxu0 0
      %2255 = vmatprep.subr.bf16.mxu0 0
      %2256 = vmatpush1.bf16.msra.mxu0 0
      %2257 = vmatprep.subr.bf16.mxu0 0
      %2258 = vmatpush1.bf16.msra.mxu0 0
      %2259 = vmatprep.subr.bf16.mxu0 0
      %2260 = vmatpush1.bf16.msra.mxu0 0
      %2261 = vmatprep.subr.bf16.mxu0 0
      %2262 = vmatpush1.bf16.msra.mxu0 0
      %2263 = vmatprep.subr.bf16.mxu0 0
      %2264 = vmatpush1.bf16.msra.mxu0 0
      %2265 = vmatprep.subr.bf16.mxu0 0
      %2266 = vmatpush1.bf16.msra.mxu0 0
      %2267 = vmatprep.mubr.bf16.mxu0 0
      %2268 = vmatmul.mubr.bf16.gmra.mrb[0].mxu0 %v2230
      %v2269 = vpop.f32.mrb[0].mxu0
      %v2270 = vadd.f32 0.0, %v2269
      %v2271 = vpop.f32.mrb[0].mxu0
      %v2272 = vpop.f32.mrb[0].mxu0
      %v2273 = vpop.f32.mrb[0].mxu0
      %2274 = vdwg.mxu0
      %v2276 = vsel %vm1494, %v2131, 0
      %v2279 = vsel %vm2139, %v557, 0
      %2281 = vmatprep.subr.bf16.mxu0 0
      %2282 = vmatpush1.bf16.msra.mxu0 %v2279
      %2283 = vmatprep.subr.bf16.mxu0 0
      %2284 = vmatpush1.bf16.msra.mxu0 0
      %2285 = vmatprep.subr.bf16.mxu0 0
      %2286 = vmatpush1.bf16.msra.mxu0 0
      %2287 = vmatprep.subr.bf16.mxu0 0
      %2288 = vmatpush1.bf16.msra.mxu0 0
      %2289 = vmatprep.subr.bf16.mxu0 0
      %2290 = vmatpush1.bf16.msra.mxu0 0
      %2291 = vmatprep.subr.bf16.mxu0 0
      %2292 = vmatpush1.bf16.msra.mxu0 0
      %2293 = vmatprep.subr.bf16.mxu0 0
      %2294 = vmatpush1.bf16.msra.mxu0 0
      %2295 = vmatprep.subr.bf16.mxu0 0
      %2296 = vmatpush1.bf16.msra.mxu0 0
      %2297 = vmatprep.subr.bf16.mxu0 0
      %2298 = vmatpush1.bf16.msra.mxu0 0
      %2299 = vmatprep.subr.bf16.mxu0 0
      %2300 = vmatpush1.bf16.msra.mxu0 0
      %2301 = vmatprep.subr.bf16.mxu0 0
      %2302 = vmatpush1.bf16.msra.mxu0 0
      %2303 = vmatprep.subr.bf16.mxu0 0
      %2304 = vmatpush1.bf16.msra.mxu0 0
      %2305 = vmatprep.subr.bf16.mxu0 0
      %2306 = vmatpush1.bf16.msra.mxu0 0
      %2307 = vmatprep.subr.bf16.mxu0 0
      %2308 = vmatpush1.bf16.msra.mxu0 0
      %2309 = vmatprep.subr.bf16.mxu0 0
      %2310 = vmatpush1.bf16.msra.mxu0 0
      %2311 = vmatprep.subr.bf16.mxu0 0
      %2312 = vmatpush1.bf16.msra.mxu0 0
      %2313 = vmatprep.mubr.bf16.mxu0 0
      %2314 = vmatmul.mubr.bf16.gmra.mrb[0].mxu0 %v2276
      %v2315 = vpop.f32.mrb[0].mxu0
      %v2316 = vadd.f32 0.0, %v2315
      %v2317 = vpop.f32.mrb[0].mxu0
      %v2318 = vpop.f32.mrb[0].mxu0
      %v2319 = vpop.f32.mrb[0].mxu0
      %2320 = vdwg.mxu0
      %v2322 = vsel %vm1494, %v2132, 0
      %v2325 = vsel %vm2139, %v558, 0
      %2327 = vmatprep.subr.bf16.mxu0 0
      %2328 = vmatpush1.bf16.msra.mxu0 %v2325
      %2329 = vmatprep.subr.bf16.mxu0 0
      %2330 = vmatpush1.bf16.msra.mxu0 0
      %2331 = vmatprep.subr.bf16.mxu0 0
      %2332 = vmatpush1.bf16.msra.mxu0 0
      %2333 = vmatprep.subr.bf16.mxu0 0
      %2334 = vmatpush1.bf16.msra.mxu0 0
      %2335 = vmatprep.subr.bf16.mxu0 0
      %2336 = vmatpush1.bf16.msra.mxu0 0
      %2337 = vmatprep.subr.bf16.mxu0 0
      %2338 = vmatpush1.bf16.msra.mxu0 0
      %2339 = vmatprep.subr.bf16.mxu0 0
      %2340 = vmatpush1.bf16.msra.mxu0 0
      %2341 = vmatprep.subr.bf16.mxu0 0
      %2342 = vmatpush1.bf16.msra.mxu0 0
      %2343 = vmatprep.subr.bf16.mxu0 0
      %2344 = vmatpush1.bf16.msra.mxu0 0
      %2345 = vmatprep.subr.bf16.mxu0 0
      %2346 = vmatpush1.bf16.msra.mxu0 0
      %2347 = vmatprep.subr.bf16.mxu0 0
      %2348 = vmatpush1.bf16.msra.mxu0 0
      %2349 = vmatprep.subr.bf16.mxu0 0
      %2350 = vmatpush1.bf16.msra.mxu0 0
      %2351 = vmatprep.subr.bf16.mxu0 0
      %2352 = vmatpush1.bf16.msra.mxu0 0
      %2353 = vmatprep.subr.bf16.mxu0 0
      %2354 = vmatpush1.bf16.msra.mxu0 0
      %2355 = vmatprep.subr.bf16.mxu0 0
      %2356 = vmatpush1.bf16.msra.mxu0 0
      %2357 = vmatprep.subr.bf16.mxu0 0
      %2358 = vmatpush1.bf16.msra.mxu0 0
      %2359 = vmatprep.mubr.bf16.mxu0 0
      %2360 = vmatmul.mubr.bf16.gmra.mrb[0].mxu0 %v2322
      %v2361 = vpop.f32.mrb[0].mxu0
      %v2362 = vadd.f32 0.0, %v2361
      %v2363 = vpop.f32.mrb[0].mxu0
      %v2364 = vpop.f32.mrb[0].mxu0
      %v2365 = vpop.f32.mrb[0].mxu0
      %2366 = vdwg.mxu0
      %v2368 = vsel %vm1494, %v2133, 0
      %v2371 = vsel %vm2139, %v559, 0
      %2373 = vmatprep.subr.bf16.mxu0 0
      %2374 = vmatpush1.bf16.msra.mxu0 %v2371
      %2375 = vmatprep.subr.bf16.mxu0 0
      %2376 = vmatpush1.bf16.msra.mxu0 0
      %2377 = vmatprep.subr.bf16.mxu0 0
      %2378 = vmatpush1.bf16.msra.mxu0 0
      %2379 = vmatprep.subr.bf16.mxu0 0
      %2380 = vmatpush1.bf16.msra.mxu0 0
      %2381 = vmatprep.subr.bf16.mxu0 0
      %2382 = vmatpush1.bf16.msra.mxu0 0
      %2383 = vmatprep.subr.bf16.mxu0 0
      %2384 = vmatpush1.bf16.msra.mxu0 0
      %2385 = vmatprep.subr.bf16.mxu0 0
      %2386 = vmatpush1.bf16.msra.mxu0 0
      %2387 = vmatprep.subr.bf16.mxu0 0
      %2388 = vmatpush1.bf16.msra.mxu0 0
      %2389 = vmatprep.subr.bf16.mxu0 0
      %2390 = vmatpush1.bf16.msra.mxu0 0
      %2391 = vmatprep.subr.bf16.mxu0 0
      %2392 = vmatpush1.bf16.msra.mxu0 0
      %2393 = vmatprep.subr.bf16.mxu0 0
      %2394 = vmatpush1.bf16.msra.mxu0 0
      %2395 = vmatprep.subr.bf16.mxu0 0
      %2396 = vmatpush1.bf16.msra.mxu0 0
      %2397 = vmatprep.subr.bf16.mxu0 0
      %2398 = vmatpush1.bf16.msra.mxu0 0
      %2399 = vmatprep.subr.bf16.mxu0 0
      %2400 = vmatpush1.bf16.msra.mxu0 0
      %2401 = vmatprep.subr.bf16.mxu0 0
      %2402 = vmatpush1.bf16.msra.mxu0 0
      %2403 = vmatprep.subr.bf16.mxu0 0
      %2404 = vmatpush1.bf16.msra.mxu0 0
      %2405 = vmatprep.mubr.bf16.mxu0 0
      %2406 = vmatmul.mubr.bf16.gmra.mrb[0].mxu0 %v2368
      %v2407 = vpop.f32.mrb[0].mxu0
      %v2408 = vadd.f32 0.0, %v2407
      %v2409 = vpop.f32.mrb[0].mxu0
      %v2410 = vpop.f32.mrb[0].mxu0
      %v2411 = vpop.f32.mrb[0].mxu0
      %2412 = vdwg.mxu0
      %v2414 = vsel %vm1494, %v2134, 0
      %v2417 = vsel %vm2139, %v560, 0
      %2419 = vmatprep.subr.bf16.mxu0 0
      %2420 = vmatpush1.bf16.msra.mxu0 %v2417
      %2421 = vmatprep.subr.bf16.mxu0 0
      %2422 = vmatpush1.bf16.msra.mxu0 0
      %2423 = vmatprep.subr.bf16.mxu0 0
      %2424 = vmatpush1.bf16.msra.mxu0 0
      %2425 = vmatprep.subr.bf16.mxu0 0
      %2426 = vmatpush1.bf16.msra.mxu0 0
      %2427 = vmatprep.subr.bf16.mxu0 0
      %2428 = vmatpush1.bf16.msra.mxu0 0
      %2429 = vmatprep.subr.bf16.mxu0 0
      %2430 = vmatpush1.bf16.msra.mxu0 0
      %2431 = vmatprep.subr.bf16.mxu0 0
      %2432 = vmatpush1.bf16.msra.mxu0 0
      %2433 = vmatprep.subr.bf16.mxu0 0
      %2434 = vmatpush1.bf16.msra.mxu0 0
      %2435 = vmatprep.subr.bf16.mxu0 0
      %2436 = vmatpush1.bf16.msra.mxu0 0
      %2437 = vmatprep.subr.bf16.mxu0 0
      %2438 = vmatpush1.bf16.msra.mxu0 0
      %2439 = vmatprep.subr.bf16.mxu0 0
      %2440 = vmatpush1.bf16.msra.mxu0 0
      %2441 = vmatprep.subr.bf16.mxu0 0
      %2442 = vmatpush1.bf16.msra.mxu0 0
      %2443 = vmatprep.subr.bf16.mxu0 0
      %2444 = vmatpush1.bf16.msra.mxu0 0
      %2445 = vmatprep.subr.bf16.mxu0 0
      %2446 = vmatpush1.bf16.msra.mxu0 0
      %2447 = vmatprep.subr.bf16.mxu0 0
      %2448 = vmatpush1.bf16.msra.mxu0 0
      %2449 = vmatprep.subr.bf16.mxu0 0
      %2450 = vmatpush1.bf16.msra.mxu0 0
      %2451 = vmatprep.mubr.bf16.mxu0 0
      %2452 = vmatmul.mubr.bf16.gmra.mrb[0].mxu0 %v2414
      %v2453 = vpop.f32.mrb[0].mxu0
      %v2454 = vadd.f32 0.0, %v2453
      %v2455 = vpop.f32.mrb[0].mxu0
      %v2456 = vpop.f32.mrb[0].mxu0
      %v2457 = vpop.f32.mrb[0].mxu0
      %2458 = vdwg.mxu0
      %v2460 = vsel %vm1494, %v2135, 0
      %v2463 = vsel %vm2139, %v561, 0
      %2465 = vmatprep.subr.bf16.mxu0 0
      %2466 = vmatpush1.bf16.msra.mxu0 %v2463
      %2467 = vmatprep.subr.bf16.mxu0 0
      %2468 = vmatpush1.bf16.msra.mxu0 0
      %2469 = vmatprep.subr.bf16.mxu0 0
      %2470 = vmatpush1.bf16.msra.mxu0 0
      %2471 = vmatprep.subr.bf16.mxu0 0
      %2472 = vmatpush1.bf16.msra.mxu0 0
      %2473 = vmatprep.subr.bf16.mxu0 0
      %2474 = vmatpush1.bf16.msra.mxu0 0
      %2475 = vmatprep.subr.bf16.mxu0 0
      %2476 = vmatpush1.bf16.msra.mxu0 0
      %2477 = vmatprep.subr.bf16.mxu0 0
      %2478 = vmatpush1.bf16.msra.mxu0 0
      %2479 = vmatprep.subr.bf16.mxu0 0
      %2480 = vmatpush1.bf16.msra.mxu0 0
      %2481 = vmatprep.subr.bf16.mxu0 0
      %2482 = vmatpush1.bf16.msra.mxu0 0
      %2483 = vmatprep.subr.bf16.mxu0 0
      %2484 = vmatpush1.bf16.msra.mxu0 0
      %2485 = vmatprep.subr.bf16.mxu0 0
      %2486 = vmatpush1.bf16.msra.mxu0 0
      %2487 = vmatprep.subr.bf16.mxu0 0
      %2488 = vmatpush1.bf16.msra.mxu0 0
      %2489 = vmatprep.subr.bf16.mxu0 0
      %2490 = vmatpush1.bf16.msra.mxu0 0
      %2491 = vmatprep.subr.bf16.mxu0 0
      %2492 = vmatpush1.bf16.msra.mxu0 0
      %2493 = vmatprep.subr.bf16.mxu0 0
      %2494 = vmatpush1.bf16.msra.mxu0 0
      %2495 = vmatprep.subr.bf16.mxu0 0
      %2496 = vmatpush1.bf16.msra.mxu0 0
      %2497 = vmatprep.mubr.bf16.mxu0 0
      %2498 = vmatmul.mubr.bf16.gmra.mrb[0].mxu0 %v2460
      %v2499 = vpop.f32.mrb[0].mxu0
      %v2500 = vadd.f32 0.0, %v2499
      %v2501 = vpop.f32.mrb[0].mxu0
      %v2502 = vpop.f32.mrb[0].mxu0
      %v2503 = vpop.f32.mrb[0].mxu0
      %2504 = vdwg.mxu0
      %v2505 = vpack.c.bf16 %v1904, %v1904
      %v2506 = vpack.c.bf16 %v1906, %v1906
      %v2507 = vpack.c.bf16 %v1908, %v1908
      %v2508 = vpack.c.bf16 %v1910, %v1910
      %v2509 = vpack.c.bf16 %v1912, %v1912
      %v2510 = vpack.c.bf16 %v1914, %v1914
      %v2511 = vpack.c.bf16 %v1916, %v1916
      %v2512 = vpack.c.bf16 %v1918, %v1918
      %v2514 = vsel %vm1494, %v2505, 0
      %v2517 = vsel %vm2139, %v832, 0
      %2519 = vmatprep.subr.bf16.mxu0 0
      %2520 = vmatpush1.bf16.msra.mxu0 %v2517
      %2521 = vmatprep.subr.bf16.mxu0 0
      %2522 = vmatpush1.bf16.msra.mxu0 0
      %2523 = vmatprep.subr.bf16.mxu0 0
      %2524 = vmatpush1.bf16.msra.mxu0 0
      %2525 = vmatprep.subr.bf16.mxu0 0
      %2526 = vmatpush1.bf16.msra.mxu0 0
      %2527 = vmatprep.subr.bf16.mxu0 0
      %2528 = vmatpush1.bf16.msra.mxu0 0
      %2529 = vmatprep.subr.bf16.mxu0 0
      %2530 = vmatpush1.bf16.msra.mxu0 0
      %2531 = vmatprep.subr.bf16.mxu0 0
      %2532 = vmatpush1.bf16.msra.mxu0 0
      %2533 = vmatprep.subr.bf16.mxu0 0
      %2534 = vmatpush1.bf16.msra.mxu0 0
      %2535 = vmatprep.subr.bf16.mxu0 0
      %2536 = vmatpush1.bf16.msra.mxu0 0
      %2537 = vmatprep.subr.bf16.mxu0 0
      %2538 = vmatpush1.bf16.msra.mxu0 0
      %2539 = vmatprep.subr.bf16.mxu0 0
      %2540 = vmatpush1.bf16.msra.mxu0 0
      %2541 = vmatprep.subr.bf16.mxu0 0
      %2542 = vmatpush1.bf16.msra.mxu0 0
      %2543 = vmatprep.subr.bf16.mxu0 0
      %2544 = vmatpush1.bf16.msra.mxu0 0
      %2545 = vmatprep.subr.bf16.mxu0 0
      %2546 = vmatpush1.bf16.msra.mxu0 0
      %2547 = vmatprep.subr.bf16.mxu0 0
      %2548 = vmatpush1.bf16.msra.mxu0 0
      %2549 = vmatprep.subr.bf16.mxu0 0
      %2550 = vmatpush1.bf16.msra.mxu0 0
      %2551 = vmatprep.mubr.bf16.mxu0 0
      %2552 = vmatmul.mubr.bf16.gmra.mrb[0].mxu0 %v2514
      %v2553 = vpop.f32.mrb[0].mxu0
      %v2554 = vadd.f32 0.0, %v2553
      %v2555 = vpop.f32.mrb[0].mxu0
      %v2556 = vpop.f32.mrb[0].mxu0
      %v2557 = vpop.f32.mrb[0].mxu0
      %2558 = vdwg.mxu0
      %v2560 = vsel %vm1494, %v2506, 0
      %v2563 = vsel %vm2139, %v835, 0
      %2565 = vmatprep.subr.bf16.mxu0 0
      %2566 = vmatpush1.bf16.msra.mxu0 %v2563
      %2567 = vmatprep.subr.bf16.mxu0 0
      %2568 = vmatpush1.bf16.msra.mxu0 0
      %2569 = vmatprep.subr.bf16.mxu0 0
      %2570 = vmatpush1.bf16.msra.mxu0 0
      %2571 = vmatprep.subr.bf16.mxu0 0
      %2572 = vmatpush1.bf16.msra.mxu0 0
      %2573 = vmatprep.subr.bf16.mxu0 0
      %2574 = vmatpush1.bf16.msra.mxu0 0
      %2575 = vmatprep.subr.bf16.mxu0 0
      %2576 = vmatpush1.bf16.msra.mxu0 0
      %2577 = vmatprep.subr.bf16.mxu0 0
      %2578 = vmatpush1.bf16.msra.mxu0 0
      %2579 = vmatprep.subr.bf16.mxu0 0
      %2580 = vmatpush1.bf16.msra.mxu0 0
      %2581 = vmatprep.subr.bf16.mxu0 0
      %2582 = vmatpush1.bf16.msra.mxu0 0
      %2583 = vmatprep.subr.bf16.mxu0 0
      %2584 = vmatpush1.bf16.msra.mxu0 0
      %2585 = vmatprep.subr.bf16.mxu0 0
      %2586 = vmatpush1.bf16.msra.mxu0 0
      %2587 = vmatprep.subr.bf16.mxu0 0
      %2588 = vmatpush1.bf16.msra.mxu0 0
      %2589 = vmatprep.subr.bf16.mxu0 0
      %2590 = vmatpush1.bf16.msra.mxu0 0
      %2591 = vmatprep.subr.bf16.mxu0 0
      %2592 = vmatpush1.bf16.msra.mxu0 0
      %2593 = vmatprep.subr.bf16.mxu0 0
      %2594 = vmatpush1.bf16.msra.mxu0 0
      %2595 = vmatprep.subr.bf16.mxu0 0
      %2596 = vmatpush1.bf16.msra.mxu0 0
      %2597 = vmatprep.mubr.bf16.mxu0 0
      %2598 = vmatmul.mubr.bf16.gmra.mrb[0].mxu0 %v2560
      %v2599 = vpop.f32.mrb[0].mxu0
      %v2600 = vadd.f32 0.0, %v2599
      %v2601 = vpop.f32.mrb[0].mxu0
      %v2602 = vpop.f32.mrb[0].mxu0
      %v2603 = vpop.f32.mrb[0].mxu0
      %2604 = vdwg.mxu0
      %v2606 = vsel %vm1494, %v2507, 0
      %v2609 = vsel %vm2139, %v838, 0
      %2611 = vmatprep.subr.bf16.mxu0 0
      %2612 = vmatpush1.bf16.msra.mxu0 %v2609
      %2613 = vmatprep.subr.bf16.mxu0 0
      %2614 = vmatpush1.bf16.msra.mxu0 0
      %2615 = vmatprep.subr.bf16.mxu0 0
      %2616 = vmatpush1.bf16.msra.mxu0 0
      %2617 = vmatprep.subr.bf16.mxu0 0
      %2618 = vmatpush1.bf16.msra.mxu0 0
      %2619 = vmatprep.subr.bf16.mxu0 0
      %2620 = vmatpush1.bf16.msra.mxu0 0
      %2621 = vmatprep.subr.bf16.mxu0 0
      %2622 = vmatpush1.bf16.msra.mxu0 0
      %2623 = vmatprep.subr.bf16.mxu0 0
      %2624 = vmatpush1.bf16.msra.mxu0 0
      %2625 = vmatprep.subr.bf16.mxu0 0
      %2626 = vmatpush1.bf16.msra.mxu0 0
      %2627 = vmatprep.subr.bf16.mxu0 0
      %2628 = vmatpush1.bf16.msra.mxu0 0
      %2629 = vmatprep.subr.bf16.mxu0 0
      %2630 = vmatpush1.bf16.msra.mxu0 0
      %2631 = vmatprep.subr.bf16.mxu0 0
      %2632 = vmatpush1.bf16.msra.mxu0 0
      %2633 = vmatprep.subr.bf16.mxu0 0
      %2634 = vmatpush1.bf16.msra.mxu0 0
      %2635 = vmatprep.subr.bf16.mxu0 0
      %2636 = vmatpush1.bf16.msra.mxu0 0
      %2637 = vmatprep.subr.bf16.mxu0 0
      %2638 = vmatpush1.bf16.msra.mxu0 0
      %2639 = vmatprep.subr.bf16.mxu0 0
      %2640 = vmatpush1.bf16.msra.mxu0 0
      %2641 = vmatprep.subr.bf16.mxu0 0
      %2642 = vmatpush1.bf16.msra.mxu0 0
      %2643 = vmatprep.mubr.bf16.mxu0 0
      %2644 = vmatmul.mubr.bf16.gmra.mrb[0].mxu0 %v2606
      %v2645 = vpop.f32.mrb[0].mxu0
      %v2646 = vadd.f32 0.0, %v2645
      %v2647 = vpop.f32.mrb[0].mxu0
      %v2648 = vpop.f32.mrb[0].mxu0
      %v2649 = vpop.f32.mrb[0].mxu0
      %2650 = vdwg.mxu0
      %v2652 = vsel %vm1494, %v2508, 0
      %v2655 = vsel %vm2139, %v841, 0
      %2657 = vmatprep.subr.bf16.mxu0 0
      %2658 = vmatpush1.bf16.msra.mxu0 %v2655
      %2659 = vmatprep.subr.bf16.mxu0 0
      %2660 = vmatpush1.bf16.msra.mxu0 0
      %2661 = vmatprep.subr.bf16.mxu0 0
      %2662 = vmatpush1.bf16.msra.mxu0 0
      %2663 = vmatprep.subr.bf16.mxu0 0
      %2664 = vmatpush1.bf16.msra.mxu0 0
      %2665 = vmatprep.subr.bf16.mxu0 0
      %2666 = vmatpush1.bf16.msra.mxu0 0
      %2667 = vmatprep.subr.bf16.mxu0 0
      %2668 = vmatpush1.bf16.msra.mxu0 0
      %2669 = vmatprep.subr.bf16.mxu0 0
      %2670 = vmatpush1.bf16.msra.mxu0 0
      %2671 = vmatprep.subr.bf16.mxu0 0
      %2672 = vmatpush1.bf16.msra.mxu0 0
      %2673 = vmatprep.subr.bf16.mxu0 0
      %2674 = vmatpush1.bf16.msra.mxu0 0
      %2675 = vmatprep.subr.bf16.mxu0 0
      %2676 = vmatpush1.bf16.msra.mxu0 0
      %2677 = vmatprep.subr.bf16.mxu0 0
      %2678 = vmatpush1.bf16.msra.mxu0 0
      %2679 = vmatprep.subr.bf16.mxu0 0
      %2680 = vmatpush1.bf16.msra.mxu0 0
      %2681 = vmatprep.subr.bf16.mxu0 0
      %2682 = vmatpush1.bf16.msra.mxu0 0
      %2683 = vmatprep.subr.bf16.mxu0 0
      %2684 = vmatpush1.bf16.msra.mxu0 0
      %2685 = vmatprep.subr.bf16.mxu0 0
      %2686 = vmatpush1.bf16.msra.mxu0 0
      %2687 = vmatprep.subr.bf16.mxu0 0
      %2688 = vmatpush1.bf16.msra.mxu0 0
      %2689 = vmatprep.mubr.bf16.mxu0 0
      %2690 = vmatmul.mubr.bf16.gmra.mrb[0].mxu0 %v2652
      %v2691 = vpop.f32.mrb[0].mxu0
      %v2692 = vadd.f32 0.0, %v2691
      %v2693 = vpop.f32.mrb[0].mxu0
      %v2694 = vpop.f32.mrb[0].mxu0
      %v2695 = vpop.f32.mrb[0].mxu0
      %2696 = vdwg.mxu0
      %v2698 = vsel %vm1494, %v2509, 0
      %v2701 = vsel %vm2139, %v844, 0
      %2703 = vmatprep.subr.bf16.mxu0 0
      %2704 = vmatpush1.bf16.msra.mxu0 %v2701
      %2705 = vmatprep.subr.bf16.mxu0 0
      %2706 = vmatpush1.bf16.msra.mxu0 0
      %2707 = vmatprep.subr.bf16.mxu0 0
      %2708 = vmatpush1.bf16.msra.mxu0 0
      %2709 = vmatprep.subr.bf16.mxu0 0
      %2710 = vmatpush1.bf16.msra.mxu0 0
      %2711 = vmatprep.subr.bf16.mxu0 0
      %2712 = vmatpush1.bf16.msra.mxu0 0
      %2713 = vmatprep.subr.bf16.mxu0 0
      %2714 = vmatpush1.bf16.msra.mxu0 0
      %2715 = vmatprep.subr.bf16.mxu0 0
      %2716 = vmatpush1.bf16.msra.mxu0 0
      %2717 = vmatprep.subr.bf16.mxu0 0
      %2718 = vmatpush1.bf16.msra.mxu0 0
      %2719 = vmatprep.subr.bf16.mxu0 0
      %2720 = vmatpush1.bf16.msra.mxu0 0
      %2721 = vmatprep.subr.bf16.mxu0 0
      %2722 = vmatpush1.bf16.msra.mxu0 0
      %2723 = vmatprep.subr.bf16.mxu0 0
      %2724 = vmatpush1.bf16.msra.mxu0 0
      %2725 = vmatprep.subr.bf16.mxu0 0
      %2726 = vmatpush1.bf16.msra.mxu0 0
      %2727 = vmatprep.subr.bf16.mxu0 0
      %2728 = vmatpush1.bf16.msra.mxu0 0
      %2729 = vmatprep.subr.bf16.mxu0 0
      %2730 = vmatpush1.bf16.msra.mxu0 0
      %2731 = vmatprep.subr.bf16.mxu0 0
      %2732 = vmatpush1.bf16.msra.mxu0 0
      %2733 = vmatprep.subr.bf16.mxu0 0
      %2734 = vmatpush1.bf16.msra.mxu0 0
      %2735 = vmatprep.mubr.bf16.mxu0 0
      %2736 = vmatmul.mubr.bf16.gmra.mrb[0].mxu0 %v2698
      %v2737 = vpop.f32.mrb[0].mxu0
      %v2738 = vadd.f32 0.0, %v2737
      %v2739 = vpop.f32.mrb[0].mxu0
      %v2740 = vpop.f32.mrb[0].mxu0
      %v2741 = vpop.f32.mrb[0].mxu0
      %2742 = vdwg.mxu0
      %v2744 = vsel %vm1494, %v2510, 0
      %v2747 = vsel %vm2139, %v847, 0
      %2749 = vmatprep.subr.bf16.mxu0 0
      %2750 = vmatpush1.bf16.msra.mxu0 %v2747
      %2751 = vmatprep.subr.bf16.mxu0 0
      %2752 = vmatpush1.bf16.msra.mxu0 0
      %2753 = vmatprep.subr.bf16.mxu0 0
      %2754 = vmatpush1.bf16.msra.mxu0 0
      %2755 = vmatprep.subr.bf16.mxu0 0
      %2756 = vmatpush1.bf16.msra.mxu0 0
      %2757 = vmatprep.subr.bf16.mxu0 0
      %2758 = vmatpush1.bf16.msra.mxu0 0
      %2759 = vmatprep.subr.bf16.mxu0 0
      %2760 = vmatpush1.bf16.msra.mxu0 0
      %2761 = vmatprep.subr.bf16.mxu0 0
      %2762 = vmatpush1.bf16.msra.mxu0 0
      %2763 = vmatprep.subr.bf16.mxu0 0
      %2764 = vmatpush1.bf16.msra.mxu0 0
      %2765 = vmatprep.subr.bf16.mxu0 0
      %2766 = vmatpush1.bf16.msra.mxu0 0
      %2767 = vmatprep.subr.bf16.mxu0 0
      %2768 = vmatpush1.bf16.msra.mxu0 0
      %2769 = vmatprep.subr.bf16.mxu0 0
      %2770 = vmatpush1.bf16.msra.mxu0 0
      %2771 = vmatprep.subr.bf16.mxu0 0
      %2772 = vmatpush1.bf16.msra.mxu0 0
      %2773 = vmatprep.subr.bf16.mxu0 0
      %2774 = vmatpush1.bf16.msra.mxu0 0
      %2775 = vmatprep.subr.bf16.mxu0 0
      %2776 = vmatpush1.bf16.msra.mxu0 0
      %2777 = vmatprep.subr.bf16.mxu0 0
      %2778 = vmatpush1.bf16.msra.mxu0 0
      %2779 = vmatprep.subr.bf16.mxu0 0
      %2780 = vmatpush1.bf16.msra.mxu0 0
      %2781 = vmatprep.mubr.bf16.mxu0 0
      %2782 = vmatmul.mubr.bf16.gmra.mrb[0].mxu0 %v2744
      %v2783 = vpop.f32.mrb[0].mxu0
      %v2784 = vadd.f32 0.0, %v2783
      %v2785 = vpop.f32.mrb[0].mxu0
      %v2786 = vpop.f32.mrb[0].mxu0
      %v2787 = vpop.f32.mrb[0].mxu0
      %2788 = vdwg.mxu0
      %v2790 = vsel %vm1494, %v2511, 0
      %v2793 = vsel %vm2139, %v850, 0
      %2795 = vmatprep.subr.bf16.mxu0 0
      %2796 = vmatpush1.bf16.msra.mxu0 %v2793
      %2797 = vmatprep.subr.bf16.mxu0 0
      %2798 = vmatpush1.bf16.msra.mxu0 0
      %2799 = vmatprep.subr.bf16.mxu0 0
      %2800 = vmatpush1.bf16.msra.mxu0 0
      %2801 = vmatprep.subr.bf16.mxu0 0
      %2802 = vmatpush1.bf16.msra.mxu0 0
      %2803 = vmatprep.subr.bf16.mxu0 0
      %2804 = vmatpush1.bf16.msra.mxu0 0
      %2805 = vmatprep.subr.bf16.mxu0 0
      %2806 = vmatpush1.bf16.msra.mxu0 0
      %2807 = vmatprep.subr.bf16.mxu0 0
      %2808 = vmatpush1.bf16.msra.mxu0 0
      %2809 = vmatprep.subr.bf16.mxu0 0
      %2810 = vmatpush1.bf16.msra.mxu0 0
      %2811 = vmatprep.subr.bf16.mxu0 0
      %2812 = vmatpush1.bf16.msra.mxu0 0
      %2813 = vmatprep.subr.bf16.mxu0 0
      %2814 = vmatpush1.bf16.msra.mxu0 0
      %2815 = vmatprep.subr.bf16.mxu0 0
      %2816 = vmatpush1.bf16.msra.mxu0 0
      %2817 = vmatprep.subr.bf16.mxu0 0
      %2818 = vmatpush1.bf16.msra.mxu0 0
      %2819 = vmatprep.subr.bf16.mxu0 0
      %2820 = vmatpush1.bf16.msra.mxu0 0
      %2821 = vmatprep.subr.bf16.mxu0 0
      %2822 = vmatpush1.bf16.msra.mxu0 0
      %2823 = vmatprep.subr.bf16.mxu0 0
      %2824 = vmatpush1.bf16.msra.mxu0 0
      %2825 = vmatprep.subr.bf16.mxu0 0
      %2826 = vmatpush1.bf16.msra.mxu0 0
      %2827 = vmatprep.mubr.bf16.mxu0 0
      %2828 = vmatmul.mubr.bf16.gmra.mrb[0].mxu0 %v2790
      %v2829 = vpop.f32.mrb[0].mxu0
      %v2830 = vadd.f32 0.0, %v2829
      %v2831 = vpop.f32.mrb[0].mxu0
      %v2832 = vpop.f32.mrb[0].mxu0
      %v2833 = vpop.f32.mrb[0].mxu0
      %2834 = vdwg.mxu0
      %v2836 = vsel %vm1494, %v2512, 0
      %v2839 = vsel %vm2139, %v853, 0
      %2841 = vmatprep.subr.bf16.mxu0 0
      %2842 = vmatpush1.bf16.msra.mxu0 %v2839
      %2843 = vmatprep.subr.bf16.mxu0 0
      %2844 = vmatpush1.bf16.msra.mxu0 0
      %2845 = vmatprep.subr.bf16.mxu0 0
      %2846 = vmatpush1.bf16.msra.mxu0 0
      %2847 = vmatprep.subr.bf16.mxu0 0
      %2848 = vmatpush1.bf16.msra.mxu0 0
      %2849 = vmatprep.subr.bf16.mxu0 0
      %2850 = vmatpush1.bf16.msra.mxu0 0
      %2851 = vmatprep.subr.bf16.mxu0 0
      %2852 = vmatpush1.bf16.msra.mxu0 0
      %2853 = vmatprep.subr.bf16.mxu0 0
      %2854 = vmatpush1.bf16.msra.mxu0 0
      %2855 = vmatprep.subr.bf16.mxu0 0
      %2856 = vmatpush1.bf16.msra.mxu0 0
      %2857 = vmatprep.subr.bf16.mxu0 0
      %2858 = vmatpush1.bf16.msra.mxu0 0
      %2859 = vmatprep.subr.bf16.mxu0 0
      %2860 = vmatpush1.bf16.msra.mxu0 0
      %2861 = vmatprep.subr.bf16.mxu0 0
      %2862 = vmatpush1.bf16.msra.mxu0 0
      %2863 = vmatprep.subr.bf16.mxu0 0
      %2864 = vmatpush1.bf16.msra.mxu0 0
      %2865 = vmatprep.subr.bf16.mxu0 0
      %2866 = vmatpush1.bf16.msra.mxu0 0
      %2867 = vmatprep.subr.bf16.mxu0 0
      %2868 = vmatpush1.bf16.msra.mxu0 0
      %2869 = vmatprep.subr.bf16.mxu0 0
      %2870 = vmatpush1.bf16.msra.mxu0 0
      %2871 = vmatprep.subr.bf16.mxu0 0
      %2872 = vmatpush1.bf16.msra.mxu0 0
      %2873 = vmatprep.mubr.bf16.mxu0 0
      %2874 = vmatmul.mubr.bf16.gmra.mrb[0].mxu0 %v2836
      %v2875 = vpop.f32.mrb[0].mxu0
      %v2876 = vadd.f32 0.0, %v2875
      %v2877 = vpop.f32.mrb[0].mxu0
      %v2878 = vpop.f32.mrb[0].mxu0
      %v2879 = vpop.f32.mrb[0].mxu0
      %2880 = vdwg.mxu0
      %v2881 = vcombine.low %v2554, %v2646
      %v2882 = vcombine.high %v2554, %v2646
      %v2884 = vunpack.c.l.s4 1983009808
      %v2885 = vunpack.c.0.s8 %v2884
      %v2886 = vlaneseq
      %v2887 = vshrl.u32 %v2886, 7
      %v2888 = vsub.s32 %v2885, %v2887
      %v2889 = vrot.slane %v2881, %v2888
      %v2891 = vunpack.c.l.s4 1983009808
      %v2892 = vunpack.c.0.s8 %v2891
      %v2893 = vlaneseq
      %v2894 = vshrl.u32 %v2893, 7
      %v2895 = vsub.s32 %v2892, %v2894
      %v2896 = vrot.slane %v2882, %v2895
      %v2897 = vcombine.low %v2600, %v2692
      %v2898 = vcombine.high %v2600, %v2692
      %v2900 = vunpack.c.l.s4 1983009808
      %v2901 = vunpack.c.0.s8 %v2900
      %v2902 = vlaneseq
      %v2903 = vshrl.u32 %v2902, 7
      %v2904 = vsub.s32 %v2901, %v2903
      %v2905 = vrot.slane %v2897, %v2904
      %v2907 = vunpack.c.l.s4 1983009808
      %v2908 = vunpack.c.0.s8 %v2907
      %v2909 = vlaneseq
      %v2910 = vshrl.u32 %v2909, 7
      %v2911 = vsub.s32 %v2908, %v2910
      %v2912 = vrot.slane %v2898, %v2911
      %v2913 = vcombine.low %v2738, %v2830
      %v2914 = vcombine.high %v2738, %v2830
      %v2916 = vunpack.c.l.s4 1983009808
      %v2917 = vunpack.c.0.s8 %v2916
      %v2918 = vlaneseq
      %v2919 = vshrl.u32 %v2918, 7
      %v2920 = vsub.s32 %v2917, %v2919
      %v2921 = vrot.slane %v2913, %v2920
      %v2923 = vunpack.c.l.s4 1983009808
      %v2924 = vunpack.c.0.s8 %v2923
      %v2925 = vlaneseq
      %v2926 = vshrl.u32 %v2925, 7
      %v2927 = vsub.s32 %v2924, %v2926
      %v2928 = vrot.slane %v2914, %v2927
      %v2929 = vcombine.low %v2784, %v2876
      %v2930 = vcombine.high %v2784, %v2876
      %v2932 = vunpack.c.l.s4 1983009808
      %v2933 = vunpack.c.0.s8 %v2932
      %v2934 = vlaneseq
      %v2935 = vshrl.u32 %v2934, 7
      %v2936 = vsub.s32 %v2933, %v2935
      %v2937 = vrot.slane %v2929, %v2936
      %v2939 = vunpack.c.l.s4 1983009808
      %v2940 = vunpack.c.0.s8 %v2939
      %v2941 = vlaneseq
      %v2942 = vshrl.u32 %v2941, 7
      %v2943 = vsub.s32 %v2940, %v2942
      %v2944 = vrot.slane %v2930, %v2943
      %v2945 = vcombine.low %v2889, %v2905
      %v2946 = vcombine.high %v2889, %v2905
      %v2948 = vunpack.c.l.s4 1934713408
      %v2949 = vunpack.c.0.s8 %v2948
      %v2950 = vlaneseq
      %v2951 = vshrl.u32 %v2950, 7
      %v2952 = vsub.s32 %v2949, %v2951
      %v2953 = vrot.slane %v2945, %v2952
      %v2955 = vunpack.c.l.s4 1934713408
      %v2956 = vunpack.c.0.s8 %v2955
      %v2957 = vlaneseq
      %v2958 = vshrl.u32 %v2957, 7
      %v2959 = vsub.s32 %v2956, %v2958
      %v2960 = vrot.slane %v2946, %v2959
      %v2961 = vcombine.low %v2896, %v2912
      %v2962 = vcombine.high %v2896, %v2912
      %v2964 = vunpack.c.l.s4 1934713408
      %v2965 = vunpack.c.0.s8 %v2964
      %v2966 = vlaneseq
      %v2967 = vshrl.u32 %v2966, 7
      %v2968 = vsub.s32 %v2965, %v2967
      %v2969 = vrot.slane %v2961, %v2968
      %v2971 = vunpack.c.l.s4 1934713408
      %v2972 = vunpack.c.0.s8 %v2971
      %v2973 = vlaneseq
      %v2974 = vshrl.u32 %v2973, 7
      %v2975 = vsub.s32 %v2972, %v2974
      %v2976 = vrot.slane %v2962, %v2975
      %v2977 = vcombine.low %v2921, %v2937
      %v2978 = vcombine.high %v2921, %v2937
      %v2980 = vunpack.c.l.s4 1934713408
      %v2981 = vunpack.c.0.s8 %v2980
      %v2982 = vlaneseq
      %v2983 = vshrl.u32 %v2982, 7
      %v2984 = vsub.s32 %v2981, %v2983
      %v2985 = vrot.slane %v2977, %v2984
      %v2987 = vunpack.c.l.s4 1934713408
      %v2988 = vunpack.c.0.s8 %v2987
      %v2989 = vlaneseq
      %v2990 = vshrl.u32 %v2989, 7
      %v2991 = vsub.s32 %v2988, %v2990
      %v2992 = vrot.slane %v2978, %v2991
      %v2993 = vcombine.low %v2928, %v2944
      %v2994 = vcombine.high %v2928, %v2944
      %v2996 = vunpack.c.l.s4 1934713408
      %v2997 = vunpack.c.0.s8 %v2996
      %v2998 = vlaneseq
      %v2999 = vshrl.u32 %v2998, 7
      %v3000 = vsub.s32 %v2997, %v2999
      %v3001 = vrot.slane %v2993, %v3000
      %v3003 = vunpack.c.l.s4 1934713408
      %v3004 = vunpack.c.0.s8 %v3003
      %v3005 = vlaneseq
      %v3006 = vshrl.u32 %v3005, 7
      %v3007 = vsub.s32 %v3004, %v3006
      %v3008 = vrot.slane %v2994, %v3007
      %v3009 = vcombine.low %v2953, %v2985
      %v3010 = vcombine.high %v2953, %v2985
      %v3011 = vcombine.low %v2960, %v2992
      %v3012 = vcombine.high %v2960, %v2992
      %v3013 = vcombine.low %v2969, %v3001
      %v3014 = vcombine.high %v2969, %v3001
      %v3015 = vcombine.low %v2976, %v3008
      %v3016 = vcombine.high %v2976, %v3008
      %v3017 = vadd.f32 %v3009, %v2178
      %v3018 = vadd.f32 %v3010, %v2224
      %v3019 = vadd.f32 %v3011, %v2270
      %v3020 = vadd.f32 %v3012, %v2316
      %v3021 = vadd.f32 %v3013, %v2362
      %v3022 = vadd.f32 %v3014, %v2408
      %v3023 = vadd.f32 %v3015, %v2454
      %v3024 = vadd.f32 %v3016, %v2500
      %3026 = vset.pattern.permute.xlu0 0
      %3027 = vperm.xlu0 %3026, %v2120
      %v3028 = vpop.permute.xlu0 %3027
      %3031 = vset.pattern.permute.xlu0 0
      %3032 = vperm.xlu0 %3031, %v2121
      %v3033 = vpop.permute.xlu0 %3032
      %3036 = vset.pattern.permute.xlu0 0
      %3037 = vperm.xlu0 %3036, %v2122
      %v3038 = vpop.permute.xlu0 %3037
      %3041 = vset.pattern.permute.xlu0 0
      %3042 = vperm.xlu0 %3041, %v2123
      %v3043 = vpop.permute.xlu0 %3042
      %3046 = vset.pattern.permute.xlu0 0
      %3047 = vperm.xlu0 %3046, %v2124
      %v3048 = vpop.permute.xlu0 %3047
      %3051 = vset.pattern.permute.xlu0 0
      %3052 = vperm.xlu0 %3051, %v2125
      %v3053 = vpop.permute.xlu0 %3052
      %3056 = vset.pattern.permute.xlu0 0
      %3057 = vperm.xlu0 %3056, %v2126
      %v3058 = vpop.permute.xlu0 %3057
      %3061 = vset.pattern.permute.xlu0 0
      %3062 = vperm.xlu0 %3061, %v2127
      %v3063 = vpop.permute.xlu0 %3062
      %v3065 = vmul.f32 %v3017, %v3028
      %v3066 = vmul.f32 %v3018, %v3033
      %v3067 = vmul.f32 %v3019, %v3038
      %v3068 = vmul.f32 %v3020, %v3043
      %v3069 = vmul.f32 %v3021, %v3048
      %v3070 = vmul.f32 %v3022, %v3053
      %v3071 = vmul.f32 %v3023, %v3058
      %v3072 = vmul.f32 %v3024, %v3063
      %v3074 = vlaneseq
      %v3075 = vshrl.u32 %v3074, 7
      %v3076 = vsub.s32 0, %v3075
      %v3077 = vrot.slane %v339, %v3076
      %3078 = vset.pattern.permute.xlu0 0
      %3079 = vperm.xlu0 %3078, %v3077
      %v3080 = vpop.permute.xlu0 %3079
      %v3082 = vmul.f32 %v3080, %v3065
      %v3083 = vmul.f32 %v3080, %v3066
      %v3084 = vmul.f32 %v3080, %v3067
      %v3085 = vmul.f32 %v3080, %v3068
      %v3086 = vmul.f32 %v3080, %v3069
      %v3087 = vmul.f32 %v3080, %v3070
      %v3088 = vmul.f32 %v3080, %v3071
      %v3089 = vmul.f32 %v3080, %v3072
      %v3090 = vadd.f32 %v3082, %v331
      %v3091 = vadd.f32 %v3083, %v332
      %v3092 = vadd.f32 %v3084, %v333
      %v3093 = vadd.f32 %v3085, %v334
      %v3094 = vadd.f32 %v3086, %v335
      %v3095 = vadd.f32 %v3087, %v336
      %v3096 = vadd.f32 %v3088, %v337
      %v3097 = vadd.f32 %v3089, %v338
      %v3098 = vpack.c.bf16 %v3091, %v3090
      %v3099 = vpack.c.bf16 %v3093, %v3092
      %v3100 = vpack.c.bf16 %v3095, %v3094
      %v3101 = vpack.c.bf16 %v3097, %v3096
      %v3102 = vld [vmem:[%s5] sm:$0xff]
      %v3103 = vld [vmem:[%s5 + $0x8] sm:$0xf]
      %v3104 = vld [vmem:[%s5 + $0xc] sm:$0xff]
      %v3105 = vld [vmem:[%s5 + $0x14] sm:$0xf]
      %v3106 = vld [vmem:[%s6] sm:$0x7]
      %v3108 = vlaneseq
      %v3109 = vshrl.u32 %v3108, 7
      %v3110 = vsub.s32 0, %v3109
      %v3111 = vrot.slane %v3106, %v3110
      %v3112 = vlaneseq
      %v3113 = vshrl.u32 %v3112, 7
      %v3114 = vsub.s32 1, %v3113
      %v3115 = vrot.slane %v3106, %v3114
      %v3116 = vlaneseq
      %v3117 = vshrl.u32 %v3116, 7
      %v3118 = vsub.s32 2, %v3117
      %v3119 = vrot.slane %v3106, %v3118
      %v3127 = vunpack.c.l.b16 %v3102
      %v3128 = vunpack.c.h.b16 %v3102
      %v3129 = vunpack.c.l.b16 %v3103
      %v3130 = vunpack.c.l.b16 %v3104
      %v3131 = vunpack.c.h.b16 %v3104
      %v3132 = vunpack.c.l.b16 %v3105
      %v3133 = vpack.c.b16 %v3130, %v3127
      %v3134 = vpack.c.b16 %v3131, %v3128
      %v3135 = vpack.c.b16 %v3132, %v3129
      %v3140 = vsel %vm387, %v3098, 0
      %v3143 = vsel %vm387, %v3099, 0
      %v3146 = vsel %vm387, %v3100, 0
      %v3149 = vsel %vm387, %v3101, 0
      %3151 = vmatprep.subr.bf16.mxu0 %v3134
      %3152 = vmatpush1.bf16.msra.mxu0 %v3133
      %3153 = vmatprep.subr.bf16.mxu0 0
      %3154 = vmatpush1.bf16.msra.mxu0 0
      %3155 = vmatprep.subr.bf16.mxu0 0
      %3156 = vmatpush1.bf16.msra.mxu0 0
      %3157 = vmatprep.subr.bf16.mxu0 0
      %3158 = vmatpush1.bf16.msra.mxu0 0
      %3159 = vmatprep.subr.bf16.mxu0 0
      %3160 = vmatpush1.bf16.msra.mxu0 0
      %3161 = vmatprep.subr.bf16.mxu0 0
      %3162 = vmatpush1.bf16.msra.mxu0 0
      %3163 = vmatprep.subr.bf16.mxu0 0
      %3164 = vmatpush1.bf16.msra.mxu0 0
      %3165 = vmatprep.subr.bf16.mxu0 0
      %3166 = vmatpush1.bf16.msra.mxu0 0
      %3167 = vmatprep.subr.bf16.mxu0 0
      %3168 = vmatpush1.bf16.msra.mxu0 0
      %3169 = vmatprep.subr.bf16.mxu0 0
      %3170 = vmatpush1.bf16.msra.mxu0 0
      %3171 = vmatprep.subr.bf16.mxu0 0
      %3172 = vmatpush1.bf16.msra.mxu0 0
      %3173 = vmatprep.subr.bf16.mxu0 0
      %3174 = vmatpush1.bf16.msra.mxu0 0
      %3175 = vmatprep.subr.bf16.mxu0 0
      %3176 = vmatpush1.bf16.msra.mxu0 0
      %3177 = vmatprep.subr.bf16.mxu0 0
      %3178 = vmatpush1.bf16.msra.mxu0 0
      %3179 = vmatprep.subr.bf16.mxu0 0
      %3180 = vmatpush1.bf16.msra.mxu0 0
      %3181 = vmatprep.subr.bf16.mxu0 0
      %3182 = vmatpush1.bf16.msra.mxu0 0
      %3183 = vmatprep.mubr.bf16.mxu0 0
      %3184 = vmatmul.mubr.bf16.gmra.mrb[0].mxu0 %v3140
      %v3185 = vpop.f32.mrb[0].mxu0
      %v3186 = vadd.f32 %v3111, %v3185
      %v3187 = vpop.f32.mrb[0].mxu0
      %v3188 = vadd.f32 %v3115, %v3187
      %v3189 = vpop.f32.mrb[0].mxu0
      %v3190 = vadd.f32 %v3111, %v3189
      %v3191 = vpop.f32.mrb[0].mxu0
      %v3192 = vadd.f32 %v3115, %v3191
      %3193 = vmatprep.mubr.bf16.mxu0 0
      %3194 = vmatmul.mubr.bf16.gmra.mrb[0].mxu0 %v3143
      %v3195 = vpop.f32.mrb[0].mxu0
      %v3196 = vadd.f32 %v3111, %v3195
      %v3197 = vpop.f32.mrb[0].mxu0
      %v3198 = vadd.f32 %v3115, %v3197
      %v3199 = vpop.f32.mrb[0].mxu0
      %v3200 = vadd.f32 %v3111, %v3199
      %v3201 = vpop.f32.mrb[0].mxu0
      %v3202 = vadd.f32 %v3115, %v3201
      %3203 = vmatprep.mubr.bf16.mxu0 0
      %3204 = vmatmul.mubr.bf16.gmra.mrb[0].mxu0 %v3146
      %v3205 = vpop.f32.mrb[0].mxu0
      %v3206 = vadd.f32 %v3111, %v3205
      %v3207 = vpop.f32.mrb[0].mxu0
      %v3208 = vadd.f32 %v3115, %v3207
      %v3209 = vpop.f32.mrb[0].mxu0
      %v3210 = vadd.f32 %v3111, %v3209
      %v3211 = vpop.f32.mrb[0].mxu0
      %v3212 = vadd.f32 %v3115, %v3211
      %3213 = vmatprep.mubr.bf16.mxu0 0
      %3214 = vmatmul.mubr.bf16.gmra.mrb[0].mxu0 %v3149
      %v3215 = vpop.f32.mrb[0].mxu0
      %v3216 = vadd.f32 %v3111, %v3215
      %v3217 = vpop.f32.mrb[0].mxu0
      %v3218 = vadd.f32 %v3115, %v3217
      %v3219 = vpop.f32.mrb[0].mxu0
      %v3220 = vadd.f32 %v3111, %v3219
      %v3221 = vpop.f32.mrb[0].mxu0
      %v3222 = vadd.f32 %v3115, %v3221
      %3223 = vdwg.mxu0
      %3224 = vmatprep.subr.bf16.mxu0 0
      %3225 = vmatpush1.bf16.msra.mxu0 %v3135
      %3226 = vmatprep.subr.bf16.mxu0 0
      %3227 = vmatpush1.bf16.msra.mxu0 0
      %3228 = vmatprep.subr.bf16.mxu0 0
      %3229 = vmatpush1.bf16.msra.mxu0 0
      %3230 = vmatprep.subr.bf16.mxu0 0
      %3231 = vmatpush1.bf16.msra.mxu0 0
      %3232 = vmatprep.subr.bf16.mxu0 0
      %3233 = vmatpush1.bf16.msra.mxu0 0
      %3234 = vmatprep.subr.bf16.mxu0 0
      %3235 = vmatpush1.bf16.msra.mxu0 0
      %3236 = vmatprep.subr.bf16.mxu0 0
      %3237 = vmatpush1.bf16.msra.mxu0 0
      %3238 = vmatprep.subr.bf16.mxu0 0
      %3239 = vmatpush1.bf16.msra.mxu0 0
      %3240 = vmatprep.subr.bf16.mxu0 0
      %3241 = vmatpush1.bf16.msra.mxu0 0
      %3242 = vmatprep.subr.bf16.mxu0 0
      %3243 = vmatpush1.bf16.msra.mxu0 0
      %3244 = vmatprep.subr.bf16.mxu0 0
      %3245 = vmatpush1.bf16.msra.mxu0 0
      %3246 = vmatprep.subr.bf16.mxu0 0
      %3247 = vmatpush1.bf16.msra.mxu0 0
      %3248 = vmatprep.subr.bf16.mxu0 0
      %3249 = vmatpush1.bf16.msra.mxu0 0
      %3250 = vmatprep.subr.bf16.mxu0 0
      %3251 = vmatpush1.bf16.msra.mxu0 0
      %3252 = vmatprep.subr.bf16.mxu0 0
      %3253 = vmatpush1.bf16.msra.mxu0 0
      %3254 = vmatprep.subr.bf16.mxu0 0
      %3255 = vmatpush1.bf16.msra.mxu0 0
      %3256 = vmatprep.mubr.bf16.mxu0 0
      %3257 = vmatmul.mubr.bf16.gmra.mrb[0].mxu0 %v3140
      %v3258 = vpop.f32.mrb[0].mxu0
      %v3259 = vadd.f32 %v3119, %v3258
      %v3260 = vpop.f32.mrb[0].mxu0
      %v3261 = vpop.f32.mrb[0].mxu0
      %v3262 = vadd.f32 %v3119, %v3261
      %v3263 = vpop.f32.mrb[0].mxu0
      %3264 = vmatprep.mubr.bf16.mxu0 0
      %3265 = vmatmul.mubr.bf16.gmra.mrb[0].mxu0 %v3143
      %v3266 = vpop.f32.mrb[0].mxu0
      %v3267 = vadd.f32 %v3119, %v3266
      %v3268 = vpop.f32.mrb[0].mxu0
      %v3269 = vpop.f32.mrb[0].mxu0
      %v3270 = vadd.f32 %v3119, %v3269
      %v3271 = vpop.f32.mrb[0].mxu0
      %3272 = vmatprep.mubr.bf16.mxu0 0
      %3273 = vmatmul.mubr.bf16.gmra.mrb[0].mxu0 %v3146
      %v3274 = vpop.f32.mrb[0].mxu0
      %v3275 = vadd.f32 %v3119, %v3274
      %v3276 = vpop.f32.mrb[0].mxu0
      %v3277 = vpop.f32.mrb[0].mxu0
      %v3278 = vadd.f32 %v3119, %v3277
      %v3279 = vpop.f32.mrb[0].mxu0
      %3280 = vmatprep.mubr.bf16.mxu0 0
      %3281 = vmatmul.mubr.bf16.gmra.mrb[0].mxu0 %v3149
      %v3282 = vpop.f32.mrb[0].mxu0
      %v3283 = vadd.f32 %v3119, %v3282
      %v3284 = vpop.f32.mrb[0].mxu0
      %v3285 = vpop.f32.mrb[0].mxu0
      %v3286 = vadd.f32 %v3119, %v3285
      %v3287 = vpop.f32.mrb[0].mxu0
      %3288 = vdwg.mxu0
      %v3289 = vpack.c.bf16 %v3186, %v3186
      %v3290 = vpack.c.bf16 %v3190, %v3190
      %v3291 = vpack.c.bf16 %v3196, %v3196
      %v3292 = vpack.c.bf16 %v3200, %v3200
      %v3293 = vpack.c.bf16 %v3206, %v3206
      %v3294 = vpack.c.bf16 %v3210, %v3210
      %v3295 = vpack.c.bf16 %v3216, %v3216
      %v3296 = vpack.c.bf16 %v3220, %v3220
      %v3297 = vpack.c.bf16 %v3188, %v3188
      %v3298 = vpack.c.bf16 %v3192, %v3192
      %v3299 = vpack.c.bf16 %v3198, %v3198
      %v3300 = vpack.c.bf16 %v3202, %v3202
      %v3301 = vpack.c.bf16 %v3208, %v3208
      %v3302 = vpack.c.bf16 %v3212, %v3212
      %v3303 = vpack.c.bf16 %v3218, %v3218
      %v3304 = vpack.c.bf16 %v3222, %v3222
      %v3305 = vpack.c.bf16 %v3259, %v3259
      %v3306 = vpack.c.bf16 %v3262, %v3262
      %v3307 = vpack.c.bf16 %v3267, %v3267
      %v3308 = vpack.c.bf16 %v3270, %v3270
      %v3309 = vpack.c.bf16 %v3275, %v3275
      %v3310 = vpack.c.bf16 %v3278, %v3278
      %v3311 = vpack.c.bf16 %v3283, %v3283
      %v3312 = vpack.c.bf16 %v3286, %v3286
      %v3313 = vcombine.low %v3289, %v3293
      %v3315 = vunpack.c.l.s4 1983009808
      %v3316 = vunpack.c.0.s8 %v3315
      %v3317 = vlaneseq
      %v3318 = vshrl.u32 %v3317, 7
      %v3319 = vsub.s32 %v3316, %v3318
      %v3320 = vrot.slane %v3313, %v3319
      %v3321 = vcombine.low %v3291, %v3295
      %v3323 = vunpack.c.l.s4 1983009808
      %v3324 = vunpack.c.0.s8 %v3323
      %v3325 = vlaneseq
      %v3326 = vshrl.u32 %v3325, 7
      %v3327 = vsub.s32 %v3324, %v3326
      %v3328 = vrot.slane %v3321, %v3327
      %v3329 = vcombine.low %v3320, %v3328
      %v3330 = vcombine.high %v3320, %v3328
      %v3332 = vunpack.c.l.s4 1934713408
      %v3333 = vunpack.c.0.s8 %v3332
      %v3334 = vlaneseq
      %v3335 = vshrl.u32 %v3334, 7
      %v3336 = vsub.s32 %v3333, %v3335
      %v3337 = vrot.slane %v3329, %v3336
      %v3339 = vunpack.c.l.s4 1934713408
      %v3340 = vunpack.c.0.s8 %v3339
      %v3341 = vlaneseq
      %v3342 = vshrl.u32 %v3341, 7
      %v3343 = vsub.s32 %v3340, %v3342
      %v3344 = vrot.slane %v3330, %v3343
      %v3345 = vcombine.high %v3337, 0
      %v3346 = vcombine.high %v3344, 0
      %v3347 = vcombine.low %v3290, %v3294
      %v3349 = vunpack.c.l.s4 1983009808
      %v3350 = vunpack.c.0.s8 %v3349
      %v3351 = vlaneseq
      %v3352 = vshrl.u32 %v3351, 7
      %v3353 = vsub.s32 %v3350, %v3352
      %v3354 = vrot.slane %v3347, %v3353
      %v3355 = vcombine.low %v3292, %v3296
      %v3357 = vunpack.c.l.s4 1983009808
      %v3358 = vunpack.c.0.s8 %v3357
      %v3359 = vlaneseq
      %v3360 = vshrl.u32 %v3359, 7
      %v3361 = vsub.s32 %v3358, %v3360
      %v3362 = vrot.slane %v3355, %v3361
      %v3363 = vcombine.low %v3354, %v3362
      %v3364 = vcombine.high %v3354, %v3362
      %v3366 = vunpack.c.l.s4 1934713408
      %v3367 = vunpack.c.0.s8 %v3366
      %v3368 = vlaneseq
      %v3369 = vshrl.u32 %v3368, 7
      %v3370 = vsub.s32 %v3367, %v3369
      %v3371 = vrot.slane %v3363, %v3370
      %v3373 = vunpack.c.l.s4 1934713408
      %v3374 = vunpack.c.0.s8 %v3373
      %v3375 = vlaneseq
      %v3376 = vshrl.u32 %v3375, 7
      %v3377 = vsub.s32 %v3374, %v3376
      %v3378 = vrot.slane %v3364, %v3377
      %v3379 = vcombine.high %v3371, 0
      %v3380 = vcombine.high %v3378, 0
      %v3383 = vpack.i.b16 %v3371, %v3337
      %v3385 = vshrl.u32 %v3337, 16
      %v3386 = vshrl.u32 %v3371, 16
      %v3387 = vpack.i.b16 %v3386, %v3385
      %v3391 = vpack.i.b16 %v3379, %v3345
      %v3393 = vshrl.u32 %v3345, 16
      %v3394 = vshrl.u32 %v3379, 16
      %v3395 = vpack.i.b16 %v3394, %v3393
      %v3399 = vpack.i.b16 %v3378, %v3344
      %v3401 = vshrl.u32 %v3344, 16
      %v3402 = vshrl.u32 %v3378, 16
      %v3403 = vpack.i.b16 %v3402, %v3401
      %v3407 = vpack.i.b16 %v3380, %v3346
      %v3409 = vshrl.u32 %v3346, 16
      %v3410 = vshrl.u32 %v3380, 16
      %v3411 = vpack.i.b16 %v3410, %v3409
      %v3413 = vcombine.low %v3297, %v3301
      %v3415 = vunpack.c.l.s4 1983009808
      %v3416 = vunpack.c.0.s8 %v3415
      %v3417 = vlaneseq
      %v3418 = vshrl.u32 %v3417, 7
      %v3419 = vsub.s32 %v3416, %v3418
      %v3420 = vrot.slane %v3413, %v3419
      %v3421 = vcombine.low %v3299, %v3303
      %v3423 = vunpack.c.l.s4 1983009808
      %v3424 = vunpack.c.0.s8 %v3423
      %v3425 = vlaneseq
      %v3426 = vshrl.u32 %v3425, 7
      %v3427 = vsub.s32 %v3424, %v3426
      %v3428 = vrot.slane %v3421, %v3427
      %v3429 = vcombine.low %v3420, %v3428
      %v3430 = vcombine.high %v3420, %v3428
      %v3432 = vunpack.c.l.s4 1934713408
      %v3433 = vunpack.c.0.s8 %v3432
      %v3434 = vlaneseq
      %v3435 = vshrl.u32 %v3434, 7
      %v3436 = vsub.s32 %v3433, %v3435
      %v3437 = vrot.slane %v3429, %v3436
      %v3439 = vunpack.c.l.s4 1934713408
      %v3440 = vunpack.c.0.s8 %v3439
      %v3441 = vlaneseq
      %v3442 = vshrl.u32 %v3441, 7
      %v3443 = vsub.s32 %v3440, %v3442
      %v3444 = vrot.slane %v3430, %v3443
      %v3445 = vcombine.high %v3437, 0
      %v3446 = vcombine.high %v3444, 0
      %v3447 = vcombine.low %v3298, %v3302
      %v3449 = vunpack.c.l.s4 1983009808
      %v3450 = vunpack.c.0.s8 %v3449
      %v3451 = vlaneseq
      %v3452 = vshrl.u32 %v3451, 7
      %v3453 = vsub.s32 %v3450, %v3452
      %v3454 = vrot.slane %v3447, %v3453
      %v3455 = vcombine.low %v3300, %v3304
      %v3457 = vunpack.c.l.s4 1983009808
      %v3458 = vunpack.c.0.s8 %v3457
      %v3459 = vlaneseq
      %v3460 = vshrl.u32 %v3459, 7
      %v3461 = vsub.s32 %v3458, %v3460
      %v3462 = vrot.slane %v3455, %v3461
      %v3463 = vcombine.low %v3454, %v3462
      %v3464 = vcombine.high %v3454, %v3462
      %v3466 = vunpack.c.l.s4 1934713408
      %v3467 = vunpack.c.0.s8 %v3466
      %v3468 = vlaneseq
      %v3469 = vshrl.u32 %v3468, 7
      %v3470 = vsub.s32 %v3467, %v3469
      %v3471 = vrot.slane %v3463, %v3470
      %v3473 = vunpack.c.l.s4 1934713408
      %v3474 = vunpack.c.0.s8 %v3473
      %v3475 = vlaneseq
      %v3476 = vshrl.u32 %v3475, 7
      %v3477 = vsub.s32 %v3474, %v3476
      %v3478 = vrot.slane %v3464, %v3477
      %v3479 = vcombine.high %v3471, 0
      %v3480 = vcombine.high %v3478, 0
      %v3483 = vpack.i.b16 %v3471, %v3437
      %v3485 = vshrl.u32 %v3437, 16
      %v3486 = vshrl.u32 %v3471, 16
      %v3487 = vpack.i.b16 %v3486, %v3485
      %v3491 = vpack.i.b16 %v3479, %v3445
      %v3493 = vshrl.u32 %v3445, 16
      %v3494 = vshrl.u32 %v3479, 16
      %v3495 = vpack.i.b16 %v3494, %v3493
      %v3499 = vpack.i.b16 %v3478, %v3444
      %v3501 = vshrl.u32 %v3444, 16
      %v3502 = vshrl.u32 %v3478, 16
      %v3503 = vpack.i.b16 %v3502, %v3501
      %v3507 = vpack.i.b16 %v3480, %v3446
      %v3509 = vshrl.u32 %v3446, 16
      %v3510 = vshrl.u32 %v3480, 16
      %v3511 = vpack.i.b16 %v3510, %v3509
      %v3513 = vcombine.low %v3305, %v3309
      %v3515 = vunpack.c.l.s4 1983009808
      %v3516 = vunpack.c.0.s8 %v3515
      %v3517 = vlaneseq
      %v3518 = vshrl.u32 %v3517, 7
      %v3519 = vsub.s32 %v3516, %v3518
      %v3520 = vrot.slane %v3513, %v3519
      %v3521 = vcombine.low %v3307, %v3311
      %v3523 = vunpack.c.l.s4 1983009808
      %v3524 = vunpack.c.0.s8 %v3523
      %v3525 = vlaneseq
      %v3526 = vshrl.u32 %v3525, 7
      %v3527 = vsub.s32 %v3524, %v3526
      %v3528 = vrot.slane %v3521, %v3527
      %v3529 = vcombine.low %v3520, %v3528
      %v3530 = vcombine.high %v3520, %v3528
      %v3532 = vunpack.c.l.s4 1934713408
      %v3533 = vunpack.c.0.s8 %v3532
      %v3534 = vlaneseq
      %v3535 = vshrl.u32 %v3534, 7
      %v3536 = vsub.s32 %v3533, %v3535
      %v3537 = vrot.slane %v3529, %v3536
      %v3539 = vunpack.c.l.s4 1934713408
      %v3540 = vunpack.c.0.s8 %v3539
      %v3541 = vlaneseq
      %v3542 = vshrl.u32 %v3541, 7
      %v3543 = vsub.s32 %v3540, %v3542
      %v3544 = vrot.slane %v3530, %v3543
      %v3545 = vcombine.high %v3537, 0
      %v3546 = vcombine.high %v3544, 0
      %v3547 = vcombine.low %v3306, %v3310
      %v3549 = vunpack.c.l.s4 1983009808
      %v3550 = vunpack.c.0.s8 %v3549
      %v3551 = vlaneseq
      %v3552 = vshrl.u32 %v3551, 7
      %v3553 = vsub.s32 %v3550, %v3552
      %v3554 = vrot.slane %v3547, %v3553
      %v3555 = vcombine.low %v3308, %v3312
      %v3557 = vunpack.c.l.s4 1983009808
      %v3558 = vunpack.c.0.s8 %v3557
      %v3559 = vlaneseq
      %v3560 = vshrl.u32 %v3559, 7
      %v3561 = vsub.s32 %v3558, %v3560
      %v3562 = vrot.slane %v3555, %v3561
      %v3563 = vcombine.low %v3554, %v3562
      %v3564 = vcombine.high %v3554, %v3562
      %v3566 = vunpack.c.l.s4 1934713408
      %v3567 = vunpack.c.0.s8 %v3566
      %v3568 = vlaneseq
      %v3569 = vshrl.u32 %v3568, 7
      %v3570 = vsub.s32 %v3567, %v3569
      %v3571 = vrot.slane %v3563, %v3570
      %v3573 = vunpack.c.l.s4 1934713408
      %v3574 = vunpack.c.0.s8 %v3573
      %v3575 = vlaneseq
      %v3576 = vshrl.u32 %v3575, 7
      %v3577 = vsub.s32 %v3574, %v3576
      %v3578 = vrot.slane %v3564, %v3577
      %v3579 = vcombine.high %v3571, 0
      %v3580 = vcombine.high %v3578, 0
      %v3583 = vpack.i.b16 %v3571, %v3537
      %v3584 = vshrl.u32 %v3537, 16
      %v3585 = vshrl.u32 %v3571, 16
      %v3586 = vpack.i.b16 %v3585, %v3584
      %v3589 = vpack.i.b16 %v3579, %v3545
      %v3590 = vshrl.u32 %v3545, 16
      %v3591 = vshrl.u32 %v3579, 16
      %v3592 = vpack.i.b16 %v3591, %v3590
      %v3595 = vpack.i.b16 %v3578, %v3544
      %v3596 = vshrl.u32 %v3544, 16
      %v3597 = vshrl.u32 %v3578, 16
      %v3598 = vpack.i.b16 %v3597, %v3596
      %v3601 = vpack.i.b16 %v3580, %v3546
      %v3602 = vshrl.u32 %v3546, 16
      %v3603 = vshrl.u32 %v3580, 16
      %v3604 = vpack.i.b16 %v3603, %v3602
      %3605 = vmatprep.subr.bf16.mxu0 0
      %3606 = vmatpush1.bf16.xpose.msra.mxu0 %v3297
      %3607 = vmatprep.subr.bf16.mxu0 0
      %3608 = vmatpush1.bf16.xpose.msra.mxu0 0
      %3609 = vmatprep.subr.bf16.mxu0 0
      %3610 = vmatpush1.bf16.xpose.msra.mxu0 0
      %3611 = vmatprep.subr.bf16.mxu0 0
      %3612 = vmatpush1.bf16.xpose.msra.mxu0 0
      %3613 = vmatprep.subr.bf16.mxu0 0
      %3614 = vmatpush1.bf16.xpose.msra.mxu0 0
      %3615 = vmatprep.subr.bf16.mxu0 0
      %3616 = vmatpush1.bf16.xpose.msra.mxu0 0
      %3617 = vmatprep.subr.bf16.mxu0 0
      %3618 = vmatpush1.bf16.xpose.msra.mxu0 0
      %3619 = vmatprep.subr.bf16.mxu0 0
      %3620 = vmatpush1.bf16.xpose.msra.mxu0 0
      %3621 = vmatprep.subr.bf16.mxu0 0
      %3622 = vmatpush1.bf16.xpose.msra.mxu0 0
      %3623 = vmatprep.subr.bf16.mxu0 0
      %3624 = vmatpush1.bf16.xpose.msra.mxu0 0
      %3625 = vmatprep.subr.bf16.mxu0 0
      %3626 = vmatpush1.bf16.xpose.msra.mxu0 0
      %3627 = vmatprep.subr.bf16.mxu0 0
      %3628 = vmatpush1.bf16.xpose.msra.mxu0 0
      %3629 = vmatprep.subr.bf16.mxu0 0
      %3630 = vmatpush1.bf16.xpose.msra.mxu0 0
      %3631 = vmatprep.subr.bf16.mxu0 0
      %3632 = vmatpush1.bf16.xpose.msra.mxu0 0
      %3633 = vmatprep.subr.bf16.mxu0 0
      %3634 = vmatpush1.bf16.xpose.msra.mxu0 0
      %3635 = vmatprep.subr.bf16.mxu0 0
      %3636 = vmatpush1.bf16.xpose.msra.mxu0 0
      %3637 = vmatprep.mubr.bf16.mxu0 0
      %3638 = vmatmul.mubr.bf16.gmra.mrb[0].mxu0 %v3289
      %v3639 = vpop.f32.mrb[0].mxu0
      %v3640 = vadd.f32 0.0, %v3639
      %v3641 = vpop.f32.mrb[0].mxu0
      %v3642 = vpop.f32.mrb[0].mxu0
      %v3643 = vpop.f32.mrb[0].mxu0
      %3644 = vdwg.mxu0
      %3645 = vmatprep.subr.bf16.mxu0 0
      %3646 = vmatpush1.bf16.xpose.msra.mxu0 %v3298
      %3647 = vmatprep.subr.bf16.mxu0 0
      %3648 = vmatpush1.bf16.xpose.msra.mxu0 0
      %3649 = vmatprep.subr.bf16.mxu0 0
      %3650 = vmatpush1.bf16.xpose.msra.mxu0 0
      %3651 = vmatprep.subr.bf16.mxu0 0
      %3652 = vmatpush1.bf16.xpose.msra.mxu0 0
      %3653 = vmatprep.subr.bf16.mxu0 0
      %3654 = vmatpush1.bf16.xpose.msra.mxu0 0
      %3655 = vmatprep.subr.bf16.mxu0 0
      %3656 = vmatpush1.bf16.xpose.msra.mxu0 0
      %3657 = vmatprep.subr.bf16.mxu0 0
      %3658 = vmatpush1.bf16.xpose.msra.mxu0 0
      %3659 = vmatprep.subr.bf16.mxu0 0
      %3660 = vmatpush1.bf16.xpose.msra.mxu0 0
      %3661 = vmatprep.subr.bf16.mxu0 0
      %3662 = vmatpush1.bf16.xpose.msra.mxu0 0
      %3663 = vmatprep.subr.bf16.mxu0 0
      %3664 = vmatpush1.bf16.xpose.msra.mxu0 0
      %3665 = vmatprep.subr.bf16.mxu0 0
      %3666 = vmatpush1.bf16.xpose.msra.mxu0 0
      %3667 = vmatprep.subr.bf16.mxu0 0
      %3668 = vmatpush1.bf16.xpose.msra.mxu0 0
      %3669 = vmatprep.subr.bf16.mxu0 0
      %3670 = vmatpush1.bf16.xpose.msra.mxu0 0
      %3671 = vmatprep.subr.bf16.mxu0 0
      %3672 = vmatpush1.bf16.xpose.msra.mxu0 0
      %3673 = vmatprep.subr.bf16.mxu0 0
      %3674 = vmatpush1.bf16.xpose.msra.mxu0 0
      %3675 = vmatprep.subr.bf16.mxu0 0
      %3676 = vmatpush1.bf16.xpose.msra.mxu0 0
      %3677 = vmatprep.mubr.bf16.mxu0 0
      %3678 = vmatmul.mubr.bf16.gmra.mrb[0].mxu0 %v3290
      %v3679 = vpop.f32.mrb[0].mxu0
      %v3680 = vadd.f32 0.0, %v3679
      %v3681 = vpop.f32.mrb[0].mxu0
      %v3682 = vpop.f32.mrb[0].mxu0
      %v3683 = vpop.f32.mrb[0].mxu0
      %3684 = vdwg.mxu0
      %3685 = vmatprep.subr.bf16.mxu0 0
      %3686 = vmatpush1.bf16.xpose.msra.mxu0 %v3299
      %3687 = vmatprep.subr.bf16.mxu0 0
      %3688 = vmatpush1.bf16.xpose.msra.mxu0 0
      %3689 = vmatprep.subr.bf16.mxu0 0
      %3690 = vmatpush1.bf16.xpose.msra.mxu0 0
      %3691 = vmatprep.subr.bf16.mxu0 0
      %3692 = vmatpush1.bf16.xpose.msra.mxu0 0
      %3693 = vmatprep.subr.bf16.mxu0 0
      %3694 = vmatpush1.bf16.xpose.msra.mxu0 0
      %3695 = vmatprep.subr.bf16.mxu0 0
      %3696 = vmatpush1.bf16.xpose.msra.mxu0 0
      %3697 = vmatprep.subr.bf16.mxu0 0
      %3698 = vmatpush1.bf16.xpose.msra.mxu0 0
      %3699 = vmatprep.subr.bf16.mxu0 0
      %3700 = vmatpush1.bf16.xpose.msra.mxu0 0
      %3701 = vmatprep.subr.bf16.mxu0 0
      %3702 = vmatpush1.bf16.xpose.msra.mxu0 0
      %3703 = vmatprep.subr.bf16.mxu0 0
      %3704 = vmatpush1.bf16.xpose.msra.mxu0 0
      %3705 = vmatprep.subr.bf16.mxu0 0
      %3706 = vmatpush1.bf16.xpose.msra.mxu0 0
      %3707 = vmatprep.subr.bf16.mxu0 0
      %3708 = vmatpush1.bf16.xpose.msra.mxu0 0
      %3709 = vmatprep.subr.bf16.mxu0 0
      %3710 = vmatpush1.bf16.xpose.msra.mxu0 0
      %3711 = vmatprep.subr.bf16.mxu0 0
      %3712 = vmatpush1.bf16.xpose.msra.mxu0 0
      %3713 = vmatprep.subr.bf16.mxu0 0
      %3714 = vmatpush1.bf16.xpose.msra.mxu0 0
      %3715 = vmatprep.subr.bf16.mxu0 0
      %3716 = vmatpush1.bf16.xpose.msra.mxu0 0
      %3717 = vmatprep.mubr.bf16.mxu0 0
      %3718 = vmatmul.mubr.bf16.gmra.mrb[0].mxu0 %v3291
      %v3719 = vpop.f32.mrb[0].mxu0
      %v3720 = vadd.f32 0.0, %v3719
      %v3721 = vpop.f32.mrb[0].mxu0
      %v3722 = vpop.f32.mrb[0].mxu0
      %v3723 = vpop.f32.mrb[0].mxu0
      %3724 = vdwg.mxu0
      %3725 = vmatprep.subr.bf16.mxu0 0
      %3726 = vmatpush1.bf16.xpose.msra.mxu0 %v3300
      %3727 = vmatprep.subr.bf16.mxu0 0
      %3728 = vmatpush1.bf16.xpose.msra.mxu0 0
      %3729 = vmatprep.subr.bf16.mxu0 0
      %3730 = vmatpush1.bf16.xpose.msra.mxu0 0
      %3731 = vmatprep.subr.bf16.mxu0 0
      %3732 = vmatpush1.bf16.xpose.msra.mxu0 0
      %3733 = vmatprep.subr.bf16.mxu0 0
      %3734 = vmatpush1.bf16.xpose.msra.mxu0 0
      %3735 = vmatprep.subr.bf16.mxu0 0
      %3736 = vmatpush1.bf16.xpose.msra.mxu0 0
      %3737 = vmatprep.subr.bf16.mxu0 0
      %3738 = vmatpush1.bf16.xpose.msra.mxu0 0
      %3739 = vmatprep.subr.bf16.mxu0 0
      %3740 = vmatpush1.bf16.xpose.msra.mxu0 0
      %3741 = vmatprep.subr.bf16.mxu0 0
      %3742 = vmatpush1.bf16.xpose.msra.mxu0 0
      %3743 = vmatprep.subr.bf16.mxu0 0
      %3744 = vmatpush1.bf16.xpose.msra.mxu0 0
      %3745 = vmatprep.subr.bf16.mxu0 0
      %3746 = vmatpush1.bf16.xpose.msra.mxu0 0
      %3747 = vmatprep.subr.bf16.mxu0 0
      %3748 = vmatpush1.bf16.xpose.msra.mxu0 0
      %3749 = vmatprep.subr.bf16.mxu0 0
      %3750 = vmatpush1.bf16.xpose.msra.mxu0 0
      %3751 = vmatprep.subr.bf16.mxu0 0
      %3752 = vmatpush1.bf16.xpose.msra.mxu0 0
      %3753 = vmatprep.subr.bf16.mxu0 0
      %3754 = vmatpush1.bf16.xpose.msra.mxu0 0
      %3755 = vmatprep.subr.bf16.mxu0 0
      %3756 = vmatpush1.bf16.xpose.msra.mxu0 0
      %3757 = vmatprep.mubr.bf16.mxu0 0
      %3758 = vmatmul.mubr.bf16.gmra.mrb[0].mxu0 %v3292
      %v3759 = vpop.f32.mrb[0].mxu0
      %v3760 = vadd.f32 0.0, %v3759
      %v3761 = vpop.f32.mrb[0].mxu0
      %v3762 = vpop.f32.mrb[0].mxu0
      %v3763 = vpop.f32.mrb[0].mxu0
      %3764 = vdwg.mxu0
      %3765 = vmatprep.subr.bf16.mxu0 0
      %3766 = vmatpush1.bf16.xpose.msra.mxu0 %v3301
      %3767 = vmatprep.subr.bf16.mxu0 0
      %3768 = vmatpush1.bf16.xpose.msra.mxu0 0
      %3769 = vmatprep.subr.bf16.mxu0 0
      %3770 = vmatpush1.bf16.xpose.msra.mxu0 0
      %3771 = vmatprep.subr.bf16.mxu0 0
      %3772 = vmatpush1.bf16.xpose.msra.mxu0 0
      %3773 = vmatprep.subr.bf16.mxu0 0
      %3774 = vmatpush1.bf16.xpose.msra.mxu0 0
      %3775 = vmatprep.subr.bf16.mxu0 0
      %3776 = vmatpush1.bf16.xpose.msra.mxu0 0
      %3777 = vmatprep.subr.bf16.mxu0 0
      %3778 = vmatpush1.bf16.xpose.msra.mxu0 0
      %3779 = vmatprep.subr.bf16.mxu0 0
      %3780 = vmatpush1.bf16.xpose.msra.mxu0 0
      %3781 = vmatprep.subr.bf16.mxu0 0
      %3782 = vmatpush1.bf16.xpose.msra.mxu0 0
      %3783 = vmatprep.subr.bf16.mxu0 0
      %3784 = vmatpush1.bf16.xpose.msra.mxu0 0
      %3785 = vmatprep.subr.bf16.mxu0 0
      %3786 = vmatpush1.bf16.xpose.msra.mxu0 0
      %3787 = vmatprep.subr.bf16.mxu0 0
      %3788 = vmatpush1.bf16.xpose.msra.mxu0 0
      %3789 = vmatprep.subr.bf16.mxu0 0
      %3790 = vmatpush1.bf16.xpose.msra.mxu0 0
      %3791 = vmatprep.subr.bf16.mxu0 0
      %3792 = vmatpush1.bf16.xpose.msra.mxu0 0
      %3793 = vmatprep.subr.bf16.mxu0 0
      %3794 = vmatpush1.bf16.xpose.msra.mxu0 0
      %3795 = vmatprep.subr.bf16.mxu0 0
      %3796 = vmatpush1.bf16.xpose.msra.mxu0 0
      %3797 = vmatprep.mubr.bf16.mxu0 0
      %3798 = vmatmul.mubr.bf16.gmra.mrb[0].mxu0 %v3293
      %v3799 = vpop.f32.mrb[0].mxu0
      %v3800 = vadd.f32 0.0, %v3799
      %v3801 = vpop.f32.mrb[0].mxu0
      %v3802 = vpop.f32.mrb[0].mxu0
      %v3803 = vpop.f32.mrb[0].mxu0
      %3804 = vdwg.mxu0
      %3805 = vmatprep.subr.bf16.mxu0 0
      %3806 = vmatpush1.bf16.xpose.msra.mxu0 %v3302
      %3807 = vmatprep.subr.bf16.mxu0 0
      %3808 = vmatpush1.bf16.xpose.msra.mxu0 0
      %3809 = vmatprep.subr.bf16.mxu0 0
      %3810 = vmatpush1.bf16.xpose.msra.mxu0 0
      %3811 = vmatprep.subr.bf16.mxu0 0
      %3812 = vmatpush1.bf16.xpose.msra.mxu0 0
      %3813 = vmatprep.subr.bf16.mxu0 0
      %3814 = vmatpush1.bf16.xpose.msra.mxu0 0
      %3815 = vmatprep.subr.bf16.mxu0 0
      %3816 = vmatpush1.bf16.xpose.msra.mxu0 0
      %3817 = vmatprep.subr.bf16.mxu0 0
      %3818 = vmatpush1.bf16.xpose.msra.mxu0 0
      %3819 = vmatprep.subr.bf16.mxu0 0
      %3820 = vmatpush1.bf16.xpose.msra.mxu0 0
      %3821 = vmatprep.subr.bf16.mxu0 0
      %3822 = vmatpush1.bf16.xpose.msra.mxu0 0
      %3823 = vmatprep.subr.bf16.mxu0 0
      %3824 = vmatpush1.bf16.xpose.msra.mxu0 0
      %3825 = vmatprep.subr.bf16.mxu0 0
      %3826 = vmatpush1.bf16.xpose.msra.mxu0 0
      %3827 = vmatprep.subr.bf16.mxu0 0
      %3828 = vmatpush1.bf16.xpose.msra.mxu0 0
      %3829 = vmatprep.subr.bf16.mxu0 0
      %3830 = vmatpush1.bf16.xpose.msra.mxu0 0
      %3831 = vmatprep.subr.bf16.mxu0 0
      %3832 = vmatpush1.bf16.xpose.msra.mxu0 0
      %3833 = vmatprep.subr.bf16.mxu0 0
      %3834 = vmatpush1.bf16.xpose.msra.mxu0 0
      %3835 = vmatprep.subr.bf16.mxu0 0
      %3836 = vmatpush1.bf16.xpose.msra.mxu0 0
      %3837 = vmatprep.mubr.bf16.mxu0 0
      %3838 = vmatmul.mubr.bf16.gmra.mrb[0].mxu0 %v3294
      %v3839 = vpop.f32.mrb[0].mxu0
      %v3840 = vadd.f32 0.0, %v3839
      %v3841 = vpop.f32.mrb[0].mxu0
      %v3842 = vpop.f32.mrb[0].mxu0
      %v3843 = vpop.f32.mrb[0].mxu0
      %3844 = vdwg.mxu0
      %3845 = vmatprep.subr.bf16.mxu0 0
      %3846 = vmatpush1.bf16.xpose.msra.mxu0 %v3303
      %3847 = vmatprep.subr.bf16.mxu0 0
      %3848 = vmatpush1.bf16.xpose.msra.mxu0 0
      %3849 = vmatprep.subr.bf16.mxu0 0
      %3850 = vmatpush1.bf16.xpose.msra.mxu0 0
      %3851 = vmatprep.subr.bf16.mxu0 0
      %3852 = vmatpush1.bf16.xpose.msra.mxu0 0
      %3853 = vmatprep.subr.bf16.mxu0 0
      %3854 = vmatpush1.bf16.xpose.msra.mxu0 0
      %3855 = vmatprep.subr.bf16.mxu0 0
      %3856 = vmatpush1.bf16.xpose.msra.mxu0 0
      %3857 = vmatprep.subr.bf16.mxu0 0
      %3858 = vmatpush1.bf16.xpose.msra.mxu0 0
      %3859 = vmatprep.subr.bf16.mxu0 0
      %3860 = vmatpush1.bf16.xpose.msra.mxu0 0
      %3861 = vmatprep.subr.bf16.mxu0 0
      %3862 = vmatpush1.bf16.xpose.msra.mxu0 0
      %3863 = vmatprep.subr.bf16.mxu0 0
      %3864 = vmatpush1.bf16.xpose.msra.mxu0 0
      %3865 = vmatprep.subr.bf16.mxu0 0
      %3866 = vmatpush1.bf16.xpose.msra.mxu0 0
      %3867 = vmatprep.subr.bf16.mxu0 0
      %3868 = vmatpush1.bf16.xpose.msra.mxu0 0
      %3869 = vmatprep.subr.bf16.mxu0 0
      %3870 = vmatpush1.bf16.xpose.msra.mxu0 0
      %3871 = vmatprep.subr.bf16.mxu0 0
      %3872 = vmatpush1.bf16.xpose.msra.mxu0 0
      %3873 = vmatprep.subr.bf16.mxu0 0
      %3874 = vmatpush1.bf16.xpose.msra.mxu0 0
      %3875 = vmatprep.subr.bf16.mxu0 0
      %3876 = vmatpush1.bf16.xpose.msra.mxu0 0
      %3877 = vmatprep.mubr.bf16.mxu0 0
      %3878 = vmatmul.mubr.bf16.gmra.mrb[0].mxu0 %v3295
      %v3879 = vpop.f32.mrb[0].mxu0
      %v3880 = vadd.f32 0.0, %v3879
      %v3881 = vpop.f32.mrb[0].mxu0
      %v3882 = vpop.f32.mrb[0].mxu0
      %v3883 = vpop.f32.mrb[0].mxu0
      %3884 = vdwg.mxu0
      %3885 = vmatprep.subr.bf16.mxu0 0
      %3886 = vmatpush1.bf16.xpose.msra.mxu0 %v3304
      %3887 = vmatprep.subr.bf16.mxu0 0
      %3888 = vmatpush1.bf16.xpose.msra.mxu0 0
      %3889 = vmatprep.subr.bf16.mxu0 0
      %3890 = vmatpush1.bf16.xpose.msra.mxu0 0
      %3891 = vmatprep.subr.bf16.mxu0 0
      %3892 = vmatpush1.bf16.xpose.msra.mxu0 0
      %3893 = vmatprep.subr.bf16.mxu0 0
      %3894 = vmatpush1.bf16.xpose.msra.mxu0 0
      %3895 = vmatprep.subr.bf16.mxu0 0
      %3896 = vmatpush1.bf16.xpose.msra.mxu0 0
      %3897 = vmatprep.subr.bf16.mxu0 0
      %3898 = vmatpush1.bf16.xpose.msra.mxu0 0
      %3899 = vmatprep.subr.bf16.mxu0 0
      %3900 = vmatpush1.bf16.xpose.msra.mxu0 0
      %3901 = vmatprep.subr.bf16.mxu0 0
      %3902 = vmatpush1.bf16.xpose.msra.mxu0 0
      %3903 = vmatprep.subr.bf16.mxu0 0
      %3904 = vmatpush1.bf16.xpose.msra.mxu0 0
      %3905 = vmatprep.subr.bf16.mxu0 0
      %3906 = vmatpush1.bf16.xpose.msra.mxu0 0
      %3907 = vmatprep.subr.bf16.mxu0 0
      %3908 = vmatpush1.bf16.xpose.msra.mxu0 0
      %3909 = vmatprep.subr.bf16.mxu0 0
      %3910 = vmatpush1.bf16.xpose.msra.mxu0 0
      %3911 = vmatprep.subr.bf16.mxu0 0
      %3912 = vmatpush1.bf16.xpose.msra.mxu0 0
      %3913 = vmatprep.subr.bf16.mxu0 0
      %3914 = vmatpush1.bf16.xpose.msra.mxu0 0
      %3915 = vmatprep.subr.bf16.mxu0 0
      %3916 = vmatpush1.bf16.xpose.msra.mxu0 0
      %3917 = vmatprep.mubr.bf16.mxu0 0
      %3918 = vmatmul.mubr.bf16.gmra.mrb[0].mxu0 %v3296
      %v3919 = vpop.f32.mrb[0].mxu0
      %v3920 = vadd.f32 0.0, %v3919
      %v3921 = vpop.f32.mrb[0].mxu0
      %v3922 = vpop.f32.mrb[0].mxu0
      %v3923 = vpop.f32.mrb[0].mxu0
      %3924 = vdwg.mxu0
      %3925 = vmatprep.subr.bf16.mxu0 0
      %3926 = vmatpush1.bf16.xpose.msra.mxu0 %v3483
      %3927 = vmatprep.subr.bf16.mxu0 0
      %3928 = vmatpush1.bf16.xpose.msra.mxu0 0
      %3929 = vmatprep.subr.bf16.mxu0 0
      %3930 = vmatpush1.bf16.xpose.msra.mxu0 0
      %3931 = vmatprep.subr.bf16.mxu0 0
      %3932 = vmatpush1.bf16.xpose.msra.mxu0 0
      %3933 = vmatprep.subr.bf16.mxu0 0
      %3934 = vmatpush1.bf16.xpose.msra.mxu0 0
      %3935 = vmatprep.subr.bf16.mxu0 0
      %3936 = vmatpush1.bf16.xpose.msra.mxu0 0
      %3937 = vmatprep.subr.bf16.mxu0 0
      %3938 = vmatpush1.bf16.xpose.msra.mxu0 0
      %3939 = vmatprep.subr.bf16.mxu0 0
      %3940 = vmatpush1.bf16.xpose.msra.mxu0 0
      %3941 = vmatprep.subr.bf16.mxu0 0
      %3942 = vmatpush1.bf16.xpose.msra.mxu0 0
      %3943 = vmatprep.subr.bf16.mxu0 0
      %3944 = vmatpush1.bf16.xpose.msra.mxu0 0
      %3945 = vmatprep.subr.bf16.mxu0 0
      %3946 = vmatpush1.bf16.xpose.msra.mxu0 0
      %3947 = vmatprep.subr.bf16.mxu0 0
      %3948 = vmatpush1.bf16.xpose.msra.mxu0 0
      %3949 = vmatprep.subr.bf16.mxu0 0
      %3950 = vmatpush1.bf16.xpose.msra.mxu0 0
      %3951 = vmatprep.subr.bf16.mxu0 0
      %3952 = vmatpush1.bf16.xpose.msra.mxu0 0
      %3953 = vmatprep.subr.bf16.mxu0 0
      %3954 = vmatpush1.bf16.xpose.msra.mxu0 0
      %3955 = vmatprep.subr.bf16.mxu0 0
      %3956 = vmatpush1.bf16.xpose.msra.mxu0 0
      %3957 = vmatprep.mubr.bf16.mxu0 0
      %3958 = vmatmul.mubr.bf16.gmra.mrb[0].mxu0 %v3383
      %v3959 = vpop.f32.mrb[0].mxu0
      %v3960 = vadd.f32 %v345, %v3959
      %v3961 = vpop.f32.mrb[0].mxu0
      %v3962 = vpop.f32.mrb[0].mxu0
      %v3963 = vpop.f32.mrb[0].mxu0
      %3964 = vdwg.mxu0
      %3965 = vmatprep.subr.bf16.mxu0 0
      %3966 = vmatpush1.bf16.xpose.msra.mxu0 %v3487
      %3967 = vmatprep.subr.bf16.mxu0 0
      %3968 = vmatpush1.bf16.xpose.msra.mxu0 0
      %3969 = vmatprep.subr.bf16.mxu0 0
      %3970 = vmatpush1.bf16.xpose.msra.mxu0 0
      %3971 = vmatprep.subr.bf16.mxu0 0
      %3972 = vmatpush1.bf16.xpose.msra.mxu0 0
      %3973 = vmatprep.subr.bf16.mxu0 0
      %3974 = vmatpush1.bf16.xpose.msra.mxu0 0
      %3975 = vmatprep.subr.bf16.mxu0 0
      %3976 = vmatpush1.bf16.xpose.msra.mxu0 0
      %3977 = vmatprep.subr.bf16.mxu0 0
      %3978 = vmatpush1.bf16.xpose.msra.mxu0 0
      %3979 = vmatprep.subr.bf16.mxu0 0
      %3980 = vmatpush1.bf16.xpose.msra.mxu0 0
      %3981 = vmatprep.subr.bf16.mxu0 0
      %3982 = vmatpush1.bf16.xpose.msra.mxu0 0
      %3983 = vmatprep.subr.bf16.mxu0 0
      %3984 = vmatpush1.bf16.xpose.msra.mxu0 0
      %3985 = vmatprep.subr.bf16.mxu0 0
      %3986 = vmatpush1.bf16.xpose.msra.mxu0 0
      %3987 = vmatprep.subr.bf16.mxu0 0
      %3988 = vmatpush1.bf16.xpose.msra.mxu0 0
      %3989 = vmatprep.subr.bf16.mxu0 0
      %3990 = vmatpush1.bf16.xpose.msra.mxu0 0
      %3991 = vmatprep.subr.bf16.mxu0 0
      %3992 = vmatpush1.bf16.xpose.msra.mxu0 0
      %3993 = vmatprep.subr.bf16.mxu0 0
      %3994 = vmatpush1.bf16.xpose.msra.mxu0 0
      %3995 = vmatprep.subr.bf16.mxu0 0
      %3996 = vmatpush1.bf16.xpose.msra.mxu0 0
      %3997 = vmatprep.mubr.bf16.mxu0 0
      %3998 = vmatmul.mubr.bf16.gmra.mrb[0].mxu0 %v3387
      %v3999 = vpop.f32.mrb[0].mxu0
      %v4000 = vadd.f32 %v345, %v3999
      %v4001 = vpop.f32.mrb[0].mxu0
      %v4002 = vpop.f32.mrb[0].mxu0
      %v4003 = vpop.f32.mrb[0].mxu0
      %4004 = vdwg.mxu0
      %4005 = vmatprep.subr.bf16.mxu0 0
      %4006 = vmatpush1.bf16.xpose.msra.mxu0 %v3491
      %4007 = vmatprep.subr.bf16.mxu0 0
      %4008 = vmatpush1.bf16.xpose.msra.mxu0 0
      %4009 = vmatprep.subr.bf16.mxu0 0
      %4010 = vmatpush1.bf16.xpose.msra.mxu0 0
      %4011 = vmatprep.subr.bf16.mxu0 0
      %4012 = vmatpush1.bf16.xpose.msra.mxu0 0
      %4013 = vmatprep.subr.bf16.mxu0 0
      %4014 = vmatpush1.bf16.xpose.msra.mxu0 0
      %4015 = vmatprep.subr.bf16.mxu0 0
      %4016 = vmatpush1.bf16.xpose.msra.mxu0 0
      %4017 = vmatprep.subr.bf16.mxu0 0
      %4018 = vmatpush1.bf16.xpose.msra.mxu0 0
      %4019 = vmatprep.subr.bf16.mxu0 0
      %4020 = vmatpush1.bf16.xpose.msra.mxu0 0
      %4021 = vmatprep.subr.bf16.mxu0 0
      %4022 = vmatpush1.bf16.xpose.msra.mxu0 0
      %4023 = vmatprep.subr.bf16.mxu0 0
      %4024 = vmatpush1.bf16.xpose.msra.mxu0 0
      %4025 = vmatprep.subr.bf16.mxu0 0
      %4026 = vmatpush1.bf16.xpose.msra.mxu0 0
      %4027 = vmatprep.subr.bf16.mxu0 0
      %4028 = vmatpush1.bf16.xpose.msra.mxu0 0
      %4029 = vmatprep.subr.bf16.mxu0 0
      %4030 = vmatpush1.bf16.xpose.msra.mxu0 0
      %4031 = vmatprep.subr.bf16.mxu0 0
      %4032 = vmatpush1.bf16.xpose.msra.mxu0 0
      %4033 = vmatprep.subr.bf16.mxu0 0
      %4034 = vmatpush1.bf16.xpose.msra.mxu0 0
      %4035 = vmatprep.subr.bf16.mxu0 0
      %4036 = vmatpush1.bf16.xpose.msra.mxu0 0
      %4037 = vmatprep.mubr.bf16.mxu0 0
      %4038 = vmatmul.mubr.bf16.gmra.mrb[0].mxu0 %v3391
      %v4039 = vpop.f32.mrb[0].mxu0
      %v4040 = vadd.f32 %v345, %v4039
      %v4041 = vpop.f32.mrb[0].mxu0
      %v4042 = vpop.f32.mrb[0].mxu0
      %v4043 = vpop.f32.mrb[0].mxu0
      %4044 = vdwg.mxu0
      %4045 = vmatprep.subr.bf16.mxu0 0
      %4046 = vmatpush1.bf16.xpose.msra.mxu0 %v3495
      %4047 = vmatprep.subr.bf16.mxu0 0
      %4048 = vmatpush1.bf16.xpose.msra.mxu0 0
      %4049 = vmatprep.subr.bf16.mxu0 0
      %4050 = vmatpush1.bf16.xpose.msra.mxu0 0
      %4051 = vmatprep.subr.bf16.mxu0 0
      %4052 = vmatpush1.bf16.xpose.msra.mxu0 0
      %4053 = vmatprep.subr.bf16.mxu0 0
      %4054 = vmatpush1.bf16.xpose.msra.mxu0 0
      %4055 = vmatprep.subr.bf16.mxu0 0
      %4056 = vmatpush1.bf16.xpose.msra.mxu0 0
      %4057 = vmatprep.subr.bf16.mxu0 0
      %4058 = vmatpush1.bf16.xpose.msra.mxu0 0
      %4059 = vmatprep.subr.bf16.mxu0 0
      %4060 = vmatpush1.bf16.xpose.msra.mxu0 0
      %4061 = vmatprep.subr.bf16.mxu0 0
      %4062 = vmatpush1.bf16.xpose.msra.mxu0 0
      %4063 = vmatprep.subr.bf16.mxu0 0
      %4064 = vmatpush1.bf16.xpose.msra.mxu0 0
      %4065 = vmatprep.subr.bf16.mxu0 0
      %4066 = vmatpush1.bf16.xpose.msra.mxu0 0
      %4067 = vmatprep.subr.bf16.mxu0 0
      %4068 = vmatpush1.bf16.xpose.msra.mxu0 0
      %4069 = vmatprep.subr.bf16.mxu0 0
      %4070 = vmatpush1.bf16.xpose.msra.mxu0 0
      %4071 = vmatprep.subr.bf16.mxu0 0
      %4072 = vmatpush1.bf16.xpose.msra.mxu0 0
      %4073 = vmatprep.subr.bf16.mxu0 0
      %4074 = vmatpush1.bf16.xpose.msra.mxu0 0
      %4075 = vmatprep.subr.bf16.mxu0 0
      %4076 = vmatpush1.bf16.xpose.msra.mxu0 0
      %4077 = vmatprep.mubr.bf16.mxu0 0
      %4078 = vmatmul.mubr.bf16.gmra.mrb[0].mxu0 %v3395
      %v4079 = vpop.f32.mrb[0].mxu0
      %v4080 = vadd.f32 %v345, %v4079
      %v4081 = vpop.f32.mrb[0].mxu0
      %v4082 = vpop.f32.mrb[0].mxu0
      %v4083 = vpop.f32.mrb[0].mxu0
      %4084 = vdwg.mxu0
      %4085 = vmatprep.subr.bf16.mxu0 0
      %4086 = vmatpush1.bf16.xpose.msra.mxu0 %v3499
      %4087 = vmatprep.subr.bf16.mxu0 0
      %4088 = vmatpush1.bf16.xpose.msra.mxu0 0
      %4089 = vmatprep.subr.bf16.mxu0 0
      %4090 = vmatpush1.bf16.xpose.msra.mxu0 0
      %4091 = vmatprep.subr.bf16.mxu0 0
      %4092 = vmatpush1.bf16.xpose.msra.mxu0 0
      %4093 = vmatprep.subr.bf16.mxu0 0
      %4094 = vmatpush1.bf16.xpose.msra.mxu0 0
      %4095 = vmatprep.subr.bf16.mxu0 0
      %4096 = vmatpush1.bf16.xpose.msra.mxu0 0
      %4097 = vmatprep.subr.bf16.mxu0 0
      %4098 = vmatpush1.bf16.xpose.msra.mxu0 0
      %4099 = vmatprep.subr.bf16.mxu0 0
      %4100 = vmatpush1.bf16.xpose.msra.mxu0 0
      %4101 = vmatprep.subr.bf16.mxu0 0
      %4102 = vmatpush1.bf16.xpose.msra.mxu0 0
      %4103 = vmatprep.subr.bf16.mxu0 0
      %4104 = vmatpush1.bf16.xpose.msra.mxu0 0
      %4105 = vmatprep.subr.bf16.mxu0 0
      %4106 = vmatpush1.bf16.xpose.msra.mxu0 0
      %4107 = vmatprep.subr.bf16.mxu0 0
      %4108 = vmatpush1.bf16.xpose.msra.mxu0 0
      %4109 = vmatprep.subr.bf16.mxu0 0
      %4110 = vmatpush1.bf16.xpose.msra.mxu0 0
      %4111 = vmatprep.subr.bf16.mxu0 0
      %4112 = vmatpush1.bf16.xpose.msra.mxu0 0
      %4113 = vmatprep.subr.bf16.mxu0 0
      %4114 = vmatpush1.bf16.xpose.msra.mxu0 0
      %4115 = vmatprep.subr.bf16.mxu0 0
      %4116 = vmatpush1.bf16.xpose.msra.mxu0 0
      %4117 = vmatprep.mubr.bf16.mxu0 0
      %4118 = vmatmul.mubr.bf16.gmra.mrb[0].mxu0 %v3399
      %v4119 = vpop.f32.mrb[0].mxu0
      %v4120 = vadd.f32 %v345, %v4119
      %v4121 = vpop.f32.mrb[0].mxu0
      %v4122 = vpop.f32.mrb[0].mxu0
      %v4123 = vpop.f32.mrb[0].mxu0
      %4124 = vdwg.mxu0
      %4125 = vmatprep.subr.bf16.mxu0 0
      %4126 = vmatpush1.bf16.xpose.msra.mxu0 %v3503
      %4127 = vmatprep.subr.bf16.mxu0 0
      %4128 = vmatpush1.bf16.xpose.msra.mxu0 0
      %4129 = vmatprep.subr.bf16.mxu0 0
      %4130 = vmatpush1.bf16.xpose.msra.mxu0 0
      %4131 = vmatprep.subr.bf16.mxu0 0
      %4132 = vmatpush1.bf16.xpose.msra.mxu0 0
      %4133 = vmatprep.subr.bf16.mxu0 0
      %4134 = vmatpush1.bf16.xpose.msra.mxu0 0
      %4135 = vmatprep.subr.bf16.mxu0 0
      %4136 = vmatpush1.bf16.xpose.msra.mxu0 0
      %4137 = vmatprep.subr.bf16.mxu0 0
      %4138 = vmatpush1.bf16.xpose.msra.mxu0 0
      %4139 = vmatprep.subr.bf16.mxu0 0
      %4140 = vmatpush1.bf16.xpose.msra.mxu0 0
      %4141 = vmatprep.subr.bf16.mxu0 0
      %4142 = vmatpush1.bf16.xpose.msra.mxu0 0
      %4143 = vmatprep.subr.bf16.mxu0 0
      %4144 = vmatpush1.bf16.xpose.msra.mxu0 0
      %4145 = vmatprep.subr.bf16.mxu0 0
      %4146 = vmatpush1.bf16.xpose.msra.mxu0 0
      %4147 = vmatprep.subr.bf16.mxu0 0
      %4148 = vmatpush1.bf16.xpose.msra.mxu0 0
      %4149 = vmatprep.subr.bf16.mxu0 0
      %4150 = vmatpush1.bf16.xpose.msra.mxu0 0
      %4151 = vmatprep.subr.bf16.mxu0 0
      %4152 = vmatpush1.bf16.xpose.msra.mxu0 0
      %4153 = vmatprep.subr.bf16.mxu0 0
      %4154 = vmatpush1.bf16.xpose.msra.mxu0 0
      %4155 = vmatprep.subr.bf16.mxu0 0
      %4156 = vmatpush1.bf16.xpose.msra.mxu0 0
      %4157 = vmatprep.mubr.bf16.mxu0 0
      %4158 = vmatmul.mubr.bf16.gmra.mrb[0].mxu0 %v3403
      %v4159 = vpop.f32.mrb[0].mxu0
      %v4160 = vadd.f32 %v345, %v4159
      %v4161 = vpop.f32.mrb[0].mxu0
      %v4162 = vpop.f32.mrb[0].mxu0
      %v4163 = vpop.f32.mrb[0].mxu0
      %4164 = vdwg.mxu0
      %4165 = vmatprep.subr.bf16.mxu0 0
      %4166 = vmatpush1.bf16.xpose.msra.mxu0 %v3507
      %4167 = vmatprep.subr.bf16.mxu0 0
      %4168 = vmatpush1.bf16.xpose.msra.mxu0 0
      %4169 = vmatprep.subr.bf16.mxu0 0
      %4170 = vmatpush1.bf16.xpose.msra.mxu0 0
      %4171 = vmatprep.subr.bf16.mxu0 0
      %4172 = vmatpush1.bf16.xpose.msra.mxu0 0
      %4173 = vmatprep.subr.bf16.mxu0 0
      %4174 = vmatpush1.bf16.xpose.msra.mxu0 0
      %4175 = vmatprep.subr.bf16.mxu0 0
      %4176 = vmatpush1.bf16.xpose.msra.mxu0 0
      %4177 = vmatprep.subr.bf16.mxu0 0
      %4178 = vmatpush1.bf16.xpose.msra.mxu0 0
      %4179 = vmatprep.subr.bf16.mxu0 0
      %4180 = vmatpush1.bf16.xpose.msra.mxu0 0
      %4181 = vmatprep.subr.bf16.mxu0 0
      %4182 = vmatpush1.bf16.xpose.msra.mxu0 0
      %4183 = vmatprep.subr.bf16.mxu0 0
      %4184 = vmatpush1.bf16.xpose.msra.mxu0 0
      %4185 = vmatprep.subr.bf16.mxu0 0
      %4186 = vmatpush1.bf16.xpose.msra.mxu0 0
      %4187 = vmatprep.subr.bf16.mxu0 0
      %4188 = vmatpush1.bf16.xpose.msra.mxu0 0
      %4189 = vmatprep.subr.bf16.mxu0 0
      %4190 = vmatpush1.bf16.xpose.msra.mxu0 0
      %4191 = vmatprep.subr.bf16.mxu0 0
      %4192 = vmatpush1.bf16.xpose.msra.mxu0 0
      %4193 = vmatprep.subr.bf16.mxu0 0
      %4194 = vmatpush1.bf16.xpose.msra.mxu0 0
      %4195 = vmatprep.subr.bf16.mxu0 0
      %4196 = vmatpush1.bf16.xpose.msra.mxu0 0
      %4197 = vmatprep.mubr.bf16.mxu0 0
      %4198 = vmatmul.mubr.bf16.gmra.mrb[0].mxu0 %v3407
      %v4199 = vpop.f32.mrb[0].mxu0
      %v4200 = vadd.f32 %v345, %v4199
      %v4201 = vpop.f32.mrb[0].mxu0
      %v4202 = vpop.f32.mrb[0].mxu0
      %v4203 = vpop.f32.mrb[0].mxu0
      %4204 = vdwg.mxu0
      %4205 = vmatprep.subr.bf16.mxu0 0
      %4206 = vmatpush1.bf16.xpose.msra.mxu0 %v3511
      %4207 = vmatprep.subr.bf16.mxu0 0
      %4208 = vmatpush1.bf16.xpose.msra.mxu0 0
      %4209 = vmatprep.subr.bf16.mxu0 0
      %4210 = vmatpush1.bf16.xpose.msra.mxu0 0
      %4211 = vmatprep.subr.bf16.mxu0 0
      %4212 = vmatpush1.bf16.xpose.msra.mxu0 0
      %4213 = vmatprep.subr.bf16.mxu0 0
      %4214 = vmatpush1.bf16.xpose.msra.mxu0 0
      %4215 = vmatprep.subr.bf16.mxu0 0
      %4216 = vmatpush1.bf16.xpose.msra.mxu0 0
      %4217 = vmatprep.subr.bf16.mxu0 0
      %4218 = vmatpush1.bf16.xpose.msra.mxu0 0
      %4219 = vmatprep.subr.bf16.mxu0 0
      %4220 = vmatpush1.bf16.xpose.msra.mxu0 0
      %4221 = vmatprep.subr.bf16.mxu0 0
      %4222 = vmatpush1.bf16.xpose.msra.mxu0 0
      %4223 = vmatprep.subr.bf16.mxu0 0
      %4224 = vmatpush1.bf16.xpose.msra.mxu0 0
      %4225 = vmatprep.subr.bf16.mxu0 0
      %4226 = vmatpush1.bf16.xpose.msra.mxu0 0
      %4227 = vmatprep.subr.bf16.mxu0 0
      %4228 = vmatpush1.bf16.xpose.msra.mxu0 0
      %4229 = vmatprep.subr.bf16.mxu0 0
      %4230 = vmatpush1.bf16.xpose.msra.mxu0 0
      %4231 = vmatprep.subr.bf16.mxu0 0
      %4232 = vmatpush1.bf16.xpose.msra.mxu0 0
      %4233 = vmatprep.subr.bf16.mxu0 0
      %4234 = vmatpush1.bf16.xpose.msra.mxu0 0
      %4235 = vmatprep.subr.bf16.mxu0 0
      %4236 = vmatpush1.bf16.xpose.msra.mxu0 0
      %4237 = vmatprep.mubr.bf16.mxu0 0
      %4238 = vmatmul.mubr.bf16.gmra.mrb[0].mxu0 %v3411
      %v4239 = vpop.f32.mrb[0].mxu0
      %v4240 = vadd.f32 %v345, %v4239
      %v4241 = vpop.f32.mrb[0].mxu0
      %v4242 = vpop.f32.mrb[0].mxu0
      %v4243 = vpop.f32.mrb[0].mxu0
      %4244 = vdwg.mxu0
      %v4245 = vsel %vm1494, %v3640, -inf
      %4246 = vmax.xlane.f32.xlu0 %v4245
      %v4247 = vpop.xlane.xlu0 %4246
      %v4248 = vsel %vm1494, %v3680, -inf
      %4249 = vmax.xlane.f32.xlu0 %v4248
      %v4250 = vpop.xlane.xlu0 %4249
      %v4251 = vsel %vm1494, %v3720, -inf
      %4252 = vmax.xlane.f32.xlu0 %v4251
      %v4253 = vpop.xlane.xlu0 %4252
      %v4254 = vsel %vm1494, %v3760, -inf
      %4255 = vmax.xlane.f32.xlu0 %v4254
      %v4256 = vpop.xlane.xlu0 %4255
      %v4257 = vsel %vm1494, %v3800, -inf
      %4258 = vmax.xlane.f32.xlu0 %v4257
      %v4259 = vpop.xlane.xlu0 %4258
      %v4260 = vsel %vm1494, %v3840, -inf
      %4261 = vmax.xlane.f32.xlu0 %v4260
      %v4262 = vpop.xlane.xlu0 %4261
      %v4263 = vsel %vm1494, %v3880, -inf
      %4264 = vmax.xlane.f32.xlu0 %v4263
      %v4265 = vpop.xlane.xlu0 %4264
      %v4266 = vsel %vm1494, %v3920, -inf
      %4267 = vmax.xlane.f32.xlu0 %v4266
      %v4268 = vpop.xlane.xlu0 %4267
      %v4269 = vsel %vm1494, %v3960, -inf
      %4270 = vmax.xlane.f32.xlu0 %v4269
      %v4271 = vpop.xlane.xlu0 %4270
      %v4272 = vsel %vm1494, %v4000, -inf
      %4273 = vmax.xlane.f32.xlu0 %v4272
      %v4274 = vpop.xlane.xlu0 %4273
      %v4275 = vsel %vm1494, %v4040, -inf
      %4276 = vmax.xlane.f32.xlu0 %v4275
      %v4277 = vpop.xlane.xlu0 %4276
      %v4278 = vsel %vm1494, %v4080, -inf
      %4279 = vmax.xlane.f32.xlu0 %v4278
      %v4280 = vpop.xlane.xlu0 %4279
      %v4281 = vsel %vm1494, %v4120, -inf
      %4282 = vmax.xlane.f32.xlu0 %v4281
      %v4283 = vpop.xlane.xlu0 %4282
      %v4284 = vsel %vm1494, %v4160, -inf
      %4285 = vmax.xlane.f32.xlu0 %v4284
      %v4286 = vpop.xlane.xlu0 %4285
      %v4287 = vsel %vm1494, %v4200, -inf
      %4288 = vmax.xlane.f32.xlu0 %v4287
      %v4289 = vpop.xlane.xlu0 %4288
      %v4290 = vsel %vm1494, %v4240, -inf
      %4291 = vmax.xlane.f32.xlu0 %v4290
      %v4292 = vpop.xlane.xlu0 %4291
      %v4301 = vlaneseq
      %v4302 = vshrl.u32 %v4301, 7
      %v4303 = vsub.s32 %v343, %v4302
      %v4304 = vrot.slane %v4271, %v4303
      %v4305 = vlaneseq
      %v4306 = vshrl.u32 %v4305, 7
      %v4307 = vsub.s32 %v343, %v4306
      %v4308 = vrot.slane %v4274, %v4307
      %v4309 = vlaneseq
      %v4310 = vshrl.u32 %v4309, 7
      %v4311 = vsub.s32 %v343, %v4310
      %v4312 = vrot.slane %v4277, %v4311
      %v4313 = vlaneseq
      %v4314 = vshrl.u32 %v4313, 7
      %v4315 = vsub.s32 %v343, %v4314
      %v4316 = vrot.slane %v4280, %v4315
      %v4317 = vlaneseq
      %v4318 = vshrl.u32 %v4317, 7
      %v4319 = vsub.s32 %v343, %v4318
      %v4320 = vrot.slane %v4283, %v4319
      %v4321 = vlaneseq
      %v4322 = vshrl.u32 %v4321, 7
      %v4323 = vsub.s32 %v343, %v4322
      %v4324 = vrot.slane %v4286, %v4323
      %v4325 = vlaneseq
      %v4326 = vshrl.u32 %v4325, 7
      %v4327 = vsub.s32 %v343, %v4326
      %v4328 = vrot.slane %v4289, %v4327
      %v4329 = vlaneseq
      %v4330 = vshrl.u32 %v4329, 7
      %v4331 = vsub.s32 %v343, %v4330
      %v4332 = vrot.slane %v4292, %v4331
      %v4333 = vsel %vm1583, %v4308, %v4304
      %v4334 = vsel %vm1585, %v4312, %v4333
      %v4335 = vsel %vm1587, %v4316, %v4334
      %v4336 = vsel %vm1589, %v4320, %v4335
      %v4337 = vsel %vm1591, %v4324, %v4336
      %v4338 = vsel %vm1593, %v4328, %v4337
      %v4339 = vsel %vm1595, %v4332, %v4338
      %4341 = vxpose.xlu0.b32.start [1/16] %v4339, 128
      %4342 = vxpose.xlu0.b32.cont [2/16] 0.0, 128
      %4343 = vxpose.xlu0.b32.cont [3/16] 0.0, 128
      %4344 = vxpose.xlu0.b32.cont [4/16] 0.0, 128
      %4345 = vxpose.xlu0.b32.cont [5/16] 0.0, 128
      %4346 = vxpose.xlu0.b32.cont [6/16] 0.0, 128
      %4347 = vxpose.xlu0.b32.cont [7/16] 0.0, 128
      %4348 = vxpose.xlu0.b32.cont [8/16] 0.0, 128
      %4349 = vxpose.xlu0.b32.cont [9/16] 0.0, 128
      %4350 = vxpose.xlu0.b32.cont [10/16] 0.0, 128
      %4351 = vxpose.xlu0.b32.cont [11/16] 0.0, 128
      %4352 = vxpose.xlu0.b32.cont [12/16] 0.0, 128
      %4353 = vxpose.xlu0.b32.cont [13/16] 0.0, 128
      %4354 = vxpose.xlu0.b32.cont [14/16] 0.0, 128
      %4355 = vxpose.xlu0.b32.cont [15/16] 0.0, 128
      %4356 = vxpose.xlu0.b32.end [16/16] 0.0, 128
      %v4357 = vpop.trf.xlu0
      %v4358 = vpop.trf.xlu0
      %v4359 = vpop.trf.xlu0
      %v4360 = vpop.trf.xlu0
      %v4361 = vpop.trf.xlu0
      %v4362 = vpop.trf.xlu0
      %v4363 = vpop.trf.xlu0
      %v4364 = vpop.trf.xlu0
      %v4365 = vpop.trf.xlu0
      %v4366 = vpop.trf.xlu0
      %v4367 = vpop.trf.xlu0
      %v4368 = vpop.trf.xlu0
      %v4369 = vpop.trf.xlu0
      %v4370 = vpop.trf.xlu0
      %v4371 = vpop.trf.xlu0
      %v4372 = vpop.trf.xlu0
      %v4374 = vlaneseq
      %v4375 = vshrl.u32 %v4374, 7
      %v4376 = vsub.s32 0, %v4375
      %v4377 = vrot.slane %v4357, %v4376
      %4379 = vbcast.lane.b32.xlu0 %v4377, 256
      %v4380 = vpop.permute.xlu0 %4379
      %v4381 = vlaneseq
      %v4382 = vshrl.u32 %v4381, 7
      %v4383 = vsub.s32 1, %v4382
      %v4384 = vrot.slane %v4357, %v4383
      %4386 = vbcast.lane.b32.xlu0 %v4384, 256
      %v4387 = vpop.permute.xlu0 %4386
      %v4388 = vlaneseq
      %v4389 = vshrl.u32 %v4388, 7
      %v4390 = vsub.s32 2, %v4389
      %v4391 = vrot.slane %v4357, %v4390
      %4393 = vbcast.lane.b32.xlu0 %v4391, 256
      %v4394 = vpop.permute.xlu0 %4393
      %v4395 = vlaneseq
      %v4396 = vshrl.u32 %v4395, 7
      %v4397 = vsub.s32 3, %v4396
      %v4398 = vrot.slane %v4357, %v4397
      %4400 = vbcast.lane.b32.xlu0 %v4398, 256
      %v4401 = vpop.permute.xlu0 %4400
      %v4402 = vlaneseq
      %v4403 = vshrl.u32 %v4402, 7
      %v4404 = vsub.s32 4, %v4403
      %v4405 = vrot.slane %v4357, %v4404
      %4407 = vbcast.lane.b32.xlu0 %v4405, 256
      %v4408 = vpop.permute.xlu0 %4407
      %v4409 = vlaneseq
      %v4410 = vshrl.u32 %v4409, 7
      %v4411 = vsub.s32 5, %v4410
      %v4412 = vrot.slane %v4357, %v4411
      %4414 = vbcast.lane.b32.xlu0 %v4412, 256
      %v4415 = vpop.permute.xlu0 %4414
      %v4416 = vlaneseq
      %v4417 = vshrl.u32 %v4416, 7
      %v4418 = vsub.s32 6, %v4417
      %v4419 = vrot.slane %v4357, %v4418
      %4421 = vbcast.lane.b32.xlu0 %v4419, 256
      %v4422 = vpop.permute.xlu0 %4421
      %v4423 = vlaneseq
      %v4424 = vshrl.u32 %v4423, 7
      %v4425 = vsub.s32 7, %v4424
      %v4426 = vrot.slane %v4357, %v4425
      %4428 = vbcast.lane.b32.xlu0 %v4426, 256
      %v4429 = vpop.permute.xlu0 %4428
      %v4438 = vmax.f32 %v4247, %v4380
      %v4439 = vmax.f32 %v4250, %v4387
      %v4440 = vmax.f32 %v4253, %v4394
      %v4441 = vmax.f32 %v4256, %v4401
      %v4442 = vmax.f32 %v4259, %v4408
      %v4443 = vmax.f32 %v4262, %v4415
      %v4444 = vmax.f32 %v4265, %v4422
      %v4445 = vmax.f32 %v4268, %v4429
      %4447 = vset.pattern.permute.xlu0 0
      %4448 = vperm.xlu0 %4447, %v4438
      %v4449 = vpop.permute.xlu0 %4448
      %4452 = vset.pattern.permute.xlu0 0
      %4453 = vperm.xlu0 %4452, %v4439
      %v4454 = vpop.permute.xlu0 %4453
      %4457 = vset.pattern.permute.xlu0 0
      %4458 = vperm.xlu0 %4457, %v4440
      %v4459 = vpop.permute.xlu0 %4458
      %4462 = vset.pattern.permute.xlu0 0
      %4463 = vperm.xlu0 %4462, %v4441
      %v4464 = vpop.permute.xlu0 %4463
      %4467 = vset.pattern.permute.xlu0 0
      %4468 = vperm.xlu0 %4467, %v4442
      %v4469 = vpop.permute.xlu0 %4468
      %4472 = vset.pattern.permute.xlu0 0
      %4473 = vperm.xlu0 %4472, %v4443
      %v4474 = vpop.permute.xlu0 %4473
      %4477 = vset.pattern.permute.xlu0 0
      %4478 = vperm.xlu0 %4477, %v4444
      %v4479 = vpop.permute.xlu0 %4478
      %4482 = vset.pattern.permute.xlu0 0
      %4483 = vperm.xlu0 %4482, %v4445
      %v4484 = vpop.permute.xlu0 %4483
      %v4486 = vsub.f32 %v3640, %v4449
      %v4487 = vsub.f32 %v3680, %v4454
      %v4488 = vsub.f32 %v3720, %v4459
      %v4489 = vsub.f32 %v3760, %v4464
      %v4490 = vsub.f32 %v3800, %v4469
      %v4491 = vsub.f32 %v3840, %v4474
      %v4492 = vsub.f32 %v3880, %v4479
      %v4493 = vsub.f32 %v3920, %v4484
      %v4494 = vmul.f32 %v4486, 1.442695
      %v4495 = vpow.pop %v4494
      %v4496 = vmul.f32 %v4487, 1.442695
      %v4497 = vpow.pop %v4496
      %v4498 = vmul.f32 %v4488, 1.442695
      %v4499 = vpow.pop %v4498
      %v4500 = vmul.f32 %v4489, 1.442695
      %v4501 = vpow.pop %v4500
      %v4502 = vmul.f32 %v4490, 1.442695
      %v4503 = vpow.pop %v4502
      %v4504 = vmul.f32 %v4491, 1.442695
      %v4505 = vpow.pop %v4504
      %v4506 = vmul.f32 %v4492, 1.442695
      %v4507 = vpow.pop %v4506
      %v4508 = vmul.f32 %v4493, 1.442695
      %v4509 = vpow.pop %v4508
      %v4510 = vlaneseq
      %v4511 = vshrl.u32 %v4510, 7
      %v4512 = vsub.s32 %v343, %v4511
      %v4513 = vrot.slane %v4449, %v4512
      %v4514 = vlaneseq
      %v4515 = vshrl.u32 %v4514, 7
      %v4516 = vsub.s32 %v343, %v4515
      %v4517 = vrot.slane %v4454, %v4516
      %v4518 = vlaneseq
      %v4519 = vshrl.u32 %v4518, 7
      %v4520 = vsub.s32 %v343, %v4519
      %v4521 = vrot.slane %v4459, %v4520
      %v4522 = vlaneseq
      %v4523 = vshrl.u32 %v4522, 7
      %v4524 = vsub.s32 %v343, %v4523
      %v4525 = vrot.slane %v4464, %v4524
      %v4526 = vlaneseq
      %v4527 = vshrl.u32 %v4526, 7
      %v4528 = vsub.s32 %v343, %v4527
      %v4529 = vrot.slane %v4469, %v4528
      %v4530 = vlaneseq
      %v4531 = vshrl.u32 %v4530, 7
      %v4532 = vsub.s32 %v343, %v4531
      %v4533 = vrot.slane %v4474, %v4532
      %v4534 = vlaneseq
      %v4535 = vshrl.u32 %v4534, 7
      %v4536 = vsub.s32 %v343, %v4535
      %v4537 = vrot.slane %v4479, %v4536
      %v4538 = vlaneseq
      %v4539 = vshrl.u32 %v4538, 7
      %v4540 = vsub.s32 %v343, %v4539
      %v4541 = vrot.slane %v4484, %v4540
      %v4542 = vsel %vm1583, %v4517, %v4513
      %v4543 = vsel %vm1585, %v4521, %v4542
      %v4544 = vsel %vm1587, %v4525, %v4543
      %v4545 = vsel %vm1589, %v4529, %v4544
      %v4546 = vsel %vm1591, %v4533, %v4545
      %v4547 = vsel %vm1593, %v4537, %v4546
      %v4548 = vsel %vm1595, %v4541, %v4547
      %4550 = vxpose.xlu0.b32.start [1/16] %v4548, 128
      %4551 = vxpose.xlu0.b32.cont [2/16] 0.0, 128
      %4552 = vxpose.xlu0.b32.cont [3/16] 0.0, 128
      %4553 = vxpose.xlu0.b32.cont [4/16] 0.0, 128
      %4554 = vxpose.xlu0.b32.cont [5/16] 0.0, 128
      %4555 = vxpose.xlu0.b32.cont [6/16] 0.0, 128
      %4556 = vxpose.xlu0.b32.cont [7/16] 0.0, 128
      %4557 = vxpose.xlu0.b32.cont [8/16] 0.0, 128
      %4558 = vxpose.xlu0.b32.cont [9/16] 0.0, 128
      %4559 = vxpose.xlu0.b32.cont [10/16] 0.0, 128
      %4560 = vxpose.xlu0.b32.cont [11/16] 0.0, 128
      %4561 = vxpose.xlu0.b32.cont [12/16] 0.0, 128
      %4562 = vxpose.xlu0.b32.cont [13/16] 0.0, 128
      %4563 = vxpose.xlu0.b32.cont [14/16] 0.0, 128
      %4564 = vxpose.xlu0.b32.cont [15/16] 0.0, 128
      %4565 = vxpose.xlu0.b32.end [16/16] 0.0, 128
      %v4566 = vpop.trf.xlu0
      %v4567 = vpop.trf.xlu0
      %v4568 = vpop.trf.xlu0
      %v4569 = vpop.trf.xlu0
      %v4570 = vpop.trf.xlu0
      %v4571 = vpop.trf.xlu0
      %v4572 = vpop.trf.xlu0
      %v4573 = vpop.trf.xlu0
      %v4574 = vpop.trf.xlu0
      %v4575 = vpop.trf.xlu0
      %v4576 = vpop.trf.xlu0
      %v4577 = vpop.trf.xlu0
      %v4578 = vpop.trf.xlu0
      %v4579 = vpop.trf.xlu0
      %v4580 = vpop.trf.xlu0
      %v4581 = vpop.trf.xlu0
      %v4582 = vlaneseq
      %v4583 = vshrl.u32 %v4582, 7
      %v4584 = vsub.s32 0, %v4583
      %v4585 = vrot.slane %v4566, %v4584
      %4587 = vbcast.lane.b32.xlu0 %v4585, 256
      %v4588 = vpop.permute.xlu0 %4587
      %v4589 = vlaneseq
      %v4590 = vshrl.u32 %v4589, 7
      %v4591 = vsub.s32 1, %v4590
      %v4592 = vrot.slane %v4566, %v4591
      %4594 = vbcast.lane.b32.xlu0 %v4592, 256
      %v4595 = vpop.permute.xlu0 %4594
      %v4596 = vlaneseq
      %v4597 = vshrl.u32 %v4596, 7
      %v4598 = vsub.s32 2, %v4597
      %v4599 = vrot.slane %v4566, %v4598
      %4601 = vbcast.lane.b32.xlu0 %v4599, 256
      %v4602 = vpop.permute.xlu0 %4601
      %v4603 = vlaneseq
      %v4604 = vshrl.u32 %v4603, 7
      %v4605 = vsub.s32 3, %v4604
      %v4606 = vrot.slane %v4566, %v4605
      %4608 = vbcast.lane.b32.xlu0 %v4606, 256
      %v4609 = vpop.permute.xlu0 %4608
      %v4610 = vlaneseq
      %v4611 = vshrl.u32 %v4610, 7
      %v4612 = vsub.s32 4, %v4611
      %v4613 = vrot.slane %v4566, %v4612
      %4615 = vbcast.lane.b32.xlu0 %v4613, 256
      %v4616 = vpop.permute.xlu0 %4615
      %v4617 = vlaneseq
      %v4618 = vshrl.u32 %v4617, 7
      %v4619 = vsub.s32 5, %v4618
      %v4620 = vrot.slane %v4566, %v4619
      %4622 = vbcast.lane.b32.xlu0 %v4620, 256
      %v4623 = vpop.permute.xlu0 %4622
      %v4624 = vlaneseq
      %v4625 = vshrl.u32 %v4624, 7
      %v4626 = vsub.s32 6, %v4625
      %v4627 = vrot.slane %v4566, %v4626
      %4629 = vbcast.lane.b32.xlu0 %v4627, 256
      %v4630 = vpop.permute.xlu0 %4629
      %v4631 = vlaneseq
      %v4632 = vshrl.u32 %v4631, 7
      %v4633 = vsub.s32 7, %v4632
      %v4634 = vrot.slane %v4566, %v4633
      %4636 = vbcast.lane.b32.xlu0 %v4634, 256
      %v4637 = vpop.permute.xlu0 %4636
      %v4638 = vsub.f32 %v3960, %v4588
      %v4639 = vsub.f32 %v4000, %v4595
      %v4640 = vsub.f32 %v4040, %v4602
      %v4641 = vsub.f32 %v4080, %v4609
      %v4642 = vsub.f32 %v4120, %v4616
      %v4643 = vsub.f32 %v4160, %v4623
      %v4644 = vsub.f32 %v4200, %v4630
      %v4645 = vsub.f32 %v4240, %v4637
      %v4646 = vmul.f32 %v4638, 1.442695
      %v4647 = vpow.pop %v4646
      %v4648 = vmul.f32 %v4639, 1.442695
      %v4649 = vpow.pop %v4648
      %v4650 = vmul.f32 %v4640, 1.442695
      %v4651 = vpow.pop %v4650
      %v4652 = vmul.f32 %v4641, 1.442695
      %v4653 = vpow.pop %v4652
      %v4654 = vmul.f32 %v4642, 1.442695
      %v4655 = vpow.pop %v4654
      %v4656 = vmul.f32 %v4643, 1.442695
      %v4657 = vpow.pop %v4656
      %v4658 = vmul.f32 %v4644, 1.442695
      %v4659 = vpow.pop %v4658
      %v4660 = vmul.f32 %v4645, 1.442695
      %v4661 = vpow.pop %v4660
      %v4662 = vsel %vm1494, %v4495, 0.0
      %4663 = vadd.xlane.f32.xlu0 %v4662
      %v4664 = vpop.xlane.xlu0 %4663
      %v4665 = vsel %vm1494, %v4497, 0.0
      %4666 = vadd.xlane.f32.xlu0 %v4665
      %v4667 = vpop.xlane.xlu0 %4666
      %v4668 = vsel %vm1494, %v4499, 0.0
      %4669 = vadd.xlane.f32.xlu0 %v4668
      %v4670 = vpop.xlane.xlu0 %4669
      %v4671 = vsel %vm1494, %v4501, 0.0
      %4672 = vadd.xlane.f32.xlu0 %v4671
      %v4673 = vpop.xlane.xlu0 %4672
      %v4674 = vsel %vm1494, %v4503, 0.0
      %4675 = vadd.xlane.f32.xlu0 %v4674
      %v4676 = vpop.xlane.xlu0 %4675
      %v4677 = vsel %vm1494, %v4505, 0.0
      %4678 = vadd.xlane.f32.xlu0 %v4677
      %v4679 = vpop.xlane.xlu0 %4678
      %v4680 = vsel %vm1494, %v4507, 0.0
      %4681 = vadd.xlane.f32.xlu0 %v4680
      %v4682 = vpop.xlane.xlu0 %4681
      %v4683 = vsel %vm1494, %v4509, 0.0
      %4684 = vadd.xlane.f32.xlu0 %v4683
      %v4685 = vpop.xlane.xlu0 %4684
      %v4686 = vsel %vm1494, %v4647, 0.0
      %4687 = vadd.xlane.f32.xlu0 %v4686
      %v4688 = vpop.xlane.xlu0 %4687
      %v4689 = vsel %vm1494, %v4649, 0.0
      %4690 = vadd.xlane.f32.xlu0 %v4689
      %v4691 = vpop.xlane.xlu0 %4690
      %v4692 = vsel %vm1494, %v4651, 0.0
      %4693 = vadd.xlane.f32.xlu0 %v4692
      %v4694 = vpop.xlane.xlu0 %4693
      %v4695 = vsel %vm1494, %v4653, 0.0
      %4696 = vadd.xlane.f32.xlu0 %v4695
      %v4697 = vpop.xlane.xlu0 %4696
      %v4698 = vsel %vm1494, %v4655, 0.0
      %4699 = vadd.xlane.f32.xlu0 %v4698
      %v4700 = vpop.xlane.xlu0 %4699
      %v4701 = vsel %vm1494, %v4657, 0.0
      %4702 = vadd.xlane.f32.xlu0 %v4701
      %v4703 = vpop.xlane.xlu0 %4702
      %v4704 = vsel %vm1494, %v4659, 0.0
      %4705 = vadd.xlane.f32.xlu0 %v4704
      %v4706 = vpop.xlane.xlu0 %4705
      %v4707 = vsel %vm1494, %v4661, 0.0
      %4708 = vadd.xlane.f32.xlu0 %v4707
      %v4709 = vpop.xlane.xlu0 %4708
      %v4718 = vlaneseq
      %v4719 = vshrl.u32 %v4718, 7
      %v4720 = vsub.s32 %v343, %v4719
      %v4721 = vrot.slane %v4688, %v4720
      %v4722 = vlaneseq
      %v4723 = vshrl.u32 %v4722, 7
      %v4724 = vsub.s32 %v343, %v4723
      %v4725 = vrot.slane %v4691, %v4724
      %v4726 = vlaneseq
      %v4727 = vshrl.u32 %v4726, 7
      %v4728 = vsub.s32 %v343, %v4727
      %v4729 = vrot.slane %v4694, %v4728
      %v4730 = vlaneseq
      %v4731 = vshrl.u32 %v4730, 7
      %v4732 = vsub.s32 %v343, %v4731
      %v4733 = vrot.slane %v4697, %v4732
      %v4734 = vlaneseq
      %v4735 = vshrl.u32 %v4734, 7
      %v4736 = vsub.s32 %v343, %v4735
      %v4737 = vrot.slane %v4700, %v4736
      %v4738 = vlaneseq
      %v4739 = vshrl.u32 %v4738, 7
      %v4740 = vsub.s32 %v343, %v4739
      %v4741 = vrot.slane %v4703, %v4740
      %v4742 = vlaneseq
      %v4743 = vshrl.u32 %v4742, 7
      %v4744 = vsub.s32 %v343, %v4743
      %v4745 = vrot.slane %v4706, %v4744
      %v4746 = vlaneseq
      %v4747 = vshrl.u32 %v4746, 7
      %v4748 = vsub.s32 %v343, %v4747
      %v4749 = vrot.slane %v4709, %v4748
      %v4750 = vsel %vm1583, %v4725, %v4721
      %v4751 = vsel %vm1585, %v4729, %v4750
      %v4752 = vsel %vm1587, %v4733, %v4751
      %v4753 = vsel %vm1589, %v4737, %v4752
      %v4754 = vsel %vm1591, %v4741, %v4753
      %v4755 = vsel %vm1593, %v4745, %v4754
      %v4756 = vsel %vm1595, %v4749, %v4755
      %4758 = vxpose.xlu0.b32.start [1/16] %v4756, 128
      %4759 = vxpose.xlu0.b32.cont [2/16] 0.0, 128
      %4760 = vxpose.xlu0.b32.cont [3/16] 0.0, 128
      %4761 = vxpose.xlu0.b32.cont [4/16] 0.0, 128
      %4762 = vxpose.xlu0.b32.cont [5/16] 0.0, 128
      %4763 = vxpose.xlu0.b32.cont [6/16] 0.0, 128
      %4764 = vxpose.xlu0.b32.cont [7/16] 0.0, 128
      %4765 = vxpose.xlu0.b32.cont [8/16] 0.0, 128
      %4766 = vxpose.xlu0.b32.cont [9/16] 0.0, 128
      %4767 = vxpose.xlu0.b32.cont [10/16] 0.0, 128
      %4768 = vxpose.xlu0.b32.cont [11/16] 0.0, 128
      %4769 = vxpose.xlu0.b32.cont [12/16] 0.0, 128
      %4770 = vxpose.xlu0.b32.cont [13/16] 0.0, 128
      %4771 = vxpose.xlu0.b32.cont [14/16] 0.0, 128
      %4772 = vxpose.xlu0.b32.cont [15/16] 0.0, 128
      %4773 = vxpose.xlu0.b32.end [16/16] 0.0, 128
      %v4774 = vpop.trf.xlu0
      %v4775 = vpop.trf.xlu0
      %v4776 = vpop.trf.xlu0
      %v4777 = vpop.trf.xlu0
      %v4778 = vpop.trf.xlu0
      %v4779 = vpop.trf.xlu0
      %v4780 = vpop.trf.xlu0
      %v4781 = vpop.trf.xlu0
      %v4782 = vpop.trf.xlu0
      %v4783 = vpop.trf.xlu0
      %v4784 = vpop.trf.xlu0
      %v4785 = vpop.trf.xlu0
      %v4786 = vpop.trf.xlu0
      %v4787 = vpop.trf.xlu0
      %v4788 = vpop.trf.xlu0
      %v4789 = vpop.trf.xlu0
      %v4791 = vlaneseq
      %v4792 = vshrl.u32 %v4791, 7
      %v4793 = vsub.s32 0, %v4792
      %v4794 = vrot.slane %v4774, %v4793
      %4796 = vbcast.lane.b32.xlu0 %v4794, 256
      %v4797 = vpop.permute.xlu0 %4796
      %v4798 = vlaneseq
      %v4799 = vshrl.u32 %v4798, 7
      %v4800 = vsub.s32 1, %v4799
      %v4801 = vrot.slane %v4774, %v4800
      %4803 = vbcast.lane.b32.xlu0 %v4801, 256
      %v4804 = vpop.permute.xlu0 %4803
      %v4805 = vlaneseq
      %v4806 = vshrl.u32 %v4805, 7
      %v4807 = vsub.s32 2, %v4806
      %v4808 = vrot.slane %v4774, %v4807
      %4810 = vbcast.lane.b32.xlu0 %v4808, 256
      %v4811 = vpop.permute.xlu0 %4810
      %v4812 = vlaneseq
      %v4813 = vshrl.u32 %v4812, 7
      %v4814 = vsub.s32 3, %v4813
      %v4815 = vrot.slane %v4774, %v4814
      %4817 = vbcast.lane.b32.xlu0 %v4815, 256
      %v4818 = vpop.permute.xlu0 %4817
      %v4819 = vlaneseq
      %v4820 = vshrl.u32 %v4819, 7
      %v4821 = vsub.s32 4, %v4820
      %v4822 = vrot.slane %v4774, %v4821
      %4824 = vbcast.lane.b32.xlu0 %v4822, 256
      %v4825 = vpop.permute.xlu0 %4824
      %v4826 = vlaneseq
      %v4827 = vshrl.u32 %v4826, 7
      %v4828 = vsub.s32 5, %v4827
      %v4829 = vrot.slane %v4774, %v4828
      %4831 = vbcast.lane.b32.xlu0 %v4829, 256
      %v4832 = vpop.permute.xlu0 %4831
      %v4833 = vlaneseq
      %v4834 = vshrl.u32 %v4833, 7
      %v4835 = vsub.s32 6, %v4834
      %v4836 = vrot.slane %v4774, %v4835
      %4838 = vbcast.lane.b32.xlu0 %v4836, 256
      %v4839 = vpop.permute.xlu0 %4838
      %v4840 = vlaneseq
      %v4841 = vshrl.u32 %v4840, 7
      %v4842 = vsub.s32 7, %v4841
      %v4843 = vrot.slane %v4774, %v4842
      %4845 = vbcast.lane.b32.xlu0 %v4843, 256
      %v4846 = vpop.permute.xlu0 %4845
      %v4855 = vadd.f32 %v4664, %v4797
      %v4856 = vadd.f32 %v4667, %v4804
      %v4857 = vadd.f32 %v4670, %v4811
      %v4858 = vadd.f32 %v4673, %v4818
      %v4859 = vadd.f32 %v4676, %v4825
      %v4860 = vadd.f32 %v4679, %v4832
      %v4861 = vadd.f32 %v4682, %v4839
      %v4862 = vadd.f32 %v4685, %v4846
      %v4863 = vrcp.pop %v4855
      %v4864 = vrcp.pop %v4856
      %v4865 = vrcp.pop %v4857
      %v4866 = vrcp.pop %v4858
      %v4867 = vrcp.pop %v4859
      %v4868 = vrcp.pop %v4860
      %v4869 = vrcp.pop %v4861
      %v4870 = vrcp.pop %v4862
      %v4871 = vpack.c.bf16 %v4495, %v4495
      %v4872 = vpack.c.bf16 %v4497, %v4497
      %v4873 = vpack.c.bf16 %v4499, %v4499
      %v4874 = vpack.c.bf16 %v4501, %v4501
      %v4875 = vpack.c.bf16 %v4503, %v4503
      %v4876 = vpack.c.bf16 %v4505, %v4505
      %v4877 = vpack.c.bf16 %v4507, %v4507
      %v4878 = vpack.c.bf16 %v4509, %v4509
      %v4880 = vsel %vm1494, %v4871, 0
      %v4883 = vsel %vm2139, %v3305, 0
      %4885 = vmatprep.subr.bf16.mxu0 0
      %4886 = vmatpush1.bf16.msra.mxu0 %v4883
      %4887 = vmatprep.subr.bf16.mxu0 0
      %4888 = vmatpush1.bf16.msra.mxu0 0
      %4889 = vmatprep.subr.bf16.mxu0 0
      %4890 = vmatpush1.bf16.msra.mxu0 0
      %4891 = vmatprep.subr.bf16.mxu0 0
      %4892 = vmatpush1.bf16.msra.mxu0 0
      %4893 = vmatprep.subr.bf16.mxu0 0
      %4894 = vmatpush1.bf16.msra.mxu0 0
      %4895 = vmatprep.subr.bf16.mxu0 0
      %4896 = vmatpush1.bf16.msra.mxu0 0
      %4897 = vmatprep.subr.bf16.mxu0 0
      %4898 = vmatpush1.bf16.msra.mxu0 0
      %4899 = vmatprep.subr.bf16.mxu0 0
      %4900 = vmatpush1.bf16.msra.mxu0 0
      %4901 = vmatprep.subr.bf16.mxu0 0
      %4902 = vmatpush1.bf16.msra.mxu0 0
      %4903 = vmatprep.subr.bf16.mxu0 0
      %4904 = vmatpush1.bf16.msra.mxu0 0
      %4905 = vmatprep.subr.bf16.mxu0 0
      %4906 = vmatpush1.bf16.msra.mxu0 0
      %4907 = vmatprep.subr.bf16.mxu0 0
      %4908 = vmatpush1.bf16.msra.mxu0 0
      %4909 = vmatprep.subr.bf16.mxu0 0
      %4910 = vmatpush1.bf16.msra.mxu0 0
      %4911 = vmatprep.subr.bf16.mxu0 0
      %4912 = vmatpush1.bf16.msra.mxu0 0
      %4913 = vmatprep.subr.bf16.mxu0 0
      %4914 = vmatpush1.bf16.msra.mxu0 0
      %4915 = vmatprep.subr.bf16.mxu0 0
      %4916 = vmatpush1.bf16.msra.mxu0 0
      %4917 = vmatprep.mubr.bf16.mxu0 0
      %4918 = vmatmul.mubr.bf16.gmra.mrb[0].mxu0 %v4880
      %v4919 = vpop.f32.mrb[0].mxu0
      %v4920 = vadd.f32 0.0, %v4919
      %v4921 = vpop.f32.mrb[0].mxu0
      %v4922 = vpop.f32.mrb[0].mxu0
      %v4923 = vpop.f32.mrb[0].mxu0
      %4924 = vdwg.mxu0
      %v4926 = vsel %vm1494, %v4872, 0
      %v4929 = vsel %vm2139, %v3306, 0
      %4931 = vmatprep.subr.bf16.mxu0 0
      %4932 = vmatpush1.bf16.msra.mxu0 %v4929
      %4933 = vmatprep.subr.bf16.mxu0 0
      %4934 = vmatpush1.bf16.msra.mxu0 0
      %4935 = vmatprep.subr.bf16.mxu0 0
      %4936 = vmatpush1.bf16.msra.mxu0 0
      %4937 = vmatprep.subr.bf16.mxu0 0
      %4938 = vmatpush1.bf16.msra.mxu0 0
      %4939 = vmatprep.subr.bf16.mxu0 0
      %4940 = vmatpush1.bf16.msra.mxu0 0
      %4941 = vmatprep.subr.bf16.mxu0 0
      %4942 = vmatpush1.bf16.msra.mxu0 0
      %4943 = vmatprep.subr.bf16.mxu0 0
      %4944 = vmatpush1.bf16.msra.mxu0 0
      %4945 = vmatprep.subr.bf16.mxu0 0
      %4946 = vmatpush1.bf16.msra.mxu0 0
      %4947 = vmatprep.subr.bf16.mxu0 0
      %4948 = vmatpush1.bf16.msra.mxu0 0
      %4949 = vmatprep.subr.bf16.mxu0 0
      %4950 = vmatpush1.bf16.msra.mxu0 0
      %4951 = vmatprep.subr.bf16.mxu0 0
      %4952 = vmatpush1.bf16.msra.mxu0 0
      %4953 = vmatprep.subr.bf16.mxu0 0
      %4954 = vmatpush1.bf16.msra.mxu0 0
      %4955 = vmatprep.subr.bf16.mxu0 0
      %4956 = vmatpush1.bf16.msra.mxu0 0
      %4957 = vmatprep.subr.bf16.mxu0 0
      %4958 = vmatpush1.bf16.msra.mxu0 0
      %4959 = vmatprep.subr.bf16.mxu0 0
      %4960 = vmatpush1.bf16.msra.mxu0 0
      %4961 = vmatprep.subr.bf16.mxu0 0
      %4962 = vmatpush1.bf16.msra.mxu0 0
      %4963 = vmatprep.mubr.bf16.mxu0 0
      %4964 = vmatmul.mubr.bf16.gmra.mrb[0].mxu0 %v4926
      %v4965 = vpop.f32.mrb[0].mxu0
      %v4966 = vadd.f32 0.0, %v4965
      %v4967 = vpop.f32.mrb[0].mxu0
      %v4968 = vpop.f32.mrb[0].mxu0
      %v4969 = vpop.f32.mrb[0].mxu0
      %4970 = vdwg.mxu0
      %v4972 = vsel %vm1494, %v4873, 0
      %v4975 = vsel %vm2139, %v3307, 0
      %4977 = vmatprep.subr.bf16.mxu0 0
      %4978 = vmatpush1.bf16.msra.mxu0 %v4975
      %4979 = vmatprep.subr.bf16.mxu0 0
      %4980 = vmatpush1.bf16.msra.mxu0 0
      %4981 = vmatprep.subr.bf16.mxu0 0
      %4982 = vmatpush1.bf16.msra.mxu0 0
      %4983 = vmatprep.subr.bf16.mxu0 0
      %4984 = vmatpush1.bf16.msra.mxu0 0
      %4985 = vmatprep.subr.bf16.mxu0 0
      %4986 = vmatpush1.bf16.msra.mxu0 0
      %4987 = vmatprep.subr.bf16.mxu0 0
      %4988 = vmatpush1.bf16.msra.mxu0 0
      %4989 = vmatprep.subr.bf16.mxu0 0
      %4990 = vmatpush1.bf16.msra.mxu0 0
      %4991 = vmatprep.subr.bf16.mxu0 0
      %4992 = vmatpush1.bf16.msra.mxu0 0
      %4993 = vmatprep.subr.bf16.mxu0 0
      %4994 = vmatpush1.bf16.msra.mxu0 0
      %4995 = vmatprep.subr.bf16.mxu0 0
      %4996 = vmatpush1.bf16.msra.mxu0 0
      %4997 = vmatprep.subr.bf16.mxu0 0
      %4998 = vmatpush1.bf16.msra.mxu0 0
      %4999 = vmatprep.subr.bf16.mxu0 0
      %5000 = vmatpush1.bf16.msra.mxu0 0
      %5001 = vmatprep.subr.bf16.mxu0 0
      %5002 = vmatpush1.bf16.msra.mxu0 0
      %5003 = vmatprep.subr.bf16.mxu0 0
      %5004 = vmatpush1.bf16.msra.mxu0 0
      %5005 = vmatprep.subr.bf16.mxu0 0
      %5006 = vmatpush1.bf16.msra.mxu0 0
      %5007 = vmatprep.subr.bf16.mxu0 0
      %5008 = vmatpush1.bf16.msra.mxu0 0
      %5009 = vmatprep.mubr.bf16.mxu0 0
      %5010 = vmatmul.mubr.bf16.gmra.mrb[0].mxu0 %v4972
      %v5011 = vpop.f32.mrb[0].mxu0
      %v5012 = vadd.f32 0.0, %v5011
      %v5013 = vpop.f32.mrb[0].mxu0
      %v5014 = vpop.f32.mrb[0].mxu0
      %v5015 = vpop.f32.mrb[0].mxu0
      %5016 = vdwg.mxu0
      %v5018 = vsel %vm1494, %v4874, 0
      %v5021 = vsel %vm2139, %v3308, 0
      %5023 = vmatprep.subr.bf16.mxu0 0
      %5024 = vmatpush1.bf16.msra.mxu0 %v5021
      %5025 = vmatprep.subr.bf16.mxu0 0
      %5026 = vmatpush1.bf16.msra.mxu0 0
      %5027 = vmatprep.subr.bf16.mxu0 0
      %5028 = vmatpush1.bf16.msra.mxu0 0
      %5029 = vmatprep.subr.bf16.mxu0 0
      %5030 = vmatpush1.bf16.msra.mxu0 0
      %5031 = vmatprep.subr.bf16.mxu0 0
      %5032 = vmatpush1.bf16.msra.mxu0 0
      %5033 = vmatprep.subr.bf16.mxu0 0
      %5034 = vmatpush1.bf16.msra.mxu0 0
      %5035 = vmatprep.subr.bf16.mxu0 0
      %5036 = vmatpush1.bf16.msra.mxu0 0
      %5037 = vmatprep.subr.bf16.mxu0 0
      %5038 = vmatpush1.bf16.msra.mxu0 0
      %5039 = vmatprep.subr.bf16.mxu0 0
      %5040 = vmatpush1.bf16.msra.mxu0 0
      %5041 = vmatprep.subr.bf16.mxu0 0
      %5042 = vmatpush1.bf16.msra.mxu0 0
      %5043 = vmatprep.subr.bf16.mxu0 0
      %5044 = vmatpush1.bf16.msra.mxu0 0
      %5045 = vmatprep.subr.bf16.mxu0 0
      %5046 = vmatpush1.bf16.msra.mxu0 0
      %5047 = vmatprep.subr.bf16.mxu0 0
      %5048 = vmatpush1.bf16.msra.mxu0 0
      %5049 = vmatprep.subr.bf16.mxu0 0
      %5050 = vmatpush1.bf16.msra.mxu0 0
      %5051 = vmatprep.subr.bf16.mxu0 0
      %5052 = vmatpush1.bf16.msra.mxu0 0
      %5053 = vmatprep.subr.bf16.mxu0 0
      %5054 = vmatpush1.bf16.msra.mxu0 0
      %5055 = vmatprep.mubr.bf16.mxu0 0
      %5056 = vmatmul.mubr.bf16.gmra.mrb[0].mxu0 %v5018
      %v5057 = vpop.f32.mrb[0].mxu0
      %v5058 = vadd.f32 0.0, %v5057
      %v5059 = vpop.f32.mrb[0].mxu0
      %v5060 = vpop.f32.mrb[0].mxu0
      %v5061 = vpop.f32.mrb[0].mxu0
      %5062 = vdwg.mxu0
      %v5064 = vsel %vm1494, %v4875, 0
      %v5067 = vsel %vm2139, %v3309, 0
      %5069 = vmatprep.subr.bf16.mxu0 0
      %5070 = vmatpush1.bf16.msra.mxu0 %v5067
      %5071 = vmatprep.subr.bf16.mxu0 0
      %5072 = vmatpush1.bf16.msra.mxu0 0
      %5073 = vmatprep.subr.bf16.mxu0 0
      %5074 = vmatpush1.bf16.msra.mxu0 0
      %5075 = vmatprep.subr.bf16.mxu0 0
      %5076 = vmatpush1.bf16.msra.mxu0 0
      %5077 = vmatprep.subr.bf16.mxu0 0
      %5078 = vmatpush1.bf16.msra.mxu0 0
      %5079 = vmatprep.subr.bf16.mxu0 0
      %5080 = vmatpush1.bf16.msra.mxu0 0
      %5081 = vmatprep.subr.bf16.mxu0 0
      %5082 = vmatpush1.bf16.msra.mxu0 0
      %5083 = vmatprep.subr.bf16.mxu0 0
      %5084 = vmatpush1.bf16.msra.mxu0 0
      %5085 = vmatprep.subr.bf16.mxu0 0
      %5086 = vmatpush1.bf16.msra.mxu0 0
      %5087 = vmatprep.subr.bf16.mxu0 0
      %5088 = vmatpush1.bf16.msra.mxu0 0
      %5089 = vmatprep.subr.bf16.mxu0 0
      %5090 = vmatpush1.bf16.msra.mxu0 0
      %5091 = vmatprep.subr.bf16.mxu0 0
      %5092 = vmatpush1.bf16.msra.mxu0 0
      %5093 = vmatprep.subr.bf16.mxu0 0
      %5094 = vmatpush1.bf16.msra.mxu0 0
      %5095 = vmatprep.subr.bf16.mxu0 0
      %5096 = vmatpush1.bf16.msra.mxu0 0
      %5097 = vmatprep.subr.bf16.mxu0 0
      %5098 = vmatpush1.bf16.msra.mxu0 0
      %5099 = vmatprep.subr.bf16.mxu0 0
      %5100 = vmatpush1.bf16.msra.mxu0 0
      %5101 = vmatprep.mubr.bf16.mxu0 0
      %5102 = vmatmul.mubr.bf16.gmra.mrb[0].mxu0 %v5064
      %v5103 = vpop.f32.mrb[0].mxu0
      %v5104 = vadd.f32 0.0, %v5103
      %v5105 = vpop.f32.mrb[0].mxu0
      %v5106 = vpop.f32.mrb[0].mxu0
      %v5107 = vpop.f32.mrb[0].mxu0
      %5108 = vdwg.mxu0
      %v5110 = vsel %vm1494, %v4876, 0
      %v5113 = vsel %vm2139, %v3310, 0
      %5115 = vmatprep.subr.bf16.mxu0 0
      %5116 = vmatpush1.bf16.msra.mxu0 %v5113
      %5117 = vmatprep.subr.bf16.mxu0 0
      %5118 = vmatpush1.bf16.msra.mxu0 0
      %5119 = vmatprep.subr.bf16.mxu0 0
      %5120 = vmatpush1.bf16.msra.mxu0 0
      %5121 = vmatprep.subr.bf16.mxu0 0
      %5122 = vmatpush1.bf16.msra.mxu0 0
      %5123 = vmatprep.subr.bf16.mxu0 0
      %5124 = vmatpush1.bf16.msra.mxu0 0
      %5125 = vmatprep.subr.bf16.mxu0 0
      %5126 = vmatpush1.bf16.msra.mxu0 0
      %5127 = vmatprep.subr.bf16.mxu0 0
      %5128 = vmatpush1.bf16.msra.mxu0 0
      %5129 = vmatprep.subr.bf16.mxu0 0
      %5130 = vmatpush1.bf16.msra.mxu0 0
      %5131 = vmatprep.subr.bf16.mxu0 0
      %5132 = vmatpush1.bf16.msra.mxu0 0
      %5133 = vmatprep.subr.bf16.mxu0 0
      %5134 = vmatpush1.bf16.msra.mxu0 0
      %5135 = vmatprep.subr.bf16.mxu0 0
      %5136 = vmatpush1.bf16.msra.mxu0 0
      %5137 = vmatprep.subr.bf16.mxu0 0
      %5138 = vmatpush1.bf16.msra.mxu0 0
      %5139 = vmatprep.subr.bf16.mxu0 0
      %5140 = vmatpush1.bf16.msra.mxu0 0
      %5141 = vmatprep.subr.bf16.mxu0 0
      %5142 = vmatpush1.bf16.msra.mxu0 0
      %5143 = vmatprep.subr.bf16.mxu0 0
      %5144 = vmatpush1.bf16.msra.mxu0 0
      %5145 = vmatprep.subr.bf16.mxu0 0
      %5146 = vmatpush1.bf16.msra.mxu0 0
      %5147 = vmatprep.mubr.bf16.mxu0 0
      %5148 = vmatmul.mubr.bf16.gmra.mrb[0].mxu0 %v5110
      %v5149 = vpop.f32.mrb[0].mxu0
      %v5150 = vadd.f32 0.0, %v5149
      %v5151 = vpop.f32.mrb[0].mxu0
      %v5152 = vpop.f32.mrb[0].mxu0
      %v5153 = vpop.f32.mrb[0].mxu0
      %5154 = vdwg.mxu0
      %v5156 = vsel %vm1494, %v4877, 0
      %v5159 = vsel %vm2139, %v3311, 0
      %5161 = vmatprep.subr.bf16.mxu0 0
      %5162 = vmatpush1.bf16.msra.mxu0 %v5159
      %5163 = vmatprep.subr.bf16.mxu0 0
      %5164 = vmatpush1.bf16.msra.mxu0 0
      %5165 = vmatprep.subr.bf16.mxu0 0
      %5166 = vmatpush1.bf16.msra.mxu0 0
      %5167 = vmatprep.subr.bf16.mxu0 0
      %5168 = vmatpush1.bf16.msra.mxu0 0
      %5169 = vmatprep.subr.bf16.mxu0 0
      %5170 = vmatpush1.bf16.msra.mxu0 0
      %5171 = vmatprep.subr.bf16.mxu0 0
      %5172 = vmatpush1.bf16.msra.mxu0 0
      %5173 = vmatprep.subr.bf16.mxu0 0
      %5174 = vmatpush1.bf16.msra.mxu0 0
      %5175 = vmatprep.subr.bf16.mxu0 0
      %5176 = vmatpush1.bf16.msra.mxu0 0
      %5177 = vmatprep.subr.bf16.mxu0 0
      %5178 = vmatpush1.bf16.msra.mxu0 0
      %5179 = vmatprep.subr.bf16.mxu0 0
      %5180 = vmatpush1.bf16.msra.mxu0 0
      %5181 = vmatprep.subr.bf16.mxu0 0
      %5182 = vmatpush1.bf16.msra.mxu0 0
      %5183 = vmatprep.subr.bf16.mxu0 0
      %5184 = vmatpush1.bf16.msra.mxu0 0
      %5185 = vmatprep.subr.bf16.mxu0 0
      %5186 = vmatpush1.bf16.msra.mxu0 0
      %5187 = vmatprep.subr.bf16.mxu0 0
      %5188 = vmatpush1.bf16.msra.mxu0 0
      %5189 = vmatprep.subr.bf16.mxu0 0
      %5190 = vmatpush1.bf16.msra.mxu0 0
      %5191 = vmatprep.subr.bf16.mxu0 0
      %5192 = vmatpush1.bf16.msra.mxu0 0
      %5193 = vmatprep.mubr.bf16.mxu0 0
      %5194 = vmatmul.mubr.bf16.gmra.mrb[0].mxu0 %v5156
      %v5195 = vpop.f32.mrb[0].mxu0
      %v5196 = vadd.f32 0.0, %v5195
      %v5197 = vpop.f32.mrb[0].mxu0
      %v5198 = vpop.f32.mrb[0].mxu0
      %v5199 = vpop.f32.mrb[0].mxu0
      %5200 = vdwg.mxu0
      %v5202 = vsel %vm1494, %v4878, 0
      %v5205 = vsel %vm2139, %v3312, 0
      %5207 = vmatprep.subr.bf16.mxu0 0
      %5208 = vmatpush1.bf16.msra.mxu0 %v5205
      %5209 = vmatprep.subr.bf16.mxu0 0
      %5210 = vmatpush1.bf16.msra.mxu0 0
      %5211 = vmatprep.subr.bf16.mxu0 0
      %5212 = vmatpush1.bf16.msra.mxu0 0
      %5213 = vmatprep.subr.bf16.mxu0 0
      %5214 = vmatpush1.bf16.msra.mxu0 0
      %5215 = vmatprep.subr.bf16.mxu0 0
      %5216 = vmatpush1.bf16.msra.mxu0 0
      %5217 = vmatprep.subr.bf16.mxu0 0
      %5218 = vmatpush1.bf16.msra.mxu0 0
      %5219 = vmatprep.subr.bf16.mxu0 0
      %5220 = vmatpush1.bf16.msra.mxu0 0
      %5221 = vmatprep.subr.bf16.mxu0 0
      %5222 = vmatpush1.bf16.msra.mxu0 0
      %5223 = vmatprep.subr.bf16.mxu0 0
      %5224 = vmatpush1.bf16.msra.mxu0 0
      %5225 = vmatprep.subr.bf16.mxu0 0
      %5226 = vmatpush1.bf16.msra.mxu0 0
      %5227 = vmatprep.subr.bf16.mxu0 0
      %5228 = vmatpush1.bf16.msra.mxu0 0
      %5229 = vmatprep.subr.bf16.mxu0 0
      %5230 = vmatpush1.bf16.msra.mxu0 0
      %5231 = vmatprep.subr.bf16.mxu0 0
      %5232 = vmatpush1.bf16.msra.mxu0 0
      %5233 = vmatprep.subr.bf16.mxu0 0
      %5234 = vmatpush1.bf16.msra.mxu0 0
      %5235 = vmatprep.subr.bf16.mxu0 0
      %5236 = vmatpush1.bf16.msra.mxu0 0
      %5237 = vmatprep.subr.bf16.mxu0 0
      %5238 = vmatpush1.bf16.msra.mxu0 0
      %5239 = vmatprep.mubr.bf16.mxu0 0
      %5240 = vmatmul.mubr.bf16.gmra.mrb[0].mxu0 %v5202
      %v5241 = vpop.f32.mrb[0].mxu0
      %v5242 = vadd.f32 0.0, %v5241
      %v5243 = vpop.f32.mrb[0].mxu0
      %v5244 = vpop.f32.mrb[0].mxu0
      %v5245 = vpop.f32.mrb[0].mxu0
      %5246 = vdwg.mxu0
      %v5247 = vpack.c.bf16 %v4647, %v4647
      %v5248 = vpack.c.bf16 %v4649, %v4649
      %v5249 = vpack.c.bf16 %v4651, %v4651
      %v5250 = vpack.c.bf16 %v4653, %v4653
      %v5251 = vpack.c.bf16 %v4655, %v4655
      %v5252 = vpack.c.bf16 %v4657, %v4657
      %v5253 = vpack.c.bf16 %v4659, %v4659
      %v5254 = vpack.c.bf16 %v4661, %v4661
      %v5256 = vsel %vm1494, %v5247, 0
      %v5259 = vsel %vm2139, %v3583, 0
      %5261 = vmatprep.subr.bf16.mxu0 0
      %5262 = vmatpush1.bf16.msra.mxu0 %v5259
      %5263 = vmatprep.subr.bf16.mxu0 0
      %5264 = vmatpush1.bf16.msra.mxu0 0
      %5265 = vmatprep.subr.bf16.mxu0 0
      %5266 = vmatpush1.bf16.msra.mxu0 0
      %5267 = vmatprep.subr.bf16.mxu0 0
      %5268 = vmatpush1.bf16.msra.mxu0 0
      %5269 = vmatprep.subr.bf16.mxu0 0
      %5270 = vmatpush1.bf16.msra.mxu0 0
      %5271 = vmatprep.subr.bf16.mxu0 0
      %5272 = vmatpush1.bf16.msra.mxu0 0
      %5273 = vmatprep.subr.bf16.mxu0 0
      %5274 = vmatpush1.bf16.msra.mxu0 0
      %5275 = vmatprep.subr.bf16.mxu0 0
      %5276 = vmatpush1.bf16.msra.mxu0 0
      %5277 = vmatprep.subr.bf16.mxu0 0
      %5278 = vmatpush1.bf16.msra.mxu0 0
      %5279 = vmatprep.subr.bf16.mxu0 0
      %5280 = vmatpush1.bf16.msra.mxu0 0
      %5281 = vmatprep.subr.bf16.mxu0 0
      %5282 = vmatpush1.bf16.msra.mxu0 0
      %5283 = vmatprep.subr.bf16.mxu0 0
      %5284 = vmatpush1.bf16.msra.mxu0 0
      %5285 = vmatprep.subr.bf16.mxu0 0
      %5286 = vmatpush1.bf16.msra.mxu0 0
      %5287 = vmatprep.subr.bf16.mxu0 0
      %5288 = vmatpush1.bf16.msra.mxu0 0
      %5289 = vmatprep.subr.bf16.mxu0 0
      %5290 = vmatpush1.bf16.msra.mxu0 0
      %5291 = vmatprep.subr.bf16.mxu0 0
      %5292 = vmatpush1.bf16.msra.mxu0 0
      %5293 = vmatprep.mubr.bf16.mxu0 0
      %5294 = vmatmul.mubr.bf16.gmra.mrb[0].mxu0 %v5256
      %v5295 = vpop.f32.mrb[0].mxu0
      %v5296 = vadd.f32 0.0, %v5295
      %v5297 = vpop.f32.mrb[0].mxu0
      %v5298 = vpop.f32.mrb[0].mxu0
      %v5299 = vpop.f32.mrb[0].mxu0
      %5300 = vdwg.mxu0
      %v5302 = vsel %vm1494, %v5248, 0
      %v5305 = vsel %vm2139, %v3586, 0
      %5307 = vmatprep.subr.bf16.mxu0 0
      %5308 = vmatpush1.bf16.msra.mxu0 %v5305
      %5309 = vmatprep.subr.bf16.mxu0 0
      %5310 = vmatpush1.bf16.msra.mxu0 0
      %5311 = vmatprep.subr.bf16.mxu0 0
      %5312 = vmatpush1.bf16.msra.mxu0 0
      %5313 = vmatprep.subr.bf16.mxu0 0
      %5314 = vmatpush1.bf16.msra.mxu0 0
      %5315 = vmatprep.subr.bf16.mxu0 0
      %5316 = vmatpush1.bf16.msra.mxu0 0
      %5317 = vmatprep.subr.bf16.mxu0 0
      %5318 = vmatpush1.bf16.msra.mxu0 0
      %5319 = vmatprep.subr.bf16.mxu0 0
      %5320 = vmatpush1.bf16.msra.mxu0 0
      %5321 = vmatprep.subr.bf16.mxu0 0
      %5322 = vmatpush1.bf16.msra.mxu0 0
      %5323 = vmatprep.subr.bf16.mxu0 0
      %5324 = vmatpush1.bf16.msra.mxu0 0
      %5325 = vmatprep.subr.bf16.mxu0 0
      %5326 = vmatpush1.bf16.msra.mxu0 0
      %5327 = vmatprep.subr.bf16.mxu0 0
      %5328 = vmatpush1.bf16.msra.mxu0 0
      %5329 = vmatprep.subr.bf16.mxu0 0
      %5330 = vmatpush1.bf16.msra.mxu0 0
      %5331 = vmatprep.subr.bf16.mxu0 0
      %5332 = vmatpush1.bf16.msra.mxu0 0
      %5333 = vmatprep.subr.bf16.mxu0 0
      %5334 = vmatpush1.bf16.msra.mxu0 0
      %5335 = vmatprep.subr.bf16.mxu0 0
      %5336 = vmatpush1.bf16.msra.mxu0 0
      %5337 = vmatprep.subr.bf16.mxu0 0
      %5338 = vmatpush1.bf16.msra.mxu0 0
      %5339 = vmatprep.mubr.bf16.mxu0 0
      %5340 = vmatmul.mubr.bf16.gmra.mrb[0].mxu0 %v5302
      %v5341 = vpop.f32.mrb[0].mxu0
      %v5342 = vadd.f32 0.0, %v5341
      %v5343 = vpop.f32.mrb[0].mxu0
      %v5344 = vpop.f32.mrb[0].mxu0
      %v5345 = vpop.f32.mrb[0].mxu0
      %5346 = vdwg.mxu0
      %v5348 = vsel %vm1494, %v5249, 0
      %v5351 = vsel %vm2139, %v3589, 0
      %5353 = vmatprep.subr.bf16.mxu0 0
      %5354 = vmatpush1.bf16.msra.mxu0 %v5351
      %5355 = vmatprep.subr.bf16.mxu0 0
      %5356 = vmatpush1.bf16.msra.mxu0 0
      %5357 = vmatprep.subr.bf16.mxu0 0
      %5358 = vmatpush1.bf16.msra.mxu0 0
      %5359 = vmatprep.subr.bf16.mxu0 0
      %5360 = vmatpush1.bf16.msra.mxu0 0
      %5361 = vmatprep.subr.bf16.mxu0 0
      %5362 = vmatpush1.bf16.msra.mxu0 0
      %5363 = vmatprep.subr.bf16.mxu0 0
      %5364 = vmatpush1.bf16.msra.mxu0 0
      %5365 = vmatprep.subr.bf16.mxu0 0
      %5366 = vmatpush1.bf16.msra.mxu0 0
      %5367 = vmatprep.subr.bf16.mxu0 0
      %5368 = vmatpush1.bf16.msra.mxu0 0
      %5369 = vmatprep.subr.bf16.mxu0 0
      %5370 = vmatpush1.bf16.msra.mxu0 0
      %5371 = vmatprep.subr.bf16.mxu0 0
      %5372 = vmatpush1.bf16.msra.mxu0 0
      %5373 = vmatprep.subr.bf16.mxu0 0
      %5374 = vmatpush1.bf16.msra.mxu0 0
      %5375 = vmatprep.subr.bf16.mxu0 0
      %5376 = vmatpush1.bf16.msra.mxu0 0
      %5377 = vmatprep.subr.bf16.mxu0 0
      %5378 = vmatpush1.bf16.msra.mxu0 0
      %5379 = vmatprep.subr.bf16.mxu0 0
      %5380 = vmatpush1.bf16.msra.mxu0 0
      %5381 = vmatprep.subr.bf16.mxu0 0
      %5382 = vmatpush1.bf16.msra.mxu0 0
      %5383 = vmatprep.subr.bf16.mxu0 0
      %5384 = vmatpush1.bf16.msra.mxu0 0
      %5385 = vmatprep.mubr.bf16.mxu0 0
      %5386 = vmatmul.mubr.bf16.gmra.mrb[0].mxu0 %v5348
      %v5387 = vpop.f32.mrb[0].mxu0
      %v5388 = vadd.f32 0.0, %v5387
      %v5389 = vpop.f32.mrb[0].mxu0
      %v5390 = vpop.f32.mrb[0].mxu0
      %v5391 = vpop.f32.mrb[0].mxu0
      %5392 = vdwg.mxu0
      %v5394 = vsel %vm1494, %v5250, 0
      %v5397 = vsel %vm2139, %v3592, 0
      %5399 = vmatprep.subr.bf16.mxu0 0
      %5400 = vmatpush1.bf16.msra.mxu0 %v5397
      %5401 = vmatprep.subr.bf16.mxu0 0
      %5402 = vmatpush1.bf16.msra.mxu0 0
      %5403 = vmatprep.subr.bf16.mxu0 0
      %5404 = vmatpush1.bf16.msra.mxu0 0
      %5405 = vmatprep.subr.bf16.mxu0 0
      %5406 = vmatpush1.bf16.msra.mxu0 0
      %5407 = vmatprep.subr.bf16.mxu0 0
      %5408 = vmatpush1.bf16.msra.mxu0 0
      %5409 = vmatprep.subr.bf16.mxu0 0
      %5410 = vmatpush1.bf16.msra.mxu0 0
      %5411 = vmatprep.subr.bf16.mxu0 0
      %5412 = vmatpush1.bf16.msra.mxu0 0
      %5413 = vmatprep.subr.bf16.mxu0 0
      %5414 = vmatpush1.bf16.msra.mxu0 0
      %5415 = vmatprep.subr.bf16.mxu0 0
      %5416 = vmatpush1.bf16.msra.mxu0 0
      %5417 = vmatprep.subr.bf16.mxu0 0
      %5418 = vmatpush1.bf16.msra.mxu0 0
      %5419 = vmatprep.subr.bf16.mxu0 0
      %5420 = vmatpush1.bf16.msra.mxu0 0
      %5421 = vmatprep.subr.bf16.mxu0 0
      %5422 = vmatpush1.bf16.msra.mxu0 0
      %5423 = vmatprep.subr.bf16.mxu0 0
      %5424 = vmatpush1.bf16.msra.mxu0 0
      %5425 = vmatprep.subr.bf16.mxu0 0
      %5426 = vmatpush1.bf16.msra.mxu0 0
      %5427 = vmatprep.subr.bf16.mxu0 0
      %5428 = vmatpush1.bf16.msra.mxu0 0
      %5429 = vmatprep.subr.bf16.mxu0 0
      %5430 = vmatpush1.bf16.msra.mxu0 0
      %5431 = vmatprep.mubr.bf16.mxu0 0
      %5432 = vmatmul.mubr.bf16.gmra.mrb[0].mxu0 %v5394
      %v5433 = vpop.f32.mrb[0].mxu0
      %v5434 = vadd.f32 0.0, %v5433
      %v5435 = vpop.f32.mrb[0].mxu0
      %v5436 = vpop.f32.mrb[0].mxu0
      %v5437 = vpop.f32.mrb[0].mxu0
      %5438 = vdwg.mxu0
      %v5440 = vsel %vm1494, %v5251, 0
      %v5443 = vsel %vm2139, %v3595, 0
      %5445 = vmatprep.subr.bf16.mxu0 0
      %5446 = vmatpush1.bf16.msra.mxu0 %v5443
      %5447 = vmatprep.subr.bf16.mxu0 0
      %5448 = vmatpush1.bf16.msra.mxu0 0
      %5449 = vmatprep.subr.bf16.mxu0 0
      %5450 = vmatpush1.bf16.msra.mxu0 0
      %5451 = vmatprep.subr.bf16.mxu0 0
      %5452 = vmatpush1.bf16.msra.mxu0 0
      %5453 = vmatprep.subr.bf16.mxu0 0
      %5454 = vmatpush1.bf16.msra.mxu0 0
      %5455 = vmatprep.subr.bf16.mxu0 0
      %5456 = vmatpush1.bf16.msra.mxu0 0
      %5457 = vmatprep.subr.bf16.mxu0 0
      %5458 = vmatpush1.bf16.msra.mxu0 0
      %5459 = vmatprep.subr.bf16.mxu0 0
      %5460 = vmatpush1.bf16.msra.mxu0 0
      %5461 = vmatprep.subr.bf16.mxu0 0
      %5462 = vmatpush1.bf16.msra.mxu0 0
      %5463 = vmatprep.subr.bf16.mxu0 0
      %5464 = vmatpush1.bf16.msra.mxu0 0
      %5465 = vmatprep.subr.bf16.mxu0 0
      %5466 = vmatpush1.bf16.msra.mxu0 0
      %5467 = vmatprep.subr.bf16.mxu0 0
      %5468 = vmatpush1.bf16.msra.mxu0 0
      %5469 = vmatprep.subr.bf16.mxu0 0
      %5470 = vmatpush1.bf16.msra.mxu0 0
      %5471 = vmatprep.subr.bf16.mxu0 0
      %5472 = vmatpush1.bf16.msra.mxu0 0
      %5473 = vmatprep.subr.bf16.mxu0 0
      %5474 = vmatpush1.bf16.msra.mxu0 0
      %5475 = vmatprep.subr.bf16.mxu0 0
      %5476 = vmatpush1.bf16.msra.mxu0 0
      %5477 = vmatprep.mubr.bf16.mxu0 0
      %5478 = vmatmul.mubr.bf16.gmra.mrb[0].mxu0 %v5440
      %v5479 = vpop.f32.mrb[0].mxu0
      %v5480 = vadd.f32 0.0, %v5479
      %v5481 = vpop.f32.mrb[0].mxu0
      %v5482 = vpop.f32.mrb[0].mxu0
      %v5483 = vpop.f32.mrb[0].mxu0
      %5484 = vdwg.mxu0
      %v5486 = vsel %vm1494, %v5252, 0
      %v5489 = vsel %vm2139, %v3598, 0
      %5491 = vmatprep.subr.bf16.mxu0 0
      %5492 = vmatpush1.bf16.msra.mxu0 %v5489
      %5493 = vmatprep.subr.bf16.mxu0 0
      %5494 = vmatpush1.bf16.msra.mxu0 0
      %5495 = vmatprep.subr.bf16.mxu0 0
      %5496 = vmatpush1.bf16.msra.mxu0 0
      %5497 = vmatprep.subr.bf16.mxu0 0
      %5498 = vmatpush1.bf16.msra.mxu0 0
      %5499 = vmatprep.subr.bf16.mxu0 0
      %5500 = vmatpush1.bf16.msra.mxu0 0
      %5501 = vmatprep.subr.bf16.mxu0 0
      %5502 = vmatpush1.bf16.msra.mxu0 0
      %5503 = vmatprep.subr.bf16.mxu0 0
      %5504 = vmatpush1.bf16.msra.mxu0 0
      %5505 = vmatprep.subr.bf16.mxu0 0
      %5506 = vmatpush1.bf16.msra.mxu0 0
      %5507 = vmatprep.subr.bf16.mxu0 0
      %5508 = vmatpush1.bf16.msra.mxu0 0
      %5509 = vmatprep.subr.bf16.mxu0 0
      %5510 = vmatpush1.bf16.msra.mxu0 0
      %5511 = vmatprep.subr.bf16.mxu0 0
      %5512 = vmatpush1.bf16.msra.mxu0 0
      %5513 = vmatprep.subr.bf16.mxu0 0
      %5514 = vmatpush1.bf16.msra.mxu0 0
      %5515 = vmatprep.subr.bf16.mxu0 0
      %5516 = vmatpush1.bf16.msra.mxu0 0
      %5517 = vmatprep.subr.bf16.mxu0 0
      %5518 = vmatpush1.bf16.msra.mxu0 0
      %5519 = vmatprep.subr.bf16.mxu0 0
      %5520 = vmatpush1.bf16.msra.mxu0 0
      %5521 = vmatprep.subr.bf16.mxu0 0
      %5522 = vmatpush1.bf16.msra.mxu0 0
      %5523 = vmatprep.mubr.bf16.mxu0 0
      %5524 = vmatmul.mubr.bf16.gmra.mrb[0].mxu0 %v5486
      %v5525 = vpop.f32.mrb[0].mxu0
      %v5526 = vadd.f32 0.0, %v5525
      %v5527 = vpop.f32.mrb[0].mxu0
      %v5528 = vpop.f32.mrb[0].mxu0
      %v5529 = vpop.f32.mrb[0].mxu0
      %5530 = vdwg.mxu0
      %v5532 = vsel %vm1494, %v5253, 0
      %v5535 = vsel %vm2139, %v3601, 0
      %5537 = vmatprep.subr.bf16.mxu0 0
      %5538 = vmatpush1.bf16.msra.mxu0 %v5535
      %5539 = vmatprep.subr.bf16.mxu0 0
      %5540 = vmatpush1.bf16.msra.mxu0 0
      %5541 = vmatprep.subr.bf16.mxu0 0
      %5542 = vmatpush1.bf16.msra.mxu0 0
      %5543 = vmatprep.subr.bf16.mxu0 0
      %5544 = vmatpush1.bf16.msra.mxu0 0
      %5545 = vmatprep.subr.bf16.mxu0 0
      %5546 = vmatpush1.bf16.msra.mxu0 0
      %5547 = vmatprep.subr.bf16.mxu0 0
      %5548 = vmatpush1.bf16.msra.mxu0 0
      %5549 = vmatprep.subr.bf16.mxu0 0
      %5550 = vmatpush1.bf16.msra.mxu0 0
      %5551 = vmatprep.subr.bf16.mxu0 0
      %5552 = vmatpush1.bf16.msra.mxu0 0
      %5553 = vmatprep.subr.bf16.mxu0 0
      %5554 = vmatpush1.bf16.msra.mxu0 0
      %5555 = vmatprep.subr.bf16.mxu0 0
      %5556 = vmatpush1.bf16.msra.mxu0 0
      %5557 = vmatprep.subr.bf16.mxu0 0
      %5558 = vmatpush1.bf16.msra.mxu0 0
      %5559 = vmatprep.subr.bf16.mxu0 0
      %5560 = vmatpush1.bf16.msra.mxu0 0
      %5561 = vmatprep.subr.bf16.mxu0 0
      %5562 = vmatpush1.bf16.msra.mxu0 0
      %5563 = vmatprep.subr.bf16.mxu0 0
      %5564 = vmatpush1.bf16.msra.mxu0 0
      %5565 = vmatprep.subr.bf16.mxu0 0
      %5566 = vmatpush1.bf16.msra.mxu0 0
      %5567 = vmatprep.subr.bf16.mxu0 0
      %5568 = vmatpush1.bf16.msra.mxu0 0
      %5569 = vmatprep.mubr.bf16.mxu0 0
      %5570 = vmatmul.mubr.bf16.gmra.mrb[0].mxu0 %v5532
      %v5571 = vpop.f32.mrb[0].mxu0
      %v5572 = vadd.f32 0.0, %v5571
      %v5573 = vpop.f32.mrb[0].mxu0
      %v5574 = vpop.f32.mrb[0].mxu0
      %v5575 = vpop.f32.mrb[0].mxu0
      %5576 = vdwg.mxu0
      %v5578 = vsel %vm1494, %v5254, 0
      %v5581 = vsel %vm2139, %v3604, 0
      %5583 = vmatprep.subr.bf16.mxu0 0
      %5584 = vmatpush1.bf16.msra.mxu0 %v5581
      %5585 = vmatprep.subr.bf16.mxu0 0
      %5586 = vmatpush1.bf16.msra.mxu0 0
      %5587 = vmatprep.subr.bf16.mxu0 0
      %5588 = vmatpush1.bf16.msra.mxu0 0
      %5589 = vmatprep.subr.bf16.mxu0 0
      %5590 = vmatpush1.bf16.msra.mxu0 0
      %5591 = vmatprep.subr.bf16.mxu0 0
      %5592 = vmatpush1.bf16.msra.mxu0 0
      %5593 = vmatprep.subr.bf16.mxu0 0
      %5594 = vmatpush1.bf16.msra.mxu0 0
      %5595 = vmatprep.subr.bf16.mxu0 0
      %5596 = vmatpush1.bf16.msra.mxu0 0
      %5597 = vmatprep.subr.bf16.mxu0 0
      %5598 = vmatpush1.bf16.msra.mxu0 0
      %5599 = vmatprep.subr.bf16.mxu0 0
      %5600 = vmatpush1.bf16.msra.mxu0 0
      %5601 = vmatprep.subr.bf16.mxu0 0
      %5602 = vmatpush1.bf16.msra.mxu0 0
      %5603 = vmatprep.subr.bf16.mxu0 0
      %5604 = vmatpush1.bf16.msra.mxu0 0
      %5605 = vmatprep.subr.bf16.mxu0 0
      %5606 = vmatpush1.bf16.msra.mxu0 0
      %5607 = vmatprep.subr.bf16.mxu0 0
      %5608 = vmatpush1.bf16.msra.mxu0 0
      %5609 = vmatprep.subr.bf16.mxu0 0
      %5610 = vmatpush1.bf16.msra.mxu0 0
      %5611 = vmatprep.subr.bf16.mxu0 0
      %5612 = vmatpush1.bf16.msra.mxu0 0
      %5613 = vmatprep.subr.bf16.mxu0 0
      %5614 = vmatpush1.bf16.msra.mxu0 0
      %5615 = vmatprep.mubr.bf16.mxu0 0
      %5616 = vmatmul.mubr.bf16.gmra.mrb[0].mxu0 %v5578
      %v5617 = vpop.f32.mrb[0].mxu0
      %v5618 = vadd.f32 0.0, %v5617
      %v5619 = vpop.f32.mrb[0].mxu0
      %v5620 = vpop.f32.mrb[0].mxu0
      %v5621 = vpop.f32.mrb[0].mxu0
      %5622 = vdwg.mxu0
      %v5623 = vcombine.low %v5296, %v5388
      %v5624 = vcombine.high %v5296, %v5388
      %v5626 = vunpack.c.l.s4 1983009808
      %v5627 = vunpack.c.0.s8 %v5626
      %v5628 = vlaneseq
      %v5629 = vshrl.u32 %v5628, 7
      %v5630 = vsub.s32 %v5627, %v5629
      %v5631 = vrot.slane %v5623, %v5630
      %v5633 = vunpack.c.l.s4 1983009808
      %v5634 = vunpack.c.0.s8 %v5633
      %v5635 = vlaneseq
      %v5636 = vshrl.u32 %v5635, 7
      %v5637 = vsub.s32 %v5634, %v5636
      %v5638 = vrot.slane %v5624, %v5637
      %v5639 = vcombine.low %v5342, %v5434
      %v5640 = vcombine.high %v5342, %v5434
      %v5642 = vunpack.c.l.s4 1983009808
      %v5643 = vunpack.c.0.s8 %v5642
      %v5644 = vlaneseq
      %v5645 = vshrl.u32 %v5644, 7
      %v5646 = vsub.s32 %v5643, %v5645
      %v5647 = vrot.slane %v5639, %v5646
      %v5649 = vunpack.c.l.s4 1983009808
      %v5650 = vunpack.c.0.s8 %v5649
      %v5651 = vlaneseq
      %v5652 = vshrl.u32 %v5651, 7
      %v5653 = vsub.s32 %v5650, %v5652
      %v5654 = vrot.slane %v5640, %v5653
      %v5655 = vcombine.low %v5480, %v5572
      %v5656 = vcombine.high %v5480, %v5572
      %v5658 = vunpack.c.l.s4 1983009808
      %v5659 = vunpack.c.0.s8 %v5658
      %v5660 = vlaneseq
      %v5661 = vshrl.u32 %v5660, 7
      %v5662 = vsub.s32 %v5659, %v5661
      %v5663 = vrot.slane %v5655, %v5662
      %v5665 = vunpack.c.l.s4 1983009808
      %v5666 = vunpack.c.0.s8 %v5665
      %v5667 = vlaneseq
      %v5668 = vshrl.u32 %v5667, 7
      %v5669 = vsub.s32 %v5666, %v5668
      %v5670 = vrot.slane %v5656, %v5669
      %v5671 = vcombine.low %v5526, %v5618
      %v5672 = vcombine.high %v5526, %v5618
      %v5674 = vunpack.c.l.s4 1983009808
      %v5675 = vunpack.c.0.s8 %v5674
      %v5676 = vlaneseq
      %v5677 = vshrl.u32 %v5676, 7
      %v5678 = vsub.s32 %v5675, %v5677
      %v5679 = vrot.slane %v5671, %v5678
      %v5681 = vunpack.c.l.s4 1983009808
      %v5682 = vunpack.c.0.s8 %v5681
      %v5683 = vlaneseq
      %v5684 = vshrl.u32 %v5683, 7
      %v5685 = vsub.s32 %v5682, %v5684
      %v5686 = vrot.slane %v5672, %v5685
      %v5687 = vcombine.low %v5631, %v5647
      %v5688 = vcombine.high %v5631, %v5647
      %v5690 = vunpack.c.l.s4 1934713408
      %v5691 = vunpack.c.0.s8 %v5690
      %v5692 = vlaneseq
      %v5693 = vshrl.u32 %v5692, 7
      %v5694 = vsub.s32 %v5691, %v5693
      %v5695 = vrot.slane %v5687, %v5694
      %v5697 = vunpack.c.l.s4 1934713408
      %v5698 = vunpack.c.0.s8 %v5697
      %v5699 = vlaneseq
      %v5700 = vshrl.u32 %v5699, 7
      %v5701 = vsub.s32 %v5698, %v5700
      %v5702 = vrot.slane %v5688, %v5701
      %v5703 = vcombine.low %v5638, %v5654
      %v5704 = vcombine.high %v5638, %v5654
      %v5706 = vunpack.c.l.s4 1934713408
      %v5707 = vunpack.c.0.s8 %v5706
      %v5708 = vlaneseq
      %v5709 = vshrl.u32 %v5708, 7
      %v5710 = vsub.s32 %v5707, %v5709
      %v5711 = vrot.slane %v5703, %v5710
      %v5713 = vunpack.c.l.s4 1934713408
      %v5714 = vunpack.c.0.s8 %v5713
      %v5715 = vlaneseq
      %v5716 = vshrl.u32 %v5715, 7
      %v5717 = vsub.s32 %v5714, %v5716
      %v5718 = vrot.slane %v5704, %v5717
      %v5719 = vcombine.low %v5663, %v5679
      %v5720 = vcombine.high %v5663, %v5679
      %v5722 = vunpack.c.l.s4 1934713408
      %v5723 = vunpack.c.0.s8 %v5722
      %v5724 = vlaneseq
      %v5725 = vshrl.u32 %v5724, 7
      %v5726 = vsub.s32 %v5723, %v5725
      %v5727 = vrot.slane %v5719, %v5726
      %v5729 = vunpack.c.l.s4 1934713408
      %v5730 = vunpack.c.0.s8 %v5729
      %v5731 = vlaneseq
      %v5732 = vshrl.u32 %v5731, 7
      %v5733 = vsub.s32 %v5730, %v5732
      %v5734 = vrot.slane %v5720, %v5733
      %v5735 = vcombine.low %v5670, %v5686
      %v5736 = vcombine.high %v5670, %v5686
      %v5738 = vunpack.c.l.s4 1934713408
      %v5739 = vunpack.c.0.s8 %v5738
      %v5740 = vlaneseq
      %v5741 = vshrl.u32 %v5740, 7
      %v5742 = vsub.s32 %v5739, %v5741
      %v5743 = vrot.slane %v5735, %v5742
      %v5745 = vunpack.c.l.s4 1934713408
      %v5746 = vunpack.c.0.s8 %v5745
      %v5747 = vlaneseq
      %v5748 = vshrl.u32 %v5747, 7
      %v5749 = vsub.s32 %v5746, %v5748
      %v5750 = vrot.slane %v5736, %v5749
      %v5751 = vcombine.low %v5695, %v5727
      %v5752 = vcombine.high %v5695, %v5727
      %v5753 = vcombine.low %v5702, %v5734
      %v5754 = vcombine.high %v5702, %v5734
      %v5755 = vcombine.low %v5711, %v5743
      %v5756 = vcombine.high %v5711, %v5743
      %v5757 = vcombine.low %v5718, %v5750
      %v5758 = vcombine.high %v5718, %v5750
      %v5759 = vadd.f32 %v5751, %v4920
      %v5760 = vadd.f32 %v5752, %v4966
      %v5761 = vadd.f32 %v5753, %v5012
      %v5762 = vadd.f32 %v5754, %v5058
      %v5763 = vadd.f32 %v5755, %v5104
      %v5764 = vadd.f32 %v5756, %v5150
      %v5765 = vadd.f32 %v5757, %v5196
      %v5766 = vadd.f32 %v5758, %v5242
      %5768 = vset.pattern.permute.xlu0 0
      %5769 = vperm.xlu0 %5768, %v4863
      %v5770 = vpop.permute.xlu0 %5769
      %5773 = vset.pattern.permute.xlu0 0
      %5774 = vperm.xlu0 %5773, %v4864
      %v5775 = vpop.permute.xlu0 %5774
      %5778 = vset.pattern.permute.xlu0 0
      %5779 = vperm.xlu0 %5778, %v4865
      %v5780 = vpop.permute.xlu0 %5779
      %5783 = vset.pattern.permute.xlu0 0
      %5784 = vperm.xlu0 %5783, %v4866
      %v5785 = vpop.permute.xlu0 %5784
      %5788 = vset.pattern.permute.xlu0 0
      %5789 = vperm.xlu0 %5788, %v4867
      %v5790 = vpop.permute.xlu0 %5789
      %5793 = vset.pattern.permute.xlu0 0
      %5794 = vperm.xlu0 %5793, %v4868
      %v5795 = vpop.permute.xlu0 %5794
      %5798 = vset.pattern.permute.xlu0 0
      %5799 = vperm.xlu0 %5798, %v4869
      %v5800 = vpop.permute.xlu0 %5799
      %5803 = vset.pattern.permute.xlu0 0
      %5804 = vperm.xlu0 %5803, %v4870
      %v5805 = vpop.permute.xlu0 %5804
      %v5807 = vmul.f32 %v5759, %v5770
      %v5808 = vmul.f32 %v5760, %v5775
      %v5809 = vmul.f32 %v5761, %v5780
      %v5810 = vmul.f32 %v5762, %v5785
      %v5811 = vmul.f32 %v5763, %v5790
      %v5812 = vmul.f32 %v5764, %v5795
      %v5813 = vmul.f32 %v5765, %v5800
      %v5814 = vmul.f32 %v5766, %v5805
      %v5815 = vmul.f32 %v3080, %v5807
      %v5816 = vmul.f32 %v3080, %v5808
      %v5817 = vmul.f32 %v3080, %v5809
      %v5818 = vmul.f32 %v3080, %v5810
      %v5819 = vmul.f32 %v3080, %v5811
      %v5820 = vmul.f32 %v3080, %v5812
      %v5821 = vmul.f32 %v3080, %v5813
      %v5822 = vmul.f32 %v3080, %v5814
      %v5823 = vadd.f32 %v5815, %v3090
      %v5824 = vadd.f32 %v5816, %v3091
      %v5825 = vadd.f32 %v5817, %v3092
      %v5826 = vadd.f32 %v5818, %v3093
      %v5827 = vadd.f32 %v5819, %v3094
      %v5828 = vadd.f32 %v5820, %v3095
      %v5829 = vadd.f32 %v5821, %v3096
      %v5830 = vadd.f32 %v5822, %v3097
      %5831 = vst.msk [vmem:[%s280] sm:$0xff] %vm387, %v5823
      %5832 = vst.msk [vmem:[%s280 + $0x8] sm:$0xff] %vm387, %v5824
      %5833 = vst.msk [vmem:[%s280 + $0x10] sm:$0xff] %vm387, %v5825
      %5834 = vst.msk [vmem:[%s280 + $0x18] sm:$0xff] %vm387, %v5826
      %5835 = vst.msk [vmem:[%s280 + $0x20] sm:$0xff] %vm387, %v5827
      %5836 = vst.msk [vmem:[%s280 + $0x28] sm:$0xff] %vm387, %v5828
      %5837 = vst.msk [vmem:[%s280 + $0x30] sm:$0xff] %vm387, %v5829
      %5838 = vst.msk [vmem:[%s280 + $0x38] sm:$0xff] %vm387, %v5830
      %p5839 = scmp.lt.s32.totalorder %s20, 1
      %s5840 = scalar_select %p5839, %s20, 1
      %s5841 = smul.addr %s5840, 8
      %s5842 = smul.addr %s5841, 8
      %s5843 = scalar_lea.vmem %s7, %s5842
      // Predicated region
      $region49: #{rcca_forward.7} parent=47 // pred_check
        %p5844 = pneg %p190
      $region50: #{rcca_forward.7} parent=47 // pred_check_branch
        %5846 = sbr.rel (%p5844) target = $region52
      $region51: #{rcca_forward.7} parent=47 // pred_region
        _
      $region52: #{rcca_forward.7} parent=47 // pred_fallthru
        _
    $region48: #{rcca_forward.7} parent=5 // pred_fallthru
      _
    %p5847 = scmp.le.s32.totalorder 2, %s15
    // Predicated region
    $region53: #{rcca_forward.7} parent=5 // pred_check
      %p5848 = pneg %p5847
    $region54: #{rcca_forward.7} parent=5 // pred_check_branch
      %5850 = sbr.rel (%p5848) target = $region56
    $region55: #{rcca_forward.7} parent=5 // pred_region
      %s5851 = ssub.s32 %s15, 2
      // Predicated region
      $region57: #{rcca_forward.7} parent=55 // pred_check
        %p5852 = pneg %p196
      $region58: #{rcca_forward.7} parent=55 // pred_check_branch
        %5854 = sbr.rel (%p5852) target = $region60
      $region59: #{rcca_forward.7} parent=55 // pred_region
        %p5855 = scmp.lt.s32.totalorder %s21, 1
        %s5856 = scalar_select %p5855, %s21, 1
        %s5857 = smul.addr %s5856, 8
        %s5858 = smul.addr %s5857, 8
        %s5859 = scalar_lea.vmem %s7, %s5858
      $region60: #{rcca_forward.7} parent=55 // pred_fallthru
        _
    $region56: #{rcca_forward.7} parent=5 // pred_fallthru
      _
  $region6: #{rcca_forward.7} parent=0 // loop_footer
    %s19 = sadd.s32 1, %s15
  $region7: #{rcca_forward.7} parent=0 // loop_footer_branch
    %14 = sbr.rel target = $region3
  $region8: #{rcca_forward.7} parent=0 // loop_exit
    _

</llo_original>
